<compile_context>
chip_gen: v6e
topology: v6e:2x2x1
jax: 0.10.0
libtpu: 0.0.40
codegen_flags: <defaults>
</compile_context>

<pallas_src>
import jax
import jax.numpy as jnp
from jax.experimental import pallas as pl
from jax.experimental.pallas import tpu as pltpu


# ----------------------------------------------------------------------------
# Pallas kernels
# ----------------------------------------------------------------------------
def _conv_pool_kernel(p00, p01, p10, p11, w_ref, b_ref, o_ref):
    """Fused conv (as 4 pool-grouped im2col matmuls) + bias + ReLU + 2x2 maxpool.

    p**: (M2, K) bf16 patches, one matrix per pool offset (py, px).
    w_ref: (K, O) bf16, b_ref: (1, O) f32, o_ref: (M2, O) f32.
    maxpool(relu(conv)) == relu(max_i(patch_i @ W) + b) since bias is shared
    and ReLU is monotone.
    """
    w = w_ref[...]
    m = jnp.dot(p00[...], w, preferred_element_type=jnp.float32)
    m = jnp.maximum(m, jnp.dot(p01[...], w, preferred_element_type=jnp.float32))
    m = jnp.maximum(m, jnp.dot(p10[...], w, preferred_element_type=jnp.float32))
    m = jnp.maximum(m, jnp.dot(p11[...], w, preferred_element_type=jnp.float32))
    o_ref[...] = jnp.maximum(m + b_ref[...], 0.0).astype(o_ref.dtype)


def _fc_chain_kernel(x_ref, w3, b3, w4, b4, w5, b5, w6, b6, o_ref):
    """layer3 (Linear+ReLU) -> fc1 -> fc2 -> fc3, all weights VMEM-resident.

    Weights are pre-transposed to (in, out), zero-padded to lane-friendly
    widths (1000->1024, 500->512, 10->128) and cast to bf16.  Accumulation is
    f32; intermediate activations are cast to bf16 before the next matmul.
    """
    h = jnp.dot(x_ref[...], w3[...], preferred_element_type=jnp.float32)
    h = jnp.maximum(h + b3[...], 0.0)                                   # layer3 ReLU
    h = jnp.dot(h.astype(jnp.bfloat16), w4[...],
                preferred_element_type=jnp.float32) + b4[...]           # fc1
    h = jnp.dot(h.astype(jnp.bfloat16), w5[...],
                preferred_element_type=jnp.float32) + b5[...]           # fc2
    h = jnp.dot(h.astype(jnp.bfloat16), w6[...],
                preferred_element_type=jnp.float32) + b6[...]           # fc3
    o_ref[...] = h.astype(o_ref.dtype)


# ----------------------------------------------------------------------------
# Wrappers
# ----------------------------------------------------------------------------
def conv_relu_pool(x, wm, b2d, *, kh, kw, pad):
    """Conv2d(stride 1) + ReLU + MaxPool(2,2), fused in one pallas_call.

    x: (B, H, W, Cin) f32 NHWC.  wm: (kh*kw*Cin, O) bf16 (column order
    (dy*kw+dx)*Cin + c).  b2d: (1, O) f32.  Returns (B, Ho/2, Wo/2, O) f32.
    """
    B, H, W, Cin = x.shape
    if pad:
        x = jnp.pad(x, ((0, 0), (pad, pad), (pad, pad), (0, 0)))
    Ho = H + 2 * pad - kh + 1
    Wo = W + 2 * pad - kw + 1
    Ho2, Wo2 = Ho // 2, Wo // 2
    K = kh * kw * Cin
    O = wm.shape[1]
    xb = x.astype(jnp.bfloat16)

    # One im2col matrix per pool offset (py, px); each row is one pooled
    # output position, columns ordered (dy, dx, c) to match wm.
    patches = []
    for py in (0, 1):
        for px in (0, 1):
            cols = [
                xb[:,
                   py + dy: py + dy + 2 * (Ho2 - 1) + 1: 2,
                   px + dx: px + dx + 2 * (Wo2 - 1) + 1: 2,
                   :]
                for dy in range(kh) for dx in range(kw)
            ]
            p = jnp.concatenate(cols, axis=-1).reshape(B * Ho2 * Wo2, K)
            patches.append(p)

    out = pl.pallas_call(
        _conv_pool_kernel,
        out_shape=jax.ShapeDtypeStruct((B * Ho2 * Wo2, O), jnp.float32),
        compiler_params=pltpu.CompilerParams(vmem_limit_bytes=32 * 1024 * 1024),
    )(*patches, wm, b2d)
    return out.reshape(B, Ho2, Wo2, O)


def fc_chain(x_flat, prep):
    """Fused layer3 + fc1 + fc2 + fc3.  x_flat: (B, 1728) f32 -> (B, 10) f32."""
    B = x_flat.shape[0]
    Mp = ((B + 7) // 8) * 8                       # pad batch only to 8 sublanes
    xp = jnp.pad(x_flat, ((0, Mp - B), (0, 0))).astype(jnp.bfloat16)
    out = pl.pallas_call(
        _fc_chain_kernel,
        out_shape=jax.ShapeDtypeStruct((Mp, 128), jnp.float32),
        compiler_params=pltpu.CompilerParams(vmem_limit_bytes=32 * 1024 * 1024),
    )(xp, prep["w3"], prep["b3"], prep["w4"], prep["b4"],
      prep["w5"], prep["b5"], prep["w6"], prep["b6"])
    return out[:B, :10]


# ----------------------------------------------------------------------------
# Parameters (PyTorch-style init) and one-time re-layout for the kernels
# ----------------------------------------------------------------------------
def init_params(key):
    def uconv(k, o, i, kh, kw):
        s = 1.0 / jnp.sqrt(i * kh * kw)
        return jax.random.uniform(k, (o, i, kh, kw), jnp.float32, -s, s)

    def ulin(k, o, i):
        s = 1.0 / jnp.sqrt(i)
        return jax.random.uniform(k, (o, i), jnp.float32, -s, s)

    def ubias(k, n, fan_in):
        s = 1.0 / jnp.sqrt(fan_in)
        return jax.random.uniform(k, (n,), jnp.float32, -s, s)

    ks = jax.random.split(key, 12)
    return dict(
        w1=uconv(ks[0], 24, 1, 5, 5),     b1=ubias(ks[1], 24, 1 * 25),
        w2=uconv(ks[2], 48, 24, 5, 5),    b2=ubias(ks[3], 48, 24 * 25),
        w3=ulin(ks[4], 1000, 6 * 6 * 48), b3=ubias(ks[5], 1000, 6 * 6 * 48),
        w4=ulin(ks[6], 500, 1000),        b4=ubias(ks[7], 500, 1000),
        w5=ulin(ks[8], 256, 500),         b5=ubias(ks[9], 256, 500),
        w6=ulin(ks[10], 10, 256),         b6=ubias(ks[11], 10, 256),
    )


def prepare_params(p):
    """One-time transpose / pad / bf16-cast of all weights into kernel layout."""
    def conv_w(w):                       # (O, Cin, kh, kw) -> (kh*kw*Cin, O) bf16
        O, Cin, kh, kw = w.shape
        return (jnp.transpose(w, (2, 3, 1, 0))
                .reshape(kh * kw * Cin, O).astype(jnp.bfloat16))

    def lin_w(w, kpad, npad):            # torch (out, in) -> (in_pad, out_pad) bf16
        o, i = w.shape
        wt = jnp.transpose(w)
        wt = jnp.pad(wt, ((0, kpad - i), (0, npad - o)))
        return wt.astype(jnp.bfloat16)

    def bias2d(b, npad):
        return jnp.pad(b, (0, npad - b.shape[0])).reshape(1, npad).astype(jnp.float32)

    return dict(
        w1=conv_w(p["w1"]), b1=p["b1"].reshape(1, -1).astype(jnp.float32),
        w2=conv_w(p["w2"]), b2=p["b2"].reshape(1, -1).astype(jnp.float32),
        w3=lin_w(p["w3"], 1728, 1024), b3=bias2d(p["b3"], 1024),
        w4=lin_w(p["w4"], 1024, 512),  b4=bias2d(p["b4"], 512),
        w5=lin_w(p["w5"], 512, 256),   b5=bias2d(p["b5"], 256),
        w6=lin_w(p["w6"], 256, 128),   b6=bias2d(p["b6"], 128),
    )


# ----------------------------------------------------------------------------
# Forward (matches PyTorch Network; expects NCHW [B, 1, 28, 28] input)
# ----------------------------------------------------------------------------
@jax.jit
def forward(x_nchw, prep):
    x = jnp.transpose(x_nchw, (0, 2, 3, 1)).astype(jnp.float32)        # NCHW -> NHWC
    # layer1: conv(1->24, k5, pad 0) + ReLU + maxpool2   -> (B, 12, 12, 24)
    x = conv_relu_pool(x, prep["w1"], prep["b1"], kh=5, kw=5, pad=0)
    # layer2: conv(24->48, k5, pad 2) + ReLU + maxpool2  -> (B, 6, 6, 48)
    x = conv_relu_pool(x, prep["w2"], prep["b2"], kh=5, kw=5, pad=2)
    # flatten in PyTorch NCHW channel-major order -> (B, 1728)
    B = x.shape[0]
    x = jnp.transpose(x, (0, 3, 1, 2)).reshape(B, -1)
    # layer3 + fc1 + fc2 + fc3 fused in one VMEM-resident kernel -> (B, 10)
    return fc_chain(x, prep)


if __name__ == "__main__":
    key = jax.random.PRNGKey(0)
    k_x, k_p = jax.random.split(key)
    # The module's 6*6*48 flatten implies 28x28 single-channel input.
    x = jax.random.normal(k_x, (2, 1, 28, 28), dtype=jnp.float32)
    params = init_params(k_p)
    prep = prepare_params(params)          # one-time weight re-layout (off hot path)
    out = forward(x, prep)
    out = jax.block_until_ready(out)
    assert out.shape == (2, 10)
    print("KERNEL_OK")
</pallas_src>

<mosaic_0001>
module attributes {stable_mosaic.version = 11 : i64} {
  func.func @_conv_pool_kernel(%arg0: memref<288x25xbf16, #tpu.memory_space<vmem>>, %arg1: memref<288x25xbf16, #tpu.memory_space<vmem>>, %arg2: memref<288x25xbf16, #tpu.memory_space<vmem>>, %arg3: memref<288x25xbf16, #tpu.memory_space<vmem>>, %arg4: memref<25x24xbf16, #tpu.memory_space<vmem>>, %arg5: memref<1x24xf32, #tpu.memory_space<vmem>>, %arg6: memref<288x24xf32, #tpu.memory_space<vmem>>) attributes {dimension_semantics = [], scalar_prefetch = 0 : i64, scratch_operands = 0 : i64, tpu.core_type = #tpu.core_type<tc>} {
    %c0 = arith.constant 0 : index
    %c0_0 = arith.constant 0 : index
    %0 = vector.load %arg4[%c0, %c0_0] : memref<25x24xbf16, #tpu.memory_space<vmem>>, vector<25x24xbf16>
    %c0_1 = arith.constant 0 : index
    %c0_2 = arith.constant 0 : index
    %1 = vector.load %arg0[%c0_1, %c0_2] : memref<288x25xbf16, #tpu.memory_space<vmem>>, vector<288x25xbf16>
    %cst = arith.constant dense<0.000000e+00> : vector<288x24xf32>
    %2 = tpu.matmul %1, %0, %cst {dimension_numbers = #tpu.dot_dimension_numbers<[1], [0], [0], [1], [0, 0, 1, 1], [], []>} : vector<288x25xbf16>, vector<25x24xbf16>, vector<288x24xf32> -> vector<288x24xf32>
    %c0_3 = arith.constant 0 : index
    %c0_4 = arith.constant 0 : index
    %3 = vector.load %arg1[%c0_3, %c0_4] : memref<288x25xbf16, #tpu.memory_space<vmem>>, vector<288x25xbf16>
    %cst_5 = arith.constant dense<0.000000e+00> : vector<288x24xf32>
    %4 = tpu.matmul %3, %0, %cst_5 {dimension_numbers = #tpu.dot_dimension_numbers<[1], [0], [0], [1], [0, 0, 1, 1], [], []>} : vector<288x25xbf16>, vector<25x24xbf16>, vector<288x24xf32> -> vector<288x24xf32>
    %5 = arith.maximumf %2, %4 : vector<288x24xf32>
    %c0_6 = arith.constant 0 : index
    %c0_7 = arith.constant 0 : index
    %6 = vector.load %arg2[%c0_6, %c0_7] : memref<288x25xbf16, #tpu.memory_space<vmem>>, vector<288x25xbf16>
    %cst_8 = arith.constant dense<0.000000e+00> : vector<288x24xf32>
    %7 = tpu.matmul %6, %0, %cst_8 {dimension_numbers = #tpu.dot_dimension_numbers<[1], [0], [0], [1], [0, 0, 1, 1], [], []>} : vector<288x25xbf16>, vector<25x24xbf16>, vector<288x24xf32> -> vector<288x24xf32>
    %8 = arith.maximumf %5, %7 : vector<288x24xf32>
    %c0_9 = arith.constant 0 : index
    %c0_10 = arith.constant 0 : index
    %9 = vector.load %arg3[%c0_9, %c0_10] : memref<288x25xbf16, #tpu.memory_space<vmem>>, vector<288x25xbf16>
    %cst_11 = arith.constant dense<0.000000e+00> : vector<288x24xf32>
    %10 = tpu.matmul %9, %0, %cst_11 {dimension_numbers = #tpu.dot_dimension_numbers<[1], [0], [0], [1], [0, 0, 1, 1], [], []>} : vector<288x25xbf16>, vector<25x24xbf16>, vector<288x24xf32> -> vector<288x24xf32>
    %11 = arith.maximumf %8, %10 : vector<288x24xf32>
    %c0_12 = arith.constant 0 : index
    %c0_13 = arith.constant 0 : index
    %12 = vector.load %arg5[%c0_12, %c0_13] : memref<1x24xf32, #tpu.memory_space<vmem>>, vector<1x24xf32>
    %13 = vector.broadcast %12 : vector<1x24xf32> to vector<288x24xf32>
    %14 = arith.addf %11, %13 : vector<288x24xf32>
    %cst_14 = arith.constant 0.000000e+00 : f32
    %15 = vector.broadcast %cst_14 : f32 to vector<288x24xf32>
    %16 = arith.maximumf %14, %15 : vector<288x24xf32>
    %c0_15 = arith.constant 0 : index
    %c0_16 = arith.constant 0 : index
    %17 = vector.load %arg6[%c0_15, %c0_16] : memref<288x24xf32, #tpu.memory_space<vmem>>, vector<288x24xf32>
    tpu.vector_store %arg6[%c0_15, %c0_16], %16 {strides = array<i32>} : memref<288x24xf32, #tpu.memory_space<vmem>>, vector<288x24xf32>,
    return
  }
}

module attributes {stable_mosaic.version = 11 : i64} {
  func.func @_conv_pool_kernel(%arg0: memref<72x600xbf16, #tpu.memory_space<vmem>>, %arg1: memref<72x600xbf16, #tpu.memory_space<vmem>>, %arg2: memref<72x600xbf16, #tpu.memory_space<vmem>>, %arg3: memref<72x600xbf16, #tpu.memory_space<vmem>>, %arg4: memref<600x48xbf16, #tpu.memory_space<vmem>>, %arg5: memref<1x48xf32, #tpu.memory_space<vmem>>, %arg6: memref<72x48xf32, #tpu.memory_space<vmem>>) attributes {dimension_semantics = [], scalar_prefetch = 0 : i64, scratch_operands = 0 : i64, tpu.core_type = #tpu.core_type<tc>} {
    %c0 = arith.constant 0 : index
    %c0_0 = arith.constant 0 : index
    %0 = vector.load %arg4[%c0, %c0_0] : memref<600x48xbf16, #tpu.memory_space<vmem>>, vector<600x48xbf16>
    %c0_1 = arith.constant 0 : index
    %c0_2 = arith.constant 0 : index
    %1 = vector.load %arg0[%c0_1, %c0_2] : memref<72x600xbf16, #tpu.memory_space<vmem>>, vector<72x600xbf16>
    %cst = arith.constant dense<0.000000e+00> : vector<72x48xf32>
    %2 = tpu.matmul %1, %0, %cst {dimension_numbers = #tpu.dot_dimension_numbers<[1], [0], [0], [1], [0, 0, 1, 1], [], []>} : vector<72x600xbf16>, vector<600x48xbf16>, vector<72x48xf32> -> vector<72x48xf32>
    %c0_3 = arith.constant 0 : index
    %c0_4 = arith.constant 0 : index
    %3 = vector.load %arg1[%c0_3, %c0_4] : memref<72x600xbf16, #tpu.memory_space<vmem>>, vector<72x600xbf16>
    %cst_5 = arith.constant dense<0.000000e+00> : vector<72x48xf32>
    %4 = tpu.matmul %3, %0, %cst_5 {dimension_numbers = #tpu.dot_dimension_numbers<[1], [0], [0], [1], [0, 0, 1, 1], [], []>} : vector<72x600xbf16>, vector<600x48xbf16>, vector<72x48xf32> -> vector<72x48xf32>
    %5 = arith.maximumf %2, %4 : vector<72x48xf32>
    %c0_6 = arith.constant 0 : index
    %c0_7 = arith.constant 0 : index
    %6 = vector.load %arg2[%c0_6, %c0_7] : memref<72x600xbf16, #tpu.memory_space<vmem>>, vector<72x600xbf16>
    %cst_8 = arith.constant dense<0.000000e+00> : vector<72x48xf32>
    %7 = tpu.matmul %6, %0, %cst_8 {dimension_numbers = #tpu.dot_dimension_numbers<[1], [0], [0], [1], [0, 0, 1, 1], [], []>} : vector<72x600xbf16>, vector<600x48xbf16>, vector<72x48xf32> -> vector<72x48xf32>
    %8 = arith.maximumf %5, %7 : vector<72x48xf32>
    %c0_9 = arith.constant 0 : index
    %c0_10 = arith.constant 0 : index
    %9 = vector.load %arg3[%c0_9, %c0_10] : memref<72x600xbf16, #tpu.memory_space<vmem>>, vector<72x600xbf16>
    %cst_11 = arith.constant dense<0.000000e+00> : vector<72x48xf32>
    %10 = tpu.matmul %9, %0, %cst_11 {dimension_numbers = #tpu.dot_dimension_numbers<[1], [0], [0], [1], [0, 0, 1, 1], [], []>} : vector<72x600xbf16>, vector<600x48xbf16>, vector<72x48xf32> -> vector<72x48xf32>
    %11 = arith.maximumf %8, %10 : vector<72x48xf32>
    %c0_12 = arith.constant 0 : index
    %c0_13 = arith.constant 0 : index
    %12 = vector.load %arg5[%c0_12, %c0_13] : memref<1x48xf32, #tpu.memory_space<vmem>>, vector<1x48xf32>
    %13 = vector.broadcast %12 : vector<1x48xf32> to vector<72x48xf32>
    %14 = arith.addf %11, %13 : vector<72x48xf32>
    %cst_14 = arith.constant 0.000000e+00 : f32
    %15 = vector.broadcast %cst_14 : f32 to vector<72x48xf32>
    %16 = arith.maximumf %14, %15 : vector<72x48xf32>
    %c0_15 = arith.constant 0 : index
    %c0_16 = arith.constant 0 : index
    %17 = vector.load %arg6[%c0_15, %c0_16] : memref<72x48xf32, #tpu.memory_space<vmem>>, vector<72x48xf32>
    tpu.vector_store %arg6[%c0_15, %c0_16], %16 {strides = array<i32>} : memref<72x48xf32, #tpu.memory_space<vmem>>, vector<72x48xf32>,
    return
  }
}

module attributes {stable_mosaic.version = 11 : i64} {
  func.func @_fc_chain_kernel(%arg0: memref<8x1728xbf16, #tpu.memory_space<vmem>>, %arg1: memref<1728x1024xbf16, #tpu.memory_space<vmem>>, %arg2: memref<1x1024xf32, #tpu.memory_space<vmem>>, %arg3: memref<1024x512xbf16, #tpu.memory_space<vmem>>, %arg4: memref<1x512xf32, #tpu.memory_space<vmem>>, %arg5: memref<512x256xbf16, #tpu.memory_space<vmem>>, %arg6: memref<1x256xf32, #tpu.memory_space<vmem>>, %arg7: memref<256x128xbf16, #tpu.memory_space<vmem>>, %arg8: memref<1x128xf32, #tpu.memory_space<vmem>>, %arg9: memref<8x128xf32, #tpu.memory_space<vmem>>) attributes {dimension_semantics = [], scalar_prefetch = 0 : i64, scratch_operands = 0 : i64, tpu.core_type = #tpu.core_type<tc>} {
    %c0 = arith.constant 0 : index
    %c0_0 = arith.constant 0 : index
    %0 = vector.load %arg0[%c0, %c0_0] : memref<8x1728xbf16, #tpu.memory_space<vmem>>, vector<8x1728xbf16>
    %c0_1 = arith.constant 0 : index
    %c0_2 = arith.constant 0 : index
    %1 = vector.load %arg1[%c0_1, %c0_2] : memref<1728x1024xbf16, #tpu.memory_space<vmem>>, vector<1728x1024xbf16>
    %cst = arith.constant dense<0.000000e+00> : vector<8x1024xf32>
    %2 = tpu.matmul %0, %1, %cst {dimension_numbers = #tpu.dot_dimension_numbers<[1], [0], [0], [1], [0, 0, 1, 1], [], []>} : vector<8x1728xbf16>, vector<1728x1024xbf16>, vector<8x1024xf32> -> vector<8x1024xf32>
    %c0_3 = arith.constant 0 : index
    %c0_4 = arith.constant 0 : index
    %3 = vector.load %arg2[%c0_3, %c0_4] : memref<1x1024xf32, #tpu.memory_space<vmem>>, vector<1x1024xf32>
    %4 = vector.broadcast %3 : vector<1x1024xf32> to vector<8x1024xf32>
    %5 = arith.addf %2, %4 : vector<8x1024xf32>
    %cst_5 = arith.constant 0.000000e+00 : f32
    %6 = vector.broadcast %cst_5 : f32 to vector<8x1024xf32>
    %7 = arith.maximumf %5, %6 : vector<8x1024xf32>
    %8 = arith.truncf %7 : vector<8x1024xf32> to vector<8x1024xbf16>
    %c0_6 = arith.constant 0 : index
    %c0_7 = arith.constant 0 : index
    %9 = vector.load %arg3[%c0_6, %c0_7] : memref<1024x512xbf16, #tpu.memory_space<vmem>>, vector<1024x512xbf16>
    %cst_8 = arith.constant dense<0.000000e+00> : vector<8x512xf32>
    %10 = tpu.matmul %8, %9, %cst_8 {dimension_numbers = #tpu.dot_dimension_numbers<[1], [0], [0], [1], [0, 0, 1, 1], [], []>} : vector<8x1024xbf16>, vector<1024x512xbf16>, vector<8x512xf32> -> vector<8x512xf32>
    %c0_9 = arith.constant 0 : index
    %c0_10 = arith.constant 0 : index
    %11 = vector.load %arg4[%c0_9, %c0_10] : memref<1x512xf32, #tpu.memory_space<vmem>>, vector<1x512xf32>
    %12 = vector.broadcast %11 : vector<1x512xf32> to vector<8x512xf32>
    %13 = arith.addf %10, %12 : vector<8x512xf32>
    %14 = arith.truncf %13 : vector<8x512xf32> to vector<8x512xbf16>
    %c0_11 = arith.constant 0 : index
    %c0_12 = arith.constant 0 : index
    %15 = vector.load %arg5[%c0_11, %c0_12] : memref<512x256xbf16, #tpu.memory_space<vmem>>, vector<512x256xbf16>
    %cst_13 = arith.constant dense<0.000000e+00> : vector<8x256xf32>
    %16 = tpu.matmul %14, %15, %cst_13 {dimension_numbers = #tpu.dot_dimension_numbers<[1], [0], [0], [1], [0, 0, 1, 1], [], []>} : vector<8x512xbf16>, vector<512x256xbf16>, vector<8x256xf32> -> vector<8x256xf32>
    %c0_14 = arith.constant 0 : index
    %c0_15 = arith.constant 0 : index
    %17 = vector.load %arg6[%c0_14, %c0_15] : memref<1x256xf32, #tpu.memory_space<vmem>>, vector<1x256xf32>
    %18 = vector.broadcast %17 : vector<1x256xf32> to vector<8x256xf32>
    %19 = arith.addf %16, %18 : vector<8x256xf32>
    %20 = arith.truncf %19 : vector<8x256xf32> to vector<8x256xbf16>
    %c0_16 = arith.constant 0 : index
    %c0_17 = arith.constant 0 : index
    %21 = vector.load %arg7[%c0_16, %c0_17] : memref<256x128xbf16, #tpu.memory_space<vmem>>, vector<256x128xbf16>
    %cst_18 = arith.constant dense<0.000000e+00> : vector<8x128xf32>
    %22 = tpu.matmul %20, %21, %cst_18 {dimension_numbers = #tpu.dot_dimension_numbers<[1], [0], [0], [1], [0, 0, 1, 1], [], []>} : vector<8x256xbf16>, vector<256x128xbf16>, vector<8x128xf32> -> vector<8x128xf32>
    %c0_19 = arith.constant 0 : index
    %c0_20 = arith.constant 0 : index
    %23 = vector.load %arg8[%c0_19, %c0_20] : memref<1x128xf32, #tpu.memory_space<vmem>>, vector<1x128xf32>
    %24 = vector.broadcast %23 : vector<1x128xf32> to vector<8x128xf32>
    %25 = arith.addf %22, %24 : vector<8x128xf32>
    %c0_21 = arith.constant 0 : index
    %c0_22 = arith.constant 0 : index
    %26 = vector.load %arg9[%c0_21, %c0_22] : memref<8x128xf32, #tpu.memory_space<vmem>>, vector<8x128xf32>
    tpu.vector_store %arg9[%c0_21, %c0_22], %25 {strides = array<i32>} : memref<8x128xf32, #tpu.memory_space<vmem>>, vector<8x128xf32>,
    return
  }
}

</mosaic_0001>

<llo_original>
// kernel: forward.3
$region0: #{forward.3}
  #allocation0 [shape = 'u32[]', space=smem, size = 0x4, offset = 0x4, fixed_abs, tag = 'smem constant byte address 0x4 - core index']
  #allocation1 [shape = 'u32[144,128]{1,0:T(1,128)}', space=vmem, size = 0x12000, scoped, tag = 'internal scratch']
  %s0 = inlined_call_operand.vmem [shape: bf16[288,25], index: 0, kind: input, shape index: {}]
  %s1 = inlined_call_operand.vmem [shape: bf16[288,25], index: 1, kind: input, shape index: {}]
  %s2 = inlined_call_operand.vmem [shape: bf16[288,25], index: 2, kind: input, shape index: {}]
  %s3 = inlined_call_operand.vmem [shape: bf16[288,25], index: 3, kind: input, shape index: {}]
  %s4 = inlined_call_operand.vmem [shape: bf16[25,24], index: 4, kind: input, shape index: {}]
  %s5 = inlined_call_operand.hbm [shape: f32[1,24], index: 5, kind: input, shape index: {}]
  %s6 = inlined_call_operand.vmem [shape: f32[288,24], index: 6, kind: output, shape index: {}]
  %s7 = sld [smem:[#allocation0]]
  $region38: #{forward.3} parent=0
    _
  %s9 = ssub.s32 1, %s7
  %s10 = scalar_select 0, %s9, %s7
  $region1: #{forward.3} parent=0
    #allocation2 [shape = 'u8[512]{0}', space=vmem, size = 0x400, scoped, tag = 'input window, operand 5, single buffered']
    #allocation3 [shape = 's32[1]{0}', space=sflag, size = 0x4, scoped, tag = 'scoped memory for forward.3']
    %11 = vsyncpa [#allocation3], 0
    // Predicated region
    $region2: #{forward.3} parent=1 // pred_check
      _
    $region3: #{forward.3} parent=1 // pred_check_branch
      %13 = sbr.rel (0) target = $region5
    $region4: #{forward.3} parent=1 // pred_region
      _
    $region5: #{forward.3} parent=1 // pred_fallthru
      _
    // Predicated region
    $region6: #{forward.3} parent=1 // pred_check
      _
    $region7: #{forward.3} parent=1 // pred_check_branch
      %15 = sbr.rel (0) target = $region9
    $region8: #{forward.3} parent=1 // pred_region
      _
    $region9: #{forward.3} parent=1 // pred_fallthru
      _
    // Predicated region
    $region10: #{forward.3} parent=1 // pred_check
      _
    $region11: #{forward.3} parent=1 // pred_check_branch
      %17 = sbr.rel (0) target = $region13
    $region12: #{forward.3} parent=1 // pred_region
      _
    $region13: #{forward.3} parent=1 // pred_fallthru
      _
    // Predicated region
    $region14: #{forward.3} parent=1 // pred_check
      _
    $region15: #{forward.3} parent=1 // pred_check_branch
      %19 = sbr.rel (0) target = $region17
    $region16: #{forward.3} parent=1 // pred_region
      _
    $region17: #{forward.3} parent=1 // pred_fallthru
      _
    // Predicated region
    $region18: #{forward.3} parent=1 // pred_check
      _
    $region19: #{forward.3} parent=1 // pred_check_branch
      %21 = sbr.rel (0) target = $region21
    $region20: #{forward.3} parent=1 // pred_region
      _
    $region21: #{forward.3} parent=1 // pred_fallthru
      _
    // Predicated region
    $region22: #{forward.3} parent=1 // pred_check
      _
    $region23: #{forward.3} parent=1 // pred_check_branch
      %23 = sbr.rel (0) target = $region25
    $region24: #{forward.3} parent=1 // pred_region
      %s25 = ssub.s32 16, 16
      %26 = vsyncadd [#allocation3], %s25
      %s28 = sshll.u32 [#allocation2], 4
      %s29 = int_to_ptr.vmem [resolvable:$true] %s28
      %31 = dma.hbm_to_vmem [thread:$0]  %s5, 16, %s29, [#allocation3]
    $region25: #{forward.3} parent=1 // pred_fallthru
      _
    // Predicated region
    $region26: #{forward.3} parent=1 // pred_check
      _
    $region27: #{forward.3} parent=1 // pred_check_branch
      %33 = sbr.rel (0) target = $region29
    $region28: #{forward.3} parent=1 // pred_region
      %34 = dma.done [#allocation3], 16
    $region29: #{forward.3} parent=1 // pred_fallthru
      _
    %v36 = vld [vmem:[%s4] sm:$0xf]
    %v37 = vld [vmem:[%s4 + $0x4] sm:$0xf]
    %v38 = vld [vmem:[%s4 + $0x8] sm:$0xf]
    %v39 = vld [vmem:[%s4 + $0xc] sm:$0x1]
    %v40 = vld [vmem:[%s0] sm:$0xf]
    %v41 = vld [vmem:[%s0 + $0x4] sm:$0xf]
    %v42 = vld [vmem:[%s0 + $0x8] sm:$0xf]
    %v43 = vld [vmem:[%s0 + $0xc] sm:$0xf]
    %v44 = vld [vmem:[%s0 + $0x10] sm:$0xf]
    %v45 = vld [vmem:[%s0 + $0x14] sm:$0xf]
    %v46 = vld [vmem:[%s0 + $0x18] sm:$0xf]
    %v47 = vld [vmem:[%s0 + $0x1c] sm:$0xf]
    %v48 = vld [vmem:[%s0 + $0x20] sm:$0xf]
    %v49 = vld [vmem:[%s0 + $0x24] sm:$0xf]
    %v50 = vld [vmem:[%s0 + $0x28] sm:$0xf]
    %v51 = vld [vmem:[%s0 + $0x2c] sm:$0xf]
    %v52 = vld [vmem:[%s0 + $0x30] sm:$0xf]
    %v53 = vld [vmem:[%s0 + $0x34] sm:$0xf]
    %v54 = vld [vmem:[%s0 + $0x38] sm:$0xf]
    %v55 = vld [vmem:[%s0 + $0x3c] sm:$0xf]
    %v56 = vld [vmem:[%s0 + $0x40] sm:$0xf]
    %v57 = vld [vmem:[%s0 + $0x44] sm:$0xf]
    %v58 = vld [vmem:[%s0 + $0x48] sm:$0xf]
    %v59 = vld [vmem:[%s0 + $0x4c] sm:$0xf]
    %v60 = vld [vmem:[%s0 + $0x50] sm:$0xf]
    %v61 = vld [vmem:[%s0 + $0x54] sm:$0xf]
    %v62 = vld [vmem:[%s0 + $0x58] sm:$0xf]
    %v63 = vld [vmem:[%s0 + $0x5c] sm:$0xf]
    %v64 = vld [vmem:[%s0 + $0x60] sm:$0xf]
    %v65 = vld [vmem:[%s0 + $0x64] sm:$0xf]
    %v66 = vld [vmem:[%s0 + $0x68] sm:$0xf]
    %v67 = vld [vmem:[%s0 + $0x6c] sm:$0xf]
    %v68 = vld [vmem:[%s0 + $0x70] sm:$0xf]
    %v69 = vld [vmem:[%s0 + $0x74] sm:$0xf]
    %v70 = vld [vmem:[%s0 + $0x78] sm:$0xf]
    %v71 = vld [vmem:[%s0 + $0x7c] sm:$0xf]
    %v72 = vld [vmem:[%s0 + $0x80] sm:$0xf]
    %v73 = vld [vmem:[%s0 + $0x84] sm:$0xf]
    %v74 = vld [vmem:[%s0 + $0x88] sm:$0xf]
    %v75 = vld [vmem:[%s0 + $0x8c] sm:$0xf]
    %v112 = vunpack.c.l.b16 %v40
    %v113 = vunpack.c.l.b16 %v41
    %v114 = vunpack.c.l.b16 %v42
    %v115 = vunpack.c.l.b16 %v43
    %v116 = vunpack.c.l.b16 %v44
    %v117 = vunpack.c.l.b16 %v45
    %v118 = vunpack.c.l.b16 %v46
    %v119 = vunpack.c.l.b16 %v47
    %v120 = vunpack.c.l.b16 %v48
    %v121 = vunpack.c.l.b16 %v49
    %v122 = vunpack.c.l.b16 %v50
    %v123 = vunpack.c.l.b16 %v51
    %v124 = vunpack.c.l.b16 %v52
    %v125 = vunpack.c.l.b16 %v53
    %v126 = vunpack.c.l.b16 %v54
    %v127 = vunpack.c.l.b16 %v55
    %v128 = vunpack.c.l.b16 %v56
    %v129 = vunpack.c.l.b16 %v57
    %v130 = vunpack.c.l.b16 %v58
    %v131 = vunpack.c.l.b16 %v59
    %v132 = vunpack.c.l.b16 %v60
    %v133 = vunpack.c.l.b16 %v61
    %v134 = vunpack.c.l.b16 %v62
    %v135 = vunpack.c.l.b16 %v63
    %v136 = vunpack.c.l.b16 %v64
    %v137 = vunpack.c.l.b16 %v65
    %v138 = vunpack.c.l.b16 %v66
    %v139 = vunpack.c.l.b16 %v67
    %v140 = vunpack.c.l.b16 %v68
    %v141 = vunpack.c.l.b16 %v69
    %v142 = vunpack.c.l.b16 %v70
    %v143 = vunpack.c.l.b16 %v71
    %v144 = vunpack.c.l.b16 %v72
    %v145 = vunpack.c.l.b16 %v73
    %v146 = vunpack.c.l.b16 %v74
    %v147 = vunpack.c.l.b16 %v75
    %v148 = vpack.c.b16 %v113, %v112
    %v149 = vpack.c.b16 %v115, %v114
    %v150 = vpack.c.b16 %v117, %v116
    %v151 = vpack.c.b16 %v119, %v118
    %v152 = vpack.c.b16 %v121, %v120
    %v153 = vpack.c.b16 %v123, %v122
    %v154 = vpack.c.b16 %v125, %v124
    %v155 = vpack.c.b16 %v127, %v126
    %v156 = vpack.c.b16 %v129, %v128
    %v157 = vpack.c.b16 %v131, %v130
    %v158 = vpack.c.b16 %v133, %v132
    %v159 = vpack.c.b16 %v135, %v134
    %v160 = vpack.c.b16 %v137, %v136
    %v161 = vpack.c.b16 %v139, %v138
    %v162 = vpack.c.b16 %v141, %v140
    %v163 = vpack.c.b16 %v143, %v142
    %v164 = vpack.c.b16 %v145, %v144
    %v165 = vpack.c.b16 %v147, %v146
    %v170 = vunpack.c.l.b16 %v36
    %v171 = vunpack.c.l.b16 %v37
    %v172 = vunpack.c.l.b16 %v38
    %v173 = vunpack.c.l.b16 %v39
    %v174 = vpack.c.b16 %v171, %v170
    %v175 = vpack.c.b16 %v173, %v172
    %vm177 = vcmask 203776
    %v179 = vsel %vm177, %v148, 0
    %v182 = vsel %vm177, %v149, 0
    %v185 = vsel %vm177, %v150, 0
    %v188 = vsel %vm177, %v151, 0
    %v191 = vsel %vm177, %v152, 0
    %v194 = vsel %vm177, %v153, 0
    %v197 = vsel %vm177, %v154, 0
    %v200 = vsel %vm177, %v155, 0
    %v203 = vsel %vm177, %v156, 0
    %v206 = vsel %vm177, %v157, 0
    %v209 = vsel %vm177, %v158, 0
    %v212 = vsel %vm177, %v159, 0
    %v215 = vsel %vm177, %v160, 0
    %v218 = vsel %vm177, %v161, 0
    %v221 = vsel %vm177, %v162, 0
    %v224 = vsel %vm177, %v163, 0
    %v227 = vsel %vm177, %v164, 0
    %v230 = vsel %vm177, %v165, 0
    %vm232 = vcmask 1043456
    %vm233 = vcmask 1044480
    %v234 = vsel %vm232, 4294967295, 65535
    %v235 = vsel %vm233, %v234, 0
    %v237 = vand.u32 %v175, %v235
    %239 = vmatprep.subr.bf16.mxu0 0
    %240 = vmatpush1.bf16.msra.mxu0 0
    %241 = vmatprep.subr.bf16.mxu0 0
    %242 = vmatpush1.bf16.msra.mxu0 0
    %243 = vmatprep.subr.bf16.mxu0 0
    %244 = vmatpush1.bf16.msra.mxu0 0
    %245 = vmatprep.subr.bf16.mxu0 0
    %246 = vmatpush1.bf16.msra.mxu0 0
    %247 = vmatprep.subr.bf16.mxu0 0
    %248 = vmatpush1.bf16.msra.mxu0 0
    %249 = vmatprep.subr.bf16.mxu0 0
    %250 = vmatpush1.bf16.msra.mxu0 0
    %251 = vmatprep.subr.bf16.mxu0 0
    %252 = vmatpush1.bf16.msra.mxu0 %v237
    %253 = vmatprep.subr.bf16.mxu0 0
    %254 = vmatpush1.bf16.msra.mxu0 %v174
    %255 = vmatprep.subr.bf16.mxu0 0
    %256 = vmatpush2.bf16.msra.mxu0 0
    %257 = vmatprep.subr.bf16.mxu0 0
    %258 = vmatpush2.bf16.msra.mxu0 0
    %259 = vmatprep.subr.bf16.mxu0 0
    %260 = vmatpush2.bf16.msra.mxu0 0
    %261 = vmatprep.subr.bf16.mxu0 0
    %262 = vmatpush2.bf16.msra.mxu0 0
    %263 = vmatprep.subr.bf16.mxu0 0
    %264 = vmatpush2.bf16.msra.mxu0 0
    %265 = vmatprep.subr.bf16.mxu0 0
    %266 = vmatpush2.bf16.msra.mxu0 0
    %267 = vmatprep.subr.bf16.mxu0 0
    %268 = vmatpush2.bf16.msra.mxu0 0
    %269 = vmatprep.subr.bf16.mxu0 0
    %270 = vmatpush2.bf16.msra.mxu0 0
    %271 = vmatprep.mubr.bf16.mxu0 0
    %272 = vmatmul.mubr.bf16.gmra.mxu0 %v179
    %v273 = vpop.f32.mrf.mxu0
    %v274 = vadd.f32 0.0, %v273
    %v275 = vpop.f32.mrf.mxu0
    %v276 = vpop.f32.mrf.mxu0
    %v277 = vadd.f32 0.0, %v276
    %v278 = vpop.f32.mrf.mxu0
    %279 = vmatprep.mubr.bf16.mxu0 0
    %280 = vmatmul.mubr.bf16.gmra.mxu0 %v182
    %v281 = vpop.f32.mrf.mxu0
    %v282 = vadd.f32 0.0, %v281
    %v283 = vpop.f32.mrf.mxu0
    %v284 = vpop.f32.mrf.mxu0
    %v285 = vadd.f32 0.0, %v284
    %v286 = vpop.f32.mrf.mxu0
    %287 = vmatprep.mubr.bf16.mxu0 0
    %288 = vmatmul.mubr.bf16.gmra.mxu0 %v185
    %v289 = vpop.f32.mrf.mxu0
    %v290 = vadd.f32 0.0, %v289
    %v291 = vpop.f32.mrf.mxu0
    %v292 = vpop.f32.mrf.mxu0
    %v293 = vadd.f32 0.0, %v292
    %v294 = vpop.f32.mrf.mxu0
    %295 = vmatprep.mubr.bf16.mxu0 0
    %296 = vmatmul.mubr.bf16.gmra.mxu0 %v188
    %v297 = vpop.f32.mrf.mxu0
    %v298 = vadd.f32 0.0, %v297
    %v299 = vpop.f32.mrf.mxu0
    %v300 = vpop.f32.mrf.mxu0
    %v301 = vadd.f32 0.0, %v300
    %v302 = vpop.f32.mrf.mxu0
    %303 = vmatprep.mubr.bf16.mxu0 0
    %304 = vmatmul.mubr.bf16.gmra.mxu0 %v191
    %v305 = vpop.f32.mrf.mxu0
    %v306 = vadd.f32 0.0, %v305
    %v307 = vpop.f32.mrf.mxu0
    %v308 = vpop.f32.mrf.mxu0
    %v309 = vadd.f32 0.0, %v308
    %v310 = vpop.f32.mrf.mxu0
    %311 = vmatprep.mubr.bf16.mxu0 0
    %312 = vmatmul.mubr.bf16.gmra.mxu0 %v194
    %v313 = vpop.f32.mrf.mxu0
    %v314 = vadd.f32 0.0, %v313
    %v315 = vpop.f32.mrf.mxu0
    %v316 = vpop.f32.mrf.mxu0
    %v317 = vadd.f32 0.0, %v316
    %v318 = vpop.f32.mrf.mxu0
    %319 = vmatprep.mubr.bf16.mxu0 0
    %320 = vmatmul.mubr.bf16.gmra.mxu0 %v197
    %v321 = vpop.f32.mrf.mxu0
    %v322 = vadd.f32 0.0, %v321
    %v323 = vpop.f32.mrf.mxu0
    %v324 = vpop.f32.mrf.mxu0
    %v325 = vadd.f32 0.0, %v324
    %v326 = vpop.f32.mrf.mxu0
    %327 = vmatprep.mubr.bf16.mxu0 0
    %328 = vmatmul.mubr.bf16.gmra.mxu0 %v200
    %v329 = vpop.f32.mrf.mxu0
    %v330 = vadd.f32 0.0, %v329
    %v331 = vpop.f32.mrf.mxu0
    %v332 = vpop.f32.mrf.mxu0
    %v333 = vadd.f32 0.0, %v332
    %v334 = vpop.f32.mrf.mxu0
    %335 = vmatprep.mubr.bf16.mxu0 0
    %336 = vmatmul.mubr.bf16.gmra.mxu0 %v203
    %v337 = vpop.f32.mrf.mxu0
    %v338 = vadd.f32 0.0, %v337
    %v339 = vpop.f32.mrf.mxu0
    %v340 = vpop.f32.mrf.mxu0
    %v341 = vadd.f32 0.0, %v340
    %v342 = vpop.f32.mrf.mxu0
    %343 = vmatprep.mubr.bf16.mxu0 0
    %344 = vmatmul.mubr.bf16.gmra.mxu0 %v206
    %v345 = vpop.f32.mrf.mxu0
    %v346 = vadd.f32 0.0, %v345
    %v347 = vpop.f32.mrf.mxu0
    %v348 = vpop.f32.mrf.mxu0
    %v349 = vadd.f32 0.0, %v348
    %v350 = vpop.f32.mrf.mxu0
    %351 = vmatprep.mubr.bf16.mxu0 0
    %352 = vmatmul.mubr.bf16.gmra.mxu0 %v209
    %v353 = vpop.f32.mrf.mxu0
    %v354 = vadd.f32 0.0, %v353
    %v355 = vpop.f32.mrf.mxu0
    %v356 = vpop.f32.mrf.mxu0
    %v357 = vadd.f32 0.0, %v356
    %v358 = vpop.f32.mrf.mxu0
    %359 = vmatprep.mubr.bf16.mxu0 0
    %360 = vmatmul.mubr.bf16.gmra.mxu0 %v212
    %v361 = vpop.f32.mrf.mxu0
    %v362 = vadd.f32 0.0, %v361
    %v363 = vpop.f32.mrf.mxu0
    %v364 = vpop.f32.mrf.mxu0
    %v365 = vadd.f32 0.0, %v364
    %v366 = vpop.f32.mrf.mxu0
    %367 = vmatprep.mubr.bf16.mxu0 0
    %368 = vmatmul.mubr.bf16.gmra.mxu0 %v215
    %v369 = vpop.f32.mrf.mxu0
    %v370 = vadd.f32 0.0, %v369
    %v371 = vpop.f32.mrf.mxu0
    %v372 = vpop.f32.mrf.mxu0
    %v373 = vadd.f32 0.0, %v372
    %v374 = vpop.f32.mrf.mxu0
    %375 = vmatprep.mubr.bf16.mxu0 0
    %376 = vmatmul.mubr.bf16.gmra.mxu0 %v218
    %v377 = vpop.f32.mrf.mxu0
    %v378 = vadd.f32 0.0, %v377
    %v379 = vpop.f32.mrf.mxu0
    %v380 = vpop.f32.mrf.mxu0
    %v381 = vadd.f32 0.0, %v380
    %v382 = vpop.f32.mrf.mxu0
    %383 = vmatprep.mubr.bf16.mxu0 0
    %384 = vmatmul.mubr.bf16.gmra.mxu0 %v221
    %v385 = vpop.f32.mrf.mxu0
    %v386 = vadd.f32 0.0, %v385
    %v387 = vpop.f32.mrf.mxu0
    %v388 = vpop.f32.mrf.mxu0
    %v389 = vadd.f32 0.0, %v388
    %v390 = vpop.f32.mrf.mxu0
    %391 = vmatprep.mubr.bf16.mxu0 0
    %392 = vmatmul.mubr.bf16.gmra.mxu0 %v224
    %v393 = vpop.f32.mrf.mxu0
    %v394 = vadd.f32 0.0, %v393
    %v395 = vpop.f32.mrf.mxu0
    %v396 = vpop.f32.mrf.mxu0
    %v397 = vadd.f32 0.0, %v396
    %v398 = vpop.f32.mrf.mxu0
    %399 = vmatprep.mubr.bf16.mxu0 0
    %400 = vmatmul.mubr.bf16.gmra.mxu0 %v227
    %v401 = vpop.f32.mrf.mxu0
    %v402 = vadd.f32 0.0, %v401
    %v403 = vpop.f32.mrf.mxu0
    %v404 = vpop.f32.mrf.mxu0
    %v405 = vadd.f32 0.0, %v404
    %v406 = vpop.f32.mrf.mxu0
    %407 = vmatprep.mubr.bf16.mxu0 0
    %408 = vmatmul.mubr.bf16.gmra.mxu0 %v230
    %v409 = vpop.f32.mrf.mxu0
    %v410 = vadd.f32 0.0, %v409
    %v411 = vpop.f32.mrf.mxu0
    %v412 = vpop.f32.mrf.mxu0
    %v413 = vadd.f32 0.0, %v412
    %v414 = vpop.f32.mrf.mxu0
    %415 = vdwg.mxu0
    %v416 = vld [vmem:[%s1] sm:$0xf]
    %v417 = vld [vmem:[%s1 + $0x4] sm:$0xf]
    %v418 = vld [vmem:[%s1 + $0x8] sm:$0xf]
    %v419 = vld [vmem:[%s1 + $0xc] sm:$0xf]
    %v420 = vld [vmem:[%s1 + $0x10] sm:$0xf]
    %v421 = vld [vmem:[%s1 + $0x14] sm:$0xf]
    %v422 = vld [vmem:[%s1 + $0x18] sm:$0xf]
    %v423 = vld [vmem:[%s1 + $0x1c] sm:$0xf]
    %v424 = vld [vmem:[%s1 + $0x20] sm:$0xf]
    %v425 = vld [vmem:[%s1 + $0x24] sm:$0xf]
    %v426 = vld [vmem:[%s1 + $0x28] sm:$0xf]
    %v427 = vld [vmem:[%s1 + $0x2c] sm:$0xf]
    %v428 = vld [vmem:[%s1 + $0x30] sm:$0xf]
    %v429 = vld [vmem:[%s1 + $0x34] sm:$0xf]
    %v430 = vld [vmem:[%s1 + $0x38] sm:$0xf]
    %v431 = vld [vmem:[%s1 + $0x3c] sm:$0xf]
    %v432 = vld [vmem:[%s1 + $0x40] sm:$0xf]
    %v433 = vld [vmem:[%s1 + $0x44] sm:$0xf]
    %v434 = vld [vmem:[%s1 + $0x48] sm:$0xf]
    %v435 = vld [vmem:[%s1 + $0x4c] sm:$0xf]
    %v436 = vld [vmem:[%s1 + $0x50] sm:$0xf]
    %v437 = vld [vmem:[%s1 + $0x54] sm:$0xf]
    %v438 = vld [vmem:[%s1 + $0x58] sm:$0xf]
    %v439 = vld [vmem:[%s1 + $0x5c] sm:$0xf]
    %v440 = vld [vmem:[%s1 + $0x60] sm:$0xf]
    %v441 = vld [vmem:[%s1 + $0x64] sm:$0xf]
    %v442 = vld [vmem:[%s1 + $0x68] sm:$0xf]
    %v443 = vld [vmem:[%s1 + $0x6c] sm:$0xf]
    %v444 = vld [vmem:[%s1 + $0x70] sm:$0xf]
    %v445 = vld [vmem:[%s1 + $0x74] sm:$0xf]
    %v446 = vld [vmem:[%s1 + $0x78] sm:$0xf]
    %v447 = vld [vmem:[%s1 + $0x7c] sm:$0xf]
    %v448 = vld [vmem:[%s1 + $0x80] sm:$0xf]
    %v449 = vld [vmem:[%s1 + $0x84] sm:$0xf]
    %v450 = vld [vmem:[%s1 + $0x88] sm:$0xf]
    %v451 = vld [vmem:[%s1 + $0x8c] sm:$0xf]
    %v488 = vunpack.c.l.b16 %v416
    %v489 = vunpack.c.l.b16 %v417
    %v490 = vunpack.c.l.b16 %v418
    %v491 = vunpack.c.l.b16 %v419
    %v492 = vunpack.c.l.b16 %v420
    %v493 = vunpack.c.l.b16 %v421
    %v494 = vunpack.c.l.b16 %v422
    %v495 = vunpack.c.l.b16 %v423
    %v496 = vunpack.c.l.b16 %v424
    %v497 = vunpack.c.l.b16 %v425
    %v498 = vunpack.c.l.b16 %v426
    %v499 = vunpack.c.l.b16 %v427
    %v500 = vunpack.c.l.b16 %v428
    %v501 = vunpack.c.l.b16 %v429
    %v502 = vunpack.c.l.b16 %v430
    %v503 = vunpack.c.l.b16 %v431
    %v504 = vunpack.c.l.b16 %v432
    %v505 = vunpack.c.l.b16 %v433
    %v506 = vunpack.c.l.b16 %v434
    %v507 = vunpack.c.l.b16 %v435
    %v508 = vunpack.c.l.b16 %v436
    %v509 = vunpack.c.l.b16 %v437
    %v510 = vunpack.c.l.b16 %v438
    %v511 = vunpack.c.l.b16 %v439
    %v512 = vunpack.c.l.b16 %v440
    %v513 = vunpack.c.l.b16 %v441
    %v514 = vunpack.c.l.b16 %v442
    %v515 = vunpack.c.l.b16 %v443
    %v516 = vunpack.c.l.b16 %v444
    %v517 = vunpack.c.l.b16 %v445
    %v518 = vunpack.c.l.b16 %v446
    %v519 = vunpack.c.l.b16 %v447
    %v520 = vunpack.c.l.b16 %v448
    %v521 = vunpack.c.l.b16 %v449
    %v522 = vunpack.c.l.b16 %v450
    %v523 = vunpack.c.l.b16 %v451
    %v524 = vpack.c.b16 %v489, %v488
    %v525 = vpack.c.b16 %v491, %v490
    %v526 = vpack.c.b16 %v493, %v492
    %v527 = vpack.c.b16 %v495, %v494
    %v528 = vpack.c.b16 %v497, %v496
    %v529 = vpack.c.b16 %v499, %v498
    %v530 = vpack.c.b16 %v501, %v500
    %v531 = vpack.c.b16 %v503, %v502
    %v532 = vpack.c.b16 %v505, %v504
    %v533 = vpack.c.b16 %v507, %v506
    %v534 = vpack.c.b16 %v509, %v508
    %v535 = vpack.c.b16 %v511, %v510
    %v536 = vpack.c.b16 %v513, %v512
    %v537 = vpack.c.b16 %v515, %v514
    %v538 = vpack.c.b16 %v517, %v516
    %v539 = vpack.c.b16 %v519, %v518
    %v540 = vpack.c.b16 %v521, %v520
    %v541 = vpack.c.b16 %v523, %v522
    %v543 = vsel %vm177, %v524, 0
    %v546 = vsel %vm177, %v525, 0
    %v549 = vsel %vm177, %v526, 0
    %v552 = vsel %vm177, %v527, 0
    %v555 = vsel %vm177, %v528, 0
    %v558 = vsel %vm177, %v529, 0
    %v561 = vsel %vm177, %v530, 0
    %v564 = vsel %vm177, %v531, 0
    %v567 = vsel %vm177, %v532, 0
    %v570 = vsel %vm177, %v533, 0
    %v573 = vsel %vm177, %v534, 0
    %v576 = vsel %vm177, %v535, 0
    %v579 = vsel %vm177, %v536, 0
    %v582 = vsel %vm177, %v537, 0
    %v585 = vsel %vm177, %v538, 0
    %v588 = vsel %vm177, %v539, 0
    %v591 = vsel %vm177, %v540, 0
    %v594 = vsel %vm177, %v541, 0
    %596 = vmatprep.subr.bf16.mxu0 0
    %597 = vmatpush1.bf16.msra.mxu0 0
    %598 = vmatprep.subr.bf16.mxu0 0
    %599 = vmatpush1.bf16.msra.mxu0 0
    %600 = vmatprep.subr.bf16.mxu0 0
    %601 = vmatpush1.bf16.msra.mxu0 0
    %602 = vmatprep.subr.bf16.mxu0 0
    %603 = vmatpush1.bf16.msra.mxu0 0
    %604 = vmatprep.subr.bf16.mxu0 0
    %605 = vmatpush1.bf16.msra.mxu0 0
    %606 = vmatprep.subr.bf16.mxu0 0
    %607 = vmatpush1.bf16.msra.mxu0 0
    %608 = vmatprep.subr.bf16.mxu0 0
    %609 = vmatpush1.bf16.msra.mxu0 %v237
    %610 = vmatprep.subr.bf16.mxu0 0
    %611 = vmatpush1.bf16.msra.mxu0 %v174
    %612 = vmatprep.subr.bf16.mxu0 0
    %613 = vmatpush2.bf16.msra.mxu0 0
    %614 = vmatprep.subr.bf16.mxu0 0
    %615 = vmatpush2.bf16.msra.mxu0 0
    %616 = vmatprep.subr.bf16.mxu0 0
    %617 = vmatpush2.bf16.msra.mxu0 0
    %618 = vmatprep.subr.bf16.mxu0 0
    %619 = vmatpush2.bf16.msra.mxu0 0
    %620 = vmatprep.subr.bf16.mxu0 0
    %621 = vmatpush2.bf16.msra.mxu0 0
    %622 = vmatprep.subr.bf16.mxu0 0
    %623 = vmatpush2.bf16.msra.mxu0 0
    %624 = vmatprep.subr.bf16.mxu0 0
    %625 = vmatpush2.bf16.msra.mxu0 0
    %626 = vmatprep.subr.bf16.mxu0 0
    %627 = vmatpush2.bf16.msra.mxu0 0
    %628 = vmatprep.mubr.bf16.mxu0 0
    %629 = vmatmul.mubr.bf16.gmra.mxu0 %v543
    %v630 = vpop.f32.mrf.mxu0
    %v631 = vadd.f32 0.0, %v630
    %v632 = vpop.f32.mrf.mxu0
    %v633 = vpop.f32.mrf.mxu0
    %v634 = vadd.f32 0.0, %v633
    %v635 = vpop.f32.mrf.mxu0
    %636 = vmatprep.mubr.bf16.mxu0 0
    %637 = vmatmul.mubr.bf16.gmra.mxu0 %v546
    %v638 = vpop.f32.mrf.mxu0
    %v639 = vadd.f32 0.0, %v638
    %v640 = vpop.f32.mrf.mxu0
    %v641 = vpop.f32.mrf.mxu0
    %v642 = vadd.f32 0.0, %v641
    %v643 = vpop.f32.mrf.mxu0
    %644 = vmatprep.mubr.bf16.mxu0 0
    %645 = vmatmul.mubr.bf16.gmra.mxu0 %v549
    %v646 = vpop.f32.mrf.mxu0
    %v647 = vadd.f32 0.0, %v646
    %v648 = vpop.f32.mrf.mxu0
    %v649 = vpop.f32.mrf.mxu0
    %v650 = vadd.f32 0.0, %v649
    %v651 = vpop.f32.mrf.mxu0
    %652 = vmatprep.mubr.bf16.mxu0 0
    %653 = vmatmul.mubr.bf16.gmra.mxu0 %v552
    %v654 = vpop.f32.mrf.mxu0
    %v655 = vadd.f32 0.0, %v654
    %v656 = vpop.f32.mrf.mxu0
    %v657 = vpop.f32.mrf.mxu0
    %v658 = vadd.f32 0.0, %v657
    %v659 = vpop.f32.mrf.mxu0
    %660 = vmatprep.mubr.bf16.mxu0 0
    %661 = vmatmul.mubr.bf16.gmra.mxu0 %v555
    %v662 = vpop.f32.mrf.mxu0
    %v663 = vadd.f32 0.0, %v662
    %v664 = vpop.f32.mrf.mxu0
    %v665 = vpop.f32.mrf.mxu0
    %v666 = vadd.f32 0.0, %v665
    %v667 = vpop.f32.mrf.mxu0
    %668 = vmatprep.mubr.bf16.mxu0 0
    %669 = vmatmul.mubr.bf16.gmra.mxu0 %v558
    %v670 = vpop.f32.mrf.mxu0
    %v671 = vadd.f32 0.0, %v670
    %v672 = vpop.f32.mrf.mxu0
    %v673 = vpop.f32.mrf.mxu0
    %v674 = vadd.f32 0.0, %v673
    %v675 = vpop.f32.mrf.mxu0
    %676 = vmatprep.mubr.bf16.mxu0 0
    %677 = vmatmul.mubr.bf16.gmra.mxu0 %v561
    %v678 = vpop.f32.mrf.mxu0
    %v679 = vadd.f32 0.0, %v678
    %v680 = vpop.f32.mrf.mxu0
    %v681 = vpop.f32.mrf.mxu0
    %v682 = vadd.f32 0.0, %v681
    %v683 = vpop.f32.mrf.mxu0
    %684 = vmatprep.mubr.bf16.mxu0 0
    %685 = vmatmul.mubr.bf16.gmra.mxu0 %v564
    %v686 = vpop.f32.mrf.mxu0
    %v687 = vadd.f32 0.0, %v686
    %v688 = vpop.f32.mrf.mxu0
    %v689 = vpop.f32.mrf.mxu0
    %v690 = vadd.f32 0.0, %v689
    %v691 = vpop.f32.mrf.mxu0
    %692 = vmatprep.mubr.bf16.mxu0 0
    %693 = vmatmul.mubr.bf16.gmra.mxu0 %v567
    %v694 = vpop.f32.mrf.mxu0
    %v695 = vadd.f32 0.0, %v694
    %v696 = vpop.f32.mrf.mxu0
    %v697 = vpop.f32.mrf.mxu0
    %v698 = vadd.f32 0.0, %v697
    %v699 = vpop.f32.mrf.mxu0
    %700 = vmatprep.mubr.bf16.mxu0 0
    %701 = vmatmul.mubr.bf16.gmra.mxu0 %v570
    %v702 = vpop.f32.mrf.mxu0
    %v703 = vadd.f32 0.0, %v702
    %v704 = vpop.f32.mrf.mxu0
    %v705 = vpop.f32.mrf.mxu0
    %v706 = vadd.f32 0.0, %v705
    %v707 = vpop.f32.mrf.mxu0
    %708 = vmatprep.mubr.bf16.mxu0 0
    %709 = vmatmul.mubr.bf16.gmra.mxu0 %v573
    %v710 = vpop.f32.mrf.mxu0
    %v711 = vadd.f32 0.0, %v710
    %v712 = vpop.f32.mrf.mxu0
    %v713 = vpop.f32.mrf.mxu0
    %v714 = vadd.f32 0.0, %v713
    %v715 = vpop.f32.mrf.mxu0
    %716 = vmatprep.mubr.bf16.mxu0 0
    %717 = vmatmul.mubr.bf16.gmra.mxu0 %v576
    %v718 = vpop.f32.mrf.mxu0
    %v719 = vadd.f32 0.0, %v718
    %v720 = vpop.f32.mrf.mxu0
    %v721 = vpop.f32.mrf.mxu0
    %v722 = vadd.f32 0.0, %v721
    %v723 = vpop.f32.mrf.mxu0
    %724 = vmatprep.mubr.bf16.mxu0 0
    %725 = vmatmul.mubr.bf16.gmra.mxu0 %v579
    %v726 = vpop.f32.mrf.mxu0
    %v727 = vadd.f32 0.0, %v726
    %v728 = vpop.f32.mrf.mxu0
    %v729 = vpop.f32.mrf.mxu0
    %v730 = vadd.f32 0.0, %v729
    %v731 = vpop.f32.mrf.mxu0
    %732 = vmatprep.mubr.bf16.mxu0 0
    %733 = vmatmul.mubr.bf16.gmra.mxu0 %v582
    %v734 = vpop.f32.mrf.mxu0
    %v735 = vadd.f32 0.0, %v734
    %v736 = vpop.f32.mrf.mxu0
    %v737 = vpop.f32.mrf.mxu0
    %v738 = vadd.f32 0.0, %v737
    %v739 = vpop.f32.mrf.mxu0
    %740 = vmatprep.mubr.bf16.mxu0 0
    %741 = vmatmul.mubr.bf16.gmra.mxu0 %v585
    %v742 = vpop.f32.mrf.mxu0
    %v743 = vadd.f32 0.0, %v742
    %v744 = vpop.f32.mrf.mxu0
    %v745 = vpop.f32.mrf.mxu0
    %v746 = vadd.f32 0.0, %v745
    %v747 = vpop.f32.mrf.mxu0
    %748 = vmatprep.mubr.bf16.mxu0 0
    %749 = vmatmul.mubr.bf16.gmra.mxu0 %v588
    %v750 = vpop.f32.mrf.mxu0
    %v751 = vadd.f32 0.0, %v750
    %v752 = vpop.f32.mrf.mxu0
    %v753 = vpop.f32.mrf.mxu0
    %v754 = vadd.f32 0.0, %v753
    %v755 = vpop.f32.mrf.mxu0
    %756 = vmatprep.mubr.bf16.mxu0 0
    %757 = vmatmul.mubr.bf16.gmra.mxu0 %v591
    %v758 = vpop.f32.mrf.mxu0
    %v759 = vadd.f32 0.0, %v758
    %v760 = vpop.f32.mrf.mxu0
    %v761 = vpop.f32.mrf.mxu0
    %v762 = vadd.f32 0.0, %v761
    %v763 = vpop.f32.mrf.mxu0
    %764 = vmatprep.mubr.bf16.mxu0 0
    %765 = vmatmul.mubr.bf16.gmra.mxu0 %v594
    %v766 = vpop.f32.mrf.mxu0
    %v767 = vadd.f32 0.0, %v766
    %v768 = vpop.f32.mrf.mxu0
    %v769 = vpop.f32.mrf.mxu0
    %v770 = vadd.f32 0.0, %v769
    %v771 = vpop.f32.mrf.mxu0
    %772 = vdwg.mxu0
    %v773 = vmax.f32 %v274, %v631
    %v774 = vmax.f32 %v277, %v634
    %v775 = vmax.f32 %v282, %v639
    %v776 = vmax.f32 %v285, %v642
    %v777 = vmax.f32 %v290, %v647
    %v778 = vmax.f32 %v293, %v650
    %v779 = vmax.f32 %v298, %v655
    %v780 = vmax.f32 %v301, %v658
    %v781 = vmax.f32 %v306, %v663
    %v782 = vmax.f32 %v309, %v666
    %v783 = vmax.f32 %v314, %v671
    %v784 = vmax.f32 %v317, %v674
    %v785 = vmax.f32 %v322, %v679
    %v786 = vmax.f32 %v325, %v682
    %v787 = vmax.f32 %v330, %v687
    %v788 = vmax.f32 %v333, %v690
    %v789 = vmax.f32 %v338, %v695
    %v790 = vmax.f32 %v341, %v698
    %v791 = vmax.f32 %v346, %v703
    %v792 = vmax.f32 %v349, %v706
    %v793 = vmax.f32 %v354, %v711
    %v794 = vmax.f32 %v357, %v714
    %v795 = vmax.f32 %v362, %v719
    %v796 = vmax.f32 %v365, %v722
    %v797 = vmax.f32 %v370, %v727
    %v798 = vmax.f32 %v373, %v730
    %v799 = vmax.f32 %v378, %v735
    %v800 = vmax.f32 %v381, %v738
    %v801 = vmax.f32 %v386, %v743
    %v802 = vmax.f32 %v389, %v746
    %v803 = vmax.f32 %v394, %v751
    %v804 = vmax.f32 %v397, %v754
    %v805 = vmax.f32 %v402, %v759
    %v806 = vmax.f32 %v405, %v762
    %v807 = vmax.f32 %v410, %v767
    %v808 = vmax.f32 %v413, %v770
    %v809 = vld [vmem:[%s2] sm:$0xf]
    %v810 = vld [vmem:[%s2 + $0x4] sm:$0xf]
    %v811 = vld [vmem:[%s2 + $0x8] sm:$0xf]
    %v812 = vld [vmem:[%s2 + $0xc] sm:$0xf]
    %v813 = vld [vmem:[%s2 + $0x10] sm:$0xf]
    %v814 = vld [vmem:[%s2 + $0x14] sm:$0xf]
    %v815 = vld [vmem:[%s2 + $0x18] sm:$0xf]
    %v816 = vld [vmem:[%s2 + $0x1c] sm:$0xf]
    %v817 = vld [vmem:[%s2 + $0x20] sm:$0xf]
    %v818 = vld [vmem:[%s2 + $0x24] sm:$0xf]
    %v819 = vld [vmem:[%s2 + $0x28] sm:$0xf]
    %v820 = vld [vmem:[%s2 + $0x2c] sm:$0xf]
    %v821 = vld [vmem:[%s2 + $0x30] sm:$0xf]
    %v822 = vld [vmem:[%s2 + $0x34] sm:$0xf]
    %v823 = vld [vmem:[%s2 + $0x38] sm:$0xf]
    %v824 = vld [vmem:[%s2 + $0x3c] sm:$0xf]
    %v825 = vld [vmem:[%s2 + $0x40] sm:$0xf]
    %v826 = vld [vmem:[%s2 + $0x44] sm:$0xf]
    %v827 = vld [vmem:[%s2 + $0x48] sm:$0xf]
    %v828 = vld [vmem:[%s2 + $0x4c] sm:$0xf]
    %v829 = vld [vmem:[%s2 + $0x50] sm:$0xf]
    %v830 = vld [vmem:[%s2 + $0x54] sm:$0xf]
    %v831 = vld [vmem:[%s2 + $0x58] sm:$0xf]
    %v832 = vld [vmem:[%s2 + $0x5c] sm:$0xf]
    %v833 = vld [vmem:[%s2 + $0x60] sm:$0xf]
    %v834 = vld [vmem:[%s2 + $0x64] sm:$0xf]
    %v835 = vld [vmem:[%s2 + $0x68] sm:$0xf]
    %v836 = vld [vmem:[%s2 + $0x6c] sm:$0xf]
    %v837 = vld [vmem:[%s2 + $0x70] sm:$0xf]
    %v838 = vld [vmem:[%s2 + $0x74] sm:$0xf]
    %v839 = vld [vmem:[%s2 + $0x78] sm:$0xf]
    %v840 = vld [vmem:[%s2 + $0x7c] sm:$0xf]
    %v841 = vld [vmem:[%s2 + $0x80] sm:$0xf]
    %v842 = vld [vmem:[%s2 + $0x84] sm:$0xf]
    %v843 = vld [vmem:[%s2 + $0x88] sm:$0xf]
    %v844 = vld [vmem:[%s2 + $0x8c] sm:$0xf]
    %v881 = vunpack.c.l.b16 %v809
    %v882 = vunpack.c.l.b16 %v810
    %v883 = vunpack.c.l.b16 %v811
    %v884 = vunpack.c.l.b16 %v812
    %v885 = vunpack.c.l.b16 %v813
    %v886 = vunpack.c.l.b16 %v814
    %v887 = vunpack.c.l.b16 %v815
    %v888 = vunpack.c.l.b16 %v816
    %v889 = vunpack.c.l.b16 %v817
    %v890 = vunpack.c.l.b16 %v818
    %v891 = vunpack.c.l.b16 %v819
    %v892 = vunpack.c.l.b16 %v820
    %v893 = vunpack.c.l.b16 %v821
    %v894 = vunpack.c.l.b16 %v822
    %v895 = vunpack.c.l.b16 %v823
    %v896 = vunpack.c.l.b16 %v824
    %v897 = vunpack.c.l.b16 %v825
    %v898 = vunpack.c.l.b16 %v826
    %v899 = vunpack.c.l.b16 %v827
    %v900 = vunpack.c.l.b16 %v828
    %v901 = vunpack.c.l.b16 %v829
    %v902 = vunpack.c.l.b16 %v830
    %v903 = vunpack.c.l.b16 %v831
    %v904 = vunpack.c.l.b16 %v832
    %v905 = vunpack.c.l.b16 %v833
    %v906 = vunpack.c.l.b16 %v834
    %v907 = vunpack.c.l.b16 %v835
    %v908 = vunpack.c.l.b16 %v836
    %v909 = vunpack.c.l.b16 %v837
    %v910 = vunpack.c.l.b16 %v838
    %v911 = vunpack.c.l.b16 %v839
    %v912 = vunpack.c.l.b16 %v840
    %v913 = vunpack.c.l.b16 %v841
    %v914 = vunpack.c.l.b16 %v842
    %v915 = vunpack.c.l.b16 %v843
    %v916 = vunpack.c.l.b16 %v844
    %v917 = vpack.c.b16 %v882, %v881
    %v918 = vpack.c.b16 %v884, %v883
    %v919 = vpack.c.b16 %v886, %v885
    %v920 = vpack.c.b16 %v888, %v887
    %v921 = vpack.c.b16 %v890, %v889
    %v922 = vpack.c.b16 %v892, %v891
    %v923 = vpack.c.b16 %v894, %v893
    %v924 = vpack.c.b16 %v896, %v895
    %v925 = vpack.c.b16 %v898, %v897
    %v926 = vpack.c.b16 %v900, %v899
    %v927 = vpack.c.b16 %v902, %v901
    %v928 = vpack.c.b16 %v904, %v903
    %v929 = vpack.c.b16 %v906, %v905
    %v930 = vpack.c.b16 %v908, %v907
    %v931 = vpack.c.b16 %v910, %v909
    %v932 = vpack.c.b16 %v912, %v911
    %v933 = vpack.c.b16 %v914, %v913
    %v934 = vpack.c.b16 %v916, %v915
    %v936 = vsel %vm177, %v917, 0
    %v939 = vsel %vm177, %v918, 0
    %v942 = vsel %vm177, %v919, 0
    %v945 = vsel %vm177, %v920, 0
    %v948 = vsel %vm177, %v921, 0
    %v951 = vsel %vm177, %v922, 0
    %v954 = vsel %vm177, %v923, 0
    %v957 = vsel %vm177, %v924, 0
    %v960 = vsel %vm177, %v925, 0
    %v963 = vsel %vm177, %v926, 0
    %v966 = vsel %vm177, %v927, 0
    %v969 = vsel %vm177, %v928, 0
    %v972 = vsel %vm177, %v929, 0
    %v975 = vsel %vm177, %v930, 0
    %v978 = vsel %vm177, %v931, 0
    %v981 = vsel %vm177, %v932, 0
    %v984 = vsel %vm177, %v933, 0
    %v987 = vsel %vm177, %v934, 0
    %989 = vmatprep.subr.bf16.mxu0 0
    %990 = vmatpush1.bf16.msra.mxu0 0
    %991 = vmatprep.subr.bf16.mxu0 0
    %992 = vmatpush1.bf16.msra.mxu0 0
    %993 = vmatprep.subr.bf16.mxu0 0
    %994 = vmatpush1.bf16.msra.mxu0 0
    %995 = vmatprep.subr.bf16.mxu0 0
    %996 = vmatpush1.bf16.msra.mxu0 0
    %997 = vmatprep.subr.bf16.mxu0 0
    %998 = vmatpush1.bf16.msra.mxu0 0
    %999 = vmatprep.subr.bf16.mxu0 0
    %1000 = vmatpush1.bf16.msra.mxu0 0
    %1001 = vmatprep.subr.bf16.mxu0 0
    %1002 = vmatpush1.bf16.msra.mxu0 %v237
    %1003 = vmatprep.subr.bf16.mxu0 0
    %1004 = vmatpush1.bf16.msra.mxu0 %v174
    %1005 = vmatprep.subr.bf16.mxu0 0
    %1006 = vmatpush2.bf16.msra.mxu0 0
    %1007 = vmatprep.subr.bf16.mxu0 0
    %1008 = vmatpush2.bf16.msra.mxu0 0
    %1009 = vmatprep.subr.bf16.mxu0 0
    %1010 = vmatpush2.bf16.msra.mxu0 0
    %1011 = vmatprep.subr.bf16.mxu0 0
    %1012 = vmatpush2.bf16.msra.mxu0 0
    %1013 = vmatprep.subr.bf16.mxu0 0
    %1014 = vmatpush2.bf16.msra.mxu0 0
    %1015 = vmatprep.subr.bf16.mxu0 0
    %1016 = vmatpush2.bf16.msra.mxu0 0
    %1017 = vmatprep.subr.bf16.mxu0 0
    %1018 = vmatpush2.bf16.msra.mxu0 0
    %1019 = vmatprep.subr.bf16.mxu0 0
    %1020 = vmatpush2.bf16.msra.mxu0 0
    %1021 = vmatprep.mubr.bf16.mxu0 0
    %1022 = vmatmul.mubr.bf16.gmra.mxu0 %v936
    %v1023 = vpop.f32.mrf.mxu0
    %v1024 = vadd.f32 0.0, %v1023
    %v1025 = vpop.f32.mrf.mxu0
    %v1026 = vpop.f32.mrf.mxu0
    %v1027 = vadd.f32 0.0, %v1026
    %v1028 = vpop.f32.mrf.mxu0
    %1029 = vmatprep.mubr.bf16.mxu0 0
    %1030 = vmatmul.mubr.bf16.gmra.mxu0 %v939
    %v1031 = vpop.f32.mrf.mxu0
    %v1032 = vadd.f32 0.0, %v1031
    %v1033 = vpop.f32.mrf.mxu0
    %v1034 = vpop.f32.mrf.mxu0
    %v1035 = vadd.f32 0.0, %v1034
    %v1036 = vpop.f32.mrf.mxu0
    %1037 = vmatprep.mubr.bf16.mxu0 0
    %1038 = vmatmul.mubr.bf16.gmra.mxu0 %v942
    %v1039 = vpop.f32.mrf.mxu0
    %v1040 = vadd.f32 0.0, %v1039
    %v1041 = vpop.f32.mrf.mxu0
    %v1042 = vpop.f32.mrf.mxu0
    %v1043 = vadd.f32 0.0, %v1042
    %v1044 = vpop.f32.mrf.mxu0
    %1045 = vmatprep.mubr.bf16.mxu0 0
    %1046 = vmatmul.mubr.bf16.gmra.mxu0 %v945
    %v1047 = vpop.f32.mrf.mxu0
    %v1048 = vadd.f32 0.0, %v1047
    %v1049 = vpop.f32.mrf.mxu0
    %v1050 = vpop.f32.mrf.mxu0
    %v1051 = vadd.f32 0.0, %v1050
    %v1052 = vpop.f32.mrf.mxu0
    %1053 = vmatprep.mubr.bf16.mxu0 0
    %1054 = vmatmul.mubr.bf16.gmra.mxu0 %v948
    %v1055 = vpop.f32.mrf.mxu0
    %v1056 = vadd.f32 0.0, %v1055
    %v1057 = vpop.f32.mrf.mxu0
    %v1058 = vpop.f32.mrf.mxu0
    %v1059 = vadd.f32 0.0, %v1058
    %v1060 = vpop.f32.mrf.mxu0
    %1061 = vmatprep.mubr.bf16.mxu0 0
    %1062 = vmatmul.mubr.bf16.gmra.mxu0 %v951
    %v1063 = vpop.f32.mrf.mxu0
    %v1064 = vadd.f32 0.0, %v1063
    %v1065 = vpop.f32.mrf.mxu0
    %v1066 = vpop.f32.mrf.mxu0
    %v1067 = vadd.f32 0.0, %v1066
    %v1068 = vpop.f32.mrf.mxu0
    %1069 = vmatprep.mubr.bf16.mxu0 0
    %1070 = vmatmul.mubr.bf16.gmra.mxu0 %v954
    %v1071 = vpop.f32.mrf.mxu0
    %v1072 = vadd.f32 0.0, %v1071
    %v1073 = vpop.f32.mrf.mxu0
    %v1074 = vpop.f32.mrf.mxu0
    %v1075 = vadd.f32 0.0, %v1074
    %v1076 = vpop.f32.mrf.mxu0
    %1077 = vmatprep.mubr.bf16.mxu0 0
    %1078 = vmatmul.mubr.bf16.gmra.mxu0 %v957
    %v1079 = vpop.f32.mrf.mxu0
    %v1080 = vadd.f32 0.0, %v1079
    %v1081 = vpop.f32.mrf.mxu0
    %v1082 = vpop.f32.mrf.mxu0
    %v1083 = vadd.f32 0.0, %v1082
    %v1084 = vpop.f32.mrf.mxu0
    %1085 = vmatprep.mubr.bf16.mxu0 0
    %1086 = vmatmul.mubr.bf16.gmra.mxu0 %v960
    %v1087 = vpop.f32.mrf.mxu0
    %v1088 = vadd.f32 0.0, %v1087
    %v1089 = vpop.f32.mrf.mxu0
    %v1090 = vpop.f32.mrf.mxu0
    %v1091 = vadd.f32 0.0, %v1090
    %v1092 = vpop.f32.mrf.mxu0
    %1093 = vmatprep.mubr.bf16.mxu0 0
    %1094 = vmatmul.mubr.bf16.gmra.mxu0 %v963
    %v1095 = vpop.f32.mrf.mxu0
    %v1096 = vadd.f32 0.0, %v1095
    %v1097 = vpop.f32.mrf.mxu0
    %v1098 = vpop.f32.mrf.mxu0
    %v1099 = vadd.f32 0.0, %v1098
    %v1100 = vpop.f32.mrf.mxu0
    %1101 = vmatprep.mubr.bf16.mxu0 0
    %1102 = vmatmul.mubr.bf16.gmra.mxu0 %v966
    %v1103 = vpop.f32.mrf.mxu0
    %v1104 = vadd.f32 0.0, %v1103
    %v1105 = vpop.f32.mrf.mxu0
    %v1106 = vpop.f32.mrf.mxu0
    %v1107 = vadd.f32 0.0, %v1106
    %v1108 = vpop.f32.mrf.mxu0
    %1109 = vmatprep.mubr.bf16.mxu0 0
    %1110 = vmatmul.mubr.bf16.gmra.mxu0 %v969
    %v1111 = vpop.f32.mrf.mxu0
    %v1112 = vadd.f32 0.0, %v1111
    %v1113 = vpop.f32.mrf.mxu0
    %v1114 = vpop.f32.mrf.mxu0
    %v1115 = vadd.f32 0.0, %v1114
    %v1116 = vpop.f32.mrf.mxu0
    %1117 = vmatprep.mubr.bf16.mxu0 0
    %1118 = vmatmul.mubr.bf16.gmra.mxu0 %v972
    %v1119 = vpop.f32.mrf.mxu0
    %v1120 = vadd.f32 0.0, %v1119
    %v1121 = vpop.f32.mrf.mxu0
    %v1122 = vpop.f32.mrf.mxu0
    %v1123 = vadd.f32 0.0, %v1122
    %v1124 = vpop.f32.mrf.mxu0
    %1125 = vmatprep.mubr.bf16.mxu0 0
    %1126 = vmatmul.mubr.bf16.gmra.mxu0 %v975
    %v1127 = vpop.f32.mrf.mxu0
    %v1128 = vadd.f32 0.0, %v1127
    %v1129 = vpop.f32.mrf.mxu0
    %v1130 = vpop.f32.mrf.mxu0
    %v1131 = vadd.f32 0.0, %v1130
    %v1132 = vpop.f32.mrf.mxu0
    %1133 = vmatprep.mubr.bf16.mxu0 0
    %1134 = vmatmul.mubr.bf16.gmra.mxu0 %v978
    %v1135 = vpop.f32.mrf.mxu0
    %v1136 = vadd.f32 0.0, %v1135
    %v1137 = vpop.f32.mrf.mxu0
    %v1138 = vpop.f32.mrf.mxu0
    %v1139 = vadd.f32 0.0, %v1138
    %v1140 = vpop.f32.mrf.mxu0
    %1141 = vmatprep.mubr.bf16.mxu0 0
    %1142 = vmatmul.mubr.bf16.gmra.mxu0 %v981
    %v1143 = vpop.f32.mrf.mxu0
    %v1144 = vadd.f32 0.0, %v1143
    %v1145 = vpop.f32.mrf.mxu0
    %v1146 = vpop.f32.mrf.mxu0
    %v1147 = vadd.f32 0.0, %v1146
    %v1148 = vpop.f32.mrf.mxu0
    %1149 = vmatprep.mubr.bf16.mxu0 0
    %1150 = vmatmul.mubr.bf16.gmra.mxu0 %v984
    %v1151 = vpop.f32.mrf.mxu0
    %v1152 = vadd.f32 0.0, %v1151
    %v1153 = vpop.f32.mrf.mxu0
    %v1154 = vpop.f32.mrf.mxu0
    %v1155 = vadd.f32 0.0, %v1154
    %v1156 = vpop.f32.mrf.mxu0
    %1157 = vmatprep.mubr.bf16.mxu0 0
    %1158 = vmatmul.mubr.bf16.gmra.mxu0 %v987
    %v1159 = vpop.f32.mrf.mxu0
    %v1160 = vadd.f32 0.0, %v1159
    %v1161 = vpop.f32.mrf.mxu0
    %v1162 = vpop.f32.mrf.mxu0
    %v1163 = vadd.f32 0.0, %v1162
    %v1164 = vpop.f32.mrf.mxu0
    %1165 = vdwg.mxu0
    %v1166 = vmax.f32 %v773, %v1024
    %v1167 = vmax.f32 %v774, %v1027
    %v1168 = vmax.f32 %v775, %v1032
    %v1169 = vmax.f32 %v776, %v1035
    %v1170 = vmax.f32 %v777, %v1040
    %v1171 = vmax.f32 %v778, %v1043
    %v1172 = vmax.f32 %v779, %v1048
    %v1173 = vmax.f32 %v780, %v1051
    %v1174 = vmax.f32 %v781, %v1056
    %v1175 = vmax.f32 %v782, %v1059
    %v1176 = vmax.f32 %v783, %v1064
    %v1177 = vmax.f32 %v784, %v1067
    %v1178 = vmax.f32 %v785, %v1072
    %v1179 = vmax.f32 %v786, %v1075
    %v1180 = vmax.f32 %v787, %v1080
    %v1181 = vmax.f32 %v788, %v1083
    %v1182 = vmax.f32 %v789, %v1088
    %v1183 = vmax.f32 %v790, %v1091
    %v1184 = vmax.f32 %v791, %v1096
    %v1185 = vmax.f32 %v792, %v1099
    %v1186 = vmax.f32 %v793, %v1104
    %v1187 = vmax.f32 %v794, %v1107
    %v1188 = vmax.f32 %v795, %v1112
    %v1189 = vmax.f32 %v796, %v1115
    %v1190 = vmax.f32 %v797, %v1120
    %v1191 = vmax.f32 %v798, %v1123
    %v1192 = vmax.f32 %v799, %v1128
    %v1193 = vmax.f32 %v800, %v1131
    %v1194 = vmax.f32 %v801, %v1136
    %v1195 = vmax.f32 %v802, %v1139
    %v1196 = vmax.f32 %v803, %v1144
    %v1197 = vmax.f32 %v804, %v1147
    %v1198 = vmax.f32 %v805, %v1152
    %v1199 = vmax.f32 %v806, %v1155
    %v1200 = vmax.f32 %v807, %v1160
    %v1201 = vmax.f32 %v808, %v1163
    %v1202 = vld [vmem:[%s3] sm:$0xf]
    %v1203 = vld [vmem:[%s3 + $0x4] sm:$0xf]
    %v1204 = vld [vmem:[%s3 + $0x8] sm:$0xf]
    %v1205 = vld [vmem:[%s3 + $0xc] sm:$0xf]
    %v1206 = vld [vmem:[%s3 + $0x10] sm:$0xf]
    %v1207 = vld [vmem:[%s3 + $0x14] sm:$0xf]
    %v1208 = vld [vmem:[%s3 + $0x18] sm:$0xf]
    %v1209 = vld [vmem:[%s3 + $0x1c] sm:$0xf]
    %v1210 = vld [vmem:[%s3 + $0x20] sm:$0xf]
    %v1211 = vld [vmem:[%s3 + $0x24] sm:$0xf]
    %v1212 = vld [vmem:[%s3 + $0x28] sm:$0xf]
    %v1213 = vld [vmem:[%s3 + $0x2c] sm:$0xf]
    %v1214 = vld [vmem:[%s3 + $0x30] sm:$0xf]
    %v1215 = vld [vmem:[%s3 + $0x34] sm:$0xf]
    %v1216 = vld [vmem:[%s3 + $0x38] sm:$0xf]
    %v1217 = vld [vmem:[%s3 + $0x3c] sm:$0xf]
    %v1218 = vld [vmem:[%s3 + $0x40] sm:$0xf]
    %v1219 = vld [vmem:[%s3 + $0x44] sm:$0xf]
    %v1220 = vld [vmem:[%s3 + $0x48] sm:$0xf]
    %v1221 = vld [vmem:[%s3 + $0x4c] sm:$0xf]
    %v1222 = vld [vmem:[%s3 + $0x50] sm:$0xf]
    %v1223 = vld [vmem:[%s3 + $0x54] sm:$0xf]
    %v1224 = vld [vmem:[%s3 + $0x58] sm:$0xf]
    %v1225 = vld [vmem:[%s3 + $0x5c] sm:$0xf]
    %v1226 = vld [vmem:[%s3 + $0x60] sm:$0xf]
    %v1227 = vld [vmem:[%s3 + $0x64] sm:$0xf]
    %v1228 = vld [vmem:[%s3 + $0x68] sm:$0xf]
    %v1229 = vld [vmem:[%s3 + $0x6c] sm:$0xf]
    %v1230 = vld [vmem:[%s3 + $0x70] sm:$0xf]
    %v1231 = vld [vmem:[%s3 + $0x74] sm:$0xf]
    %v1232 = vld [vmem:[%s3 + $0x78] sm:$0xf]
    %v1233 = vld [vmem:[%s3 + $0x7c] sm:$0xf]
    %v1234 = vld [vmem:[%s3 + $0x80] sm:$0xf]
    %v1235 = vld [vmem:[%s3 + $0x84] sm:$0xf]
    %v1236 = vld [vmem:[%s3 + $0x88] sm:$0xf]
    %v1237 = vld [vmem:[%s3 + $0x8c] sm:$0xf]
    %v1274 = vunpack.c.l.b16 %v1202
    %v1275 = vunpack.c.l.b16 %v1203
    %v1276 = vunpack.c.l.b16 %v1204
    %v1277 = vunpack.c.l.b16 %v1205
    %v1278 = vunpack.c.l.b16 %v1206
    %v1279 = vunpack.c.l.b16 %v1207
    %v1280 = vunpack.c.l.b16 %v1208
    %v1281 = vunpack.c.l.b16 %v1209
    %v1282 = vunpack.c.l.b16 %v1210
    %v1283 = vunpack.c.l.b16 %v1211
    %v1284 = vunpack.c.l.b16 %v1212
    %v1285 = vunpack.c.l.b16 %v1213
    %v1286 = vunpack.c.l.b16 %v1214
    %v1287 = vunpack.c.l.b16 %v1215
    %v1288 = vunpack.c.l.b16 %v1216
    %v1289 = vunpack.c.l.b16 %v1217
    %v1290 = vunpack.c.l.b16 %v1218
    %v1291 = vunpack.c.l.b16 %v1219
    %v1292 = vunpack.c.l.b16 %v1220
    %v1293 = vunpack.c.l.b16 %v1221
    %v1294 = vunpack.c.l.b16 %v1222
    %v1295 = vunpack.c.l.b16 %v1223
    %v1296 = vunpack.c.l.b16 %v1224
    %v1297 = vunpack.c.l.b16 %v1225
    %v1298 = vunpack.c.l.b16 %v1226
    %v1299 = vunpack.c.l.b16 %v1227
    %v1300 = vunpack.c.l.b16 %v1228
    %v1301 = vunpack.c.l.b16 %v1229
    %v1302 = vunpack.c.l.b16 %v1230
    %v1303 = vunpack.c.l.b16 %v1231
    %v1304 = vunpack.c.l.b16 %v1232
    %v1305 = vunpack.c.l.b16 %v1233
    %v1306 = vunpack.c.l.b16 %v1234
    %v1307 = vunpack.c.l.b16 %v1235
    %v1308 = vunpack.c.l.b16 %v1236
    %v1309 = vunpack.c.l.b16 %v1237
    %v1310 = vpack.c.b16 %v1275, %v1274
    %v1311 = vpack.c.b16 %v1277, %v1276
    %v1312 = vpack.c.b16 %v1279, %v1278
    %v1313 = vpack.c.b16 %v1281, %v1280
    %v1314 = vpack.c.b16 %v1283, %v1282
    %v1315 = vpack.c.b16 %v1285, %v1284
    %v1316 = vpack.c.b16 %v1287, %v1286
    %v1317 = vpack.c.b16 %v1289, %v1288
    %v1318 = vpack.c.b16 %v1291, %v1290
    %v1319 = vpack.c.b16 %v1293, %v1292
    %v1320 = vpack.c.b16 %v1295, %v1294
    %v1321 = vpack.c.b16 %v1297, %v1296
    %v1322 = vpack.c.b16 %v1299, %v1298
    %v1323 = vpack.c.b16 %v1301, %v1300
    %v1324 = vpack.c.b16 %v1303, %v1302
    %v1325 = vpack.c.b16 %v1305, %v1304
    %v1326 = vpack.c.b16 %v1307, %v1306
    %v1327 = vpack.c.b16 %v1309, %v1308
    %v1329 = vsel %vm177, %v1310, 0
    %v1332 = vsel %vm177, %v1311, 0
    %v1335 = vsel %vm177, %v1312, 0
    %v1338 = vsel %vm177, %v1313, 0
    %v1341 = vsel %vm177, %v1314, 0
    %v1344 = vsel %vm177, %v1315, 0
    %v1347 = vsel %vm177, %v1316, 0
    %v1350 = vsel %vm177, %v1317, 0
    %v1353 = vsel %vm177, %v1318, 0
    %v1356 = vsel %vm177, %v1319, 0
    %v1359 = vsel %vm177, %v1320, 0
    %v1362 = vsel %vm177, %v1321, 0
    %v1365 = vsel %vm177, %v1322, 0
    %v1368 = vsel %vm177, %v1323, 0
    %v1371 = vsel %vm177, %v1324, 0
    %v1374 = vsel %vm177, %v1325, 0
    %v1377 = vsel %vm177, %v1326, 0
    %v1380 = vsel %vm177, %v1327, 0
    %1382 = vmatprep.subr.bf16.mxu0 0
    %1383 = vmatpush1.bf16.msra.mxu0 0
    %1384 = vmatprep.subr.bf16.mxu0 0
    %1385 = vmatpush1.bf16.msra.mxu0 0
    %1386 = vmatprep.subr.bf16.mxu0 0
    %1387 = vmatpush1.bf16.msra.mxu0 0
    %1388 = vmatprep.subr.bf16.mxu0 0
    %1389 = vmatpush1.bf16.msra.mxu0 0
    %1390 = vmatprep.subr.bf16.mxu0 0
    %1391 = vmatpush1.bf16.msra.mxu0 0
    %1392 = vmatprep.subr.bf16.mxu0 0
    %1393 = vmatpush1.bf16.msra.mxu0 0
    %1394 = vmatprep.subr.bf16.mxu0 0
    %1395 = vmatpush1.bf16.msra.mxu0 %v237
    %1396 = vmatprep.subr.bf16.mxu0 0
    %1397 = vmatpush1.bf16.msra.mxu0 %v174
    %1398 = vmatprep.subr.bf16.mxu0 0
    %1399 = vmatpush2.bf16.msra.mxu0 0
    %1400 = vmatprep.subr.bf16.mxu0 0
    %1401 = vmatpush2.bf16.msra.mxu0 0
    %1402 = vmatprep.subr.bf16.mxu0 0
    %1403 = vmatpush2.bf16.msra.mxu0 0
    %1404 = vmatprep.subr.bf16.mxu0 0
    %1405 = vmatpush2.bf16.msra.mxu0 0
    %1406 = vmatprep.subr.bf16.mxu0 0
    %1407 = vmatpush2.bf16.msra.mxu0 0
    %1408 = vmatprep.subr.bf16.mxu0 0
    %1409 = vmatpush2.bf16.msra.mxu0 0
    %1410 = vmatprep.subr.bf16.mxu0 0
    %1411 = vmatpush2.bf16.msra.mxu0 0
    %1412 = vmatprep.subr.bf16.mxu0 0
    %1413 = vmatpush2.bf16.msra.mxu0 0
    %1414 = vmatprep.mubr.bf16.mxu0 0
    %1415 = vmatmul.mubr.bf16.gmra.mxu0 %v1329
    %v1416 = vpop.f32.mrf.mxu0
    %v1417 = vadd.f32 0.0, %v1416
    %v1418 = vpop.f32.mrf.mxu0
    %v1419 = vpop.f32.mrf.mxu0
    %v1420 = vadd.f32 0.0, %v1419
    %v1421 = vpop.f32.mrf.mxu0
    %1422 = vmatprep.mubr.bf16.mxu0 0
    %1423 = vmatmul.mubr.bf16.gmra.mxu0 %v1332
    %v1424 = vpop.f32.mrf.mxu0
    %v1425 = vadd.f32 0.0, %v1424
    %v1426 = vpop.f32.mrf.mxu0
    %v1427 = vpop.f32.mrf.mxu0
    %v1428 = vadd.f32 0.0, %v1427
    %v1429 = vpop.f32.mrf.mxu0
    %1430 = vmatprep.mubr.bf16.mxu0 0
    %1431 = vmatmul.mubr.bf16.gmra.mxu0 %v1335
    %v1432 = vpop.f32.mrf.mxu0
    %v1433 = vadd.f32 0.0, %v1432
    %v1434 = vpop.f32.mrf.mxu0
    %v1435 = vpop.f32.mrf.mxu0
    %v1436 = vadd.f32 0.0, %v1435
    %v1437 = vpop.f32.mrf.mxu0
    %1438 = vmatprep.mubr.bf16.mxu0 0
    %1439 = vmatmul.mubr.bf16.gmra.mxu0 %v1338
    %v1440 = vpop.f32.mrf.mxu0
    %v1441 = vadd.f32 0.0, %v1440
    %v1442 = vpop.f32.mrf.mxu0
    %v1443 = vpop.f32.mrf.mxu0
    %v1444 = vadd.f32 0.0, %v1443
    %v1445 = vpop.f32.mrf.mxu0
    %1446 = vmatprep.mubr.bf16.mxu0 0
    %1447 = vmatmul.mubr.bf16.gmra.mxu0 %v1341
    %v1448 = vpop.f32.mrf.mxu0
    %v1449 = vadd.f32 0.0, %v1448
    %v1450 = vpop.f32.mrf.mxu0
    %v1451 = vpop.f32.mrf.mxu0
    %v1452 = vadd.f32 0.0, %v1451
    %v1453 = vpop.f32.mrf.mxu0
    %1454 = vmatprep.mubr.bf16.mxu0 0
    %1455 = vmatmul.mubr.bf16.gmra.mxu0 %v1344
    %v1456 = vpop.f32.mrf.mxu0
    %v1457 = vadd.f32 0.0, %v1456
    %v1458 = vpop.f32.mrf.mxu0
    %v1459 = vpop.f32.mrf.mxu0
    %v1460 = vadd.f32 0.0, %v1459
    %v1461 = vpop.f32.mrf.mxu0
    %1462 = vmatprep.mubr.bf16.mxu0 0
    %1463 = vmatmul.mubr.bf16.gmra.mxu0 %v1347
    %v1464 = vpop.f32.mrf.mxu0
    %v1465 = vadd.f32 0.0, %v1464
    %v1466 = vpop.f32.mrf.mxu0
    %v1467 = vpop.f32.mrf.mxu0
    %v1468 = vadd.f32 0.0, %v1467
    %v1469 = vpop.f32.mrf.mxu0
    %1470 = vmatprep.mubr.bf16.mxu0 0
    %1471 = vmatmul.mubr.bf16.gmra.mxu0 %v1350
    %v1472 = vpop.f32.mrf.mxu0
    %v1473 = vadd.f32 0.0, %v1472
    %v1474 = vpop.f32.mrf.mxu0
    %v1475 = vpop.f32.mrf.mxu0
    %v1476 = vadd.f32 0.0, %v1475
    %v1477 = vpop.f32.mrf.mxu0
    %1478 = vmatprep.mubr.bf16.mxu0 0
    %1479 = vmatmul.mubr.bf16.gmra.mxu0 %v1353
    %v1480 = vpop.f32.mrf.mxu0
    %v1481 = vadd.f32 0.0, %v1480
    %v1482 = vpop.f32.mrf.mxu0
    %v1483 = vpop.f32.mrf.mxu0
    %v1484 = vadd.f32 0.0, %v1483
    %v1485 = vpop.f32.mrf.mxu0
    %1486 = vmatprep.mubr.bf16.mxu0 0
    %1487 = vmatmul.mubr.bf16.gmra.mxu0 %v1356
    %v1488 = vpop.f32.mrf.mxu0
    %v1489 = vadd.f32 0.0, %v1488
    %v1490 = vpop.f32.mrf.mxu0
    %v1491 = vpop.f32.mrf.mxu0
    %v1492 = vadd.f32 0.0, %v1491
    %v1493 = vpop.f32.mrf.mxu0
    %1494 = vmatprep.mubr.bf16.mxu0 0
    %1495 = vmatmul.mubr.bf16.gmra.mxu0 %v1359
    %v1496 = vpop.f32.mrf.mxu0
    %v1497 = vadd.f32 0.0, %v1496
    %v1498 = vpop.f32.mrf.mxu0
    %v1499 = vpop.f32.mrf.mxu0
    %v1500 = vadd.f32 0.0, %v1499
    %v1501 = vpop.f32.mrf.mxu0
    %1502 = vmatprep.mubr.bf16.mxu0 0
    %1503 = vmatmul.mubr.bf16.gmra.mxu0 %v1362
    %v1504 = vpop.f32.mrf.mxu0
    %v1505 = vadd.f32 0.0, %v1504
    %v1506 = vpop.f32.mrf.mxu0
    %v1507 = vpop.f32.mrf.mxu0
    %v1508 = vadd.f32 0.0, %v1507
    %v1509 = vpop.f32.mrf.mxu0
    %1510 = vmatprep.mubr.bf16.mxu0 0
    %1511 = vmatmul.mubr.bf16.gmra.mxu0 %v1365
    %v1512 = vpop.f32.mrf.mxu0
    %v1513 = vadd.f32 0.0, %v1512
    %v1514 = vpop.f32.mrf.mxu0
    %v1515 = vpop.f32.mrf.mxu0
    %v1516 = vadd.f32 0.0, %v1515
    %v1517 = vpop.f32.mrf.mxu0
    %1518 = vmatprep.mubr.bf16.mxu0 0
    %1519 = vmatmul.mubr.bf16.gmra.mxu0 %v1368
    %v1520 = vpop.f32.mrf.mxu0
    %v1521 = vadd.f32 0.0, %v1520
    %v1522 = vpop.f32.mrf.mxu0
    %v1523 = vpop.f32.mrf.mxu0
    %v1524 = vadd.f32 0.0, %v1523
    %v1525 = vpop.f32.mrf.mxu0
    %1526 = vmatprep.mubr.bf16.mxu0 0
    %1527 = vmatmul.mubr.bf16.gmra.mxu0 %v1371
    %v1528 = vpop.f32.mrf.mxu0
    %v1529 = vadd.f32 0.0, %v1528
    %v1530 = vpop.f32.mrf.mxu0
    %v1531 = vpop.f32.mrf.mxu0
    %v1532 = vadd.f32 0.0, %v1531
    %v1533 = vpop.f32.mrf.mxu0
    %1534 = vmatprep.mubr.bf16.mxu0 0
    %1535 = vmatmul.mubr.bf16.gmra.mxu0 %v1374
    %v1536 = vpop.f32.mrf.mxu0
    %v1537 = vadd.f32 0.0, %v1536
    %v1538 = vpop.f32.mrf.mxu0
    %v1539 = vpop.f32.mrf.mxu0
    %v1540 = vadd.f32 0.0, %v1539
    %v1541 = vpop.f32.mrf.mxu0
    %1542 = vmatprep.mubr.bf16.mxu0 0
    %1543 = vmatmul.mubr.bf16.gmra.mxu0 %v1377
    %v1544 = vpop.f32.mrf.mxu0
    %v1545 = vadd.f32 0.0, %v1544
    %v1546 = vpop.f32.mrf.mxu0
    %v1547 = vpop.f32.mrf.mxu0
    %v1548 = vadd.f32 0.0, %v1547
    %v1549 = vpop.f32.mrf.mxu0
    %1550 = vmatprep.mubr.bf16.mxu0 0
    %1551 = vmatmul.mubr.bf16.gmra.mxu0 %v1380
    %v1552 = vpop.f32.mrf.mxu0
    %v1553 = vadd.f32 0.0, %v1552
    %v1554 = vpop.f32.mrf.mxu0
    %v1555 = vpop.f32.mrf.mxu0
    %v1556 = vadd.f32 0.0, %v1555
    %v1557 = vpop.f32.mrf.mxu0
    %1558 = vdwg.mxu0
    %v1559 = vmax.f32 %v1166, %v1417
    %v1560 = vmax.f32 %v1167, %v1420
    %v1561 = vmax.f32 %v1168, %v1425
    %v1562 = vmax.f32 %v1169, %v1428
    %v1563 = vmax.f32 %v1170, %v1433
    %v1564 = vmax.f32 %v1171, %v1436
    %v1565 = vmax.f32 %v1172, %v1441
    %v1566 = vmax.f32 %v1173, %v1444
    %v1567 = vmax.f32 %v1174, %v1449
    %v1568 = vmax.f32 %v1175, %v1452
    %v1569 = vmax.f32 %v1176, %v1457
    %v1570 = vmax.f32 %v1177, %v1460
    %v1571 = vmax.f32 %v1178, %v1465
    %v1572 = vmax.f32 %v1179, %v1468
    %v1573 = vmax.f32 %v1180, %v1473
    %v1574 = vmax.f32 %v1181, %v1476
    %v1575 = vmax.f32 %v1182, %v1481
    %v1576 = vmax.f32 %v1183, %v1484
    %v1577 = vmax.f32 %v1184, %v1489
    %v1578 = vmax.f32 %v1185, %v1492
    %v1579 = vmax.f32 %v1186, %v1497
    %v1580 = vmax.f32 %v1187, %v1500
    %v1581 = vmax.f32 %v1188, %v1505
    %v1582 = vmax.f32 %v1189, %v1508
    %v1583 = vmax.f32 %v1190, %v1513
    %v1584 = vmax.f32 %v1191, %v1516
    %v1585 = vmax.f32 %v1192, %v1521
    %v1586 = vmax.f32 %v1193, %v1524
    %v1587 = vmax.f32 %v1194, %v1529
    %v1588 = vmax.f32 %v1195, %v1532
    %v1589 = vmax.f32 %v1196, %v1537
    %v1590 = vmax.f32 %v1197, %v1540
    %v1591 = vmax.f32 %v1198, %v1545
    %v1592 = vmax.f32 %v1199, %v1548
    %v1593 = vmax.f32 %v1200, %v1553
    %v1594 = vmax.f32 %v1201, %v1556
    %v1595 = vld [vmem:[#allocation2] sm:$0x1]
    %v1597 = vlaneseq
    %v1598 = vshrl.u32 %v1597, 7
    %v1599 = vsub.s32 0, %v1598
    %v1600 = vrot.slane %v1595, %v1599
    %v1602 = vadd.f32 %v1559, %v1600
    %v1603 = vadd.f32 %v1560, %v1600
    %v1604 = vadd.f32 %v1561, %v1600
    %v1605 = vadd.f32 %v1562, %v1600
    %v1606 = vadd.f32 %v1563, %v1600
    %v1607 = vadd.f32 %v1564, %v1600
    %v1608 = vadd.f32 %v1565, %v1600
    %v1609 = vadd.f32 %v1566, %v1600
    %v1610 = vadd.f32 %v1567, %v1600
    %v1611 = vadd.f32 %v1568, %v1600
    %v1612 = vadd.f32 %v1569, %v1600
    %v1613 = vadd.f32 %v1570, %v1600
    %v1614 = vadd.f32 %v1571, %v1600
    %v1615 = vadd.f32 %v1572, %v1600
    %v1616 = vadd.f32 %v1573, %v1600
    %v1617 = vadd.f32 %v1574, %v1600
    %v1618 = vadd.f32 %v1575, %v1600
    %v1619 = vadd.f32 %v1576, %v1600
    %v1620 = vadd.f32 %v1577, %v1600
    %v1621 = vadd.f32 %v1578, %v1600
    %v1622 = vadd.f32 %v1579, %v1600
    %v1623 = vadd.f32 %v1580, %v1600
    %v1624 = vadd.f32 %v1581, %v1600
    %v1625 = vadd.f32 %v1582, %v1600
    %v1626 = vadd.f32 %v1583, %v1600
    %v1627 = vadd.f32 %v1584, %v1600
    %v1628 = vadd.f32 %v1585, %v1600
    %v1629 = vadd.f32 %v1586, %v1600
    %v1630 = vadd.f32 %v1587, %v1600
    %v1631 = vadd.f32 %v1588, %v1600
    %v1632 = vadd.f32 %v1589, %v1600
    %v1633 = vadd.f32 %v1590, %v1600
    %v1634 = vadd.f32 %v1591, %v1600
    %v1635 = vadd.f32 %v1592, %v1600
    %v1636 = vadd.f32 %v1593, %v1600
    %v1637 = vadd.f32 %v1594, %v1600
    %v1638 = vmax.f32 %v1602, 0.0
    %v1639 = vmax.f32 %v1603, 0.0
    %v1640 = vmax.f32 %v1604, 0.0
    %v1641 = vmax.f32 %v1605, 0.0
    %v1642 = vmax.f32 %v1606, 0.0
    %v1643 = vmax.f32 %v1607, 0.0
    %v1644 = vmax.f32 %v1608, 0.0
    %v1645 = vmax.f32 %v1609, 0.0
    %v1646 = vmax.f32 %v1610, 0.0
    %v1647 = vmax.f32 %v1611, 0.0
    %v1648 = vmax.f32 %v1612, 0.0
    %v1649 = vmax.f32 %v1613, 0.0
    %v1650 = vmax.f32 %v1614, 0.0
    %v1651 = vmax.f32 %v1615, 0.0
    %v1652 = vmax.f32 %v1616, 0.0
    %v1653 = vmax.f32 %v1617, 0.0
    %v1654 = vmax.f32 %v1618, 0.0
    %v1655 = vmax.f32 %v1619, 0.0
    %v1656 = vmax.f32 %v1620, 0.0
    %v1657 = vmax.f32 %v1621, 0.0
    %v1658 = vmax.f32 %v1622, 0.0
    %v1659 = vmax.f32 %v1623, 0.0
    %v1660 = vmax.f32 %v1624, 0.0
    %v1661 = vmax.f32 %v1625, 0.0
    %v1662 = vmax.f32 %v1626, 0.0
    %v1663 = vmax.f32 %v1627, 0.0
    %v1664 = vmax.f32 %v1628, 0.0
    %v1665 = vmax.f32 %v1629, 0.0
    %v1666 = vmax.f32 %v1630, 0.0
    %v1667 = vmax.f32 %v1631, 0.0
    %v1668 = vmax.f32 %v1632, 0.0
    %v1669 = vmax.f32 %v1633, 0.0
    %v1670 = vmax.f32 %v1634, 0.0
    %v1671 = vmax.f32 %v1635, 0.0
    %v1672 = vmax.f32 %v1636, 0.0
    %v1673 = vmax.f32 %v1637, 0.0
    %vm1674 = vcmask 195584
    %1675 = vst.msk [vmem:[%s6] sm:$0xff] %vm1674, %v1638
    %1676 = vst.msk [vmem:[%s6 + $0x8] sm:$0xff] %vm1674, %v1639
    %1677 = vst.msk [vmem:[%s6 + $0x10] sm:$0xff] %vm1674, %v1640
    %1678 = vst.msk [vmem:[%s6 + $0x18] sm:$0xff] %vm1674, %v1641
    %1679 = vst.msk [vmem:[%s6 + $0x20] sm:$0xff] %vm1674, %v1642
    %1680 = vst.msk [vmem:[%s6 + $0x28] sm:$0xff] %vm1674, %v1643
    %1681 = vst.msk [vmem:[%s6 + $0x30] sm:$0xff] %vm1674, %v1644
    %1682 = vst.msk [vmem:[%s6 + $0x38] sm:$0xff] %vm1674, %v1645
    %1683 = vst.msk [vmem:[%s6 + $0x40] sm:$0xff] %vm1674, %v1646
    %1684 = vst.msk [vmem:[%s6 + $0x48] sm:$0xff] %vm1674, %v1647
    %1685 = vst.msk [vmem:[%s6 + $0x50] sm:$0xff] %vm1674, %v1648
    %1686 = vst.msk [vmem:[%s6 + $0x58] sm:$0xff] %vm1674, %v1649
    %1687 = vst.msk [vmem:[%s6 + $0x60] sm:$0xff] %vm1674, %v1650
    %1688 = vst.msk [vmem:[%s6 + $0x68] sm:$0xff] %vm1674, %v1651
    %1689 = vst.msk [vmem:[%s6 + $0x70] sm:$0xff] %vm1674, %v1652
    %1690 = vst.msk [vmem:[%s6 + $0x78] sm:$0xff] %vm1674, %v1653
    %1691 = vst.msk [vmem:[%s6 + $0x80] sm:$0xff] %vm1674, %v1654
    %1692 = vst.msk [vmem:[%s6 + $0x88] sm:$0xff] %vm1674, %v1655
    %1693 = vst.msk [vmem:[%s6 + $0x90] sm:$0xff] %vm1674, %v1656
    %1694 = vst.msk [vmem:[%s6 + $0x98] sm:$0xff] %vm1674, %v1657
    %1695 = vst.msk [vmem:[%s6 + $0xa0] sm:$0xff] %vm1674, %v1658
    %1696 = vst.msk [vmem:[%s6 + $0xa8] sm:$0xff] %vm1674, %v1659
    %1697 = vst.msk [vmem:[%s6 + $0xb0] sm:$0xff] %vm1674, %v1660
    %1698 = vst.msk [vmem:[%s6 + $0xb8] sm:$0xff] %vm1674, %v1661
    %1699 = vst.msk [vmem:[%s6 + $0xc0] sm:$0xff] %vm1674, %v1662
    %1700 = vst.msk [vmem:[%s6 + $0xc8] sm:$0xff] %vm1674, %v1663
    %1701 = vst.msk [vmem:[%s6 + $0xd0] sm:$0xff] %vm1674, %v1664
    %1702 = vst.msk [vmem:[%s6 + $0xd8] sm:$0xff] %vm1674, %v1665
    %1703 = vst.msk [vmem:[%s6 + $0xe0] sm:$0xff] %vm1674, %v1666
    %1704 = vst.msk [vmem:[%s6 + $0xe8] sm:$0xff] %vm1674, %v1667
    %1705 = vst.msk [vmem:[%s6 + $0xf0] sm:$0xff] %vm1674, %v1668
    %1706 = vst.msk [vmem:[%s6 + $0xf8] sm:$0xff] %vm1674, %v1669
    %1707 = vst.msk [vmem:[%s6 + $0x100] sm:$0xff] %vm1674, %v1670
    %1708 = vst.msk [vmem:[%s6 + $0x108] sm:$0xff] %vm1674, %v1671
    %1709 = vst.msk [vmem:[%s6 + $0x110] sm:$0xff] %vm1674, %v1672
    %1710 = vst.msk [vmem:[%s6 + $0x118] sm:$0xff] %vm1674, %v1673
    // Predicated region
    $region30: #{forward.3} parent=1 // pred_check
      _
    $region31: #{forward.3} parent=1 // pred_check_branch
      %1712 = sbr.rel (0) target = $region33
    $region32: #{forward.3} parent=1 // pred_region
      _
    $region33: #{forward.3} parent=1 // pred_fallthru
      _
    // Predicated region
    $region34: #{forward.3} parent=1 // pred_check
      _
    $region35: #{forward.3} parent=1 // pred_check_branch
      %1714 = sbr.rel (0) target = $region37
    $region36: #{forward.3} parent=1 // pred_region
      _
    $region37: #{forward.3} parent=1 // pred_fallthru
      _
    %1715 = vsyncpa [#allocation3], 1

// kernel: forward.4
$region0: #{forward.4}
  #allocation0 [shape = 'u32[]', space=smem, size = 0x4, offset = 0x4, fixed_abs, tag = 'smem constant byte address 0x4 - core index']
  #allocation1 [shape = 'u32[144,128]{1,0:T(1,128)}', space=vmem, size = 0x12000, scoped, tag = 'internal scratch']
  %s0 = inlined_call_operand.vmem [shape: bf16[72,600], index: 0, kind: input, shape index: {}]
  %s1 = inlined_call_operand.vmem [shape: bf16[72,600], index: 1, kind: input, shape index: {}]
  %s2 = inlined_call_operand.vmem [shape: bf16[72,600], index: 2, kind: input, shape index: {}]
  %s3 = inlined_call_operand.vmem [shape: bf16[72,600], index: 3, kind: input, shape index: {}]
  %s4 = inlined_call_operand.vmem [shape: bf16[600,48], index: 4, kind: input, shape index: {}]
  %s5 = inlined_call_operand.vmem [shape: f32[1,48], index: 5, kind: input, shape index: {}]
  %s6 = inlined_call_operand.vmem [shape: f32[72,48], index: 6, kind: output, shape index: {}]
  %s7 = sld [smem:[#allocation0]]
  $region34: #{forward.4} parent=0
    _
  %s9 = ssub.s32 1, %s7
  %s10 = scalar_select 0, %s9, %s7
  // Predicated region
  $region2: #{forward.4} parent=0 // pred_check
    _
  $region3: #{forward.4} parent=0 // pred_check_branch
    %12 = sbr.rel (0) target = $region5
  $region4: #{forward.4} parent=0 // pred_region
    _
  $region5: #{forward.4} parent=0 // pred_fallthru
    _
  // Predicated region
  $region6: #{forward.4} parent=0 // pred_check
    _
  $region7: #{forward.4} parent=0 // pred_check_branch
    %14 = sbr.rel (0) target = $region9
  $region8: #{forward.4} parent=0 // pred_region
    _
  $region9: #{forward.4} parent=0 // pred_fallthru
    _
  // Predicated region
  $region10: #{forward.4} parent=0 // pred_check
    _
  $region11: #{forward.4} parent=0 // pred_check_branch
    %16 = sbr.rel (0) target = $region13
  $region12: #{forward.4} parent=0 // pred_region
    _
  $region13: #{forward.4} parent=0 // pred_fallthru
    _
  // Predicated region
  $region14: #{forward.4} parent=0 // pred_check
    _
  $region15: #{forward.4} parent=0 // pred_check_branch
    %18 = sbr.rel (0) target = $region17
  $region16: #{forward.4} parent=0 // pred_region
    _
  $region17: #{forward.4} parent=0 // pred_fallthru
    _
  // Predicated region
  $region18: #{forward.4} parent=0 // pred_check
    _
  $region19: #{forward.4} parent=0 // pred_check_branch
    %20 = sbr.rel (0) target = $region21
  $region20: #{forward.4} parent=0 // pred_region
    _
  $region21: #{forward.4} parent=0 // pred_fallthru
    _
  // Predicated region
  $region22: #{forward.4} parent=0 // pred_check
    _
  $region23: #{forward.4} parent=0 // pred_check_branch
    %22 = sbr.rel (0) target = $region25
  $region24: #{forward.4} parent=0 // pred_region
    _
  $region25: #{forward.4} parent=0 // pred_fallthru
    _
  %v24 = vld [vmem:[%s4] sm:$0xf]
  %v25 = vld [vmem:[%s4 + $0x4] sm:$0xf]
  %v26 = vld [vmem:[%s4 + $0x8] sm:$0xf]
  %v27 = vld [vmem:[%s4 + $0xc] sm:$0xf]
  %v28 = vld [vmem:[%s4 + $0x10] sm:$0xf]
  %v29 = vld [vmem:[%s4 + $0x14] sm:$0xf]
  %v30 = vld [vmem:[%s4 + $0x18] sm:$0xf]
  %v31 = vld [vmem:[%s4 + $0x1c] sm:$0xf]
  %v32 = vld [vmem:[%s4 + $0x20] sm:$0xf]
  %v33 = vld [vmem:[%s4 + $0x24] sm:$0xf]
  %v34 = vld [vmem:[%s4 + $0x28] sm:$0xf]
  %v35 = vld [vmem:[%s4 + $0x2c] sm:$0xf]
  %v36 = vld [vmem:[%s4 + $0x30] sm:$0xf]
  %v37 = vld [vmem:[%s4 + $0x34] sm:$0xf]
  %v38 = vld [vmem:[%s4 + $0x38] sm:$0xf]
  %v39 = vld [vmem:[%s4 + $0x3c] sm:$0xf]
  %v40 = vld [vmem:[%s4 + $0x40] sm:$0xf]
  %v41 = vld [vmem:[%s4 + $0x44] sm:$0xf]
  %v42 = vld [vmem:[%s4 + $0x48] sm:$0xf]
  %v43 = vld [vmem:[%s4 + $0x4c] sm:$0xf]
  %v44 = vld [vmem:[%s4 + $0x50] sm:$0xf]
  %v45 = vld [vmem:[%s4 + $0x54] sm:$0xf]
  %v46 = vld [vmem:[%s4 + $0x58] sm:$0xf]
  %v47 = vld [vmem:[%s4 + $0x5c] sm:$0xf]
  %v48 = vld [vmem:[%s4 + $0x60] sm:$0xf]
  %v49 = vld [vmem:[%s4 + $0x64] sm:$0xf]
  %v50 = vld [vmem:[%s4 + $0x68] sm:$0xf]
  %v51 = vld [vmem:[%s4 + $0x6c] sm:$0xf]
  %v52 = vld [vmem:[%s4 + $0x70] sm:$0xf]
  %v53 = vld [vmem:[%s4 + $0x74] sm:$0xf]
  %v54 = vld [vmem:[%s4 + $0x78] sm:$0xf]
  %v55 = vld [vmem:[%s4 + $0x7c] sm:$0xf]
  %v56 = vld [vmem:[%s4 + $0x80] sm:$0xf]
  %v57 = vld [vmem:[%s4 + $0x84] sm:$0xf]
  %v58 = vld [vmem:[%s4 + $0x88] sm:$0xf]
  %v59 = vld [vmem:[%s4 + $0x8c] sm:$0xf]
  %v60 = vld [vmem:[%s4 + $0x90] sm:$0xf]
  %v61 = vld [vmem:[%s4 + $0x94] sm:$0xf]
  %v62 = vld [vmem:[%s4 + $0x98] sm:$0xf]
  %v63 = vld [vmem:[%s4 + $0x9c] sm:$0xf]
  %v64 = vld [vmem:[%s4 + $0xa0] sm:$0xf]
  %v65 = vld [vmem:[%s4 + $0xa4] sm:$0xf]
  %v66 = vld [vmem:[%s4 + $0xa8] sm:$0xf]
  %v67 = vld [vmem:[%s4 + $0xac] sm:$0xf]
  %v68 = vld [vmem:[%s4 + $0xb0] sm:$0xf]
  %v69 = vld [vmem:[%s4 + $0xb4] sm:$0xf]
  %v70 = vld [vmem:[%s4 + $0xb8] sm:$0xf]
  %v71 = vld [vmem:[%s4 + $0xbc] sm:$0xf]
  %v72 = vld [vmem:[%s4 + $0xc0] sm:$0xf]
  %v73 = vld [vmem:[%s4 + $0xc4] sm:$0xf]
  %v74 = vld [vmem:[%s4 + $0xc8] sm:$0xf]
  %v75 = vld [vmem:[%s4 + $0xcc] sm:$0xf]
  %v76 = vld [vmem:[%s4 + $0xd0] sm:$0xf]
  %v77 = vld [vmem:[%s4 + $0xd4] sm:$0xf]
  %v78 = vld [vmem:[%s4 + $0xd8] sm:$0xf]
  %v79 = vld [vmem:[%s4 + $0xdc] sm:$0xf]
  %v80 = vld [vmem:[%s4 + $0xe0] sm:$0xf]
  %v81 = vld [vmem:[%s4 + $0xe4] sm:$0xf]
  %v82 = vld [vmem:[%s4 + $0xe8] sm:$0xf]
  %v83 = vld [vmem:[%s4 + $0xec] sm:$0xf]
  %v84 = vld [vmem:[%s4 + $0xf0] sm:$0xf]
  %v85 = vld [vmem:[%s4 + $0xf4] sm:$0xf]
  %v86 = vld [vmem:[%s4 + $0xf8] sm:$0xf]
  %v87 = vld [vmem:[%s4 + $0xfc] sm:$0xf]
  %v88 = vld [vmem:[%s4 + $0x100] sm:$0xf]
  %v89 = vld [vmem:[%s4 + $0x104] sm:$0xf]
  %v90 = vld [vmem:[%s4 + $0x108] sm:$0xf]
  %v91 = vld [vmem:[%s4 + $0x10c] sm:$0xf]
  %v92 = vld [vmem:[%s4 + $0x110] sm:$0xf]
  %v93 = vld [vmem:[%s4 + $0x114] sm:$0xf]
  %v94 = vld [vmem:[%s4 + $0x118] sm:$0xf]
  %v95 = vld [vmem:[%s4 + $0x11c] sm:$0xf]
  %v96 = vld [vmem:[%s4 + $0x120] sm:$0xf]
  %v97 = vld [vmem:[%s4 + $0x124] sm:$0xf]
  %v98 = vld [vmem:[%s4 + $0x128] sm:$0xf]
  %v99 = vld [vmem:[%s0] sm:$0xff]
  %v100 = vld [vmem:[%s0 + $0x8] sm:$0xff]
  %v101 = vld [vmem:[%s0 + $0x10] sm:$0xf]
  %v102 = vld [vmem:[%s0 + $0x14] sm:$0xff]
  %v103 = vld [vmem:[%s0 + $0x1c] sm:$0xff]
  %v104 = vld [vmem:[%s0 + $0x24] sm:$0xf]
  %v105 = vld [vmem:[%s0 + $0x28] sm:$0xff]
  %v106 = vld [vmem:[%s0 + $0x30] sm:$0xff]
  %v107 = vld [vmem:[%s0 + $0x38] sm:$0xf]
  %v108 = vld [vmem:[%s0 + $0x3c] sm:$0xff]
  %v109 = vld [vmem:[%s0 + $0x44] sm:$0xff]
  %v110 = vld [vmem:[%s0 + $0x4c] sm:$0xf]
  %v111 = vld [vmem:[%s0 + $0x50] sm:$0xff]
  %v112 = vld [vmem:[%s0 + $0x58] sm:$0xff]
  %v113 = vld [vmem:[%s0 + $0x60] sm:$0xf]
  %v114 = vld [vmem:[%s0 + $0x64] sm:$0xff]
  %v115 = vld [vmem:[%s0 + $0x6c] sm:$0xff]
  %v116 = vld [vmem:[%s0 + $0x74] sm:$0xf]
  %v117 = vld [vmem:[%s0 + $0x78] sm:$0xff]
  %v118 = vld [vmem:[%s0 + $0x80] sm:$0xff]
  %v119 = vld [vmem:[%s0 + $0x88] sm:$0xf]
  %v120 = vld [vmem:[%s0 + $0x8c] sm:$0xff]
  %v121 = vld [vmem:[%s0 + $0x94] sm:$0xff]
  %v122 = vld [vmem:[%s0 + $0x9c] sm:$0xf]
  %v123 = vld [vmem:[%s0 + $0xa0] sm:$0xff]
  %v124 = vld [vmem:[%s0 + $0xa8] sm:$0xff]
  %v125 = vld [vmem:[%s0 + $0xb0] sm:$0xf]
  %v153 = vunpack.c.l.b16 %v99
  %v154 = vunpack.c.h.b16 %v99
  %v155 = vunpack.c.l.b16 %v100
  %v156 = vunpack.c.h.b16 %v100
  %v157 = vunpack.c.l.b16 %v101
  %v158 = vunpack.c.l.b16 %v102
  %v159 = vunpack.c.h.b16 %v102
  %v160 = vunpack.c.l.b16 %v103
  %v161 = vunpack.c.h.b16 %v103
  %v162 = vunpack.c.l.b16 %v104
  %v163 = vunpack.c.l.b16 %v105
  %v164 = vunpack.c.h.b16 %v105
  %v165 = vunpack.c.l.b16 %v106
  %v166 = vunpack.c.h.b16 %v106
  %v167 = vunpack.c.l.b16 %v107
  %v168 = vunpack.c.l.b16 %v108
  %v169 = vunpack.c.h.b16 %v108
  %v170 = vunpack.c.l.b16 %v109
  %v171 = vunpack.c.h.b16 %v109
  %v172 = vunpack.c.l.b16 %v110
  %v173 = vunpack.c.l.b16 %v111
  %v174 = vunpack.c.h.b16 %v111
  %v175 = vunpack.c.l.b16 %v112
  %v176 = vunpack.c.h.b16 %v112
  %v177 = vunpack.c.l.b16 %v113
  %v178 = vunpack.c.l.b16 %v114
  %v179 = vunpack.c.h.b16 %v114
  %v180 = vunpack.c.l.b16 %v115
  %v181 = vunpack.c.h.b16 %v115
  %v182 = vunpack.c.l.b16 %v116
  %v183 = vunpack.c.l.b16 %v117
  %v184 = vunpack.c.h.b16 %v117
  %v185 = vunpack.c.l.b16 %v118
  %v186 = vunpack.c.h.b16 %v118
  %v187 = vunpack.c.l.b16 %v119
  %v188 = vunpack.c.l.b16 %v120
  %v189 = vunpack.c.h.b16 %v120
  %v190 = vunpack.c.l.b16 %v121
  %v191 = vunpack.c.h.b16 %v121
  %v192 = vunpack.c.l.b16 %v122
  %v193 = vunpack.c.l.b16 %v123
  %v194 = vunpack.c.h.b16 %v123
  %v195 = vunpack.c.l.b16 %v124
  %v196 = vunpack.c.h.b16 %v124
  %v197 = vunpack.c.l.b16 %v125
  %v198 = vpack.c.b16 %v158, %v153
  %v199 = vpack.c.b16 %v159, %v154
  %v200 = vpack.c.b16 %v160, %v155
  %v201 = vpack.c.b16 %v161, %v156
  %v202 = vpack.c.b16 %v162, %v157
  %v203 = vpack.c.b16 %v168, %v163
  %v204 = vpack.c.b16 %v169, %v164
  %v205 = vpack.c.b16 %v170, %v165
  %v206 = vpack.c.b16 %v171, %v166
  %v207 = vpack.c.b16 %v172, %v167
  %v208 = vpack.c.b16 %v178, %v173
  %v209 = vpack.c.b16 %v179, %v174
  %v210 = vpack.c.b16 %v180, %v175
  %v211 = vpack.c.b16 %v181, %v176
  %v212 = vpack.c.b16 %v182, %v177
  %v213 = vpack.c.b16 %v188, %v183
  %v214 = vpack.c.b16 %v189, %v184
  %v215 = vpack.c.b16 %v190, %v185
  %v216 = vpack.c.b16 %v191, %v186
  %v217 = vpack.c.b16 %v192, %v187
  %v218 = vpack.c.b16 %v193, %v193
  %v219 = vpack.c.b16 %v194, %v194
  %v220 = vpack.c.b16 %v195, %v195
  %v221 = vpack.c.b16 %v196, %v196
  %v222 = vpack.c.b16 %v197, %v197
  %v318 = vunpack.c.l.b16 %v24
  %v319 = vunpack.c.l.b16 %v25
  %v320 = vunpack.c.l.b16 %v26
  %v321 = vunpack.c.l.b16 %v27
  %v322 = vunpack.c.l.b16 %v28
  %v323 = vunpack.c.l.b16 %v29
  %v324 = vunpack.c.l.b16 %v30
  %v325 = vunpack.c.l.b16 %v31
  %v326 = vunpack.c.l.b16 %v32
  %v327 = vunpack.c.l.b16 %v33
  %v328 = vunpack.c.l.b16 %v34
  %v329 = vunpack.c.l.b16 %v35
  %v330 = vunpack.c.l.b16 %v36
  %v331 = vunpack.c.l.b16 %v37
  %v332 = vunpack.c.l.b16 %v38
  %v333 = vunpack.c.l.b16 %v39
  %v334 = vunpack.c.l.b16 %v40
  %v335 = vunpack.c.l.b16 %v41
  %v336 = vunpack.c.l.b16 %v42
  %v337 = vunpack.c.l.b16 %v43
  %v338 = vunpack.c.l.b16 %v44
  %v339 = vunpack.c.l.b16 %v45
  %v340 = vunpack.c.l.b16 %v46
  %v341 = vunpack.c.l.b16 %v47
  %v342 = vunpack.c.l.b16 %v48
  %v343 = vunpack.c.l.b16 %v49
  %v344 = vunpack.c.l.b16 %v50
  %v345 = vunpack.c.l.b16 %v51
  %v346 = vunpack.c.l.b16 %v52
  %v347 = vunpack.c.l.b16 %v53
  %v348 = vunpack.c.l.b16 %v54
  %v349 = vunpack.c.l.b16 %v55
  %v350 = vunpack.c.l.b16 %v56
  %v351 = vunpack.c.l.b16 %v57
  %v352 = vunpack.c.l.b16 %v58
  %v353 = vunpack.c.l.b16 %v59
  %v354 = vunpack.c.l.b16 %v60
  %v355 = vunpack.c.l.b16 %v61
  %v356 = vunpack.c.l.b16 %v62
  %v357 = vunpack.c.l.b16 %v63
  %v358 = vunpack.c.l.b16 %v64
  %v359 = vunpack.c.l.b16 %v65
  %v360 = vunpack.c.l.b16 %v66
  %v361 = vunpack.c.l.b16 %v67
  %v362 = vunpack.c.l.b16 %v68
  %v363 = vunpack.c.l.b16 %v69
  %v364 = vunpack.c.l.b16 %v70
  %v365 = vunpack.c.l.b16 %v71
  %v366 = vunpack.c.l.b16 %v72
  %v367 = vunpack.c.l.b16 %v73
  %v368 = vunpack.c.l.b16 %v74
  %v369 = vunpack.c.l.b16 %v75
  %v370 = vunpack.c.l.b16 %v76
  %v371 = vunpack.c.l.b16 %v77
  %v372 = vunpack.c.l.b16 %v78
  %v373 = vunpack.c.l.b16 %v79
  %v374 = vunpack.c.l.b16 %v80
  %v375 = vunpack.c.l.b16 %v81
  %v376 = vunpack.c.l.b16 %v82
  %v377 = vunpack.c.l.b16 %v83
  %v378 = vunpack.c.l.b16 %v84
  %v379 = vunpack.c.l.b16 %v85
  %v380 = vunpack.c.l.b16 %v86
  %v381 = vunpack.c.l.b16 %v87
  %v382 = vunpack.c.l.b16 %v88
  %v383 = vunpack.c.l.b16 %v89
  %v384 = vunpack.c.l.b16 %v90
  %v385 = vunpack.c.l.b16 %v91
  %v386 = vunpack.c.l.b16 %v92
  %v387 = vunpack.c.l.b16 %v93
  %v388 = vunpack.c.l.b16 %v94
  %v389 = vunpack.c.l.b16 %v95
  %v390 = vunpack.c.l.b16 %v96
  %v391 = vunpack.c.l.b16 %v97
  %v392 = vunpack.c.l.b16 %v98
  %v393 = vpack.c.b16 %v319, %v318
  %v394 = vpack.c.b16 %v321, %v320
  %v395 = vpack.c.b16 %v323, %v322
  %v396 = vpack.c.b16 %v325, %v324
  %v397 = vpack.c.b16 %v327, %v326
  %v398 = vpack.c.b16 %v329, %v328
  %v399 = vpack.c.b16 %v331, %v330
  %v400 = vpack.c.b16 %v333, %v332
  %v401 = vpack.c.b16 %v335, %v334
  %v402 = vpack.c.b16 %v337, %v336
  %v403 = vpack.c.b16 %v339, %v338
  %v404 = vpack.c.b16 %v341, %v340
  %v405 = vpack.c.b16 %v343, %v342
  %v406 = vpack.c.b16 %v345, %v344
  %v407 = vpack.c.b16 %v347, %v346
  %v408 = vpack.c.b16 %v349, %v348
  %v409 = vpack.c.b16 %v351, %v350
  %v410 = vpack.c.b16 %v353, %v352
  %v411 = vpack.c.b16 %v355, %v354
  %v412 = vpack.c.b16 %v357, %v356
  %v413 = vpack.c.b16 %v359, %v358
  %v414 = vpack.c.b16 %v361, %v360
  %v415 = vpack.c.b16 %v363, %v362
  %v416 = vpack.c.b16 %v365, %v364
  %v417 = vpack.c.b16 %v367, %v366
  %v418 = vpack.c.b16 %v369, %v368
  %v419 = vpack.c.b16 %v371, %v370
  %v420 = vpack.c.b16 %v373, %v372
  %v421 = vpack.c.b16 %v375, %v374
  %v422 = vpack.c.b16 %v377, %v376
  %v423 = vpack.c.b16 %v379, %v378
  %v424 = vpack.c.b16 %v381, %v380
  %v425 = vpack.c.b16 %v383, %v382
  %v426 = vpack.c.b16 %v385, %v384
  %v427 = vpack.c.b16 %v387, %v386
  %v428 = vpack.c.b16 %v389, %v388
  %v429 = vpack.c.b16 %v391, %v390
  %v430 = vpack.c.b16 %v392, %v392
  %vm468 = vcmask 719872
  %v470 = vsel %vm468, %v202, 0
  %v473 = vsel %vm468, %v207, 0
  %v476 = vsel %vm468, %v212, 0
  %v479 = vsel %vm468, %v217, 0
  %v482 = vsel %vm468, %v222, 0
  %vm484 = vcmask 1043456
  %v486 = vsel %vm484, %v430, 0
  %488 = vmatprep.subr.bf16.mxu0 0
  %489 = vmatpush1.bf16.msra.mxu0 %v400
  %490 = vmatprep.subr.bf16.mxu0 0
  %491 = vmatpush1.bf16.msra.mxu0 %v399
  %492 = vmatprep.subr.bf16.mxu0 0
  %493 = vmatpush1.bf16.msra.mxu0 %v398
  %494 = vmatprep.subr.bf16.mxu0 0
  %495 = vmatpush1.bf16.msra.mxu0 %v397
  %496 = vmatprep.subr.bf16.mxu0 0
  %497 = vmatpush1.bf16.msra.mxu0 %v396
  %498 = vmatprep.subr.bf16.mxu0 0
  %499 = vmatpush1.bf16.msra.mxu0 %v395
  %500 = vmatprep.subr.bf16.mxu0 0
  %501 = vmatpush1.bf16.msra.mxu0 %v394
  %502 = vmatprep.subr.bf16.mxu0 0
  %503 = vmatpush1.bf16.msra.mxu0 %v393
  %504 = vmatprep.subr.bf16.mxu0 0
  %505 = vmatpush2.bf16.msra.mxu0 %v408
  %506 = vmatprep.subr.bf16.mxu0 0
  %507 = vmatpush2.bf16.msra.mxu0 %v407
  %508 = vmatprep.subr.bf16.mxu0 0
  %509 = vmatpush2.bf16.msra.mxu0 %v406
  %510 = vmatprep.subr.bf16.mxu0 0
  %511 = vmatpush2.bf16.msra.mxu0 %v405
  %512 = vmatprep.subr.bf16.mxu0 0
  %513 = vmatpush2.bf16.msra.mxu0 %v404
  %514 = vmatprep.subr.bf16.mxu0 0
  %515 = vmatpush2.bf16.msra.mxu0 %v403
  %516 = vmatprep.subr.bf16.mxu0 0
  %517 = vmatpush2.bf16.msra.mxu0 %v402
  %518 = vmatprep.subr.bf16.mxu0 0
  %519 = vmatpush2.bf16.msra.mxu0 %v401
  %520 = vmatprep.mubr.bf16.mxu0 %v199
  %521 = vmatmul.mubr.bf16.gmra.mxu0 %v198
  %v522 = vpop.f32.mrf.mxu0
  %v523 = vadd.f32 0.0, %v522
  %v524 = vpop.f32.mrf.mxu0
  %v525 = vpop.f32.mrf.mxu0
  %v526 = vadd.f32 0.0, %v525
  %v527 = vpop.f32.mrf.mxu0
  %528 = vmatprep.mubr.bf16.mxu0 %v204
  %529 = vmatmul.mubr.bf16.gmra.mxu0 %v203
  %v530 = vpop.f32.mrf.mxu0
  %v531 = vadd.f32 0.0, %v530
  %v532 = vpop.f32.mrf.mxu0
  %v533 = vpop.f32.mrf.mxu0
  %v534 = vadd.f32 0.0, %v533
  %v535 = vpop.f32.mrf.mxu0
  %536 = vmatprep.mubr.bf16.mxu0 %v209
  %537 = vmatmul.mubr.bf16.gmra.mxu0 %v208
  %v538 = vpop.f32.mrf.mxu0
  %v539 = vadd.f32 0.0, %v538
  %v540 = vpop.f32.mrf.mxu0
  %v541 = vpop.f32.mrf.mxu0
  %v542 = vadd.f32 0.0, %v541
  %v543 = vpop.f32.mrf.mxu0
  %544 = vmatprep.mubr.bf16.mxu0 %v214
  %545 = vmatmul.mubr.bf16.gmra.mxu0 %v213
  %v546 = vpop.f32.mrf.mxu0
  %v547 = vadd.f32 0.0, %v546
  %v548 = vpop.f32.mrf.mxu0
  %v549 = vpop.f32.mrf.mxu0
  %v550 = vadd.f32 0.0, %v549
  %v551 = vpop.f32.mrf.mxu0
  %552 = vmatprep.mubr.bf16.mxu0 %v219
  %553 = vmatmul.mubr.bf16.gmra.mxu0 %v218
  %v554 = vpop.f32.mrf.mxu0
  %v555 = vadd.f32 0.0, %v554
  %v556 = vpop.f32.mrf.mxu0
  %v557 = vpop.f32.mrf.mxu0
  %v558 = vpop.f32.mrf.mxu0
  %559 = vdwg.mxu0
  %560 = vmatprep.subr.bf16.mxu0 0
  %561 = vmatpush1.bf16.msra.mxu0 %v416
  %562 = vmatprep.subr.bf16.mxu0 0
  %563 = vmatpush1.bf16.msra.mxu0 %v415
  %564 = vmatprep.subr.bf16.mxu0 0
  %565 = vmatpush1.bf16.msra.mxu0 %v414
  %566 = vmatprep.subr.bf16.mxu0 0
  %567 = vmatpush1.bf16.msra.mxu0 %v413
  %568 = vmatprep.subr.bf16.mxu0 0
  %569 = vmatpush1.bf16.msra.mxu0 %v412
  %570 = vmatprep.subr.bf16.mxu0 0
  %571 = vmatpush1.bf16.msra.mxu0 %v411
  %572 = vmatprep.subr.bf16.mxu0 0
  %573 = vmatpush1.bf16.msra.mxu0 %v410
  %574 = vmatprep.subr.bf16.mxu0 0
  %575 = vmatpush1.bf16.msra.mxu0 %v409
  %576 = vmatprep.subr.bf16.mxu0 0
  %577 = vmatpush2.bf16.msra.mxu0 %v424
  %578 = vmatprep.subr.bf16.mxu0 0
  %579 = vmatpush2.bf16.msra.mxu0 %v423
  %580 = vmatprep.subr.bf16.mxu0 0
  %581 = vmatpush2.bf16.msra.mxu0 %v422
  %582 = vmatprep.subr.bf16.mxu0 0
  %583 = vmatpush2.bf16.msra.mxu0 %v421
  %584 = vmatprep.subr.bf16.mxu0 0
  %585 = vmatpush2.bf16.msra.mxu0 %v420
  %586 = vmatprep.subr.bf16.mxu0 0
  %587 = vmatpush2.bf16.msra.mxu0 %v419
  %588 = vmatprep.subr.bf16.mxu0 0
  %589 = vmatpush2.bf16.msra.mxu0 %v418
  %590 = vmatprep.subr.bf16.mxu0 0
  %591 = vmatpush2.bf16.msra.mxu0 %v417
  %592 = vmatprep.mubr.bf16.mxu0 %v201
  %593 = vmatmul.mubr.bf16.gmra.mxu0 %v200
  %v594 = vpop.f32.mrf.mxu0
  %v595 = vadd.f32 %v523, %v594
  %v596 = vpop.f32.mrf.mxu0
  %v597 = vpop.f32.mrf.mxu0
  %v598 = vadd.f32 %v526, %v597
  %v599 = vpop.f32.mrf.mxu0
  %600 = vmatprep.mubr.bf16.mxu0 %v206
  %601 = vmatmul.mubr.bf16.gmra.mxu0 %v205
  %v602 = vpop.f32.mrf.mxu0
  %v603 = vadd.f32 %v531, %v602
  %v604 = vpop.f32.mrf.mxu0
  %v605 = vpop.f32.mrf.mxu0
  %v606 = vadd.f32 %v534, %v605
  %v607 = vpop.f32.mrf.mxu0
  %608 = vmatprep.mubr.bf16.mxu0 %v211
  %609 = vmatmul.mubr.bf16.gmra.mxu0 %v210
  %v610 = vpop.f32.mrf.mxu0
  %v611 = vadd.f32 %v539, %v610
  %v612 = vpop.f32.mrf.mxu0
  %v613 = vpop.f32.mrf.mxu0
  %v614 = vadd.f32 %v542, %v613
  %v615 = vpop.f32.mrf.mxu0
  %616 = vmatprep.mubr.bf16.mxu0 %v216
  %617 = vmatmul.mubr.bf16.gmra.mxu0 %v215
  %v618 = vpop.f32.mrf.mxu0
  %v619 = vadd.f32 %v547, %v618
  %v620 = vpop.f32.mrf.mxu0
  %v621 = vpop.f32.mrf.mxu0
  %v622 = vadd.f32 %v550, %v621
  %v623 = vpop.f32.mrf.mxu0
  %624 = vmatprep.mubr.bf16.mxu0 %v221
  %625 = vmatmul.mubr.bf16.gmra.mxu0 %v220
  %v626 = vpop.f32.mrf.mxu0
  %v627 = vadd.f32 %v555, %v626
  %v628 = vpop.f32.mrf.mxu0
  %v629 = vpop.f32.mrf.mxu0
  %v630 = vpop.f32.mrf.mxu0
  %631 = vdwg.mxu0
  %632 = vmatprep.subr.bf16.mxu0 0
  %633 = vmatpush1.bf16.msra.mxu0 0
  %634 = vmatprep.subr.bf16.mxu0 0
  %635 = vmatpush1.bf16.msra.mxu0 0
  %636 = vmatprep.subr.bf16.mxu0 0
  %637 = vmatpush1.bf16.msra.mxu0 %v486
  %638 = vmatprep.subr.bf16.mxu0 0
  %639 = vmatpush1.bf16.msra.mxu0 %v429
  %640 = vmatprep.subr.bf16.mxu0 0
  %641 = vmatpush1.bf16.msra.mxu0 %v428
  %642 = vmatprep.subr.bf16.mxu0 0
  %643 = vmatpush1.bf16.msra.mxu0 %v427
  %644 = vmatprep.subr.bf16.mxu0 0
  %645 = vmatpush1.bf16.msra.mxu0 %v426
  %646 = vmatprep.subr.bf16.mxu0 0
  %647 = vmatpush1.bf16.msra.mxu0 %v425
  %648 = vmatprep.subr.bf16.mxu0 0
  %649 = vmatpush2.bf16.msra.mxu0 0
  %650 = vmatprep.subr.bf16.mxu0 0
  %651 = vmatpush2.bf16.msra.mxu0 0
  %652 = vmatprep.subr.bf16.mxu0 0
  %653 = vmatpush2.bf16.msra.mxu0 0
  %654 = vmatprep.subr.bf16.mxu0 0
  %655 = vmatpush2.bf16.msra.mxu0 0
  %656 = vmatprep.subr.bf16.mxu0 0
  %657 = vmatpush2.bf16.msra.mxu0 0
  %658 = vmatprep.subr.bf16.mxu0 0
  %659 = vmatpush2.bf16.msra.mxu0 0
  %660 = vmatprep.subr.bf16.mxu0 0
  %661 = vmatpush2.bf16.msra.mxu0 0
  %662 = vmatprep.subr.bf16.mxu0 0
  %663 = vmatpush2.bf16.msra.mxu0 0
  %664 = vmatprep.mubr.bf16.mxu0 0
  %665 = vmatmul.mubr.bf16.gmra.mxu0 %v470
  %v666 = vpop.f32.mrf.mxu0
  %v667 = vadd.f32 %v595, %v666
  %v668 = vpop.f32.mrf.mxu0
  %v669 = vpop.f32.mrf.mxu0
  %v670 = vadd.f32 %v598, %v669
  %v671 = vpop.f32.mrf.mxu0
  %672 = vmatprep.mubr.bf16.mxu0 0
  %673 = vmatmul.mubr.bf16.gmra.mxu0 %v473
  %v674 = vpop.f32.mrf.mxu0
  %v675 = vadd.f32 %v603, %v674
  %v676 = vpop.f32.mrf.mxu0
  %v677 = vpop.f32.mrf.mxu0
  %v678 = vadd.f32 %v606, %v677
  %v679 = vpop.f32.mrf.mxu0
  %680 = vmatprep.mubr.bf16.mxu0 0
  %681 = vmatmul.mubr.bf16.gmra.mxu0 %v476
  %v682 = vpop.f32.mrf.mxu0
  %v683 = vadd.f32 %v611, %v682
  %v684 = vpop.f32.mrf.mxu0
  %v685 = vpop.f32.mrf.mxu0
  %v686 = vadd.f32 %v614, %v685
  %v687 = vpop.f32.mrf.mxu0
  %688 = vmatprep.mubr.bf16.mxu0 0
  %689 = vmatmul.mubr.bf16.gmra.mxu0 %v479
  %v690 = vpop.f32.mrf.mxu0
  %v691 = vadd.f32 %v619, %v690
  %v692 = vpop.f32.mrf.mxu0
  %v693 = vpop.f32.mrf.mxu0
  %v694 = vadd.f32 %v622, %v693
  %v695 = vpop.f32.mrf.mxu0
  %696 = vmatprep.mubr.bf16.mxu0 0
  %697 = vmatmul.mubr.bf16.gmra.mxu0 %v482
  %v698 = vpop.f32.mrf.mxu0
  %v699 = vadd.f32 %v627, %v698
  %v700 = vpop.f32.mrf.mxu0
  %v701 = vpop.f32.mrf.mxu0
  %v702 = vpop.f32.mrf.mxu0
  %703 = vdwg.mxu0
  %v704 = vld [vmem:[%s1] sm:$0xff]
  %v705 = vld [vmem:[%s1 + $0x8] sm:$0xff]
  %v706 = vld [vmem:[%s1 + $0x10] sm:$0xf]
  %v707 = vld [vmem:[%s1 + $0x14] sm:$0xff]
  %v708 = vld [vmem:[%s1 + $0x1c] sm:$0xff]
  %v709 = vld [vmem:[%s1 + $0x24] sm:$0xf]
  %v710 = vld [vmem:[%s1 + $0x28] sm:$0xff]
  %v711 = vld [vmem:[%s1 + $0x30] sm:$0xff]
  %v712 = vld [vmem:[%s1 + $0x38] sm:$0xf]
  %v713 = vld [vmem:[%s1 + $0x3c] sm:$0xff]
  %v714 = vld [vmem:[%s1 + $0x44] sm:$0xff]
  %v715 = vld [vmem:[%s1 + $0x4c] sm:$0xf]
  %v716 = vld [vmem:[%s1 + $0x50] sm:$0xff]
  %v717 = vld [vmem:[%s1 + $0x58] sm:$0xff]
  %v718 = vld [vmem:[%s1 + $0x60] sm:$0xf]
  %v719 = vld [vmem:[%s1 + $0x64] sm:$0xff]
  %v720 = vld [vmem:[%s1 + $0x6c] sm:$0xff]
  %v721 = vld [vmem:[%s1 + $0x74] sm:$0xf]
  %v722 = vld [vmem:[%s1 + $0x78] sm:$0xff]
  %v723 = vld [vmem:[%s1 + $0x80] sm:$0xff]
  %v724 = vld [vmem:[%s1 + $0x88] sm:$0xf]
  %v725 = vld [vmem:[%s1 + $0x8c] sm:$0xff]
  %v726 = vld [vmem:[%s1 + $0x94] sm:$0xff]
  %v727 = vld [vmem:[%s1 + $0x9c] sm:$0xf]
  %v728 = vld [vmem:[%s1 + $0xa0] sm:$0xff]
  %v729 = vld [vmem:[%s1 + $0xa8] sm:$0xff]
  %v730 = vld [vmem:[%s1 + $0xb0] sm:$0xf]
  %v758 = vunpack.c.l.b16 %v704
  %v759 = vunpack.c.h.b16 %v704
  %v760 = vunpack.c.l.b16 %v705
  %v761 = vunpack.c.h.b16 %v705
  %v762 = vunpack.c.l.b16 %v706
  %v763 = vunpack.c.l.b16 %v707
  %v764 = vunpack.c.h.b16 %v707
  %v765 = vunpack.c.l.b16 %v708
  %v766 = vunpack.c.h.b16 %v708
  %v767 = vunpack.c.l.b16 %v709
  %v768 = vunpack.c.l.b16 %v710
  %v769 = vunpack.c.h.b16 %v710
  %v770 = vunpack.c.l.b16 %v711
  %v771 = vunpack.c.h.b16 %v711
  %v772 = vunpack.c.l.b16 %v712
  %v773 = vunpack.c.l.b16 %v713
  %v774 = vunpack.c.h.b16 %v713
  %v775 = vunpack.c.l.b16 %v714
  %v776 = vunpack.c.h.b16 %v714
  %v777 = vunpack.c.l.b16 %v715
  %v778 = vunpack.c.l.b16 %v716
  %v779 = vunpack.c.h.b16 %v716
  %v780 = vunpack.c.l.b16 %v717
  %v781 = vunpack.c.h.b16 %v717
  %v782 = vunpack.c.l.b16 %v718
  %v783 = vunpack.c.l.b16 %v719
  %v784 = vunpack.c.h.b16 %v719
  %v785 = vunpack.c.l.b16 %v720
  %v786 = vunpack.c.h.b16 %v720
  %v787 = vunpack.c.l.b16 %v721
  %v788 = vunpack.c.l.b16 %v722
  %v789 = vunpack.c.h.b16 %v722
  %v790 = vunpack.c.l.b16 %v723
  %v791 = vunpack.c.h.b16 %v723
  %v792 = vunpack.c.l.b16 %v724
  %v793 = vunpack.c.l.b16 %v725
  %v794 = vunpack.c.h.b16 %v725
  %v795 = vunpack.c.l.b16 %v726
  %v796 = vunpack.c.h.b16 %v726
  %v797 = vunpack.c.l.b16 %v727
  %v798 = vunpack.c.l.b16 %v728
  %v799 = vunpack.c.h.b16 %v728
  %v800 = vunpack.c.l.b16 %v729
  %v801 = vunpack.c.h.b16 %v729
  %v802 = vunpack.c.l.b16 %v730
  %v803 = vpack.c.b16 %v763, %v758
  %v804 = vpack.c.b16 %v764, %v759
  %v805 = vpack.c.b16 %v765, %v760
  %v806 = vpack.c.b16 %v766, %v761
  %v807 = vpack.c.b16 %v767, %v762
  %v808 = vpack.c.b16 %v773, %v768
  %v809 = vpack.c.b16 %v774, %v769
  %v810 = vpack.c.b16 %v775, %v770
  %v811 = vpack.c.b16 %v776, %v771
  %v812 = vpack.c.b16 %v777, %v772
  %v813 = vpack.c.b16 %v783, %v778
  %v814 = vpack.c.b16 %v784, %v779
  %v815 = vpack.c.b16 %v785, %v780
  %v816 = vpack.c.b16 %v786, %v781
  %v817 = vpack.c.b16 %v787, %v782
  %v818 = vpack.c.b16 %v793, %v788
  %v819 = vpack.c.b16 %v794, %v789
  %v820 = vpack.c.b16 %v795, %v790
  %v821 = vpack.c.b16 %v796, %v791
  %v822 = vpack.c.b16 %v797, %v792
  %v823 = vpack.c.b16 %v798, %v798
  %v824 = vpack.c.b16 %v799, %v799
  %v825 = vpack.c.b16 %v800, %v800
  %v826 = vpack.c.b16 %v801, %v801
  %v827 = vpack.c.b16 %v802, %v802
  %v849 = vsel %vm468, %v807, 0
  %v852 = vsel %vm468, %v812, 0
  %v855 = vsel %vm468, %v817, 0
  %v858 = vsel %vm468, %v822, 0
  %v861 = vsel %vm468, %v827, 0
  %863 = vmatprep.subr.bf16.mxu0 0
  %864 = vmatpush1.bf16.msra.mxu0 %v400
  %865 = vmatprep.subr.bf16.mxu0 0
  %866 = vmatpush1.bf16.msra.mxu0 %v399
  %867 = vmatprep.subr.bf16.mxu0 0
  %868 = vmatpush1.bf16.msra.mxu0 %v398
  %869 = vmatprep.subr.bf16.mxu0 0
  %870 = vmatpush1.bf16.msra.mxu0 %v397
  %871 = vmatprep.subr.bf16.mxu0 0
  %872 = vmatpush1.bf16.msra.mxu0 %v396
  %873 = vmatprep.subr.bf16.mxu0 0
  %874 = vmatpush1.bf16.msra.mxu0 %v395
  %875 = vmatprep.subr.bf16.mxu0 0
  %876 = vmatpush1.bf16.msra.mxu0 %v394
  %877 = vmatprep.subr.bf16.mxu0 0
  %878 = vmatpush1.bf16.msra.mxu0 %v393
  %879 = vmatprep.subr.bf16.mxu0 0
  %880 = vmatpush2.bf16.msra.mxu0 %v408
  %881 = vmatprep.subr.bf16.mxu0 0
  %882 = vmatpush2.bf16.msra.mxu0 %v407
  %883 = vmatprep.subr.bf16.mxu0 0
  %884 = vmatpush2.bf16.msra.mxu0 %v406
  %885 = vmatprep.subr.bf16.mxu0 0
  %886 = vmatpush2.bf16.msra.mxu0 %v405
  %887 = vmatprep.subr.bf16.mxu0 0
  %888 = vmatpush2.bf16.msra.mxu0 %v404
  %889 = vmatprep.subr.bf16.mxu0 0
  %890 = vmatpush2.bf16.msra.mxu0 %v403
  %891 = vmatprep.subr.bf16.mxu0 0
  %892 = vmatpush2.bf16.msra.mxu0 %v402
  %893 = vmatprep.subr.bf16.mxu0 0
  %894 = vmatpush2.bf16.msra.mxu0 %v401
  %895 = vmatprep.mubr.bf16.mxu0 %v804
  %896 = vmatmul.mubr.bf16.gmra.mxu0 %v803
  %v897 = vpop.f32.mrf.mxu0
  %v898 = vadd.f32 0.0, %v897
  %v899 = vpop.f32.mrf.mxu0
  %v900 = vpop.f32.mrf.mxu0
  %v901 = vadd.f32 0.0, %v900
  %v902 = vpop.f32.mrf.mxu0
  %903 = vmatprep.mubr.bf16.mxu0 %v809
  %904 = vmatmul.mubr.bf16.gmra.mxu0 %v808
  %v905 = vpop.f32.mrf.mxu0
  %v906 = vadd.f32 0.0, %v905
  %v907 = vpop.f32.mrf.mxu0
  %v908 = vpop.f32.mrf.mxu0
  %v909 = vadd.f32 0.0, %v908
  %v910 = vpop.f32.mrf.mxu0
  %911 = vmatprep.mubr.bf16.mxu0 %v814
  %912 = vmatmul.mubr.bf16.gmra.mxu0 %v813
  %v913 = vpop.f32.mrf.mxu0
  %v914 = vadd.f32 0.0, %v913
  %v915 = vpop.f32.mrf.mxu0
  %v916 = vpop.f32.mrf.mxu0
  %v917 = vadd.f32 0.0, %v916
  %v918 = vpop.f32.mrf.mxu0
  %919 = vmatprep.mubr.bf16.mxu0 %v819
  %920 = vmatmul.mubr.bf16.gmra.mxu0 %v818
  %v921 = vpop.f32.mrf.mxu0
  %v922 = vadd.f32 0.0, %v921
  %v923 = vpop.f32.mrf.mxu0
  %v924 = vpop.f32.mrf.mxu0
  %v925 = vadd.f32 0.0, %v924
  %v926 = vpop.f32.mrf.mxu0
  %927 = vmatprep.mubr.bf16.mxu0 %v824
  %928 = vmatmul.mubr.bf16.gmra.mxu0 %v823
  %v929 = vpop.f32.mrf.mxu0
  %v930 = vadd.f32 0.0, %v929
  %v931 = vpop.f32.mrf.mxu0
  %v932 = vpop.f32.mrf.mxu0
  %v933 = vpop.f32.mrf.mxu0
  %934 = vdwg.mxu0
  %935 = vmatprep.subr.bf16.mxu0 0
  %936 = vmatpush1.bf16.msra.mxu0 %v416
  %937 = vmatprep.subr.bf16.mxu0 0
  %938 = vmatpush1.bf16.msra.mxu0 %v415
  %939 = vmatprep.subr.bf16.mxu0 0
  %940 = vmatpush1.bf16.msra.mxu0 %v414
  %941 = vmatprep.subr.bf16.mxu0 0
  %942 = vmatpush1.bf16.msra.mxu0 %v413
  %943 = vmatprep.subr.bf16.mxu0 0
  %944 = vmatpush1.bf16.msra.mxu0 %v412
  %945 = vmatprep.subr.bf16.mxu0 0
  %946 = vmatpush1.bf16.msra.mxu0 %v411
  %947 = vmatprep.subr.bf16.mxu0 0
  %948 = vmatpush1.bf16.msra.mxu0 %v410
  %949 = vmatprep.subr.bf16.mxu0 0
  %950 = vmatpush1.bf16.msra.mxu0 %v409
  %951 = vmatprep.subr.bf16.mxu0 0
  %952 = vmatpush2.bf16.msra.mxu0 %v424
  %953 = vmatprep.subr.bf16.mxu0 0
  %954 = vmatpush2.bf16.msra.mxu0 %v423
  %955 = vmatprep.subr.bf16.mxu0 0
  %956 = vmatpush2.bf16.msra.mxu0 %v422
  %957 = vmatprep.subr.bf16.mxu0 0
  %958 = vmatpush2.bf16.msra.mxu0 %v421
  %959 = vmatprep.subr.bf16.mxu0 0
  %960 = vmatpush2.bf16.msra.mxu0 %v420
  %961 = vmatprep.subr.bf16.mxu0 0
  %962 = vmatpush2.bf16.msra.mxu0 %v419
  %963 = vmatprep.subr.bf16.mxu0 0
  %964 = vmatpush2.bf16.msra.mxu0 %v418
  %965 = vmatprep.subr.bf16.mxu0 0
  %966 = vmatpush2.bf16.msra.mxu0 %v417
  %967 = vmatprep.mubr.bf16.mxu0 %v806
  %968 = vmatmul.mubr.bf16.gmra.mxu0 %v805
  %v969 = vpop.f32.mrf.mxu0
  %v970 = vadd.f32 %v898, %v969
  %v971 = vpop.f32.mrf.mxu0
  %v972 = vpop.f32.mrf.mxu0
  %v973 = vadd.f32 %v901, %v972
  %v974 = vpop.f32.mrf.mxu0
  %975 = vmatprep.mubr.bf16.mxu0 %v811
  %976 = vmatmul.mubr.bf16.gmra.mxu0 %v810
  %v977 = vpop.f32.mrf.mxu0
  %v978 = vadd.f32 %v906, %v977
  %v979 = vpop.f32.mrf.mxu0
  %v980 = vpop.f32.mrf.mxu0
  %v981 = vadd.f32 %v909, %v980
  %v982 = vpop.f32.mrf.mxu0
  %983 = vmatprep.mubr.bf16.mxu0 %v816
  %984 = vmatmul.mubr.bf16.gmra.mxu0 %v815
  %v985 = vpop.f32.mrf.mxu0
  %v986 = vadd.f32 %v914, %v985
  %v987 = vpop.f32.mrf.mxu0
  %v988 = vpop.f32.mrf.mxu0
  %v989 = vadd.f32 %v917, %v988
  %v990 = vpop.f32.mrf.mxu0
  %991 = vmatprep.mubr.bf16.mxu0 %v821
  %992 = vmatmul.mubr.bf16.gmra.mxu0 %v820
  %v993 = vpop.f32.mrf.mxu0
  %v994 = vadd.f32 %v922, %v993
  %v995 = vpop.f32.mrf.mxu0
  %v996 = vpop.f32.mrf.mxu0
  %v997 = vadd.f32 %v925, %v996
  %v998 = vpop.f32.mrf.mxu0
  %999 = vmatprep.mubr.bf16.mxu0 %v826
  %1000 = vmatmul.mubr.bf16.gmra.mxu0 %v825
  %v1001 = vpop.f32.mrf.mxu0
  %v1002 = vadd.f32 %v930, %v1001
  %v1003 = vpop.f32.mrf.mxu0
  %v1004 = vpop.f32.mrf.mxu0
  %v1005 = vpop.f32.mrf.mxu0
  %1006 = vdwg.mxu0
  %1007 = vmatprep.subr.bf16.mxu0 0
  %1008 = vmatpush1.bf16.msra.mxu0 0
  %1009 = vmatprep.subr.bf16.mxu0 0
  %1010 = vmatpush1.bf16.msra.mxu0 0
  %1011 = vmatprep.subr.bf16.mxu0 0
  %1012 = vmatpush1.bf16.msra.mxu0 %v486
  %1013 = vmatprep.subr.bf16.mxu0 0
  %1014 = vmatpush1.bf16.msra.mxu0 %v429
  %1015 = vmatprep.subr.bf16.mxu0 0
  %1016 = vmatpush1.bf16.msra.mxu0 %v428
  %1017 = vmatprep.subr.bf16.mxu0 0
  %1018 = vmatpush1.bf16.msra.mxu0 %v427
  %1019 = vmatprep.subr.bf16.mxu0 0
  %1020 = vmatpush1.bf16.msra.mxu0 %v426
  %1021 = vmatprep.subr.bf16.mxu0 0
  %1022 = vmatpush1.bf16.msra.mxu0 %v425
  %1023 = vmatprep.subr.bf16.mxu0 0
  %1024 = vmatpush2.bf16.msra.mxu0 0
  %1025 = vmatprep.subr.bf16.mxu0 0
  %1026 = vmatpush2.bf16.msra.mxu0 0
  %1027 = vmatprep.subr.bf16.mxu0 0
  %1028 = vmatpush2.bf16.msra.mxu0 0
  %1029 = vmatprep.subr.bf16.mxu0 0
  %1030 = vmatpush2.bf16.msra.mxu0 0
  %1031 = vmatprep.subr.bf16.mxu0 0
  %1032 = vmatpush2.bf16.msra.mxu0 0
  %1033 = vmatprep.subr.bf16.mxu0 0
  %1034 = vmatpush2.bf16.msra.mxu0 0
  %1035 = vmatprep.subr.bf16.mxu0 0
  %1036 = vmatpush2.bf16.msra.mxu0 0
  %1037 = vmatprep.subr.bf16.mxu0 0
  %1038 = vmatpush2.bf16.msra.mxu0 0
  %1039 = vmatprep.mubr.bf16.mxu0 0
  %1040 = vmatmul.mubr.bf16.gmra.mxu0 %v849
  %v1041 = vpop.f32.mrf.mxu0
  %v1042 = vadd.f32 %v970, %v1041
  %v1043 = vpop.f32.mrf.mxu0
  %v1044 = vpop.f32.mrf.mxu0
  %v1045 = vadd.f32 %v973, %v1044
  %v1046 = vpop.f32.mrf.mxu0
  %1047 = vmatprep.mubr.bf16.mxu0 0
  %1048 = vmatmul.mubr.bf16.gmra.mxu0 %v852
  %v1049 = vpop.f32.mrf.mxu0
  %v1050 = vadd.f32 %v978, %v1049
  %v1051 = vpop.f32.mrf.mxu0
  %v1052 = vpop.f32.mrf.mxu0
  %v1053 = vadd.f32 %v981, %v1052
  %v1054 = vpop.f32.mrf.mxu0
  %1055 = vmatprep.mubr.bf16.mxu0 0
  %1056 = vmatmul.mubr.bf16.gmra.mxu0 %v855
  %v1057 = vpop.f32.mrf.mxu0
  %v1058 = vadd.f32 %v986, %v1057
  %v1059 = vpop.f32.mrf.mxu0
  %v1060 = vpop.f32.mrf.mxu0
  %v1061 = vadd.f32 %v989, %v1060
  %v1062 = vpop.f32.mrf.mxu0
  %1063 = vmatprep.mubr.bf16.mxu0 0
  %1064 = vmatmul.mubr.bf16.gmra.mxu0 %v858
  %v1065 = vpop.f32.mrf.mxu0
  %v1066 = vadd.f32 %v994, %v1065
  %v1067 = vpop.f32.mrf.mxu0
  %v1068 = vpop.f32.mrf.mxu0
  %v1069 = vadd.f32 %v997, %v1068
  %v1070 = vpop.f32.mrf.mxu0
  %1071 = vmatprep.mubr.bf16.mxu0 0
  %1072 = vmatmul.mubr.bf16.gmra.mxu0 %v861
  %v1073 = vpop.f32.mrf.mxu0
  %v1074 = vadd.f32 %v1002, %v1073
  %v1075 = vpop.f32.mrf.mxu0
  %v1076 = vpop.f32.mrf.mxu0
  %v1077 = vpop.f32.mrf.mxu0
  %1078 = vdwg.mxu0
  %v1079 = vmax.f32 %v667, %v1042
  %v1080 = vmax.f32 %v670, %v1045
  %v1081 = vmax.f32 %v675, %v1050
  %v1082 = vmax.f32 %v678, %v1053
  %v1083 = vmax.f32 %v683, %v1058
  %v1084 = vmax.f32 %v686, %v1061
  %v1085 = vmax.f32 %v691, %v1066
  %v1086 = vmax.f32 %v694, %v1069
  %v1087 = vmax.f32 %v699, %v1074
  %v1088 = vld [vmem:[%s2] sm:$0xff]
  %v1089 = vld [vmem:[%s2 + $0x8] sm:$0xff]
  %v1090 = vld [vmem:[%s2 + $0x10] sm:$0xf]
  %v1091 = vld [vmem:[%s2 + $0x14] sm:$0xff]
  %v1092 = vld [vmem:[%s2 + $0x1c] sm:$0xff]
  %v1093 = vld [vmem:[%s2 + $0x24] sm:$0xf]
  %v1094 = vld [vmem:[%s2 + $0x28] sm:$0xff]
  %v1095 = vld [vmem:[%s2 + $0x30] sm:$0xff]
  %v1096 = vld [vmem:[%s2 + $0x38] sm:$0xf]
  %v1097 = vld [vmem:[%s2 + $0x3c] sm:$0xff]
  %v1098 = vld [vmem:[%s2 + $0x44] sm:$0xff]
  %v1099 = vld [vmem:[%s2 + $0x4c] sm:$0xf]
  %v1100 = vld [vmem:[%s2 + $0x50] sm:$0xff]
  %v1101 = vld [vmem:[%s2 + $0x58] sm:$0xff]
  %v1102 = vld [vmem:[%s2 + $0x60] sm:$0xf]
  %v1103 = vld [vmem:[%s2 + $0x64] sm:$0xff]
  %v1104 = vld [vmem:[%s2 + $0x6c] sm:$0xff]
  %v1105 = vld [vmem:[%s2 + $0x74] sm:$0xf]
  %v1106 = vld [vmem:[%s2 + $0x78] sm:$0xff]
  %v1107 = vld [vmem:[%s2 + $0x80] sm:$0xff]
  %v1108 = vld [vmem:[%s2 + $0x88] sm:$0xf]
  %v1109 = vld [vmem:[%s2 + $0x8c] sm:$0xff]
  %v1110 = vld [vmem:[%s2 + $0x94] sm:$0xff]
  %v1111 = vld [vmem:[%s2 + $0x9c] sm:$0xf]
  %v1112 = vld [vmem:[%s2 + $0xa0] sm:$0xff]
  %v1113 = vld [vmem:[%s2 + $0xa8] sm:$0xff]
  %v1114 = vld [vmem:[%s2 + $0xb0] sm:$0xf]
  %v1142 = vunpack.c.l.b16 %v1088
  %v1143 = vunpack.c.h.b16 %v1088
  %v1144 = vunpack.c.l.b16 %v1089
  %v1145 = vunpack.c.h.b16 %v1089
  %v1146 = vunpack.c.l.b16 %v1090
  %v1147 = vunpack.c.l.b16 %v1091
  %v1148 = vunpack.c.h.b16 %v1091
  %v1149 = vunpack.c.l.b16 %v1092
  %v1150 = vunpack.c.h.b16 %v1092
  %v1151 = vunpack.c.l.b16 %v1093
  %v1152 = vunpack.c.l.b16 %v1094
  %v1153 = vunpack.c.h.b16 %v1094
  %v1154 = vunpack.c.l.b16 %v1095
  %v1155 = vunpack.c.h.b16 %v1095
  %v1156 = vunpack.c.l.b16 %v1096
  %v1157 = vunpack.c.l.b16 %v1097
  %v1158 = vunpack.c.h.b16 %v1097
  %v1159 = vunpack.c.l.b16 %v1098
  %v1160 = vunpack.c.h.b16 %v1098
  %v1161 = vunpack.c.l.b16 %v1099
  %v1162 = vunpack.c.l.b16 %v1100
  %v1163 = vunpack.c.h.b16 %v1100
  %v1164 = vunpack.c.l.b16 %v1101
  %v1165 = vunpack.c.h.b16 %v1101
  %v1166 = vunpack.c.l.b16 %v1102
  %v1167 = vunpack.c.l.b16 %v1103
  %v1168 = vunpack.c.h.b16 %v1103
  %v1169 = vunpack.c.l.b16 %v1104
  %v1170 = vunpack.c.h.b16 %v1104
  %v1171 = vunpack.c.l.b16 %v1105
  %v1172 = vunpack.c.l.b16 %v1106
  %v1173 = vunpack.c.h.b16 %v1106
  %v1174 = vunpack.c.l.b16 %v1107
  %v1175 = vunpack.c.h.b16 %v1107
  %v1176 = vunpack.c.l.b16 %v1108
  %v1177 = vunpack.c.l.b16 %v1109
  %v1178 = vunpack.c.h.b16 %v1109
  %v1179 = vunpack.c.l.b16 %v1110
  %v1180 = vunpack.c.h.b16 %v1110
  %v1181 = vunpack.c.l.b16 %v1111
  %v1182 = vunpack.c.l.b16 %v1112
  %v1183 = vunpack.c.h.b16 %v1112
  %v1184 = vunpack.c.l.b16 %v1113
  %v1185 = vunpack.c.h.b16 %v1113
  %v1186 = vunpack.c.l.b16 %v1114
  %v1187 = vpack.c.b16 %v1147, %v1142
  %v1188 = vpack.c.b16 %v1148, %v1143
  %v1189 = vpack.c.b16 %v1149, %v1144
  %v1190 = vpack.c.b16 %v1150, %v1145
  %v1191 = vpack.c.b16 %v1151, %v1146
  %v1192 = vpack.c.b16 %v1157, %v1152
  %v1193 = vpack.c.b16 %v1158, %v1153
  %v1194 = vpack.c.b16 %v1159, %v1154
  %v1195 = vpack.c.b16 %v1160, %v1155
  %v1196 = vpack.c.b16 %v1161, %v1156
  %v1197 = vpack.c.b16 %v1167, %v1162
  %v1198 = vpack.c.b16 %v1168, %v1163
  %v1199 = vpack.c.b16 %v1169, %v1164
  %v1200 = vpack.c.b16 %v1170, %v1165
  %v1201 = vpack.c.b16 %v1171, %v1166
  %v1202 = vpack.c.b16 %v1177, %v1172
  %v1203 = vpack.c.b16 %v1178, %v1173
  %v1204 = vpack.c.b16 %v1179, %v1174
  %v1205 = vpack.c.b16 %v1180, %v1175
  %v1206 = vpack.c.b16 %v1181, %v1176
  %v1207 = vpack.c.b16 %v1182, %v1182
  %v1208 = vpack.c.b16 %v1183, %v1183
  %v1209 = vpack.c.b16 %v1184, %v1184
  %v1210 = vpack.c.b16 %v1185, %v1185
  %v1211 = vpack.c.b16 %v1186, %v1186
  %v1233 = vsel %vm468, %v1191, 0
  %v1236 = vsel %vm468, %v1196, 0
  %v1239 = vsel %vm468, %v1201, 0
  %v1242 = vsel %vm468, %v1206, 0
  %v1245 = vsel %vm468, %v1211, 0
  %1247 = vmatprep.subr.bf16.mxu0 0
  %1248 = vmatpush1.bf16.msra.mxu0 %v400
  %1249 = vmatprep.subr.bf16.mxu0 0
  %1250 = vmatpush1.bf16.msra.mxu0 %v399
  %1251 = vmatprep.subr.bf16.mxu0 0
  %1252 = vmatpush1.bf16.msra.mxu0 %v398
  %1253 = vmatprep.subr.bf16.mxu0 0
  %1254 = vmatpush1.bf16.msra.mxu0 %v397
  %1255 = vmatprep.subr.bf16.mxu0 0
  %1256 = vmatpush1.bf16.msra.mxu0 %v396
  %1257 = vmatprep.subr.bf16.mxu0 0
  %1258 = vmatpush1.bf16.msra.mxu0 %v395
  %1259 = vmatprep.subr.bf16.mxu0 0
  %1260 = vmatpush1.bf16.msra.mxu0 %v394
  %1261 = vmatprep.subr.bf16.mxu0 0
  %1262 = vmatpush1.bf16.msra.mxu0 %v393
  %1263 = vmatprep.subr.bf16.mxu0 0
  %1264 = vmatpush2.bf16.msra.mxu0 %v408
  %1265 = vmatprep.subr.bf16.mxu0 0
  %1266 = vmatpush2.bf16.msra.mxu0 %v407
  %1267 = vmatprep.subr.bf16.mxu0 0
  %1268 = vmatpush2.bf16.msra.mxu0 %v406
  %1269 = vmatprep.subr.bf16.mxu0 0
  %1270 = vmatpush2.bf16.msra.mxu0 %v405
  %1271 = vmatprep.subr.bf16.mxu0 0
  %1272 = vmatpush2.bf16.msra.mxu0 %v404
  %1273 = vmatprep.subr.bf16.mxu0 0
  %1274 = vmatpush2.bf16.msra.mxu0 %v403
  %1275 = vmatprep.subr.bf16.mxu0 0
  %1276 = vmatpush2.bf16.msra.mxu0 %v402
  %1277 = vmatprep.subr.bf16.mxu0 0
  %1278 = vmatpush2.bf16.msra.mxu0 %v401
  %1279 = vmatprep.mubr.bf16.mxu0 %v1188
  %1280 = vmatmul.mubr.bf16.gmra.mxu0 %v1187
  %v1281 = vpop.f32.mrf.mxu0
  %v1282 = vadd.f32 0.0, %v1281
  %v1283 = vpop.f32.mrf.mxu0
  %v1284 = vpop.f32.mrf.mxu0
  %v1285 = vadd.f32 0.0, %v1284
  %v1286 = vpop.f32.mrf.mxu0
  %1287 = vmatprep.mubr.bf16.mxu0 %v1193
  %1288 = vmatmul.mubr.bf16.gmra.mxu0 %v1192
  %v1289 = vpop.f32.mrf.mxu0
  %v1290 = vadd.f32 0.0, %v1289
  %v1291 = vpop.f32.mrf.mxu0
  %v1292 = vpop.f32.mrf.mxu0
  %v1293 = vadd.f32 0.0, %v1292
  %v1294 = vpop.f32.mrf.mxu0
  %1295 = vmatprep.mubr.bf16.mxu0 %v1198
  %1296 = vmatmul.mubr.bf16.gmra.mxu0 %v1197
  %v1297 = vpop.f32.mrf.mxu0
  %v1298 = vadd.f32 0.0, %v1297
  %v1299 = vpop.f32.mrf.mxu0
  %v1300 = vpop.f32.mrf.mxu0
  %v1301 = vadd.f32 0.0, %v1300
  %v1302 = vpop.f32.mrf.mxu0
  %1303 = vmatprep.mubr.bf16.mxu0 %v1203
  %1304 = vmatmul.mubr.bf16.gmra.mxu0 %v1202
  %v1305 = vpop.f32.mrf.mxu0
  %v1306 = vadd.f32 0.0, %v1305
  %v1307 = vpop.f32.mrf.mxu0
  %v1308 = vpop.f32.mrf.mxu0
  %v1309 = vadd.f32 0.0, %v1308
  %v1310 = vpop.f32.mrf.mxu0
  %1311 = vmatprep.mubr.bf16.mxu0 %v1208
  %1312 = vmatmul.mubr.bf16.gmra.mxu0 %v1207
  %v1313 = vpop.f32.mrf.mxu0
  %v1314 = vadd.f32 0.0, %v1313
  %v1315 = vpop.f32.mrf.mxu0
  %v1316 = vpop.f32.mrf.mxu0
  %v1317 = vpop.f32.mrf.mxu0
  %1318 = vdwg.mxu0
  %1319 = vmatprep.subr.bf16.mxu0 0
  %1320 = vmatpush1.bf16.msra.mxu0 %v416
  %1321 = vmatprep.subr.bf16.mxu0 0
  %1322 = vmatpush1.bf16.msra.mxu0 %v415
  %1323 = vmatprep.subr.bf16.mxu0 0
  %1324 = vmatpush1.bf16.msra.mxu0 %v414
  %1325 = vmatprep.subr.bf16.mxu0 0
  %1326 = vmatpush1.bf16.msra.mxu0 %v413
  %1327 = vmatprep.subr.bf16.mxu0 0
  %1328 = vmatpush1.bf16.msra.mxu0 %v412
  %1329 = vmatprep.subr.bf16.mxu0 0
  %1330 = vmatpush1.bf16.msra.mxu0 %v411
  %1331 = vmatprep.subr.bf16.mxu0 0
  %1332 = vmatpush1.bf16.msra.mxu0 %v410
  %1333 = vmatprep.subr.bf16.mxu0 0
  %1334 = vmatpush1.bf16.msra.mxu0 %v409
  %1335 = vmatprep.subr.bf16.mxu0 0
  %1336 = vmatpush2.bf16.msra.mxu0 %v424
  %1337 = vmatprep.subr.bf16.mxu0 0
  %1338 = vmatpush2.bf16.msra.mxu0 %v423
  %1339 = vmatprep.subr.bf16.mxu0 0
  %1340 = vmatpush2.bf16.msra.mxu0 %v422
  %1341 = vmatprep.subr.bf16.mxu0 0
  %1342 = vmatpush2.bf16.msra.mxu0 %v421
  %1343 = vmatprep.subr.bf16.mxu0 0
  %1344 = vmatpush2.bf16.msra.mxu0 %v420
  %1345 = vmatprep.subr.bf16.mxu0 0
  %1346 = vmatpush2.bf16.msra.mxu0 %v419
  %1347 = vmatprep.subr.bf16.mxu0 0
  %1348 = vmatpush2.bf16.msra.mxu0 %v418
  %1349 = vmatprep.subr.bf16.mxu0 0
  %1350 = vmatpush2.bf16.msra.mxu0 %v417
  %1351 = vmatprep.mubr.bf16.mxu0 %v1190
  %1352 = vmatmul.mubr.bf16.gmra.mxu0 %v1189
  %v1353 = vpop.f32.mrf.mxu0
  %v1354 = vadd.f32 %v1282, %v1353
  %v1355 = vpop.f32.mrf.mxu0
  %v1356 = vpop.f32.mrf.mxu0
  %v1357 = vadd.f32 %v1285, %v1356
  %v1358 = vpop.f32.mrf.mxu0
  %1359 = vmatprep.mubr.bf16.mxu0 %v1195
  %1360 = vmatmul.mubr.bf16.gmra.mxu0 %v1194
  %v1361 = vpop.f32.mrf.mxu0
  %v1362 = vadd.f32 %v1290, %v1361
  %v1363 = vpop.f32.mrf.mxu0
  %v1364 = vpop.f32.mrf.mxu0
  %v1365 = vadd.f32 %v1293, %v1364
  %v1366 = vpop.f32.mrf.mxu0
  %1367 = vmatprep.mubr.bf16.mxu0 %v1200
  %1368 = vmatmul.mubr.bf16.gmra.mxu0 %v1199
  %v1369 = vpop.f32.mrf.mxu0
  %v1370 = vadd.f32 %v1298, %v1369
  %v1371 = vpop.f32.mrf.mxu0
  %v1372 = vpop.f32.mrf.mxu0
  %v1373 = vadd.f32 %v1301, %v1372
  %v1374 = vpop.f32.mrf.mxu0
  %1375 = vmatprep.mubr.bf16.mxu0 %v1205
  %1376 = vmatmul.mubr.bf16.gmra.mxu0 %v1204
  %v1377 = vpop.f32.mrf.mxu0
  %v1378 = vadd.f32 %v1306, %v1377
  %v1379 = vpop.f32.mrf.mxu0
  %v1380 = vpop.f32.mrf.mxu0
  %v1381 = vadd.f32 %v1309, %v1380
  %v1382 = vpop.f32.mrf.mxu0
  %1383 = vmatprep.mubr.bf16.mxu0 %v1210
  %1384 = vmatmul.mubr.bf16.gmra.mxu0 %v1209
  %v1385 = vpop.f32.mrf.mxu0
  %v1386 = vadd.f32 %v1314, %v1385
  %v1387 = vpop.f32.mrf.mxu0
  %v1388 = vpop.f32.mrf.mxu0
  %v1389 = vpop.f32.mrf.mxu0
  %1390 = vdwg.mxu0
  %1391 = vmatprep.subr.bf16.mxu0 0
  %1392 = vmatpush1.bf16.msra.mxu0 0
  %1393 = vmatprep.subr.bf16.mxu0 0
  %1394 = vmatpush1.bf16.msra.mxu0 0
  %1395 = vmatprep.subr.bf16.mxu0 0
  %1396 = vmatpush1.bf16.msra.mxu0 %v486
  %1397 = vmatprep.subr.bf16.mxu0 0
  %1398 = vmatpush1.bf16.msra.mxu0 %v429
  %1399 = vmatprep.subr.bf16.mxu0 0
  %1400 = vmatpush1.bf16.msra.mxu0 %v428
  %1401 = vmatprep.subr.bf16.mxu0 0
  %1402 = vmatpush1.bf16.msra.mxu0 %v427
  %1403 = vmatprep.subr.bf16.mxu0 0
  %1404 = vmatpush1.bf16.msra.mxu0 %v426
  %1405 = vmatprep.subr.bf16.mxu0 0
  %1406 = vmatpush1.bf16.msra.mxu0 %v425
  %1407 = vmatprep.subr.bf16.mxu0 0
  %1408 = vmatpush2.bf16.msra.mxu0 0
  %1409 = vmatprep.subr.bf16.mxu0 0
  %1410 = vmatpush2.bf16.msra.mxu0 0
  %1411 = vmatprep.subr.bf16.mxu0 0
  %1412 = vmatpush2.bf16.msra.mxu0 0
  %1413 = vmatprep.subr.bf16.mxu0 0
  %1414 = vmatpush2.bf16.msra.mxu0 0
  %1415 = vmatprep.subr.bf16.mxu0 0
  %1416 = vmatpush2.bf16.msra.mxu0 0
  %1417 = vmatprep.subr.bf16.mxu0 0
  %1418 = vmatpush2.bf16.msra.mxu0 0
  %1419 = vmatprep.subr.bf16.mxu0 0
  %1420 = vmatpush2.bf16.msra.mxu0 0
  %1421 = vmatprep.subr.bf16.mxu0 0
  %1422 = vmatpush2.bf16.msra.mxu0 0
  %1423 = vmatprep.mubr.bf16.mxu0 0
  %1424 = vmatmul.mubr.bf16.gmra.mxu0 %v1233
  %v1425 = vpop.f32.mrf.mxu0
  %v1426 = vadd.f32 %v1354, %v1425
  %v1427 = vpop.f32.mrf.mxu0
  %v1428 = vpop.f32.mrf.mxu0
  %v1429 = vadd.f32 %v1357, %v1428
  %v1430 = vpop.f32.mrf.mxu0
  %1431 = vmatprep.mubr.bf16.mxu0 0
  %1432 = vmatmul.mubr.bf16.gmra.mxu0 %v1236
  %v1433 = vpop.f32.mrf.mxu0
  %v1434 = vadd.f32 %v1362, %v1433
  %v1435 = vpop.f32.mrf.mxu0
  %v1436 = vpop.f32.mrf.mxu0
  %v1437 = vadd.f32 %v1365, %v1436
  %v1438 = vpop.f32.mrf.mxu0
  %1439 = vmatprep.mubr.bf16.mxu0 0
  %1440 = vmatmul.mubr.bf16.gmra.mxu0 %v1239
  %v1441 = vpop.f32.mrf.mxu0
  %v1442 = vadd.f32 %v1370, %v1441
  %v1443 = vpop.f32.mrf.mxu0
  %v1444 = vpop.f32.mrf.mxu0
  %v1445 = vadd.f32 %v1373, %v1444
  %v1446 = vpop.f32.mrf.mxu0
  %1447 = vmatprep.mubr.bf16.mxu0 0
  %1448 = vmatmul.mubr.bf16.gmra.mxu0 %v1242
  %v1449 = vpop.f32.mrf.mxu0
  %v1450 = vadd.f32 %v1378, %v1449
  %v1451 = vpop.f32.mrf.mxu0
  %v1452 = vpop.f32.mrf.mxu0
  %v1453 = vadd.f32 %v1381, %v1452
  %v1454 = vpop.f32.mrf.mxu0
  %1455 = vmatprep.mubr.bf16.mxu0 0
  %1456 = vmatmul.mubr.bf16.gmra.mxu0 %v1245
  %v1457 = vpop.f32.mrf.mxu0
  %v1458 = vadd.f32 %v1386, %v1457
  %v1459 = vpop.f32.mrf.mxu0
  %v1460 = vpop.f32.mrf.mxu0
  %v1461 = vpop.f32.mrf.mxu0
  %1462 = vdwg.mxu0
  %v1463 = vmax.f32 %v1079, %v1426
  %v1464 = vmax.f32 %v1080, %v1429
  %v1465 = vmax.f32 %v1081, %v1434
  %v1466 = vmax.f32 %v1082, %v1437
  %v1467 = vmax.f32 %v1083, %v1442
  %v1468 = vmax.f32 %v1084, %v1445
  %v1469 = vmax.f32 %v1085, %v1450
  %v1470 = vmax.f32 %v1086, %v1453
  %v1471 = vmax.f32 %v1087, %v1458
  %v1472 = vld [vmem:[%s3] sm:$0xff]
  %v1473 = vld [vmem:[%s3 + $0x8] sm:$0xff]
  %v1474 = vld [vmem:[%s3 + $0x10] sm:$0xf]
  %v1475 = vld [vmem:[%s3 + $0x14] sm:$0xff]
  %v1476 = vld [vmem:[%s3 + $0x1c] sm:$0xff]
  %v1477 = vld [vmem:[%s3 + $0x24] sm:$0xf]
  %v1478 = vld [vmem:[%s3 + $0x28] sm:$0xff]
  %v1479 = vld [vmem:[%s3 + $0x30] sm:$0xff]
  %v1480 = vld [vmem:[%s3 + $0x38] sm:$0xf]
  %v1481 = vld [vmem:[%s3 + $0x3c] sm:$0xff]
  %v1482 = vld [vmem:[%s3 + $0x44] sm:$0xff]
  %v1483 = vld [vmem:[%s3 + $0x4c] sm:$0xf]
  %v1484 = vld [vmem:[%s3 + $0x50] sm:$0xff]
  %v1485 = vld [vmem:[%s3 + $0x58] sm:$0xff]
  %v1486 = vld [vmem:[%s3 + $0x60] sm:$0xf]
  %v1487 = vld [vmem:[%s3 + $0x64] sm:$0xff]
  %v1488 = vld [vmem:[%s3 + $0x6c] sm:$0xff]
  %v1489 = vld [vmem:[%s3 + $0x74] sm:$0xf]
  %v1490 = vld [vmem:[%s3 + $0x78] sm:$0xff]
  %v1491 = vld [vmem:[%s3 + $0x80] sm:$0xff]
  %v1492 = vld [vmem:[%s3 + $0x88] sm:$0xf]
  %v1493 = vld [vmem:[%s3 + $0x8c] sm:$0xff]
  %v1494 = vld [vmem:[%s3 + $0x94] sm:$0xff]
  %v1495 = vld [vmem:[%s3 + $0x9c] sm:$0xf]
  %v1496 = vld [vmem:[%s3 + $0xa0] sm:$0xff]
  %v1497 = vld [vmem:[%s3 + $0xa8] sm:$0xff]
  %v1498 = vld [vmem:[%s3 + $0xb0] sm:$0xf]
  %v1526 = vunpack.c.l.b16 %v1472
  %v1527 = vunpack.c.h.b16 %v1472
  %v1528 = vunpack.c.l.b16 %v1473
  %v1529 = vunpack.c.h.b16 %v1473
  %v1530 = vunpack.c.l.b16 %v1474
  %v1531 = vunpack.c.l.b16 %v1475
  %v1532 = vunpack.c.h.b16 %v1475
  %v1533 = vunpack.c.l.b16 %v1476
  %v1534 = vunpack.c.h.b16 %v1476
  %v1535 = vunpack.c.l.b16 %v1477
  %v1536 = vunpack.c.l.b16 %v1478
  %v1537 = vunpack.c.h.b16 %v1478
  %v1538 = vunpack.c.l.b16 %v1479
  %v1539 = vunpack.c.h.b16 %v1479
  %v1540 = vunpack.c.l.b16 %v1480
  %v1541 = vunpack.c.l.b16 %v1481
  %v1542 = vunpack.c.h.b16 %v1481
  %v1543 = vunpack.c.l.b16 %v1482
  %v1544 = vunpack.c.h.b16 %v1482
  %v1545 = vunpack.c.l.b16 %v1483
  %v1546 = vunpack.c.l.b16 %v1484
  %v1547 = vunpack.c.h.b16 %v1484
  %v1548 = vunpack.c.l.b16 %v1485
  %v1549 = vunpack.c.h.b16 %v1485
  %v1550 = vunpack.c.l.b16 %v1486
  %v1551 = vunpack.c.l.b16 %v1487
  %v1552 = vunpack.c.h.b16 %v1487
  %v1553 = vunpack.c.l.b16 %v1488
  %v1554 = vunpack.c.h.b16 %v1488
  %v1555 = vunpack.c.l.b16 %v1489
  %v1556 = vunpack.c.l.b16 %v1490
  %v1557 = vunpack.c.h.b16 %v1490
  %v1558 = vunpack.c.l.b16 %v1491
  %v1559 = vunpack.c.h.b16 %v1491
  %v1560 = vunpack.c.l.b16 %v1492
  %v1561 = vunpack.c.l.b16 %v1493
  %v1562 = vunpack.c.h.b16 %v1493
  %v1563 = vunpack.c.l.b16 %v1494
  %v1564 = vunpack.c.h.b16 %v1494
  %v1565 = vunpack.c.l.b16 %v1495
  %v1566 = vunpack.c.l.b16 %v1496
  %v1567 = vunpack.c.h.b16 %v1496
  %v1568 = vunpack.c.l.b16 %v1497
  %v1569 = vunpack.c.h.b16 %v1497
  %v1570 = vunpack.c.l.b16 %v1498
  %v1571 = vpack.c.b16 %v1531, %v1526
  %v1572 = vpack.c.b16 %v1532, %v1527
  %v1573 = vpack.c.b16 %v1533, %v1528
  %v1574 = vpack.c.b16 %v1534, %v1529
  %v1575 = vpack.c.b16 %v1535, %v1530
  %v1576 = vpack.c.b16 %v1541, %v1536
  %v1577 = vpack.c.b16 %v1542, %v1537
  %v1578 = vpack.c.b16 %v1543, %v1538
  %v1579 = vpack.c.b16 %v1544, %v1539
  %v1580 = vpack.c.b16 %v1545, %v1540
  %v1581 = vpack.c.b16 %v1551, %v1546
  %v1582 = vpack.c.b16 %v1552, %v1547
  %v1583 = vpack.c.b16 %v1553, %v1548
  %v1584 = vpack.c.b16 %v1554, %v1549
  %v1585 = vpack.c.b16 %v1555, %v1550
  %v1586 = vpack.c.b16 %v1561, %v1556
  %v1587 = vpack.c.b16 %v1562, %v1557
  %v1588 = vpack.c.b16 %v1563, %v1558
  %v1589 = vpack.c.b16 %v1564, %v1559
  %v1590 = vpack.c.b16 %v1565, %v1560
  %v1591 = vpack.c.b16 %v1566, %v1566
  %v1592 = vpack.c.b16 %v1567, %v1567
  %v1593 = vpack.c.b16 %v1568, %v1568
  %v1594 = vpack.c.b16 %v1569, %v1569
  %v1595 = vpack.c.b16 %v1570, %v1570
  %v1617 = vsel %vm468, %v1575, 0
  %v1620 = vsel %vm468, %v1580, 0
  %v1623 = vsel %vm468, %v1585, 0
  %v1626 = vsel %vm468, %v1590, 0
  %v1629 = vsel %vm468, %v1595, 0
  %1631 = vmatprep.subr.bf16.mxu0 0
  %1632 = vmatpush1.bf16.msra.mxu0 %v400
  %1633 = vmatprep.subr.bf16.mxu0 0
  %1634 = vmatpush1.bf16.msra.mxu0 %v399
  %1635 = vmatprep.subr.bf16.mxu0 0
  %1636 = vmatpush1.bf16.msra.mxu0 %v398
  %1637 = vmatprep.subr.bf16.mxu0 0
  %1638 = vmatpush1.bf16.msra.mxu0 %v397
  %1639 = vmatprep.subr.bf16.mxu0 0
  %1640 = vmatpush1.bf16.msra.mxu0 %v396
  %1641 = vmatprep.subr.bf16.mxu0 0
  %1642 = vmatpush1.bf16.msra.mxu0 %v395
  %1643 = vmatprep.subr.bf16.mxu0 0
  %1644 = vmatpush1.bf16.msra.mxu0 %v394
  %1645 = vmatprep.subr.bf16.mxu0 0
  %1646 = vmatpush1.bf16.msra.mxu0 %v393
  %1647 = vmatprep.subr.bf16.mxu0 0
  %1648 = vmatpush2.bf16.msra.mxu0 %v408
  %1649 = vmatprep.subr.bf16.mxu0 0
  %1650 = vmatpush2.bf16.msra.mxu0 %v407
  %1651 = vmatprep.subr.bf16.mxu0 0
  %1652 = vmatpush2.bf16.msra.mxu0 %v406
  %1653 = vmatprep.subr.bf16.mxu0 0
  %1654 = vmatpush2.bf16.msra.mxu0 %v405
  %1655 = vmatprep.subr.bf16.mxu0 0
  %1656 = vmatpush2.bf16.msra.mxu0 %v404
  %1657 = vmatprep.subr.bf16.mxu0 0
  %1658 = vmatpush2.bf16.msra.mxu0 %v403
  %1659 = vmatprep.subr.bf16.mxu0 0
  %1660 = vmatpush2.bf16.msra.mxu0 %v402
  %1661 = vmatprep.subr.bf16.mxu0 0
  %1662 = vmatpush2.bf16.msra.mxu0 %v401
  %1663 = vmatprep.mubr.bf16.mxu0 %v1572
  %1664 = vmatmul.mubr.bf16.gmra.mxu0 %v1571
  %v1665 = vpop.f32.mrf.mxu0
  %v1666 = vadd.f32 0.0, %v1665
  %v1667 = vpop.f32.mrf.mxu0
  %v1668 = vpop.f32.mrf.mxu0
  %v1669 = vadd.f32 0.0, %v1668
  %v1670 = vpop.f32.mrf.mxu0
  %1671 = vmatprep.mubr.bf16.mxu0 %v1577
  %1672 = vmatmul.mubr.bf16.gmra.mxu0 %v1576
  %v1673 = vpop.f32.mrf.mxu0
  %v1674 = vadd.f32 0.0, %v1673
  %v1675 = vpop.f32.mrf.mxu0
  %v1676 = vpop.f32.mrf.mxu0
  %v1677 = vadd.f32 0.0, %v1676
  %v1678 = vpop.f32.mrf.mxu0
  %1679 = vmatprep.mubr.bf16.mxu0 %v1582
  %1680 = vmatmul.mubr.bf16.gmra.mxu0 %v1581
  %v1681 = vpop.f32.mrf.mxu0
  %v1682 = vadd.f32 0.0, %v1681
  %v1683 = vpop.f32.mrf.mxu0
  %v1684 = vpop.f32.mrf.mxu0
  %v1685 = vadd.f32 0.0, %v1684
  %v1686 = vpop.f32.mrf.mxu0
  %1687 = vmatprep.mubr.bf16.mxu0 %v1587
  %1688 = vmatmul.mubr.bf16.gmra.mxu0 %v1586
  %v1689 = vpop.f32.mrf.mxu0
  %v1690 = vadd.f32 0.0, %v1689
  %v1691 = vpop.f32.mrf.mxu0
  %v1692 = vpop.f32.mrf.mxu0
  %v1693 = vadd.f32 0.0, %v1692
  %v1694 = vpop.f32.mrf.mxu0
  %1695 = vmatprep.mubr.bf16.mxu0 %v1592
  %1696 = vmatmul.mubr.bf16.gmra.mxu0 %v1591
  %v1697 = vpop.f32.mrf.mxu0
  %v1698 = vadd.f32 0.0, %v1697
  %v1699 = vpop.f32.mrf.mxu0
  %v1700 = vpop.f32.mrf.mxu0
  %v1701 = vpop.f32.mrf.mxu0
  %1702 = vdwg.mxu0
  %1703 = vmatprep.subr.bf16.mxu0 0
  %1704 = vmatpush1.bf16.msra.mxu0 %v416
  %1705 = vmatprep.subr.bf16.mxu0 0
  %1706 = vmatpush1.bf16.msra.mxu0 %v415
  %1707 = vmatprep.subr.bf16.mxu0 0
  %1708 = vmatpush1.bf16.msra.mxu0 %v414
  %1709 = vmatprep.subr.bf16.mxu0 0
  %1710 = vmatpush1.bf16.msra.mxu0 %v413
  %1711 = vmatprep.subr.bf16.mxu0 0
  %1712 = vmatpush1.bf16.msra.mxu0 %v412
  %1713 = vmatprep.subr.bf16.mxu0 0
  %1714 = vmatpush1.bf16.msra.mxu0 %v411
  %1715 = vmatprep.subr.bf16.mxu0 0
  %1716 = vmatpush1.bf16.msra.mxu0 %v410
  %1717 = vmatprep.subr.bf16.mxu0 0
  %1718 = vmatpush1.bf16.msra.mxu0 %v409
  %1719 = vmatprep.subr.bf16.mxu0 0
  %1720 = vmatpush2.bf16.msra.mxu0 %v424
  %1721 = vmatprep.subr.bf16.mxu0 0
  %1722 = vmatpush2.bf16.msra.mxu0 %v423
  %1723 = vmatprep.subr.bf16.mxu0 0
  %1724 = vmatpush2.bf16.msra.mxu0 %v422
  %1725 = vmatprep.subr.bf16.mxu0 0
  %1726 = vmatpush2.bf16.msra.mxu0 %v421
  %1727 = vmatprep.subr.bf16.mxu0 0
  %1728 = vmatpush2.bf16.msra.mxu0 %v420
  %1729 = vmatprep.subr.bf16.mxu0 0
  %1730 = vmatpush2.bf16.msra.mxu0 %v419
  %1731 = vmatprep.subr.bf16.mxu0 0
  %1732 = vmatpush2.bf16.msra.mxu0 %v418
  %1733 = vmatprep.subr.bf16.mxu0 0
  %1734 = vmatpush2.bf16.msra.mxu0 %v417
  %1735 = vmatprep.mubr.bf16.mxu0 %v1574
  %1736 = vmatmul.mubr.bf16.gmra.mxu0 %v1573
  %v1737 = vpop.f32.mrf.mxu0
  %v1738 = vadd.f32 %v1666, %v1737
  %v1739 = vpop.f32.mrf.mxu0
  %v1740 = vpop.f32.mrf.mxu0
  %v1741 = vadd.f32 %v1669, %v1740
  %v1742 = vpop.f32.mrf.mxu0
  %1743 = vmatprep.mubr.bf16.mxu0 %v1579
  %1744 = vmatmul.mubr.bf16.gmra.mxu0 %v1578
  %v1745 = vpop.f32.mrf.mxu0
  %v1746 = vadd.f32 %v1674, %v1745
  %v1747 = vpop.f32.mrf.mxu0
  %v1748 = vpop.f32.mrf.mxu0
  %v1749 = vadd.f32 %v1677, %v1748
  %v1750 = vpop.f32.mrf.mxu0
  %1751 = vmatprep.mubr.bf16.mxu0 %v1584
  %1752 = vmatmul.mubr.bf16.gmra.mxu0 %v1583
  %v1753 = vpop.f32.mrf.mxu0
  %v1754 = vadd.f32 %v1682, %v1753
  %v1755 = vpop.f32.mrf.mxu0
  %v1756 = vpop.f32.mrf.mxu0
  %v1757 = vadd.f32 %v1685, %v1756
  %v1758 = vpop.f32.mrf.mxu0
  %1759 = vmatprep.mubr.bf16.mxu0 %v1589
  %1760 = vmatmul.mubr.bf16.gmra.mxu0 %v1588
  %v1761 = vpop.f32.mrf.mxu0
  %v1762 = vadd.f32 %v1690, %v1761
  %v1763 = vpop.f32.mrf.mxu0
  %v1764 = vpop.f32.mrf.mxu0
  %v1765 = vadd.f32 %v1693, %v1764
  %v1766 = vpop.f32.mrf.mxu0
  %1767 = vmatprep.mubr.bf16.mxu0 %v1594
  %1768 = vmatmul.mubr.bf16.gmra.mxu0 %v1593
  %v1769 = vpop.f32.mrf.mxu0
  %v1770 = vadd.f32 %v1698, %v1769
  %v1771 = vpop.f32.mrf.mxu0
  %v1772 = vpop.f32.mrf.mxu0
  %v1773 = vpop.f32.mrf.mxu0
  %1774 = vdwg.mxu0
  %1775 = vmatprep.subr.bf16.mxu0 0
  %1776 = vmatpush1.bf16.msra.mxu0 0
  %1777 = vmatprep.subr.bf16.mxu0 0
  %1778 = vmatpush1.bf16.msra.mxu0 0
  %1779 = vmatprep.subr.bf16.mxu0 0
  %1780 = vmatpush1.bf16.msra.mxu0 %v486
  %1781 = vmatprep.subr.bf16.mxu0 0
  %1782 = vmatpush1.bf16.msra.mxu0 %v429
  %1783 = vmatprep.subr.bf16.mxu0 0
  %1784 = vmatpush1.bf16.msra.mxu0 %v428
  %1785 = vmatprep.subr.bf16.mxu0 0
  %1786 = vmatpush1.bf16.msra.mxu0 %v427
  %1787 = vmatprep.subr.bf16.mxu0 0
  %1788 = vmatpush1.bf16.msra.mxu0 %v426
  %1789 = vmatprep.subr.bf16.mxu0 0
  %1790 = vmatpush1.bf16.msra.mxu0 %v425
  %1791 = vmatprep.subr.bf16.mxu0 0
  %1792 = vmatpush2.bf16.msra.mxu0 0
  %1793 = vmatprep.subr.bf16.mxu0 0
  %1794 = vmatpush2.bf16.msra.mxu0 0
  %1795 = vmatprep.subr.bf16.mxu0 0
  %1796 = vmatpush2.bf16.msra.mxu0 0
  %1797 = vmatprep.subr.bf16.mxu0 0
  %1798 = vmatpush2.bf16.msra.mxu0 0
  %1799 = vmatprep.subr.bf16.mxu0 0
  %1800 = vmatpush2.bf16.msra.mxu0 0
  %1801 = vmatprep.subr.bf16.mxu0 0
  %1802 = vmatpush2.bf16.msra.mxu0 0
  %1803 = vmatprep.subr.bf16.mxu0 0
  %1804 = vmatpush2.bf16.msra.mxu0 0
  %1805 = vmatprep.subr.bf16.mxu0 0
  %1806 = vmatpush2.bf16.msra.mxu0 0
  %1807 = vmatprep.mubr.bf16.mxu0 0
  %1808 = vmatmul.mubr.bf16.gmra.mxu0 %v1617
  %v1809 = vpop.f32.mrf.mxu0
  %v1810 = vadd.f32 %v1738, %v1809
  %v1811 = vpop.f32.mrf.mxu0
  %v1812 = vpop.f32.mrf.mxu0
  %v1813 = vadd.f32 %v1741, %v1812
  %v1814 = vpop.f32.mrf.mxu0
  %1815 = vmatprep.mubr.bf16.mxu0 0
  %1816 = vmatmul.mubr.bf16.gmra.mxu0 %v1620
  %v1817 = vpop.f32.mrf.mxu0
  %v1818 = vadd.f32 %v1746, %v1817
  %v1819 = vpop.f32.mrf.mxu0
  %v1820 = vpop.f32.mrf.mxu0
  %v1821 = vadd.f32 %v1749, %v1820
  %v1822 = vpop.f32.mrf.mxu0
  %1823 = vmatprep.mubr.bf16.mxu0 0
  %1824 = vmatmul.mubr.bf16.gmra.mxu0 %v1623
  %v1825 = vpop.f32.mrf.mxu0
  %v1826 = vadd.f32 %v1754, %v1825
  %v1827 = vpop.f32.mrf.mxu0
  %v1828 = vpop.f32.mrf.mxu0
  %v1829 = vadd.f32 %v1757, %v1828
  %v1830 = vpop.f32.mrf.mxu0
  %1831 = vmatprep.mubr.bf16.mxu0 0
  %1832 = vmatmul.mubr.bf16.gmra.mxu0 %v1626
  %v1833 = vpop.f32.mrf.mxu0
  %v1834 = vadd.f32 %v1762, %v1833
  %v1835 = vpop.f32.mrf.mxu0
  %v1836 = vpop.f32.mrf.mxu0
  %v1837 = vadd.f32 %v1765, %v1836
  %v1838 = vpop.f32.mrf.mxu0
  %1839 = vmatprep.mubr.bf16.mxu0 0
  %1840 = vmatmul.mubr.bf16.gmra.mxu0 %v1629
  %v1841 = vpop.f32.mrf.mxu0
  %v1842 = vadd.f32 %v1770, %v1841
  %v1843 = vpop.f32.mrf.mxu0
  %v1844 = vpop.f32.mrf.mxu0
  %v1845 = vpop.f32.mrf.mxu0
  %1846 = vdwg.mxu0
  %v1847 = vmax.f32 %v1463, %v1810
  %v1848 = vmax.f32 %v1464, %v1813
  %v1849 = vmax.f32 %v1465, %v1818
  %v1850 = vmax.f32 %v1466, %v1821
  %v1851 = vmax.f32 %v1467, %v1826
  %v1852 = vmax.f32 %v1468, %v1829
  %v1853 = vmax.f32 %v1469, %v1834
  %v1854 = vmax.f32 %v1470, %v1837
  %v1855 = vmax.f32 %v1471, %v1842
  %v1856 = vld [vmem:[%s5] sm:$0x1]
  %v1858 = vlaneseq
  %v1859 = vshrl.u32 %v1858, 7
  %v1860 = vsub.s32 0, %v1859
  %v1861 = vrot.slane %v1856, %v1860
  %v1863 = vadd.f32 %v1847, %v1861
  %v1864 = vadd.f32 %v1848, %v1861
  %v1865 = vadd.f32 %v1849, %v1861
  %v1866 = vadd.f32 %v1850, %v1861
  %v1867 = vadd.f32 %v1851, %v1861
  %v1868 = vadd.f32 %v1852, %v1861
  %v1869 = vadd.f32 %v1853, %v1861
  %v1870 = vadd.f32 %v1854, %v1861
  %v1871 = vadd.f32 %v1855, %v1861
  %v1872 = vmax.f32 %v1863, 0.0
  %v1873 = vmax.f32 %v1864, 0.0
  %v1874 = vmax.f32 %v1865, 0.0
  %v1875 = vmax.f32 %v1866, 0.0
  %v1876 = vmax.f32 %v1867, 0.0
  %v1877 = vmax.f32 %v1868, 0.0
  %v1878 = vmax.f32 %v1869, 0.0
  %v1879 = vmax.f32 %v1870, 0.0
  %v1880 = vmax.f32 %v1871, 0.0
  %vm1881 = vcmask 392192
  %1882 = vst.msk [vmem:[%s6] sm:$0xff] %vm1881, %v1872
  %1883 = vst.msk [vmem:[%s6 + $0x8] sm:$0xff] %vm1881, %v1873
  %1884 = vst.msk [vmem:[%s6 + $0x10] sm:$0xff] %vm1881, %v1874
  %1885 = vst.msk [vmem:[%s6 + $0x18] sm:$0xff] %vm1881, %v1875
  %1886 = vst.msk [vmem:[%s6 + $0x20] sm:$0xff] %vm1881, %v1876
  %1887 = vst.msk [vmem:[%s6 + $0x28] sm:$0xff] %vm1881, %v1877
  %1888 = vst.msk [vmem:[%s6 + $0x30] sm:$0xff] %vm1881, %v1878
  %1889 = vst.msk [vmem:[%s6 + $0x38] sm:$0xff] %vm1881, %v1879
  %1890 = vst.msk [vmem:[%s6 + $0x40] sm:$0xff] %vm1881, %v1880
  // Predicated region
  $region26: #{forward.4} parent=0 // pred_check
    _
  $region27: #{forward.4} parent=0 // pred_check_branch
    %1892 = sbr.rel (0) target = $region29
  $region28: #{forward.4} parent=0 // pred_region
    _
  $region29: #{forward.4} parent=0 // pred_fallthru
    _
  // Predicated region
  $region30: #{forward.4} parent=0 // pred_check
    _
  $region31: #{forward.4} parent=0 // pred_check_branch
    %1894 = sbr.rel (0) target = $region33
  $region32: #{forward.4} parent=0 // pred_region
    _
  $region33: #{forward.4} parent=0 // pred_fallthru
    _

// kernel: forward.5
$region0: #{forward.5}
  #allocation0 [shape = 'u32[]', space=smem, size = 0x4, offset = 0x4, fixed_abs, tag = 'smem constant byte address 0x4 - core index']
  #allocation1 [shape = 'u32[144,128]{1,0:T(1,128)}', space=vmem, size = 0x12000, scoped, tag = 'internal scratch']
  %s0 = inlined_call_operand.vmem [shape: bf16[8,1728], index: 0, kind: input, shape index: {}]
  %s1 = inlined_call_operand.vmem [shape: bf16[1728,1024], index: 1, kind: input, shape index: {}]
  %s2 = inlined_call_operand.vmem [shape: f32[1,1024], index: 2, kind: input, shape index: {}]
  %s3 = inlined_call_operand.vmem [shape: bf16[1024,512], index: 3, kind: input, shape index: {}]
  %s4 = inlined_call_operand.vmem [shape: f32[1,512], index: 4, kind: input, shape index: {}]
  %s5 = inlined_call_operand.vmem [shape: bf16[512,256], index: 5, kind: input, shape index: {}]
  %s6 = inlined_call_operand.vmem [shape: f32[1,256], index: 6, kind: input, shape index: {}]
  %s7 = inlined_call_operand.vmem [shape: bf16[256,128], index: 7, kind: input, shape index: {}]
  %s8 = inlined_call_operand.vmem [shape: f32[1,128], index: 8, kind: input, shape index: {}]
  %s9 = inlined_call_operand.vmem [shape: f32[8,128], index: 9, kind: output, shape index: {}]
  %s10 = sld [smem:[#allocation0]]
  $region46: #{forward.5} parent=0
    _
  %s12 = ssub.s32 1, %s10
  %s13 = scalar_select 0, %s12, %s10
  // Predicated region
  $region2: #{forward.5} parent=0 // pred_check
    _
  $region3: #{forward.5} parent=0 // pred_check_branch
    %15 = sbr.rel (0) target = $region5
  $region4: #{forward.5} parent=0 // pred_region
    _
  $region5: #{forward.5} parent=0 // pred_fallthru
    _
  // Predicated region
  $region6: #{forward.5} parent=0 // pred_check
    _
  $region7: #{forward.5} parent=0 // pred_check_branch
    %17 = sbr.rel (0) target = $region9
  $region8: #{forward.5} parent=0 // pred_region
    _
  $region9: #{forward.5} parent=0 // pred_fallthru
    _
  // Predicated region
  $region10: #{forward.5} parent=0 // pred_check
    _
  $region11: #{forward.5} parent=0 // pred_check_branch
    %19 = sbr.rel (0) target = $region13
  $region12: #{forward.5} parent=0 // pred_region
    _
  $region13: #{forward.5} parent=0 // pred_fallthru
    _
  // Predicated region
  $region14: #{forward.5} parent=0 // pred_check
    _
  $region15: #{forward.5} parent=0 // pred_check_branch
    %21 = sbr.rel (0) target = $region17
  $region16: #{forward.5} parent=0 // pred_region
    _
  $region17: #{forward.5} parent=0 // pred_fallthru
    _
  // Predicated region
  $region18: #{forward.5} parent=0 // pred_check
    _
  $region19: #{forward.5} parent=0 // pred_check_branch
    %23 = sbr.rel (0) target = $region21
  $region20: #{forward.5} parent=0 // pred_region
    _
  $region21: #{forward.5} parent=0 // pred_fallthru
    _
  // Predicated region
  $region22: #{forward.5} parent=0 // pred_check
    _
  $region23: #{forward.5} parent=0 // pred_check_branch
    %25 = sbr.rel (0) target = $region25
  $region24: #{forward.5} parent=0 // pred_region
    _
  $region25: #{forward.5} parent=0 // pred_fallthru
    _
  // Predicated region
  $region26: #{forward.5} parent=0 // pred_check
    _
  $region27: #{forward.5} parent=0 // pred_check_branch
    %27 = sbr.rel (0) target = $region29
  $region28: #{forward.5} parent=0 // pred_region
    _
  $region29: #{forward.5} parent=0 // pred_fallthru
    _
  // Predicated region
  $region30: #{forward.5} parent=0 // pred_check
    _
  $region31: #{forward.5} parent=0 // pred_check_branch
    %29 = sbr.rel (0) target = $region33
  $region32: #{forward.5} parent=0 // pred_region
    _
  $region33: #{forward.5} parent=0 // pred_fallthru
    _
  // Predicated region
  $region34: #{forward.5} parent=0 // pred_check
    _
  $region35: #{forward.5} parent=0 // pred_check_branch
    %31 = sbr.rel (0) target = $region37
  $region36: #{forward.5} parent=0 // pred_region
    _
  $region37: #{forward.5} parent=0 // pred_fallthru
    _
  %v33 = vld [vmem:[%s0] sm:$0xff]
  %v34 = vld [vmem:[%s0 + $0x8] sm:$0xff]
  %v35 = vld [vmem:[%s0 + $0x10] sm:$0xff]
  %v36 = vld [vmem:[%s0 + $0x18] sm:$0xff]
  %v37 = vld [vmem:[%s0 + $0x20] sm:$0xff]
  %v38 = vld [vmem:[%s0 + $0x28] sm:$0xff]
  %v39 = vld [vmem:[%s0 + $0x30] sm:$0xff]
  %v40 = vld [vmem:[%s1] sm:$0xff]
  %v41 = vld [vmem:[%s1 + $0x8] sm:$0xff]
  %v42 = vld [vmem:[%s1 + $0x10] sm:$0xff]
  %v43 = vld [vmem:[%s1 + $0x18] sm:$0xff]
  %v44 = vld [vmem:[%s1 + $0x20] sm:$0xff]
  %v45 = vld [vmem:[%s1 + $0x28] sm:$0xff]
  %v46 = vld [vmem:[%s1 + $0x30] sm:$0xff]
  %v47 = vld [vmem:[%s1 + $0x38] sm:$0xff]
  %v48 = vld [vmem:[%s1 + $0x40] sm:$0xff]
  %v49 = vld [vmem:[%s1 + $0x48] sm:$0xff]
  %v50 = vld [vmem:[%s1 + $0x50] sm:$0xff]
  %v51 = vld [vmem:[%s1 + $0x58] sm:$0xff]
  %v52 = vld [vmem:[%s1 + $0x60] sm:$0xff]
  %v53 = vld [vmem:[%s1 + $0x68] sm:$0xff]
  %v54 = vld [vmem:[%s1 + $0x70] sm:$0xff]
  %v55 = vld [vmem:[%s1 + $0x78] sm:$0xff]
  %v56 = vld [vmem:[%s1 + $0x80] sm:$0xff]
  %v57 = vld [vmem:[%s1 + $0x88] sm:$0xff]
  %v58 = vld [vmem:[%s1 + $0x90] sm:$0xff]
  %v59 = vld [vmem:[%s1 + $0x98] sm:$0xff]
  %v60 = vld [vmem:[%s1 + $0xa0] sm:$0xff]
  %v61 = vld [vmem:[%s1 + $0xa8] sm:$0xff]
  %v62 = vld [vmem:[%s1 + $0xb0] sm:$0xff]
  %v63 = vld [vmem:[%s1 + $0xb8] sm:$0xff]
  %v64 = vld [vmem:[%s1 + $0xc0] sm:$0xff]
  %v65 = vld [vmem:[%s1 + $0xc8] sm:$0xff]
  %v66 = vld [vmem:[%s1 + $0xd0] sm:$0xff]
  %v67 = vld [vmem:[%s1 + $0xd8] sm:$0xff]
  %v68 = vld [vmem:[%s1 + $0xe0] sm:$0xff]
  %v69 = vld [vmem:[%s1 + $0xe8] sm:$0xff]
  %v70 = vld [vmem:[%s1 + $0xf0] sm:$0xff]
  %v71 = vld [vmem:[%s1 + $0xf8] sm:$0xff]
  %v72 = vld [vmem:[%s1 + $0x100] sm:$0xff]
  %v73 = vld [vmem:[%s1 + $0x108] sm:$0xff]
  %v74 = vld [vmem:[%s1 + $0x110] sm:$0xff]
  %v75 = vld [vmem:[%s1 + $0x118] sm:$0xff]
  %v76 = vld [vmem:[%s1 + $0x120] sm:$0xff]
  %v77 = vld [vmem:[%s1 + $0x128] sm:$0xff]
  %v78 = vld [vmem:[%s1 + $0x130] sm:$0xff]
  %v79 = vld [vmem:[%s1 + $0x138] sm:$0xff]
  %v80 = vld [vmem:[%s1 + $0x140] sm:$0xff]
  %v81 = vld [vmem:[%s1 + $0x148] sm:$0xff]
  %v82 = vld [vmem:[%s1 + $0x150] sm:$0xff]
  %v83 = vld [vmem:[%s1 + $0x158] sm:$0xff]
  %v84 = vld [vmem:[%s1 + $0x160] sm:$0xff]
  %v85 = vld [vmem:[%s1 + $0x168] sm:$0xff]
  %v86 = vld [vmem:[%s1 + $0x170] sm:$0xff]
  %v87 = vld [vmem:[%s1 + $0x178] sm:$0xff]
  %v88 = vld [vmem:[%s1 + $0x180] sm:$0xff]
  %v89 = vld [vmem:[%s1 + $0x188] sm:$0xff]
  %v90 = vld [vmem:[%s1 + $0x190] sm:$0xff]
  %v91 = vld [vmem:[%s1 + $0x198] sm:$0xff]
  %v92 = vld [vmem:[%s1 + $0x1a0] sm:$0xff]
  %v93 = vld [vmem:[%s1 + $0x1a8] sm:$0xff]
  %v94 = vld [vmem:[%s1 + $0x1b0] sm:$0xff]
  %v95 = vld [vmem:[%s1 + $0x1b8] sm:$0xff]
  %v96 = vld [vmem:[%s1 + $0x1c0] sm:$0xff]
  %v97 = vld [vmem:[%s1 + $0x1c8] sm:$0xff]
  %v98 = vld [vmem:[%s1 + $0x1d0] sm:$0xff]
  %v99 = vld [vmem:[%s1 + $0x1d8] sm:$0xff]
  %v100 = vld [vmem:[%s1 + $0x1e0] sm:$0xff]
  %v101 = vld [vmem:[%s1 + $0x1e8] sm:$0xff]
  %v102 = vld [vmem:[%s1 + $0x1f0] sm:$0xff]
  %v103 = vld [vmem:[%s1 + $0x1f8] sm:$0xff]
  %v104 = vld [vmem:[%s1 + $0x200] sm:$0xff]
  %v105 = vld [vmem:[%s1 + $0x208] sm:$0xff]
  %v106 = vld [vmem:[%s1 + $0x210] sm:$0xff]
  %v107 = vld [vmem:[%s1 + $0x218] sm:$0xff]
  %v108 = vld [vmem:[%s1 + $0x220] sm:$0xff]
  %v109 = vld [vmem:[%s1 + $0x228] sm:$0xff]
  %v110 = vld [vmem:[%s1 + $0x230] sm:$0xff]
  %v111 = vld [vmem:[%s1 + $0x238] sm:$0xff]
  %v112 = vld [vmem:[%s1 + $0x240] sm:$0xff]
  %v113 = vld [vmem:[%s1 + $0x248] sm:$0xff]
  %v114 = vld [vmem:[%s1 + $0x250] sm:$0xff]
  %v115 = vld [vmem:[%s1 + $0x258] sm:$0xff]
  %v116 = vld [vmem:[%s1 + $0x260] sm:$0xff]
  %v117 = vld [vmem:[%s1 + $0x268] sm:$0xff]
  %v118 = vld [vmem:[%s1 + $0x270] sm:$0xff]
  %v119 = vld [vmem:[%s1 + $0x278] sm:$0xff]
  %v120 = vld [vmem:[%s1 + $0x280] sm:$0xff]
  %v121 = vld [vmem:[%s1 + $0x288] sm:$0xff]
  %v122 = vld [vmem:[%s1 + $0x290] sm:$0xff]
  %v123 = vld [vmem:[%s1 + $0x298] sm:$0xff]
  %v124 = vld [vmem:[%s1 + $0x2a0] sm:$0xff]
  %v125 = vld [vmem:[%s1 + $0x2a8] sm:$0xff]
  %v126 = vld [vmem:[%s1 + $0x2b0] sm:$0xff]
  %v127 = vld [vmem:[%s1 + $0x2b8] sm:$0xff]
  %v128 = vld [vmem:[%s1 + $0x2c0] sm:$0xff]
  %v129 = vld [vmem:[%s1 + $0x2c8] sm:$0xff]
  %v130 = vld [vmem:[%s1 + $0x2d0] sm:$0xff]
  %v131 = vld [vmem:[%s1 + $0x2d8] sm:$0xff]
  %v132 = vld [vmem:[%s1 + $0x2e0] sm:$0xff]
  %v133 = vld [vmem:[%s1 + $0x2e8] sm:$0xff]
  %v134 = vld [vmem:[%s1 + $0x2f0] sm:$0xff]
  %v135 = vld [vmem:[%s1 + $0x2f8] sm:$0xff]
  %v136 = vld [vmem:[%s1 + $0x300] sm:$0xff]
  %v137 = vld [vmem:[%s1 + $0x308] sm:$0xff]
  %v138 = vld [vmem:[%s1 + $0x310] sm:$0xff]
  %v139 = vld [vmem:[%s1 + $0x318] sm:$0xff]
  %v140 = vld [vmem:[%s1 + $0x320] sm:$0xff]
  %v141 = vld [vmem:[%s1 + $0x328] sm:$0xff]
  %v142 = vld [vmem:[%s1 + $0x330] sm:$0xff]
  %v143 = vld [vmem:[%s1 + $0x338] sm:$0xff]
  %v144 = vld [vmem:[%s1 + $0x340] sm:$0xff]
  %v145 = vld [vmem:[%s1 + $0x348] sm:$0xff]
  %v146 = vld [vmem:[%s1 + $0x350] sm:$0xff]
  %v147 = vld [vmem:[%s1 + $0x358] sm:$0xff]
  %v148 = vld [vmem:[%s1 + $0x360] sm:$0xff]
  %v149 = vld [vmem:[%s1 + $0x368] sm:$0xff]
  %v150 = vld [vmem:[%s1 + $0x370] sm:$0xff]
  %v151 = vld [vmem:[%s1 + $0x378] sm:$0xff]
  %v152 = vld [vmem:[%s1 + $0x380] sm:$0xff]
  %v153 = vld [vmem:[%s1 + $0x388] sm:$0xff]
  %v154 = vld [vmem:[%s1 + $0x390] sm:$0xff]
  %v155 = vld [vmem:[%s1 + $0x398] sm:$0xff]
  %v156 = vld [vmem:[%s1 + $0x3a0] sm:$0xff]
  %v157 = vld [vmem:[%s1 + $0x3a8] sm:$0xff]
  %v158 = vld [vmem:[%s1 + $0x3b0] sm:$0xff]
  %v159 = vld [vmem:[%s1 + $0x3b8] sm:$0xff]
  %v160 = vld [vmem:[%s1 + $0x3c0] sm:$0xff]
  %v161 = vld [vmem:[%s1 + $0x3c8] sm:$0xff]
  %v162 = vld [vmem:[%s1 + $0x3d0] sm:$0xff]
  %v163 = vld [vmem:[%s1 + $0x3d8] sm:$0xff]
  %v164 = vld [vmem:[%s1 + $0x3e0] sm:$0xff]
  %v165 = vld [vmem:[%s1 + $0x3e8] sm:$0xff]
  %v166 = vld [vmem:[%s1 + $0x3f0] sm:$0xff]
  %v167 = vld [vmem:[%s1 + $0x3f8] sm:$0xff]
  %v168 = vld [vmem:[%s1 + $0x400] sm:$0xff]
  %v169 = vld [vmem:[%s1 + $0x408] sm:$0xff]
  %v170 = vld [vmem:[%s1 + $0x410] sm:$0xff]
  %v171 = vld [vmem:[%s1 + $0x418] sm:$0xff]
  %v172 = vld [vmem:[%s1 + $0x420] sm:$0xff]
  %v173 = vld [vmem:[%s1 + $0x428] sm:$0xff]
  %v174 = vld [vmem:[%s1 + $0x430] sm:$0xff]
  %v175 = vld [vmem:[%s1 + $0x438] sm:$0xff]
  %v176 = vld [vmem:[%s1 + $0x440] sm:$0xff]
  %v177 = vld [vmem:[%s1 + $0x448] sm:$0xff]
  %v178 = vld [vmem:[%s1 + $0x450] sm:$0xff]
  %v179 = vld [vmem:[%s1 + $0x458] sm:$0xff]
  %v180 = vld [vmem:[%s1 + $0x460] sm:$0xff]
  %v181 = vld [vmem:[%s1 + $0x468] sm:$0xff]
  %v182 = vld [vmem:[%s1 + $0x470] sm:$0xff]
  %v183 = vld [vmem:[%s1 + $0x478] sm:$0xff]
  %v184 = vld [vmem:[%s1 + $0x480] sm:$0xff]
  %v185 = vld [vmem:[%s1 + $0x488] sm:$0xff]
  %v186 = vld [vmem:[%s1 + $0x490] sm:$0xff]
  %v187 = vld [vmem:[%s1 + $0x498] sm:$0xff]
  %v188 = vld [vmem:[%s1 + $0x4a0] sm:$0xff]
  %v189 = vld [vmem:[%s1 + $0x4a8] sm:$0xff]
  %v190 = vld [vmem:[%s1 + $0x4b0] sm:$0xff]
  %v191 = vld [vmem:[%s1 + $0x4b8] sm:$0xff]
  %v192 = vld [vmem:[%s1 + $0x4c0] sm:$0xff]
  %v193 = vld [vmem:[%s1 + $0x4c8] sm:$0xff]
  %v194 = vld [vmem:[%s1 + $0x4d0] sm:$0xff]
  %v195 = vld [vmem:[%s1 + $0x4d8] sm:$0xff]
  %v196 = vld [vmem:[%s1 + $0x4e0] sm:$0xff]
  %v197 = vld [vmem:[%s1 + $0x4e8] sm:$0xff]
  %v198 = vld [vmem:[%s1 + $0x4f0] sm:$0xff]
  %v199 = vld [vmem:[%s1 + $0x4f8] sm:$0xff]
  %v200 = vld [vmem:[%s1 + $0x500] sm:$0xff]
  %v201 = vld [vmem:[%s1 + $0x508] sm:$0xff]
  %v202 = vld [vmem:[%s1 + $0x510] sm:$0xff]
  %v203 = vld [vmem:[%s1 + $0x518] sm:$0xff]
  %v204 = vld [vmem:[%s1 + $0x520] sm:$0xff]
  %v205 = vld [vmem:[%s1 + $0x528] sm:$0xff]
  %v206 = vld [vmem:[%s1 + $0x530] sm:$0xff]
  %v207 = vld [vmem:[%s1 + $0x538] sm:$0xff]
  %v208 = vld [vmem:[%s1 + $0x540] sm:$0xff]
  %v209 = vld [vmem:[%s1 + $0x548] sm:$0xff]
  %v210 = vld [vmem:[%s1 + $0x550] sm:$0xff]
  %v211 = vld [vmem:[%s1 + $0x558] sm:$0xff]
  %v212 = vld [vmem:[%s1 + $0x560] sm:$0xff]
  %v213 = vld [vmem:[%s1 + $0x568] sm:$0xff]
  %v214 = vld [vmem:[%s1 + $0x570] sm:$0xff]
  %v215 = vld [vmem:[%s1 + $0x578] sm:$0xff]
  %v216 = vld [vmem:[%s1 + $0x580] sm:$0xff]
  %v217 = vld [vmem:[%s1 + $0x588] sm:$0xff]
  %v218 = vld [vmem:[%s1 + $0x590] sm:$0xff]
  %v219 = vld [vmem:[%s1 + $0x598] sm:$0xff]
  %v220 = vld [vmem:[%s1 + $0x5a0] sm:$0xff]
  %v221 = vld [vmem:[%s1 + $0x5a8] sm:$0xff]
  %v222 = vld [vmem:[%s1 + $0x5b0] sm:$0xff]
  %v223 = vld [vmem:[%s1 + $0x5b8] sm:$0xff]
  %v224 = vld [vmem:[%s1 + $0x5c0] sm:$0xff]
  %v225 = vld [vmem:[%s1 + $0x5c8] sm:$0xff]
  %v226 = vld [vmem:[%s1 + $0x5d0] sm:$0xff]
  %v227 = vld [vmem:[%s1 + $0x5d8] sm:$0xff]
  %v228 = vld [vmem:[%s1 + $0x5e0] sm:$0xff]
  %v229 = vld [vmem:[%s1 + $0x5e8] sm:$0xff]
  %v230 = vld [vmem:[%s1 + $0x5f0] sm:$0xff]
  %v231 = vld [vmem:[%s1 + $0x5f8] sm:$0xff]
  %v232 = vld [vmem:[%s1 + $0x600] sm:$0xff]
  %v233 = vld [vmem:[%s1 + $0x608] sm:$0xff]
  %v234 = vld [vmem:[%s1 + $0x610] sm:$0xff]
  %v235 = vld [vmem:[%s1 + $0x618] sm:$0xff]
  %v236 = vld [vmem:[%s1 + $0x620] sm:$0xff]
  %v237 = vld [vmem:[%s1 + $0x628] sm:$0xff]
  %v238 = vld [vmem:[%s1 + $0x630] sm:$0xff]
  %v239 = vld [vmem:[%s1 + $0x638] sm:$0xff]
  %v240 = vld [vmem:[%s1 + $0x640] sm:$0xff]
  %v241 = vld [vmem:[%s1 + $0x648] sm:$0xff]
  %v242 = vld [vmem:[%s1 + $0x650] sm:$0xff]
  %v243 = vld [vmem:[%s1 + $0x658] sm:$0xff]
  %v244 = vld [vmem:[%s1 + $0x660] sm:$0xff]
  %v245 = vld [vmem:[%s1 + $0x668] sm:$0xff]
  %v246 = vld [vmem:[%s1 + $0x670] sm:$0xff]
  %v247 = vld [vmem:[%s1 + $0x678] sm:$0xff]
  %v248 = vld [vmem:[%s1 + $0x680] sm:$0xff]
  %v249 = vld [vmem:[%s1 + $0x688] sm:$0xff]
  %v250 = vld [vmem:[%s1 + $0x690] sm:$0xff]
  %v251 = vld [vmem:[%s1 + $0x698] sm:$0xff]
  %v252 = vld [vmem:[%s1 + $0x6a0] sm:$0xff]
  %v253 = vld [vmem:[%s1 + $0x6a8] sm:$0xff]
  %v254 = vld [vmem:[%s1 + $0x6b0] sm:$0xff]
  %v255 = vld [vmem:[%s1 + $0x6b8] sm:$0xff]
  %v256 = vld [vmem:[%s1 + $0x6c0] sm:$0xff]
  %v257 = vld [vmem:[%s1 + $0x6c8] sm:$0xff]
  %v258 = vld [vmem:[%s1 + $0x6d0] sm:$0xff]
  %v259 = vld [vmem:[%s1 + $0x6d8] sm:$0xff]
  %v260 = vld [vmem:[%s1 + $0x6e0] sm:$0xff]
  %v261 = vld [vmem:[%s1 + $0x6e8] sm:$0xff]
  %v262 = vld [vmem:[%s1 + $0x6f0] sm:$0xff]
  %v263 = vld [vmem:[%s1 + $0x6f8] sm:$0xff]
  %v264 = vld [vmem:[%s1 + $0x700] sm:$0xff]
  %v265 = vld [vmem:[%s1 + $0x708] sm:$0xff]
  %v266 = vld [vmem:[%s1 + $0x710] sm:$0xff]
  %v267 = vld [vmem:[%s1 + $0x718] sm:$0xff]
  %v268 = vld [vmem:[%s1 + $0x720] sm:$0xff]
  %v269 = vld [vmem:[%s1 + $0x728] sm:$0xff]
  %v270 = vld [vmem:[%s1 + $0x730] sm:$0xff]
  %v271 = vld [vmem:[%s1 + $0x738] sm:$0xff]
  %v272 = vld [vmem:[%s1 + $0x740] sm:$0xff]
  %v273 = vld [vmem:[%s1 + $0x748] sm:$0xff]
  %v274 = vld [vmem:[%s1 + $0x750] sm:$0xff]
  %v275 = vld [vmem:[%s1 + $0x758] sm:$0xff]
  %v276 = vld [vmem:[%s1 + $0x760] sm:$0xff]
  %v277 = vld [vmem:[%s1 + $0x768] sm:$0xff]
  %v278 = vld [vmem:[%s1 + $0x770] sm:$0xff]
  %v279 = vld [vmem:[%s1 + $0x778] sm:$0xff]
  %v280 = vld [vmem:[%s1 + $0x780] sm:$0xff]
  %v281 = vld [vmem:[%s1 + $0x788] sm:$0xff]
  %v282 = vld [vmem:[%s1 + $0x790] sm:$0xff]
  %v283 = vld [vmem:[%s1 + $0x798] sm:$0xff]
  %v284 = vld [vmem:[%s1 + $0x7a0] sm:$0xff]
  %v285 = vld [vmem:[%s1 + $0x7a8] sm:$0xff]
  %v286 = vld [vmem:[%s1 + $0x7b0] sm:$0xff]
  %v287 = vld [vmem:[%s1 + $0x7b8] sm:$0xff]
  %v288 = vld [vmem:[%s1 + $0x7c0] sm:$0xff]
  %v289 = vld [vmem:[%s1 + $0x7c8] sm:$0xff]
  %v290 = vld [vmem:[%s1 + $0x7d0] sm:$0xff]
  %v291 = vld [vmem:[%s1 + $0x7d8] sm:$0xff]
  %v292 = vld [vmem:[%s1 + $0x7e0] sm:$0xff]
  %v293 = vld [vmem:[%s1 + $0x7e8] sm:$0xff]
  %v294 = vld [vmem:[%s1 + $0x7f0] sm:$0xff]
  %v295 = vld [vmem:[%s1 + $0x7f8] sm:$0xff]
  %v296 = vld [vmem:[%s1 + $0x800] sm:$0xff]
  %v297 = vld [vmem:[%s1 + $0x808] sm:$0xff]
  %v298 = vld [vmem:[%s1 + $0x810] sm:$0xff]
  %v299 = vld [vmem:[%s1 + $0x818] sm:$0xff]
  %v300 = vld [vmem:[%s1 + $0x820] sm:$0xff]
  %v301 = vld [vmem:[%s1 + $0x828] sm:$0xff]
  %v302 = vld [vmem:[%s1 + $0x830] sm:$0xff]
  %v303 = vld [vmem:[%s1 + $0x838] sm:$0xff]
  %v304 = vld [vmem:[%s1 + $0x840] sm:$0xff]
  %v305 = vld [vmem:[%s1 + $0x848] sm:$0xff]
  %v306 = vld [vmem:[%s1 + $0x850] sm:$0xff]
  %v307 = vld [vmem:[%s1 + $0x858] sm:$0xff]
  %v308 = vld [vmem:[%s1 + $0x860] sm:$0xff]
  %v309 = vld [vmem:[%s1 + $0x868] sm:$0xff]
  %v310 = vld [vmem:[%s1 + $0x870] sm:$0xff]
  %v311 = vld [vmem:[%s1 + $0x878] sm:$0xff]
  %v312 = vld [vmem:[%s1 + $0x880] sm:$0xff]
  %v313 = vld [vmem:[%s1 + $0x888] sm:$0xff]
  %v314 = vld [vmem:[%s1 + $0x890] sm:$0xff]
  %v315 = vld [vmem:[%s1 + $0x898] sm:$0xff]
  %v316 = vld [vmem:[%s1 + $0x8a0] sm:$0xff]
  %v317 = vld [vmem:[%s1 + $0x8a8] sm:$0xff]
  %v318 = vld [vmem:[%s1 + $0x8b0] sm:$0xff]
  %v319 = vld [vmem:[%s1 + $0x8b8] sm:$0xff]
  %v320 = vld [vmem:[%s1 + $0x8c0] sm:$0xff]
  %v321 = vld [vmem:[%s1 + $0x8c8] sm:$0xff]
  %v322 = vld [vmem:[%s1 + $0x8d0] sm:$0xff]
  %v323 = vld [vmem:[%s1 + $0x8d8] sm:$0xff]
  %v324 = vld [vmem:[%s1 + $0x8e0] sm:$0xff]
  %v325 = vld [vmem:[%s1 + $0x8e8] sm:$0xff]
  %v326 = vld [vmem:[%s1 + $0x8f0] sm:$0xff]
  %v327 = vld [vmem:[%s1 + $0x8f8] sm:$0xff]
  %v328 = vld [vmem:[%s1 + $0x900] sm:$0xff]
  %v329 = vld [vmem:[%s1 + $0x908] sm:$0xff]
  %v330 = vld [vmem:[%s1 + $0x910] sm:$0xff]
  %v331 = vld [vmem:[%s1 + $0x918] sm:$0xff]
  %v332 = vld [vmem:[%s1 + $0x920] sm:$0xff]
  %v333 = vld [vmem:[%s1 + $0x928] sm:$0xff]
  %v334 = vld [vmem:[%s1 + $0x930] sm:$0xff]
  %v335 = vld [vmem:[%s1 + $0x938] sm:$0xff]
  %v336 = vld [vmem:[%s1 + $0x940] sm:$0xff]
  %v337 = vld [vmem:[%s1 + $0x948] sm:$0xff]
  %v338 = vld [vmem:[%s1 + $0x950] sm:$0xff]
  %v339 = vld [vmem:[%s1 + $0x958] sm:$0xff]
  %v340 = vld [vmem:[%s1 + $0x960] sm:$0xff]
  %v341 = vld [vmem:[%s1 + $0x968] sm:$0xff]
  %v342 = vld [vmem:[%s1 + $0x970] sm:$0xff]
  %v343 = vld [vmem:[%s1 + $0x978] sm:$0xff]
  %v344 = vld [vmem:[%s1 + $0x980] sm:$0xff]
  %v345 = vld [vmem:[%s1 + $0x988] sm:$0xff]
  %v346 = vld [vmem:[%s1 + $0x990] sm:$0xff]
  %v347 = vld [vmem:[%s1 + $0x998] sm:$0xff]
  %v348 = vld [vmem:[%s1 + $0x9a0] sm:$0xff]
  %v349 = vld [vmem:[%s1 + $0x9a8] sm:$0xff]
  %v350 = vld [vmem:[%s1 + $0x9b0] sm:$0xff]
  %v351 = vld [vmem:[%s1 + $0x9b8] sm:$0xff]
  %v352 = vld [vmem:[%s1 + $0x9c0] sm:$0xff]
  %v353 = vld [vmem:[%s1 + $0x9c8] sm:$0xff]
  %v354 = vld [vmem:[%s1 + $0x9d0] sm:$0xff]
  %v355 = vld [vmem:[%s1 + $0x9d8] sm:$0xff]
  %v356 = vld [vmem:[%s1 + $0x9e0] sm:$0xff]
  %v357 = vld [vmem:[%s1 + $0x9e8] sm:$0xff]
  %v358 = vld [vmem:[%s1 + $0x9f0] sm:$0xff]
  %v359 = vld [vmem:[%s1 + $0x9f8] sm:$0xff]
  %v360 = vld [vmem:[%s1 + $0xa00] sm:$0xff]
  %v361 = vld [vmem:[%s1 + $0xa08] sm:$0xff]
  %v362 = vld [vmem:[%s1 + $0xa10] sm:$0xff]
  %v363 = vld [vmem:[%s1 + $0xa18] sm:$0xff]
  %v364 = vld [vmem:[%s1 + $0xa20] sm:$0xff]
  %v365 = vld [vmem:[%s1 + $0xa28] sm:$0xff]
  %v366 = vld [vmem:[%s1 + $0xa30] sm:$0xff]
  %v367 = vld [vmem:[%s1 + $0xa38] sm:$0xff]
  %v368 = vld [vmem:[%s1 + $0xa40] sm:$0xff]
  %v369 = vld [vmem:[%s1 + $0xa48] sm:$0xff]
  %v370 = vld [vmem:[%s1 + $0xa50] sm:$0xff]
  %v371 = vld [vmem:[%s1 + $0xa58] sm:$0xff]
  %v372 = vld [vmem:[%s1 + $0xa60] sm:$0xff]
  %v373 = vld [vmem:[%s1 + $0xa68] sm:$0xff]
  %v374 = vld [vmem:[%s1 + $0xa70] sm:$0xff]
  %v375 = vld [vmem:[%s1 + $0xa78] sm:$0xff]
  %v376 = vld [vmem:[%s1 + $0xa80] sm:$0xff]
  %v377 = vld [vmem:[%s1 + $0xa88] sm:$0xff]
  %v378 = vld [vmem:[%s1 + $0xa90] sm:$0xff]
  %v379 = vld [vmem:[%s1 + $0xa98] sm:$0xff]
  %v380 = vld [vmem:[%s1 + $0xaa0] sm:$0xff]
  %v381 = vld [vmem:[%s1 + $0xaa8] sm:$0xff]
  %v382 = vld [vmem:[%s1 + $0xab0] sm:$0xff]
  %v383 = vld [vmem:[%s1 + $0xab8] sm:$0xff]
  %v384 = vld [vmem:[%s1 + $0xac0] sm:$0xff]
  %v385 = vld [vmem:[%s1 + $0xac8] sm:$0xff]
  %v386 = vld [vmem:[%s1 + $0xad0] sm:$0xff]
  %v387 = vld [vmem:[%s1 + $0xad8] sm:$0xff]
  %v388 = vld [vmem:[%s1 + $0xae0] sm:$0xff]
  %v389 = vld [vmem:[%s1 + $0xae8] sm:$0xff]
  %v390 = vld [vmem:[%s1 + $0xaf0] sm:$0xff]
  %v391 = vld [vmem:[%s1 + $0xaf8] sm:$0xff]
  %v392 = vld [vmem:[%s1 + $0xb00] sm:$0xff]
  %v393 = vld [vmem:[%s1 + $0xb08] sm:$0xff]
  %v394 = vld [vmem:[%s1 + $0xb10] sm:$0xff]
  %v395 = vld [vmem:[%s1 + $0xb18] sm:$0xff]
  %v396 = vld [vmem:[%s1 + $0xb20] sm:$0xff]
  %v397 = vld [vmem:[%s1 + $0xb28] sm:$0xff]
  %v398 = vld [vmem:[%s1 + $0xb30] sm:$0xff]
  %v399 = vld [vmem:[%s1 + $0xb38] sm:$0xff]
  %v400 = vld [vmem:[%s1 + $0xb40] sm:$0xff]
  %v401 = vld [vmem:[%s1 + $0xb48] sm:$0xff]
  %v402 = vld [vmem:[%s1 + $0xb50] sm:$0xff]
  %v403 = vld [vmem:[%s1 + $0xb58] sm:$0xff]
  %v404 = vld [vmem:[%s1 + $0xb60] sm:$0xff]
  %v405 = vld [vmem:[%s1 + $0xb68] sm:$0xff]
  %v406 = vld [vmem:[%s1 + $0xb70] sm:$0xff]
  %v407 = vld [vmem:[%s1 + $0xb78] sm:$0xff]
  %v408 = vld [vmem:[%s1 + $0xb80] sm:$0xff]
  %v409 = vld [vmem:[%s1 + $0xb88] sm:$0xff]
  %v410 = vld [vmem:[%s1 + $0xb90] sm:$0xff]
  %v411 = vld [vmem:[%s1 + $0xb98] sm:$0xff]
  %v412 = vld [vmem:[%s1 + $0xba0] sm:$0xff]
  %v413 = vld [vmem:[%s1 + $0xba8] sm:$0xff]
  %v414 = vld [vmem:[%s1 + $0xbb0] sm:$0xff]
  %v415 = vld [vmem:[%s1 + $0xbb8] sm:$0xff]
  %v416 = vld [vmem:[%s1 + $0xbc0] sm:$0xff]
  %v417 = vld [vmem:[%s1 + $0xbc8] sm:$0xff]
  %v418 = vld [vmem:[%s1 + $0xbd0] sm:$0xff]
  %v419 = vld [vmem:[%s1 + $0xbd8] sm:$0xff]
  %v420 = vld [vmem:[%s1 + $0xbe0] sm:$0xff]
  %v421 = vld [vmem:[%s1 + $0xbe8] sm:$0xff]
  %v422 = vld [vmem:[%s1 + $0xbf0] sm:$0xff]
  %v423 = vld [vmem:[%s1 + $0xbf8] sm:$0xff]
  %v424 = vld [vmem:[%s1 + $0xc00] sm:$0xff]
  %v425 = vld [vmem:[%s1 + $0xc08] sm:$0xff]
  %v426 = vld [vmem:[%s1 + $0xc10] sm:$0xff]
  %v427 = vld [vmem:[%s1 + $0xc18] sm:$0xff]
  %v428 = vld [vmem:[%s1 + $0xc20] sm:$0xff]
  %v429 = vld [vmem:[%s1 + $0xc28] sm:$0xff]
  %v430 = vld [vmem:[%s1 + $0xc30] sm:$0xff]
  %v431 = vld [vmem:[%s1 + $0xc38] sm:$0xff]
  %v432 = vld [vmem:[%s1 + $0xc40] sm:$0xff]
  %v433 = vld [vmem:[%s1 + $0xc48] sm:$0xff]
  %v434 = vld [vmem:[%s1 + $0xc50] sm:$0xff]
  %v435 = vld [vmem:[%s1 + $0xc58] sm:$0xff]
  %v436 = vld [vmem:[%s1 + $0xc60] sm:$0xff]
  %v437 = vld [vmem:[%s1 + $0xc68] sm:$0xff]
  %v438 = vld [vmem:[%s1 + $0xc70] sm:$0xff]
  %v439 = vld [vmem:[%s1 + $0xc78] sm:$0xff]
  %v440 = vld [vmem:[%s1 + $0xc80] sm:$0xff]
  %v441 = vld [vmem:[%s1 + $0xc88] sm:$0xff]
  %v442 = vld [vmem:[%s1 + $0xc90] sm:$0xff]
  %v443 = vld [vmem:[%s1 + $0xc98] sm:$0xff]
  %v444 = vld [vmem:[%s1 + $0xca0] sm:$0xff]
  %v445 = vld [vmem:[%s1 + $0xca8] sm:$0xff]
  %v446 = vld [vmem:[%s1 + $0xcb0] sm:$0xff]
  %v447 = vld [vmem:[%s1 + $0xcb8] sm:$0xff]
  %v448 = vld [vmem:[%s1 + $0xcc0] sm:$0xff]
  %v449 = vld [vmem:[%s1 + $0xcc8] sm:$0xff]
  %v450 = vld [vmem:[%s1 + $0xcd0] sm:$0xff]
  %v451 = vld [vmem:[%s1 + $0xcd8] sm:$0xff]
  %v452 = vld [vmem:[%s1 + $0xce0] sm:$0xff]
  %v453 = vld [vmem:[%s1 + $0xce8] sm:$0xff]
  %v454 = vld [vmem:[%s1 + $0xcf0] sm:$0xff]
  %v455 = vld [vmem:[%s1 + $0xcf8] sm:$0xff]
  %v456 = vld [vmem:[%s1 + $0xd00] sm:$0xff]
  %v457 = vld [vmem:[%s1 + $0xd08] sm:$0xff]
  %v458 = vld [vmem:[%s1 + $0xd10] sm:$0xff]
  %v459 = vld [vmem:[%s1 + $0xd18] sm:$0xff]
  %v460 = vld [vmem:[%s1 + $0xd20] sm:$0xff]
  %v461 = vld [vmem:[%s1 + $0xd28] sm:$0xff]
  %v462 = vld [vmem:[%s1 + $0xd30] sm:$0xff]
  %v463 = vld [vmem:[%s1 + $0xd38] sm:$0xff]
  %v464 = vld [vmem:[%s1 + $0xd40] sm:$0xff]
  %v465 = vld [vmem:[%s1 + $0xd48] sm:$0xff]
  %v466 = vld [vmem:[%s1 + $0xd50] sm:$0xff]
  %v467 = vld [vmem:[%s1 + $0xd58] sm:$0xff]
  %v468 = vld [vmem:[%s1 + $0xd60] sm:$0xff]
  %v469 = vld [vmem:[%s1 + $0xd68] sm:$0xff]
  %v470 = vld [vmem:[%s1 + $0xd70] sm:$0xff]
  %v471 = vld [vmem:[%s1 + $0xd78] sm:$0xff]
  %v472 = vld [vmem:[%s1 + $0xd80] sm:$0xff]
  %v473 = vld [vmem:[%s1 + $0xd88] sm:$0xff]
  %v474 = vld [vmem:[%s1 + $0xd90] sm:$0xff]
  %v475 = vld [vmem:[%s1 + $0xd98] sm:$0xff]
  %v476 = vld [vmem:[%s1 + $0xda0] sm:$0xff]
  %v477 = vld [vmem:[%s1 + $0xda8] sm:$0xff]
  %v478 = vld [vmem:[%s1 + $0xdb0] sm:$0xff]
  %v479 = vld [vmem:[%s1 + $0xdb8] sm:$0xff]
  %v480 = vld [vmem:[%s1 + $0xdc0] sm:$0xff]
  %v481 = vld [vmem:[%s1 + $0xdc8] sm:$0xff]
  %v482 = vld [vmem:[%s1 + $0xdd0] sm:$0xff]
  %v483 = vld [vmem:[%s1 + $0xdd8] sm:$0xff]
  %v484 = vld [vmem:[%s1 + $0xde0] sm:$0xff]
  %v485 = vld [vmem:[%s1 + $0xde8] sm:$0xff]
  %v486 = vld [vmem:[%s1 + $0xdf0] sm:$0xff]
  %v487 = vld [vmem:[%s1 + $0xdf8] sm:$0xff]
  %v488 = vld [vmem:[%s1 + $0xe00] sm:$0xff]
  %v489 = vld [vmem:[%s1 + $0xe08] sm:$0xff]
  %v490 = vld [vmem:[%s1 + $0xe10] sm:$0xff]
  %v491 = vld [vmem:[%s1 + $0xe18] sm:$0xff]
  %v492 = vld [vmem:[%s1 + $0xe20] sm:$0xff]
  %v493 = vld [vmem:[%s1 + $0xe28] sm:$0xff]
  %v494 = vld [vmem:[%s1 + $0xe30] sm:$0xff]
  %v495 = vld [vmem:[%s1 + $0xe38] sm:$0xff]
  %v496 = vld [vmem:[%s1 + $0xe40] sm:$0xff]
  %v497 = vld [vmem:[%s1 + $0xe48] sm:$0xff]
  %v498 = vld [vmem:[%s1 + $0xe50] sm:$0xff]
  %v499 = vld [vmem:[%s1 + $0xe58] sm:$0xff]
  %v500 = vld [vmem:[%s1 + $0xe60] sm:$0xff]
  %v501 = vld [vmem:[%s1 + $0xe68] sm:$0xff]
  %v502 = vld [vmem:[%s1 + $0xe70] sm:$0xff]
  %v503 = vld [vmem:[%s1 + $0xe78] sm:$0xff]
  %v504 = vld [vmem:[%s1 + $0xe80] sm:$0xff]
  %v505 = vld [vmem:[%s1 + $0xe88] sm:$0xff]
  %v506 = vld [vmem:[%s1 + $0xe90] sm:$0xff]
  %v507 = vld [vmem:[%s1 + $0xe98] sm:$0xff]
  %v508 = vld [vmem:[%s1 + $0xea0] sm:$0xff]
  %v509 = vld [vmem:[%s1 + $0xea8] sm:$0xff]
  %v510 = vld [vmem:[%s1 + $0xeb0] sm:$0xff]
  %v511 = vld [vmem:[%s1 + $0xeb8] sm:$0xff]
  %v512 = vld [vmem:[%s1 + $0xec0] sm:$0xff]
  %v513 = vld [vmem:[%s1 + $0xec8] sm:$0xff]
  %v514 = vld [vmem:[%s1 + $0xed0] sm:$0xff]
  %v515 = vld [vmem:[%s1 + $0xed8] sm:$0xff]
  %v516 = vld [vmem:[%s1 + $0xee0] sm:$0xff]
  %v517 = vld [vmem:[%s1 + $0xee8] sm:$0xff]
  %v518 = vld [vmem:[%s1 + $0xef0] sm:$0xff]
  %v519 = vld [vmem:[%s1 + $0xef8] sm:$0xff]
  %v520 = vld [vmem:[%s1 + $0xf00] sm:$0xff]
  %v521 = vld [vmem:[%s1 + $0xf08] sm:$0xff]
  %v522 = vld [vmem:[%s1 + $0xf10] sm:$0xff]
  %v523 = vld [vmem:[%s1 + $0xf18] sm:$0xff]
  %v524 = vld [vmem:[%s1 + $0xf20] sm:$0xff]
  %v525 = vld [vmem:[%s1 + $0xf28] sm:$0xff]
  %v526 = vld [vmem:[%s1 + $0xf30] sm:$0xff]
  %v527 = vld [vmem:[%s1 + $0xf38] sm:$0xff]
  %v528 = vld [vmem:[%s1 + $0xf40] sm:$0xff]
  %v529 = vld [vmem:[%s1 + $0xf48] sm:$0xff]
  %v530 = vld [vmem:[%s1 + $0xf50] sm:$0xff]
  %v531 = vld [vmem:[%s1 + $0xf58] sm:$0xff]
  %v532 = vld [vmem:[%s1 + $0xf60] sm:$0xff]
  %v533 = vld [vmem:[%s1 + $0xf68] sm:$0xff]
  %v534 = vld [vmem:[%s1 + $0xf70] sm:$0xff]
  %v535 = vld [vmem:[%s1 + $0xf78] sm:$0xff]
  %v536 = vld [vmem:[%s1 + $0xf80] sm:$0xff]
  %v537 = vld [vmem:[%s1 + $0xf88] sm:$0xff]
  %v538 = vld [vmem:[%s1 + $0xf90] sm:$0xff]
  %v539 = vld [vmem:[%s1 + $0xf98] sm:$0xff]
  %v540 = vld [vmem:[%s1 + $0xfa0] sm:$0xff]
  %v541 = vld [vmem:[%s1 + $0xfa8] sm:$0xff]
  %v542 = vld [vmem:[%s1 + $0xfb0] sm:$0xff]
  %v543 = vld [vmem:[%s1 + $0xfb8] sm:$0xff]
  %v544 = vld [vmem:[%s1 + $0xfc0] sm:$0xff]
  %v545 = vld [vmem:[%s1 + $0xfc8] sm:$0xff]
  %v546 = vld [vmem:[%s1 + $0xfd0] sm:$0xff]
  %v547 = vld [vmem:[%s1 + $0xfd8] sm:$0xff]
  %v548 = vld [vmem:[%s1 + $0xfe0] sm:$0xff]
  %v549 = vld [vmem:[%s1 + $0xfe8] sm:$0xff]
  %v550 = vld [vmem:[%s1 + $0xff0] sm:$0xff]
  %v551 = vld [vmem:[%s1 + $0xff8] sm:$0xff]
  %v552 = vld [vmem:[%s1 + $0x1000] sm:$0xff]
  %v553 = vld [vmem:[%s1 + $0x1008] sm:$0xff]
  %v554 = vld [vmem:[%s1 + $0x1010] sm:$0xff]
  %v555 = vld [vmem:[%s1 + $0x1018] sm:$0xff]
  %v556 = vld [vmem:[%s1 + $0x1020] sm:$0xff]
  %v557 = vld [vmem:[%s1 + $0x1028] sm:$0xff]
  %v558 = vld [vmem:[%s1 + $0x1030] sm:$0xff]
  %v559 = vld [vmem:[%s1 + $0x1038] sm:$0xff]
  %v560 = vld [vmem:[%s1 + $0x1040] sm:$0xff]
  %v561 = vld [vmem:[%s1 + $0x1048] sm:$0xff]
  %v562 = vld [vmem:[%s1 + $0x1050] sm:$0xff]
  %v563 = vld [vmem:[%s1 + $0x1058] sm:$0xff]
  %v564 = vld [vmem:[%s1 + $0x1060] sm:$0xff]
  %v565 = vld [vmem:[%s1 + $0x1068] sm:$0xff]
  %v566 = vld [vmem:[%s1 + $0x1070] sm:$0xff]
  %v567 = vld [vmem:[%s1 + $0x1078] sm:$0xff]
  %v568 = vld [vmem:[%s1 + $0x1080] sm:$0xff]
  %v569 = vld [vmem:[%s1 + $0x1088] sm:$0xff]
  %v570 = vld [vmem:[%s1 + $0x1090] sm:$0xff]
  %v571 = vld [vmem:[%s1 + $0x1098] sm:$0xff]
  %v572 = vld [vmem:[%s1 + $0x10a0] sm:$0xff]
  %v573 = vld [vmem:[%s1 + $0x10a8] sm:$0xff]
  %v574 = vld [vmem:[%s1 + $0x10b0] sm:$0xff]
  %v575 = vld [vmem:[%s1 + $0x10b8] sm:$0xff]
  %v576 = vld [vmem:[%s1 + $0x10c0] sm:$0xff]
  %v577 = vld [vmem:[%s1 + $0x10c8] sm:$0xff]
  %v578 = vld [vmem:[%s1 + $0x10d0] sm:$0xff]
  %v579 = vld [vmem:[%s1 + $0x10d8] sm:$0xff]
  %v580 = vld [vmem:[%s1 + $0x10e0] sm:$0xff]
  %v581 = vld [vmem:[%s1 + $0x10e8] sm:$0xff]
  %v582 = vld [vmem:[%s1 + $0x10f0] sm:$0xff]
  %v583 = vld [vmem:[%s1 + $0x10f8] sm:$0xff]
  %v584 = vld [vmem:[%s1 + $0x1100] sm:$0xff]
  %v585 = vld [vmem:[%s1 + $0x1108] sm:$0xff]
  %v586 = vld [vmem:[%s1 + $0x1110] sm:$0xff]
  %v587 = vld [vmem:[%s1 + $0x1118] sm:$0xff]
  %v588 = vld [vmem:[%s1 + $0x1120] sm:$0xff]
  %v589 = vld [vmem:[%s1 + $0x1128] sm:$0xff]
  %v590 = vld [vmem:[%s1 + $0x1130] sm:$0xff]
  %v591 = vld [vmem:[%s1 + $0x1138] sm:$0xff]
  %v592 = vld [vmem:[%s1 + $0x1140] sm:$0xff]
  %v593 = vld [vmem:[%s1 + $0x1148] sm:$0xff]
  %v594 = vld [vmem:[%s1 + $0x1150] sm:$0xff]
  %v595 = vld [vmem:[%s1 + $0x1158] sm:$0xff]
  %v596 = vld [vmem:[%s1 + $0x1160] sm:$0xff]
  %v597 = vld [vmem:[%s1 + $0x1168] sm:$0xff]
  %v598 = vld [vmem:[%s1 + $0x1170] sm:$0xff]
  %v599 = vld [vmem:[%s1 + $0x1178] sm:$0xff]
  %v600 = vld [vmem:[%s1 + $0x1180] sm:$0xff]
  %v601 = vld [vmem:[%s1 + $0x1188] sm:$0xff]
  %v602 = vld [vmem:[%s1 + $0x1190] sm:$0xff]
  %v603 = vld [vmem:[%s1 + $0x1198] sm:$0xff]
  %v604 = vld [vmem:[%s1 + $0x11a0] sm:$0xff]
  %v605 = vld [vmem:[%s1 + $0x11a8] sm:$0xff]
  %v606 = vld [vmem:[%s1 + $0x11b0] sm:$0xff]
  %v607 = vld [vmem:[%s1 + $0x11b8] sm:$0xff]
  %v608 = vld [vmem:[%s1 + $0x11c0] sm:$0xff]
  %v609 = vld [vmem:[%s1 + $0x11c8] sm:$0xff]
  %v610 = vld [vmem:[%s1 + $0x11d0] sm:$0xff]
  %v611 = vld [vmem:[%s1 + $0x11d8] sm:$0xff]
  %v612 = vld [vmem:[%s1 + $0x11e0] sm:$0xff]
  %v613 = vld [vmem:[%s1 + $0x11e8] sm:$0xff]
  %v614 = vld [vmem:[%s1 + $0x11f0] sm:$0xff]
  %v615 = vld [vmem:[%s1 + $0x11f8] sm:$0xff]
  %v616 = vld [vmem:[%s1 + $0x1200] sm:$0xff]
  %v617 = vld [vmem:[%s1 + $0x1208] sm:$0xff]
  %v618 = vld [vmem:[%s1 + $0x1210] sm:$0xff]
  %v619 = vld [vmem:[%s1 + $0x1218] sm:$0xff]
  %v620 = vld [vmem:[%s1 + $0x1220] sm:$0xff]
  %v621 = vld [vmem:[%s1 + $0x1228] sm:$0xff]
  %v622 = vld [vmem:[%s1 + $0x1230] sm:$0xff]
  %v623 = vld [vmem:[%s1 + $0x1238] sm:$0xff]
  %v624 = vld [vmem:[%s1 + $0x1240] sm:$0xff]
  %v625 = vld [vmem:[%s1 + $0x1248] sm:$0xff]
  %v626 = vld [vmem:[%s1 + $0x1250] sm:$0xff]
  %v627 = vld [vmem:[%s1 + $0x1258] sm:$0xff]
  %v628 = vld [vmem:[%s1 + $0x1260] sm:$0xff]
  %v629 = vld [vmem:[%s1 + $0x1268] sm:$0xff]
  %v630 = vld [vmem:[%s1 + $0x1270] sm:$0xff]
  %v631 = vld [vmem:[%s1 + $0x1278] sm:$0xff]
  %v632 = vld [vmem:[%s1 + $0x1280] sm:$0xff]
  %v633 = vld [vmem:[%s1 + $0x1288] sm:$0xff]
  %v634 = vld [vmem:[%s1 + $0x1290] sm:$0xff]
  %v635 = vld [vmem:[%s1 + $0x1298] sm:$0xff]
  %v636 = vld [vmem:[%s1 + $0x12a0] sm:$0xff]
  %v637 = vld [vmem:[%s1 + $0x12a8] sm:$0xff]
  %v638 = vld [vmem:[%s1 + $0x12b0] sm:$0xff]
  %v639 = vld [vmem:[%s1 + $0x12b8] sm:$0xff]
  %v640 = vld [vmem:[%s1 + $0x12c0] sm:$0xff]
  %v641 = vld [vmem:[%s1 + $0x12c8] sm:$0xff]
  %v642 = vld [vmem:[%s1 + $0x12d0] sm:$0xff]
  %v643 = vld [vmem:[%s1 + $0x12d8] sm:$0xff]
  %v644 = vld [vmem:[%s1 + $0x12e0] sm:$0xff]
  %v645 = vld [vmem:[%s1 + $0x12e8] sm:$0xff]
  %v646 = vld [vmem:[%s1 + $0x12f0] sm:$0xff]
  %v647 = vld [vmem:[%s1 + $0x12f8] sm:$0xff]
  %v648 = vld [vmem:[%s1 + $0x1300] sm:$0xff]
  %v649 = vld [vmem:[%s1 + $0x1308] sm:$0xff]
  %v650 = vld [vmem:[%s1 + $0x1310] sm:$0xff]
  %v651 = vld [vmem:[%s1 + $0x1318] sm:$0xff]
  %v652 = vld [vmem:[%s1 + $0x1320] sm:$0xff]
  %v653 = vld [vmem:[%s1 + $0x1328] sm:$0xff]
  %v654 = vld [vmem:[%s1 + $0x1330] sm:$0xff]
  %v655 = vld [vmem:[%s1 + $0x1338] sm:$0xff]
  %v656 = vld [vmem:[%s1 + $0x1340] sm:$0xff]
  %v657 = vld [vmem:[%s1 + $0x1348] sm:$0xff]
  %v658 = vld [vmem:[%s1 + $0x1350] sm:$0xff]
  %v659 = vld [vmem:[%s1 + $0x1358] sm:$0xff]
  %v660 = vld [vmem:[%s1 + $0x1360] sm:$0xff]
  %v661 = vld [vmem:[%s1 + $0x1368] sm:$0xff]
  %v662 = vld [vmem:[%s1 + $0x1370] sm:$0xff]
  %v663 = vld [vmem:[%s1 + $0x1378] sm:$0xff]
  %v664 = vld [vmem:[%s1 + $0x1380] sm:$0xff]
  %v665 = vld [vmem:[%s1 + $0x1388] sm:$0xff]
  %v666 = vld [vmem:[%s1 + $0x1390] sm:$0xff]
  %v667 = vld [vmem:[%s1 + $0x1398] sm:$0xff]
  %v668 = vld [vmem:[%s1 + $0x13a0] sm:$0xff]
  %v669 = vld [vmem:[%s1 + $0x13a8] sm:$0xff]
  %v670 = vld [vmem:[%s1 + $0x13b0] sm:$0xff]
  %v671 = vld [vmem:[%s1 + $0x13b8] sm:$0xff]
  %v672 = vld [vmem:[%s1 + $0x13c0] sm:$0xff]
  %v673 = vld [vmem:[%s1 + $0x13c8] sm:$0xff]
  %v674 = vld [vmem:[%s1 + $0x13d0] sm:$0xff]
  %v675 = vld [vmem:[%s1 + $0x13d8] sm:$0xff]
  %v676 = vld [vmem:[%s1 + $0x13e0] sm:$0xff]
  %v677 = vld [vmem:[%s1 + $0x13e8] sm:$0xff]
  %v678 = vld [vmem:[%s1 + $0x13f0] sm:$0xff]
  %v679 = vld [vmem:[%s1 + $0x13f8] sm:$0xff]
  %v680 = vld [vmem:[%s1 + $0x1400] sm:$0xff]
  %v681 = vld [vmem:[%s1 + $0x1408] sm:$0xff]
  %v682 = vld [vmem:[%s1 + $0x1410] sm:$0xff]
  %v683 = vld [vmem:[%s1 + $0x1418] sm:$0xff]
  %v684 = vld [vmem:[%s1 + $0x1420] sm:$0xff]
  %v685 = vld [vmem:[%s1 + $0x1428] sm:$0xff]
  %v686 = vld [vmem:[%s1 + $0x1430] sm:$0xff]
  %v687 = vld [vmem:[%s1 + $0x1438] sm:$0xff]
  %v688 = vld [vmem:[%s1 + $0x1440] sm:$0xff]
  %v689 = vld [vmem:[%s1 + $0x1448] sm:$0xff]
  %v690 = vld [vmem:[%s1 + $0x1450] sm:$0xff]
  %v691 = vld [vmem:[%s1 + $0x1458] sm:$0xff]
  %v692 = vld [vmem:[%s1 + $0x1460] sm:$0xff]
  %v693 = vld [vmem:[%s1 + $0x1468] sm:$0xff]
  %v694 = vld [vmem:[%s1 + $0x1470] sm:$0xff]
  %v695 = vld [vmem:[%s1 + $0x1478] sm:$0xff]
  %v696 = vld [vmem:[%s1 + $0x1480] sm:$0xff]
  %v697 = vld [vmem:[%s1 + $0x1488] sm:$0xff]
  %v698 = vld [vmem:[%s1 + $0x1490] sm:$0xff]
  %v699 = vld [vmem:[%s1 + $0x1498] sm:$0xff]
  %v700 = vld [vmem:[%s1 + $0x14a0] sm:$0xff]
  %v701 = vld [vmem:[%s1 + $0x14a8] sm:$0xff]
  %v702 = vld [vmem:[%s1 + $0x14b0] sm:$0xff]
  %v703 = vld [vmem:[%s1 + $0x14b8] sm:$0xff]
  %v704 = vld [vmem:[%s1 + $0x14c0] sm:$0xff]
  %v705 = vld [vmem:[%s1 + $0x14c8] sm:$0xff]
  %v706 = vld [vmem:[%s1 + $0x14d0] sm:$0xff]
  %v707 = vld [vmem:[%s1 + $0x14d8] sm:$0xff]
  %v708 = vld [vmem:[%s1 + $0x14e0] sm:$0xff]
  %v709 = vld [vmem:[%s1 + $0x14e8] sm:$0xff]
  %v710 = vld [vmem:[%s1 + $0x14f0] sm:$0xff]
  %v711 = vld [vmem:[%s1 + $0x14f8] sm:$0xff]
  %v712 = vld [vmem:[%s1 + $0x1500] sm:$0xff]
  %v713 = vld [vmem:[%s1 + $0x1508] sm:$0xff]
  %v714 = vld [vmem:[%s1 + $0x1510] sm:$0xff]
  %v715 = vld [vmem:[%s1 + $0x1518] sm:$0xff]
  %v716 = vld [vmem:[%s1 + $0x1520] sm:$0xff]
  %v717 = vld [vmem:[%s1 + $0x1528] sm:$0xff]
  %v718 = vld [vmem:[%s1 + $0x1530] sm:$0xff]
  %v719 = vld [vmem:[%s1 + $0x1538] sm:$0xff]
  %v720 = vld [vmem:[%s1 + $0x1540] sm:$0xff]
  %v721 = vld [vmem:[%s1 + $0x1548] sm:$0xff]
  %v722 = vld [vmem:[%s1 + $0x1550] sm:$0xff]
  %v723 = vld [vmem:[%s1 + $0x1558] sm:$0xff]
  %v724 = vld [vmem:[%s1 + $0x1560] sm:$0xff]
  %v725 = vld [vmem:[%s1 + $0x1568] sm:$0xff]
  %v726 = vld [vmem:[%s1 + $0x1570] sm:$0xff]
  %v727 = vld [vmem:[%s1 + $0x1578] sm:$0xff]
  %v728 = vld [vmem:[%s1 + $0x1580] sm:$0xff]
  %v729 = vld [vmem:[%s1 + $0x1588] sm:$0xff]
  %v730 = vld [vmem:[%s1 + $0x1590] sm:$0xff]
  %v731 = vld [vmem:[%s1 + $0x1598] sm:$0xff]
  %v732 = vld [vmem:[%s1 + $0x15a0] sm:$0xff]
  %v733 = vld [vmem:[%s1 + $0x15a8] sm:$0xff]
  %v734 = vld [vmem:[%s1 + $0x15b0] sm:$0xff]
  %v735 = vld [vmem:[%s1 + $0x15b8] sm:$0xff]
  %v736 = vld [vmem:[%s1 + $0x15c0] sm:$0xff]
  %v737 = vld [vmem:[%s1 + $0x15c8] sm:$0xff]
  %v738 = vld [vmem:[%s1 + $0x15d0] sm:$0xff]
  %v739 = vld [vmem:[%s1 + $0x15d8] sm:$0xff]
  %v740 = vld [vmem:[%s1 + $0x15e0] sm:$0xff]
  %v741 = vld [vmem:[%s1 + $0x15e8] sm:$0xff]
  %v742 = vld [vmem:[%s1 + $0x15f0] sm:$0xff]
  %v743 = vld [vmem:[%s1 + $0x15f8] sm:$0xff]
  %v744 = vld [vmem:[%s1 + $0x1600] sm:$0xff]
  %v745 = vld [vmem:[%s1 + $0x1608] sm:$0xff]
  %v746 = vld [vmem:[%s1 + $0x1610] sm:$0xff]
  %v747 = vld [vmem:[%s1 + $0x1618] sm:$0xff]
  %v748 = vld [vmem:[%s1 + $0x1620] sm:$0xff]
  %v749 = vld [vmem:[%s1 + $0x1628] sm:$0xff]
  %v750 = vld [vmem:[%s1 + $0x1630] sm:$0xff]
  %v751 = vld [vmem:[%s1 + $0x1638] sm:$0xff]
  %v752 = vld [vmem:[%s1 + $0x1640] sm:$0xff]
  %v753 = vld [vmem:[%s1 + $0x1648] sm:$0xff]
  %v754 = vld [vmem:[%s1 + $0x1650] sm:$0xff]
  %v755 = vld [vmem:[%s1 + $0x1658] sm:$0xff]
  %v756 = vld [vmem:[%s1 + $0x1660] sm:$0xff]
  %v757 = vld [vmem:[%s1 + $0x1668] sm:$0xff]
  %v758 = vld [vmem:[%s1 + $0x1670] sm:$0xff]
  %v759 = vld [vmem:[%s1 + $0x1678] sm:$0xff]
  %v760 = vld [vmem:[%s1 + $0x1680] sm:$0xff]
  %v761 = vld [vmem:[%s1 + $0x1688] sm:$0xff]
  %v762 = vld [vmem:[%s1 + $0x1690] sm:$0xff]
  %v763 = vld [vmem:[%s1 + $0x1698] sm:$0xff]
  %v764 = vld [vmem:[%s1 + $0x16a0] sm:$0xff]
  %v765 = vld [vmem:[%s1 + $0x16a8] sm:$0xff]
  %v766 = vld [vmem:[%s1 + $0x16b0] sm:$0xff]
  %v767 = vld [vmem:[%s1 + $0x16b8] sm:$0xff]
  %v768 = vld [vmem:[%s1 + $0x16c0] sm:$0xff]
  %v769 = vld [vmem:[%s1 + $0x16c8] sm:$0xff]
  %v770 = vld [vmem:[%s1 + $0x16d0] sm:$0xff]
  %v771 = vld [vmem:[%s1 + $0x16d8] sm:$0xff]
  %v772 = vld [vmem:[%s1 + $0x16e0] sm:$0xff]
  %v773 = vld [vmem:[%s1 + $0x16e8] sm:$0xff]
  %v774 = vld [vmem:[%s1 + $0x16f0] sm:$0xff]
  %v775 = vld [vmem:[%s1 + $0x16f8] sm:$0xff]
  %v776 = vld [vmem:[%s1 + $0x1700] sm:$0xff]
  %v777 = vld [vmem:[%s1 + $0x1708] sm:$0xff]
  %v778 = vld [vmem:[%s1 + $0x1710] sm:$0xff]
  %v779 = vld [vmem:[%s1 + $0x1718] sm:$0xff]
  %v780 = vld [vmem:[%s1 + $0x1720] sm:$0xff]
  %v781 = vld [vmem:[%s1 + $0x1728] sm:$0xff]
  %v782 = vld [vmem:[%s1 + $0x1730] sm:$0xff]
  %v783 = vld [vmem:[%s1 + $0x1738] sm:$0xff]
  %v784 = vld [vmem:[%s1 + $0x1740] sm:$0xff]
  %v785 = vld [vmem:[%s1 + $0x1748] sm:$0xff]
  %v786 = vld [vmem:[%s1 + $0x1750] sm:$0xff]
  %v787 = vld [vmem:[%s1 + $0x1758] sm:$0xff]
  %v788 = vld [vmem:[%s1 + $0x1760] sm:$0xff]
  %v789 = vld [vmem:[%s1 + $0x1768] sm:$0xff]
  %v790 = vld [vmem:[%s1 + $0x1770] sm:$0xff]
  %v791 = vld [vmem:[%s1 + $0x1778] sm:$0xff]
  %v792 = vld [vmem:[%s1 + $0x1780] sm:$0xff]
  %v793 = vld [vmem:[%s1 + $0x1788] sm:$0xff]
  %v794 = vld [vmem:[%s1 + $0x1790] sm:$0xff]
  %v795 = vld [vmem:[%s1 + $0x1798] sm:$0xff]
  %v796 = vld [vmem:[%s1 + $0x17a0] sm:$0xff]
  %v797 = vld [vmem:[%s1 + $0x17a8] sm:$0xff]
  %v798 = vld [vmem:[%s1 + $0x17b0] sm:$0xff]
  %v799 = vld [vmem:[%s1 + $0x17b8] sm:$0xff]
  %v800 = vld [vmem:[%s1 + $0x17c0] sm:$0xff]
  %v801 = vld [vmem:[%s1 + $0x17c8] sm:$0xff]
  %v802 = vld [vmem:[%s1 + $0x17d0] sm:$0xff]
  %v803 = vld [vmem:[%s1 + $0x17d8] sm:$0xff]
  %v804 = vld [vmem:[%s1 + $0x17e0] sm:$0xff]
  %v805 = vld [vmem:[%s1 + $0x17e8] sm:$0xff]
  %v806 = vld [vmem:[%s1 + $0x17f0] sm:$0xff]
  %v807 = vld [vmem:[%s1 + $0x17f8] sm:$0xff]
  %v808 = vld [vmem:[%s1 + $0x1800] sm:$0xff]
  %v809 = vld [vmem:[%s1 + $0x1808] sm:$0xff]
  %v810 = vld [vmem:[%s1 + $0x1810] sm:$0xff]
  %v811 = vld [vmem:[%s1 + $0x1818] sm:$0xff]
  %v812 = vld [vmem:[%s1 + $0x1820] sm:$0xff]
  %v813 = vld [vmem:[%s1 + $0x1828] sm:$0xff]
  %v814 = vld [vmem:[%s1 + $0x1830] sm:$0xff]
  %v815 = vld [vmem:[%s1 + $0x1838] sm:$0xff]
  %v816 = vld [vmem:[%s1 + $0x1840] sm:$0xff]
  %v817 = vld [vmem:[%s1 + $0x1848] sm:$0xff]
  %v818 = vld [vmem:[%s1 + $0x1850] sm:$0xff]
  %v819 = vld [vmem:[%s1 + $0x1858] sm:$0xff]
  %v820 = vld [vmem:[%s1 + $0x1860] sm:$0xff]
  %v821 = vld [vmem:[%s1 + $0x1868] sm:$0xff]
  %v822 = vld [vmem:[%s1 + $0x1870] sm:$0xff]
  %v823 = vld [vmem:[%s1 + $0x1878] sm:$0xff]
  %v824 = vld [vmem:[%s1 + $0x1880] sm:$0xff]
  %v825 = vld [vmem:[%s1 + $0x1888] sm:$0xff]
  %v826 = vld [vmem:[%s1 + $0x1890] sm:$0xff]
  %v827 = vld [vmem:[%s1 + $0x1898] sm:$0xff]
  %v828 = vld [vmem:[%s1 + $0x18a0] sm:$0xff]
  %v829 = vld [vmem:[%s1 + $0x18a8] sm:$0xff]
  %v830 = vld [vmem:[%s1 + $0x18b0] sm:$0xff]
  %v831 = vld [vmem:[%s1 + $0x18b8] sm:$0xff]
  %v832 = vld [vmem:[%s1 + $0x18c0] sm:$0xff]
  %v833 = vld [vmem:[%s1 + $0x18c8] sm:$0xff]
  %v834 = vld [vmem:[%s1 + $0x18d0] sm:$0xff]
  %v835 = vld [vmem:[%s1 + $0x18d8] sm:$0xff]
  %v836 = vld [vmem:[%s1 + $0x18e0] sm:$0xff]
  %v837 = vld [vmem:[%s1 + $0x18e8] sm:$0xff]
  %v838 = vld [vmem:[%s1 + $0x18f0] sm:$0xff]
  %v839 = vld [vmem:[%s1 + $0x18f8] sm:$0xff]
  %v840 = vld [vmem:[%s1 + $0x1900] sm:$0xff]
  %v841 = vld [vmem:[%s1 + $0x1908] sm:$0xff]
  %v842 = vld [vmem:[%s1 + $0x1910] sm:$0xff]
  %v843 = vld [vmem:[%s1 + $0x1918] sm:$0xff]
  %v844 = vld [vmem:[%s1 + $0x1920] sm:$0xff]
  %v845 = vld [vmem:[%s1 + $0x1928] sm:$0xff]
  %v846 = vld [vmem:[%s1 + $0x1930] sm:$0xff]
  %v847 = vld [vmem:[%s1 + $0x1938] sm:$0xff]
  %v848 = vld [vmem:[%s1 + $0x1940] sm:$0xff]
  %v849 = vld [vmem:[%s1 + $0x1948] sm:$0xff]
  %v850 = vld [vmem:[%s1 + $0x1950] sm:$0xff]
  %v851 = vld [vmem:[%s1 + $0x1958] sm:$0xff]
  %v852 = vld [vmem:[%s1 + $0x1960] sm:$0xff]
  %v853 = vld [vmem:[%s1 + $0x1968] sm:$0xff]
  %v854 = vld [vmem:[%s1 + $0x1970] sm:$0xff]
  %v855 = vld [vmem:[%s1 + $0x1978] sm:$0xff]
  %v856 = vld [vmem:[%s1 + $0x1980] sm:$0xff]
  %v857 = vld [vmem:[%s1 + $0x1988] sm:$0xff]
  %v858 = vld [vmem:[%s1 + $0x1990] sm:$0xff]
  %v859 = vld [vmem:[%s1 + $0x1998] sm:$0xff]
  %v860 = vld [vmem:[%s1 + $0x19a0] sm:$0xff]
  %v861 = vld [vmem:[%s1 + $0x19a8] sm:$0xff]
  %v862 = vld [vmem:[%s1 + $0x19b0] sm:$0xff]
  %v863 = vld [vmem:[%s1 + $0x19b8] sm:$0xff]
  %v864 = vld [vmem:[%s1 + $0x19c0] sm:$0xff]
  %v865 = vld [vmem:[%s1 + $0x19c8] sm:$0xff]
  %v866 = vld [vmem:[%s1 + $0x19d0] sm:$0xff]
  %v867 = vld [vmem:[%s1 + $0x19d8] sm:$0xff]
  %v868 = vld [vmem:[%s1 + $0x19e0] sm:$0xff]
  %v869 = vld [vmem:[%s1 + $0x19e8] sm:$0xff]
  %v870 = vld [vmem:[%s1 + $0x19f0] sm:$0xff]
  %v871 = vld [vmem:[%s1 + $0x19f8] sm:$0xff]
  %v872 = vld [vmem:[%s1 + $0x1a00] sm:$0xff]
  %v873 = vld [vmem:[%s1 + $0x1a08] sm:$0xff]
  %v874 = vld [vmem:[%s1 + $0x1a10] sm:$0xff]
  %v875 = vld [vmem:[%s1 + $0x1a18] sm:$0xff]
  %v876 = vld [vmem:[%s1 + $0x1a20] sm:$0xff]
  %v877 = vld [vmem:[%s1 + $0x1a28] sm:$0xff]
  %v878 = vld [vmem:[%s1 + $0x1a30] sm:$0xff]
  %v879 = vld [vmem:[%s1 + $0x1a38] sm:$0xff]
  %v880 = vld [vmem:[%s1 + $0x1a40] sm:$0xff]
  %v881 = vld [vmem:[%s1 + $0x1a48] sm:$0xff]
  %v882 = vld [vmem:[%s1 + $0x1a50] sm:$0xff]
  %v883 = vld [vmem:[%s1 + $0x1a58] sm:$0xff]
  %v884 = vld [vmem:[%s1 + $0x1a60] sm:$0xff]
  %v885 = vld [vmem:[%s1 + $0x1a68] sm:$0xff]
  %v886 = vld [vmem:[%s1 + $0x1a70] sm:$0xff]
  %v887 = vld [vmem:[%s1 + $0x1a78] sm:$0xff]
  %v888 = vld [vmem:[%s1 + $0x1a80] sm:$0xff]
  %v889 = vld [vmem:[%s1 + $0x1a88] sm:$0xff]
  %v890 = vld [vmem:[%s1 + $0x1a90] sm:$0xff]
  %v891 = vld [vmem:[%s1 + $0x1a98] sm:$0xff]
  %v892 = vld [vmem:[%s1 + $0x1aa0] sm:$0xff]
  %v893 = vld [vmem:[%s1 + $0x1aa8] sm:$0xff]
  %v894 = vld [vmem:[%s1 + $0x1ab0] sm:$0xff]
  %v895 = vld [vmem:[%s1 + $0x1ab8] sm:$0xff]
  %v896 = vld [vmem:[%s1 + $0x1ac0] sm:$0xff]
  %v897 = vld [vmem:[%s1 + $0x1ac8] sm:$0xff]
  %v898 = vld [vmem:[%s1 + $0x1ad0] sm:$0xff]
  %v899 = vld [vmem:[%s1 + $0x1ad8] sm:$0xff]
  %v900 = vld [vmem:[%s1 + $0x1ae0] sm:$0xff]
  %v901 = vld [vmem:[%s1 + $0x1ae8] sm:$0xff]
  %v902 = vld [vmem:[%s1 + $0x1af0] sm:$0xff]
  %v903 = vld [vmem:[%s1 + $0x1af8] sm:$0xff]
  %v904 = vld [vmem:[%s2] sm:$0xff]
  %v906 = vlaneseq
  %v907 = vshrl.u32 %v906, 7
  %v908 = vsub.s32 0, %v907
  %v909 = vrot.slane %v904, %v908
  %v910 = vlaneseq
  %v911 = vshrl.u32 %v910, 7
  %v912 = vsub.s32 1, %v911
  %v913 = vrot.slane %v904, %v912
  %v914 = vlaneseq
  %v915 = vshrl.u32 %v914, 7
  %v916 = vsub.s32 2, %v915
  %v917 = vrot.slane %v904, %v916
  %v918 = vlaneseq
  %v919 = vshrl.u32 %v918, 7
  %v920 = vsub.s32 3, %v919
  %v921 = vrot.slane %v904, %v920
  %v922 = vlaneseq
  %v923 = vshrl.u32 %v922, 7
  %v924 = vsub.s32 4, %v923
  %v925 = vrot.slane %v904, %v924
  %v926 = vlaneseq
  %v927 = vshrl.u32 %v926, 7
  %v928 = vsub.s32 5, %v927
  %v929 = vrot.slane %v904, %v928
  %v930 = vlaneseq
  %v931 = vshrl.u32 %v930, 7
  %v932 = vsub.s32 6, %v931
  %v933 = vrot.slane %v904, %v932
  %v934 = vlaneseq
  %v935 = vshrl.u32 %v934, 7
  %v936 = vsub.s32 7, %v935
  %v937 = vrot.slane %v904, %v936
  %v953 = vunpack.c.l.b16 %v33
  %v954 = vunpack.c.h.b16 %v33
  %v955 = vunpack.c.l.b16 %v34
  %v956 = vunpack.c.h.b16 %v34
  %v957 = vunpack.c.l.b16 %v35
  %v958 = vunpack.c.h.b16 %v35
  %v959 = vunpack.c.l.b16 %v36
  %v960 = vunpack.c.h.b16 %v36
  %v961 = vunpack.c.l.b16 %v37
  %v962 = vunpack.c.h.b16 %v37
  %v963 = vunpack.c.l.b16 %v38
  %v964 = vunpack.c.h.b16 %v38
  %v965 = vunpack.c.l.b16 %v39
  %v966 = vunpack.c.h.b16 %v39
  %v967 = vpack.c.b16 %v953, %v953
  %v968 = vpack.c.b16 %v954, %v954
  %v969 = vpack.c.b16 %v955, %v955
  %v970 = vpack.c.b16 %v956, %v956
  %v971 = vpack.c.b16 %v957, %v957
  %v972 = vpack.c.b16 %v958, %v958
  %v973 = vpack.c.b16 %v959, %v959
  %v974 = vpack.c.b16 %v960, %v960
  %v975 = vpack.c.b16 %v961, %v961
  %v976 = vpack.c.b16 %v962, %v962
  %v977 = vpack.c.b16 %v963, %v963
  %v978 = vpack.c.b16 %v964, %v964
  %v979 = vpack.c.b16 %v965, %v965
  %v980 = vpack.c.b16 %v966, %v966
  %v1858 = vunpack.c.l.b16 %v40
  %v1859 = vunpack.c.h.b16 %v40
  %v1860 = vunpack.c.l.b16 %v41
  %v1861 = vunpack.c.h.b16 %v41
  %v1862 = vunpack.c.l.b16 %v42
  %v1863 = vunpack.c.h.b16 %v42
  %v1864 = vunpack.c.l.b16 %v43
  %v1865 = vunpack.c.h.b16 %v43
  %v1866 = vunpack.c.l.b16 %v44
  %v1867 = vunpack.c.h.b16 %v44
  %v1868 = vunpack.c.l.b16 %v45
  %v1869 = vunpack.c.h.b16 %v45
  %v1870 = vunpack.c.l.b16 %v46
  %v1871 = vunpack.c.h.b16 %v46
  %v1872 = vunpack.c.l.b16 %v47
  %v1873 = vunpack.c.h.b16 %v47
  %v1874 = vunpack.c.l.b16 %v48
  %v1875 = vunpack.c.h.b16 %v48
  %v1876 = vunpack.c.l.b16 %v49
  %v1877 = vunpack.c.h.b16 %v49
  %v1878 = vunpack.c.l.b16 %v50
  %v1879 = vunpack.c.h.b16 %v50
  %v1880 = vunpack.c.l.b16 %v51
  %v1881 = vunpack.c.h.b16 %v51
  %v1882 = vunpack.c.l.b16 %v52
  %v1883 = vunpack.c.h.b16 %v52
  %v1884 = vunpack.c.l.b16 %v53
  %v1885 = vunpack.c.h.b16 %v53
  %v1886 = vunpack.c.l.b16 %v54
  %v1887 = vunpack.c.h.b16 %v54
  %v1888 = vunpack.c.l.b16 %v55
  %v1889 = vunpack.c.h.b16 %v55
  %v1890 = vunpack.c.l.b16 %v56
  %v1891 = vunpack.c.h.b16 %v56
  %v1892 = vunpack.c.l.b16 %v57
  %v1893 = vunpack.c.h.b16 %v57
  %v1894 = vunpack.c.l.b16 %v58
  %v1895 = vunpack.c.h.b16 %v58
  %v1896 = vunpack.c.l.b16 %v59
  %v1897 = vunpack.c.h.b16 %v59
  %v1898 = vunpack.c.l.b16 %v60
  %v1899 = vunpack.c.h.b16 %v60
  %v1900 = vunpack.c.l.b16 %v61
  %v1901 = vunpack.c.h.b16 %v61
  %v1902 = vunpack.c.l.b16 %v62
  %v1903 = vunpack.c.h.b16 %v62
  %v1904 = vunpack.c.l.b16 %v63
  %v1905 = vunpack.c.h.b16 %v63
  %v1906 = vunpack.c.l.b16 %v64
  %v1907 = vunpack.c.h.b16 %v64
  %v1908 = vunpack.c.l.b16 %v65
  %v1909 = vunpack.c.h.b16 %v65
  %v1910 = vunpack.c.l.b16 %v66
  %v1911 = vunpack.c.h.b16 %v66
  %v1912 = vunpack.c.l.b16 %v67
  %v1913 = vunpack.c.h.b16 %v67
  %v1914 = vunpack.c.l.b16 %v68
  %v1915 = vunpack.c.h.b16 %v68
  %v1916 = vunpack.c.l.b16 %v69
  %v1917 = vunpack.c.h.b16 %v69
  %v1918 = vunpack.c.l.b16 %v70
  %v1919 = vunpack.c.h.b16 %v70
  %v1920 = vunpack.c.l.b16 %v71
  %v1921 = vunpack.c.h.b16 %v71
  %v1922 = vunpack.c.l.b16 %v72
  %v1923 = vunpack.c.h.b16 %v72
  %v1924 = vunpack.c.l.b16 %v73
  %v1925 = vunpack.c.h.b16 %v73
  %v1926 = vunpack.c.l.b16 %v74
  %v1927 = vunpack.c.h.b16 %v74
  %v1928 = vunpack.c.l.b16 %v75
  %v1929 = vunpack.c.h.b16 %v75
  %v1930 = vunpack.c.l.b16 %v76
  %v1931 = vunpack.c.h.b16 %v76
  %v1932 = vunpack.c.l.b16 %v77
  %v1933 = vunpack.c.h.b16 %v77
  %v1934 = vunpack.c.l.b16 %v78
  %v1935 = vunpack.c.h.b16 %v78
  %v1936 = vunpack.c.l.b16 %v79
  %v1937 = vunpack.c.h.b16 %v79
  %v1938 = vunpack.c.l.b16 %v80
  %v1939 = vunpack.c.h.b16 %v80
  %v1940 = vunpack.c.l.b16 %v81
  %v1941 = vunpack.c.h.b16 %v81
  %v1942 = vunpack.c.l.b16 %v82
  %v1943 = vunpack.c.h.b16 %v82
  %v1944 = vunpack.c.l.b16 %v83
  %v1945 = vunpack.c.h.b16 %v83
  %v1946 = vunpack.c.l.b16 %v84
  %v1947 = vunpack.c.h.b16 %v84
  %v1948 = vunpack.c.l.b16 %v85
  %v1949 = vunpack.c.h.b16 %v85
  %v1950 = vunpack.c.l.b16 %v86
  %v1951 = vunpack.c.h.b16 %v86
  %v1952 = vunpack.c.l.b16 %v87
  %v1953 = vunpack.c.h.b16 %v87
  %v1954 = vunpack.c.l.b16 %v88
  %v1955 = vunpack.c.h.b16 %v88
  %v1956 = vunpack.c.l.b16 %v89
  %v1957 = vunpack.c.h.b16 %v89
  %v1958 = vunpack.c.l.b16 %v90
  %v1959 = vunpack.c.h.b16 %v90
  %v1960 = vunpack.c.l.b16 %v91
  %v1961 = vunpack.c.h.b16 %v91
  %v1962 = vunpack.c.l.b16 %v92
  %v1963 = vunpack.c.h.b16 %v92
  %v1964 = vunpack.c.l.b16 %v93
  %v1965 = vunpack.c.h.b16 %v93
  %v1966 = vunpack.c.l.b16 %v94
  %v1967 = vunpack.c.h.b16 %v94
  %v1968 = vunpack.c.l.b16 %v95
  %v1969 = vunpack.c.h.b16 %v95
  %v1970 = vunpack.c.l.b16 %v96
  %v1971 = vunpack.c.h.b16 %v96
  %v1972 = vunpack.c.l.b16 %v97
  %v1973 = vunpack.c.h.b16 %v97
  %v1974 = vunpack.c.l.b16 %v98
  %v1975 = vunpack.c.h.b16 %v98
  %v1976 = vunpack.c.l.b16 %v99
  %v1977 = vunpack.c.h.b16 %v99
  %v1978 = vunpack.c.l.b16 %v100
  %v1979 = vunpack.c.h.b16 %v100
  %v1980 = vunpack.c.l.b16 %v101
  %v1981 = vunpack.c.h.b16 %v101
  %v1982 = vunpack.c.l.b16 %v102
  %v1983 = vunpack.c.h.b16 %v102
  %v1984 = vunpack.c.l.b16 %v103
  %v1985 = vunpack.c.h.b16 %v103
  %v1986 = vunpack.c.l.b16 %v104
  %v1987 = vunpack.c.h.b16 %v104
  %v1988 = vunpack.c.l.b16 %v105
  %v1989 = vunpack.c.h.b16 %v105
  %v1990 = vunpack.c.l.b16 %v106
  %v1991 = vunpack.c.h.b16 %v106
  %v1992 = vunpack.c.l.b16 %v107
  %v1993 = vunpack.c.h.b16 %v107
  %v1994 = vunpack.c.l.b16 %v108
  %v1995 = vunpack.c.h.b16 %v108
  %v1996 = vunpack.c.l.b16 %v109
  %v1997 = vunpack.c.h.b16 %v109
  %v1998 = vunpack.c.l.b16 %v110
  %v1999 = vunpack.c.h.b16 %v110
  %v2000 = vunpack.c.l.b16 %v111
  %v2001 = vunpack.c.h.b16 %v111
  %v2002 = vunpack.c.l.b16 %v112
  %v2003 = vunpack.c.h.b16 %v112
  %v2004 = vunpack.c.l.b16 %v113
  %v2005 = vunpack.c.h.b16 %v113
  %v2006 = vunpack.c.l.b16 %v114
  %v2007 = vunpack.c.h.b16 %v114
  %v2008 = vunpack.c.l.b16 %v115
  %v2009 = vunpack.c.h.b16 %v115
  %v2010 = vunpack.c.l.b16 %v116
  %v2011 = vunpack.c.h.b16 %v116
  %v2012 = vunpack.c.l.b16 %v117
  %v2013 = vunpack.c.h.b16 %v117
  %v2014 = vunpack.c.l.b16 %v118
  %v2015 = vunpack.c.h.b16 %v118
  %v2016 = vunpack.c.l.b16 %v119
  %v2017 = vunpack.c.h.b16 %v119
  %v2018 = vunpack.c.l.b16 %v120
  %v2019 = vunpack.c.h.b16 %v120
  %v2020 = vunpack.c.l.b16 %v121
  %v2021 = vunpack.c.h.b16 %v121
  %v2022 = vunpack.c.l.b16 %v122
  %v2023 = vunpack.c.h.b16 %v122
  %v2024 = vunpack.c.l.b16 %v123
  %v2025 = vunpack.c.h.b16 %v123
  %v2026 = vunpack.c.l.b16 %v124
  %v2027 = vunpack.c.h.b16 %v124
  %v2028 = vunpack.c.l.b16 %v125
  %v2029 = vunpack.c.h.b16 %v125
  %v2030 = vunpack.c.l.b16 %v126
  %v2031 = vunpack.c.h.b16 %v126
  %v2032 = vunpack.c.l.b16 %v127
  %v2033 = vunpack.c.h.b16 %v127
  %v2034 = vunpack.c.l.b16 %v128
  %v2035 = vunpack.c.h.b16 %v128
  %v2036 = vunpack.c.l.b16 %v129
  %v2037 = vunpack.c.h.b16 %v129
  %v2038 = vunpack.c.l.b16 %v130
  %v2039 = vunpack.c.h.b16 %v130
  %v2040 = vunpack.c.l.b16 %v131
  %v2041 = vunpack.c.h.b16 %v131
  %v2042 = vunpack.c.l.b16 %v132
  %v2043 = vunpack.c.h.b16 %v132
  %v2044 = vunpack.c.l.b16 %v133
  %v2045 = vunpack.c.h.b16 %v133
  %v2046 = vunpack.c.l.b16 %v134
  %v2047 = vunpack.c.h.b16 %v134
  %v2048 = vunpack.c.l.b16 %v135
  %v2049 = vunpack.c.h.b16 %v135
  %v2050 = vunpack.c.l.b16 %v136
  %v2051 = vunpack.c.h.b16 %v136
  %v2052 = vunpack.c.l.b16 %v137
  %v2053 = vunpack.c.h.b16 %v137
  %v2054 = vunpack.c.l.b16 %v138
  %v2055 = vunpack.c.h.b16 %v138
  %v2056 = vunpack.c.l.b16 %v139
  %v2057 = vunpack.c.h.b16 %v139
  %v2058 = vunpack.c.l.b16 %v140
  %v2059 = vunpack.c.h.b16 %v140
  %v2060 = vunpack.c.l.b16 %v141
  %v2061 = vunpack.c.h.b16 %v141
  %v2062 = vunpack.c.l.b16 %v142
  %v2063 = vunpack.c.h.b16 %v142
  %v2064 = vunpack.c.l.b16 %v143
  %v2065 = vunpack.c.h.b16 %v143
  %v2066 = vunpack.c.l.b16 %v144
  %v2067 = vunpack.c.h.b16 %v144
  %v2068 = vunpack.c.l.b16 %v145
  %v2069 = vunpack.c.h.b16 %v145
  %v2070 = vunpack.c.l.b16 %v146
  %v2071 = vunpack.c.h.b16 %v146
  %v2072 = vunpack.c.l.b16 %v147
  %v2073 = vunpack.c.h.b16 %v147
  %v2074 = vunpack.c.l.b16 %v148
  %v2075 = vunpack.c.h.b16 %v148
  %v2076 = vunpack.c.l.b16 %v149
  %v2077 = vunpack.c.h.b16 %v149
  %v2078 = vunpack.c.l.b16 %v150
  %v2079 = vunpack.c.h.b16 %v150
  %v2080 = vunpack.c.l.b16 %v151
  %v2081 = vunpack.c.h.b16 %v151
  %v2082 = vunpack.c.l.b16 %v152
  %v2083 = vunpack.c.h.b16 %v152
  %v2084 = vunpack.c.l.b16 %v153
  %v2085 = vunpack.c.h.b16 %v153
  %v2086 = vunpack.c.l.b16 %v154
  %v2087 = vunpack.c.h.b16 %v154
  %v2088 = vunpack.c.l.b16 %v155
  %v2089 = vunpack.c.h.b16 %v155
  %v2090 = vunpack.c.l.b16 %v156
  %v2091 = vunpack.c.h.b16 %v156
  %v2092 = vunpack.c.l.b16 %v157
  %v2093 = vunpack.c.h.b16 %v157
  %v2094 = vunpack.c.l.b16 %v158
  %v2095 = vunpack.c.h.b16 %v158
  %v2096 = vunpack.c.l.b16 %v159
  %v2097 = vunpack.c.h.b16 %v159
  %v2098 = vunpack.c.l.b16 %v160
  %v2099 = vunpack.c.h.b16 %v160
  %v2100 = vunpack.c.l.b16 %v161
  %v2101 = vunpack.c.h.b16 %v161
  %v2102 = vunpack.c.l.b16 %v162
  %v2103 = vunpack.c.h.b16 %v162
  %v2104 = vunpack.c.l.b16 %v163
  %v2105 = vunpack.c.h.b16 %v163
  %v2106 = vunpack.c.l.b16 %v164
  %v2107 = vunpack.c.h.b16 %v164
  %v2108 = vunpack.c.l.b16 %v165
  %v2109 = vunpack.c.h.b16 %v165
  %v2110 = vunpack.c.l.b16 %v166
  %v2111 = vunpack.c.h.b16 %v166
  %v2112 = vunpack.c.l.b16 %v167
  %v2113 = vunpack.c.h.b16 %v167
  %v2114 = vunpack.c.l.b16 %v168
  %v2115 = vunpack.c.h.b16 %v168
  %v2116 = vunpack.c.l.b16 %v169
  %v2117 = vunpack.c.h.b16 %v169
  %v2118 = vunpack.c.l.b16 %v170
  %v2119 = vunpack.c.h.b16 %v170
  %v2120 = vunpack.c.l.b16 %v171
  %v2121 = vunpack.c.h.b16 %v171
  %v2122 = vunpack.c.l.b16 %v172
  %v2123 = vunpack.c.h.b16 %v172
  %v2124 = vunpack.c.l.b16 %v173
  %v2125 = vunpack.c.h.b16 %v173
  %v2126 = vunpack.c.l.b16 %v174
  %v2127 = vunpack.c.h.b16 %v174
  %v2128 = vunpack.c.l.b16 %v175
  %v2129 = vunpack.c.h.b16 %v175
  %v2130 = vunpack.c.l.b16 %v176
  %v2131 = vunpack.c.h.b16 %v176
  %v2132 = vunpack.c.l.b16 %v177
  %v2133 = vunpack.c.h.b16 %v177
  %v2134 = vunpack.c.l.b16 %v178
  %v2135 = vunpack.c.h.b16 %v178
  %v2136 = vunpack.c.l.b16 %v179
  %v2137 = vunpack.c.h.b16 %v179
  %v2138 = vunpack.c.l.b16 %v180
  %v2139 = vunpack.c.h.b16 %v180
  %v2140 = vunpack.c.l.b16 %v181
  %v2141 = vunpack.c.h.b16 %v181
  %v2142 = vunpack.c.l.b16 %v182
  %v2143 = vunpack.c.h.b16 %v182
  %v2144 = vunpack.c.l.b16 %v183
  %v2145 = vunpack.c.h.b16 %v183
  %v2146 = vunpack.c.l.b16 %v184
  %v2147 = vunpack.c.h.b16 %v184
  %v2148 = vunpack.c.l.b16 %v185
  %v2149 = vunpack.c.h.b16 %v185
  %v2150 = vunpack.c.l.b16 %v186
  %v2151 = vunpack.c.h.b16 %v186
  %v2152 = vunpack.c.l.b16 %v187
  %v2153 = vunpack.c.h.b16 %v187
  %v2154 = vunpack.c.l.b16 %v188
  %v2155 = vunpack.c.h.b16 %v188
  %v2156 = vunpack.c.l.b16 %v189
  %v2157 = vunpack.c.h.b16 %v189
  %v2158 = vunpack.c.l.b16 %v190
  %v2159 = vunpack.c.h.b16 %v190
  %v2160 = vunpack.c.l.b16 %v191
  %v2161 = vunpack.c.h.b16 %v191
  %v2162 = vunpack.c.l.b16 %v192
  %v2163 = vunpack.c.h.b16 %v192
  %v2164 = vunpack.c.l.b16 %v193
  %v2165 = vunpack.c.h.b16 %v193
  %v2166 = vunpack.c.l.b16 %v194
  %v2167 = vunpack.c.h.b16 %v194
  %v2168 = vunpack.c.l.b16 %v195
  %v2169 = vunpack.c.h.b16 %v195
  %v2170 = vunpack.c.l.b16 %v196
  %v2171 = vunpack.c.h.b16 %v196
  %v2172 = vunpack.c.l.b16 %v197
  %v2173 = vunpack.c.h.b16 %v197
  %v2174 = vunpack.c.l.b16 %v198
  %v2175 = vunpack.c.h.b16 %v198
  %v2176 = vunpack.c.l.b16 %v199
  %v2177 = vunpack.c.h.b16 %v199
  %v2178 = vunpack.c.l.b16 %v200
  %v2179 = vunpack.c.h.b16 %v200
  %v2180 = vunpack.c.l.b16 %v201
  %v2181 = vunpack.c.h.b16 %v201
  %v2182 = vunpack.c.l.b16 %v202
  %v2183 = vunpack.c.h.b16 %v202
  %v2184 = vunpack.c.l.b16 %v203
  %v2185 = vunpack.c.h.b16 %v203
  %v2186 = vunpack.c.l.b16 %v204
  %v2187 = vunpack.c.h.b16 %v204
  %v2188 = vunpack.c.l.b16 %v205
  %v2189 = vunpack.c.h.b16 %v205
  %v2190 = vunpack.c.l.b16 %v206
  %v2191 = vunpack.c.h.b16 %v206
  %v2192 = vunpack.c.l.b16 %v207
  %v2193 = vunpack.c.h.b16 %v207
  %v2194 = vunpack.c.l.b16 %v208
  %v2195 = vunpack.c.h.b16 %v208
  %v2196 = vunpack.c.l.b16 %v209
  %v2197 = vunpack.c.h.b16 %v209
  %v2198 = vunpack.c.l.b16 %v210
  %v2199 = vunpack.c.h.b16 %v210
  %v2200 = vunpack.c.l.b16 %v211
  %v2201 = vunpack.c.h.b16 %v211
  %v2202 = vunpack.c.l.b16 %v212
  %v2203 = vunpack.c.h.b16 %v212
  %v2204 = vunpack.c.l.b16 %v213
  %v2205 = vunpack.c.h.b16 %v213
  %v2206 = vunpack.c.l.b16 %v214
  %v2207 = vunpack.c.h.b16 %v214
  %v2208 = vunpack.c.l.b16 %v215
  %v2209 = vunpack.c.h.b16 %v215
  %v2210 = vunpack.c.l.b16 %v216
  %v2211 = vunpack.c.h.b16 %v216
  %v2212 = vunpack.c.l.b16 %v217
  %v2213 = vunpack.c.h.b16 %v217
  %v2214 = vunpack.c.l.b16 %v218
  %v2215 = vunpack.c.h.b16 %v218
  %v2216 = vunpack.c.l.b16 %v219
  %v2217 = vunpack.c.h.b16 %v219
  %v2218 = vunpack.c.l.b16 %v220
  %v2219 = vunpack.c.h.b16 %v220
  %v2220 = vunpack.c.l.b16 %v221
  %v2221 = vunpack.c.h.b16 %v221
  %v2222 = vunpack.c.l.b16 %v222
  %v2223 = vunpack.c.h.b16 %v222
  %v2224 = vunpack.c.l.b16 %v223
  %v2225 = vunpack.c.h.b16 %v223
  %v2226 = vunpack.c.l.b16 %v224
  %v2227 = vunpack.c.h.b16 %v224
  %v2228 = vunpack.c.l.b16 %v225
  %v2229 = vunpack.c.h.b16 %v225
  %v2230 = vunpack.c.l.b16 %v226
  %v2231 = vunpack.c.h.b16 %v226
  %v2232 = vunpack.c.l.b16 %v227
  %v2233 = vunpack.c.h.b16 %v227
  %v2234 = vunpack.c.l.b16 %v228
  %v2235 = vunpack.c.h.b16 %v228
  %v2236 = vunpack.c.l.b16 %v229
  %v2237 = vunpack.c.h.b16 %v229
  %v2238 = vunpack.c.l.b16 %v230
  %v2239 = vunpack.c.h.b16 %v230
  %v2240 = vunpack.c.l.b16 %v231
  %v2241 = vunpack.c.h.b16 %v231
  %v2242 = vunpack.c.l.b16 %v232
  %v2243 = vunpack.c.h.b16 %v232
  %v2244 = vunpack.c.l.b16 %v233
  %v2245 = vunpack.c.h.b16 %v233
  %v2246 = vunpack.c.l.b16 %v234
  %v2247 = vunpack.c.h.b16 %v234
  %v2248 = vunpack.c.l.b16 %v235
  %v2249 = vunpack.c.h.b16 %v235
  %v2250 = vunpack.c.l.b16 %v236
  %v2251 = vunpack.c.h.b16 %v236
  %v2252 = vunpack.c.l.b16 %v237
  %v2253 = vunpack.c.h.b16 %v237
  %v2254 = vunpack.c.l.b16 %v238
  %v2255 = vunpack.c.h.b16 %v238
  %v2256 = vunpack.c.l.b16 %v239
  %v2257 = vunpack.c.h.b16 %v239
  %v2258 = vunpack.c.l.b16 %v240
  %v2259 = vunpack.c.h.b16 %v240
  %v2260 = vunpack.c.l.b16 %v241
  %v2261 = vunpack.c.h.b16 %v241
  %v2262 = vunpack.c.l.b16 %v242
  %v2263 = vunpack.c.h.b16 %v242
  %v2264 = vunpack.c.l.b16 %v243
  %v2265 = vunpack.c.h.b16 %v243
  %v2266 = vunpack.c.l.b16 %v244
  %v2267 = vunpack.c.h.b16 %v244
  %v2268 = vunpack.c.l.b16 %v245
  %v2269 = vunpack.c.h.b16 %v245
  %v2270 = vunpack.c.l.b16 %v246
  %v2271 = vunpack.c.h.b16 %v246
  %v2272 = vunpack.c.l.b16 %v247
  %v2273 = vunpack.c.h.b16 %v247
  %v2274 = vunpack.c.l.b16 %v248
  %v2275 = vunpack.c.h.b16 %v248
  %v2276 = vunpack.c.l.b16 %v249
  %v2277 = vunpack.c.h.b16 %v249
  %v2278 = vunpack.c.l.b16 %v250
  %v2279 = vunpack.c.h.b16 %v250
  %v2280 = vunpack.c.l.b16 %v251
  %v2281 = vunpack.c.h.b16 %v251
  %v2282 = vunpack.c.l.b16 %v252
  %v2283 = vunpack.c.h.b16 %v252
  %v2284 = vunpack.c.l.b16 %v253
  %v2285 = vunpack.c.h.b16 %v253
  %v2286 = vunpack.c.l.b16 %v254
  %v2287 = vunpack.c.h.b16 %v254
  %v2288 = vunpack.c.l.b16 %v255
  %v2289 = vunpack.c.h.b16 %v255
  %v2290 = vunpack.c.l.b16 %v256
  %v2291 = vunpack.c.h.b16 %v256
  %v2292 = vunpack.c.l.b16 %v257
  %v2293 = vunpack.c.h.b16 %v257
  %v2294 = vunpack.c.l.b16 %v258
  %v2295 = vunpack.c.h.b16 %v258
  %v2296 = vunpack.c.l.b16 %v259
  %v2297 = vunpack.c.h.b16 %v259
  %v2298 = vunpack.c.l.b16 %v260
  %v2299 = vunpack.c.h.b16 %v260
  %v2300 = vunpack.c.l.b16 %v261
  %v2301 = vunpack.c.h.b16 %v261
  %v2302 = vunpack.c.l.b16 %v262
  %v2303 = vunpack.c.h.b16 %v262
  %v2304 = vunpack.c.l.b16 %v263
  %v2305 = vunpack.c.h.b16 %v263
  %v2306 = vunpack.c.l.b16 %v264
  %v2307 = vunpack.c.h.b16 %v264
  %v2308 = vunpack.c.l.b16 %v265
  %v2309 = vunpack.c.h.b16 %v265
  %v2310 = vunpack.c.l.b16 %v266
  %v2311 = vunpack.c.h.b16 %v266
  %v2312 = vunpack.c.l.b16 %v267
  %v2313 = vunpack.c.h.b16 %v267
  %v2314 = vunpack.c.l.b16 %v268
  %v2315 = vunpack.c.h.b16 %v268
  %v2316 = vunpack.c.l.b16 %v269
  %v2317 = vunpack.c.h.b16 %v269
  %v2318 = vunpack.c.l.b16 %v270
  %v2319 = vunpack.c.h.b16 %v270
  %v2320 = vunpack.c.l.b16 %v271
  %v2321 = vunpack.c.h.b16 %v271
  %v2322 = vunpack.c.l.b16 %v272
  %v2323 = vunpack.c.h.b16 %v272
  %v2324 = vunpack.c.l.b16 %v273
  %v2325 = vunpack.c.h.b16 %v273
  %v2326 = vunpack.c.l.b16 %v274
  %v2327 = vunpack.c.h.b16 %v274
  %v2328 = vunpack.c.l.b16 %v275
  %v2329 = vunpack.c.h.b16 %v275
  %v2330 = vunpack.c.l.b16 %v276
  %v2331 = vunpack.c.h.b16 %v276
  %v2332 = vunpack.c.l.b16 %v277
  %v2333 = vunpack.c.h.b16 %v277
  %v2334 = vunpack.c.l.b16 %v278
  %v2335 = vunpack.c.h.b16 %v278
  %v2336 = vunpack.c.l.b16 %v279
  %v2337 = vunpack.c.h.b16 %v279
  %v2338 = vunpack.c.l.b16 %v280
  %v2339 = vunpack.c.h.b16 %v280
  %v2340 = vunpack.c.l.b16 %v281
  %v2341 = vunpack.c.h.b16 %v281
  %v2342 = vunpack.c.l.b16 %v282
  %v2343 = vunpack.c.h.b16 %v282
  %v2344 = vunpack.c.l.b16 %v283
  %v2345 = vunpack.c.h.b16 %v283
  %v2346 = vunpack.c.l.b16 %v284
  %v2347 = vunpack.c.h.b16 %v284
  %v2348 = vunpack.c.l.b16 %v285
  %v2349 = vunpack.c.h.b16 %v285
  %v2350 = vunpack.c.l.b16 %v286
  %v2351 = vunpack.c.h.b16 %v286
  %v2352 = vunpack.c.l.b16 %v287
  %v2353 = vunpack.c.h.b16 %v287
  %v2354 = vunpack.c.l.b16 %v288
  %v2355 = vunpack.c.h.b16 %v288
  %v2356 = vunpack.c.l.b16 %v289
  %v2357 = vunpack.c.h.b16 %v289
  %v2358 = vunpack.c.l.b16 %v290
  %v2359 = vunpack.c.h.b16 %v290
  %v2360 = vunpack.c.l.b16 %v291
  %v2361 = vunpack.c.h.b16 %v291
  %v2362 = vunpack.c.l.b16 %v292
  %v2363 = vunpack.c.h.b16 %v292
  %v2364 = vunpack.c.l.b16 %v293
  %v2365 = vunpack.c.h.b16 %v293
  %v2366 = vunpack.c.l.b16 %v294
  %v2367 = vunpack.c.h.b16 %v294
  %v2368 = vunpack.c.l.b16 %v295
  %v2369 = vunpack.c.h.b16 %v295
  %v2370 = vunpack.c.l.b16 %v296
  %v2371 = vunpack.c.h.b16 %v296
  %v2372 = vunpack.c.l.b16 %v297
  %v2373 = vunpack.c.h.b16 %v297
  %v2374 = vunpack.c.l.b16 %v298
  %v2375 = vunpack.c.h.b16 %v298
  %v2376 = vunpack.c.l.b16 %v299
  %v2377 = vunpack.c.h.b16 %v299
  %v2378 = vunpack.c.l.b16 %v300
  %v2379 = vunpack.c.h.b16 %v300
  %v2380 = vunpack.c.l.b16 %v301
  %v2381 = vunpack.c.h.b16 %v301
  %v2382 = vunpack.c.l.b16 %v302
  %v2383 = vunpack.c.h.b16 %v302
  %v2384 = vunpack.c.l.b16 %v303
  %v2385 = vunpack.c.h.b16 %v303
  %v2386 = vunpack.c.l.b16 %v304
  %v2387 = vunpack.c.h.b16 %v304
  %v2388 = vunpack.c.l.b16 %v305
  %v2389 = vunpack.c.h.b16 %v305
  %v2390 = vunpack.c.l.b16 %v306
  %v2391 = vunpack.c.h.b16 %v306
  %v2392 = vunpack.c.l.b16 %v307
  %v2393 = vunpack.c.h.b16 %v307
  %v2394 = vunpack.c.l.b16 %v308
  %v2395 = vunpack.c.h.b16 %v308
  %v2396 = vunpack.c.l.b16 %v309
  %v2397 = vunpack.c.h.b16 %v309
  %v2398 = vunpack.c.l.b16 %v310
  %v2399 = vunpack.c.h.b16 %v310
  %v2400 = vunpack.c.l.b16 %v311
  %v2401 = vunpack.c.h.b16 %v311
  %v2402 = vunpack.c.l.b16 %v312
  %v2403 = vunpack.c.h.b16 %v312
  %v2404 = vunpack.c.l.b16 %v313
  %v2405 = vunpack.c.h.b16 %v313
  %v2406 = vunpack.c.l.b16 %v314
  %v2407 = vunpack.c.h.b16 %v314
  %v2408 = vunpack.c.l.b16 %v315
  %v2409 = vunpack.c.h.b16 %v315
  %v2410 = vunpack.c.l.b16 %v316
  %v2411 = vunpack.c.h.b16 %v316
  %v2412 = vunpack.c.l.b16 %v317
  %v2413 = vunpack.c.h.b16 %v317
  %v2414 = vunpack.c.l.b16 %v318
  %v2415 = vunpack.c.h.b16 %v318
  %v2416 = vunpack.c.l.b16 %v319
  %v2417 = vunpack.c.h.b16 %v319
  %v2418 = vunpack.c.l.b16 %v320
  %v2419 = vunpack.c.h.b16 %v320
  %v2420 = vunpack.c.l.b16 %v321
  %v2421 = vunpack.c.h.b16 %v321
  %v2422 = vunpack.c.l.b16 %v322
  %v2423 = vunpack.c.h.b16 %v322
  %v2424 = vunpack.c.l.b16 %v323
  %v2425 = vunpack.c.h.b16 %v323
  %v2426 = vunpack.c.l.b16 %v324
  %v2427 = vunpack.c.h.b16 %v324
  %v2428 = vunpack.c.l.b16 %v325
  %v2429 = vunpack.c.h.b16 %v325
  %v2430 = vunpack.c.l.b16 %v326
  %v2431 = vunpack.c.h.b16 %v326
  %v2432 = vunpack.c.l.b16 %v327
  %v2433 = vunpack.c.h.b16 %v327
  %v2434 = vunpack.c.l.b16 %v328
  %v2435 = vunpack.c.h.b16 %v328
  %v2436 = vunpack.c.l.b16 %v329
  %v2437 = vunpack.c.h.b16 %v329
  %v2438 = vunpack.c.l.b16 %v330
  %v2439 = vunpack.c.h.b16 %v330
  %v2440 = vunpack.c.l.b16 %v331
  %v2441 = vunpack.c.h.b16 %v331
  %v2442 = vunpack.c.l.b16 %v332
  %v2443 = vunpack.c.h.b16 %v332
  %v2444 = vunpack.c.l.b16 %v333
  %v2445 = vunpack.c.h.b16 %v333
  %v2446 = vunpack.c.l.b16 %v334
  %v2447 = vunpack.c.h.b16 %v334
  %v2448 = vunpack.c.l.b16 %v335
  %v2449 = vunpack.c.h.b16 %v335
  %v2450 = vunpack.c.l.b16 %v336
  %v2451 = vunpack.c.h.b16 %v336
  %v2452 = vunpack.c.l.b16 %v337
  %v2453 = vunpack.c.h.b16 %v337
  %v2454 = vunpack.c.l.b16 %v338
  %v2455 = vunpack.c.h.b16 %v338
  %v2456 = vunpack.c.l.b16 %v339
  %v2457 = vunpack.c.h.b16 %v339
  %v2458 = vunpack.c.l.b16 %v340
  %v2459 = vunpack.c.h.b16 %v340
  %v2460 = vunpack.c.l.b16 %v341
  %v2461 = vunpack.c.h.b16 %v341
  %v2462 = vunpack.c.l.b16 %v342
  %v2463 = vunpack.c.h.b16 %v342
  %v2464 = vunpack.c.l.b16 %v343
  %v2465 = vunpack.c.h.b16 %v343
  %v2466 = vunpack.c.l.b16 %v344
  %v2467 = vunpack.c.h.b16 %v344
  %v2468 = vunpack.c.l.b16 %v345
  %v2469 = vunpack.c.h.b16 %v345
  %v2470 = vunpack.c.l.b16 %v346
  %v2471 = vunpack.c.h.b16 %v346
  %v2472 = vunpack.c.l.b16 %v347
  %v2473 = vunpack.c.h.b16 %v347
  %v2474 = vunpack.c.l.b16 %v348
  %v2475 = vunpack.c.h.b16 %v348
  %v2476 = vunpack.c.l.b16 %v349
  %v2477 = vunpack.c.h.b16 %v349
  %v2478 = vunpack.c.l.b16 %v350
  %v2479 = vunpack.c.h.b16 %v350
  %v2480 = vunpack.c.l.b16 %v351
  %v2481 = vunpack.c.h.b16 %v351
  %v2482 = vunpack.c.l.b16 %v352
  %v2483 = vunpack.c.h.b16 %v352
  %v2484 = vunpack.c.l.b16 %v353
  %v2485 = vunpack.c.h.b16 %v353
  %v2486 = vunpack.c.l.b16 %v354
  %v2487 = vunpack.c.h.b16 %v354
  %v2488 = vunpack.c.l.b16 %v355
  %v2489 = vunpack.c.h.b16 %v355
  %v2490 = vunpack.c.l.b16 %v356
  %v2491 = vunpack.c.h.b16 %v356
  %v2492 = vunpack.c.l.b16 %v357
  %v2493 = vunpack.c.h.b16 %v357
  %v2494 = vunpack.c.l.b16 %v358
  %v2495 = vunpack.c.h.b16 %v358
  %v2496 = vunpack.c.l.b16 %v359
  %v2497 = vunpack.c.h.b16 %v359
  %v2498 = vunpack.c.l.b16 %v360
  %v2499 = vunpack.c.h.b16 %v360
  %v2500 = vunpack.c.l.b16 %v361
  %v2501 = vunpack.c.h.b16 %v361
  %v2502 = vunpack.c.l.b16 %v362
  %v2503 = vunpack.c.h.b16 %v362
  %v2504 = vunpack.c.l.b16 %v363
  %v2505 = vunpack.c.h.b16 %v363
  %v2506 = vunpack.c.l.b16 %v364
  %v2507 = vunpack.c.h.b16 %v364
  %v2508 = vunpack.c.l.b16 %v365
  %v2509 = vunpack.c.h.b16 %v365
  %v2510 = vunpack.c.l.b16 %v366
  %v2511 = vunpack.c.h.b16 %v366
  %v2512 = vunpack.c.l.b16 %v367
  %v2513 = vunpack.c.h.b16 %v367
  %v2514 = vunpack.c.l.b16 %v368
  %v2515 = vunpack.c.h.b16 %v368
  %v2516 = vunpack.c.l.b16 %v369
  %v2517 = vunpack.c.h.b16 %v369
  %v2518 = vunpack.c.l.b16 %v370
  %v2519 = vunpack.c.h.b16 %v370
  %v2520 = vunpack.c.l.b16 %v371
  %v2521 = vunpack.c.h.b16 %v371
  %v2522 = vunpack.c.l.b16 %v372
  %v2523 = vunpack.c.h.b16 %v372
  %v2524 = vunpack.c.l.b16 %v373
  %v2525 = vunpack.c.h.b16 %v373
  %v2526 = vunpack.c.l.b16 %v374
  %v2527 = vunpack.c.h.b16 %v374
  %v2528 = vunpack.c.l.b16 %v375
  %v2529 = vunpack.c.h.b16 %v375
  %v2530 = vunpack.c.l.b16 %v376
  %v2531 = vunpack.c.h.b16 %v376
  %v2532 = vunpack.c.l.b16 %v377
  %v2533 = vunpack.c.h.b16 %v377
  %v2534 = vunpack.c.l.b16 %v378
  %v2535 = vunpack.c.h.b16 %v378
  %v2536 = vunpack.c.l.b16 %v379
  %v2537 = vunpack.c.h.b16 %v379
  %v2538 = vunpack.c.l.b16 %v380
  %v2539 = vunpack.c.h.b16 %v380
  %v2540 = vunpack.c.l.b16 %v381
  %v2541 = vunpack.c.h.b16 %v381
  %v2542 = vunpack.c.l.b16 %v382
  %v2543 = vunpack.c.h.b16 %v382
  %v2544 = vunpack.c.l.b16 %v383
  %v2545 = vunpack.c.h.b16 %v383
  %v2546 = vunpack.c.l.b16 %v384
  %v2547 = vunpack.c.h.b16 %v384
  %v2548 = vunpack.c.l.b16 %v385
  %v2549 = vunpack.c.h.b16 %v385
  %v2550 = vunpack.c.l.b16 %v386
  %v2551 = vunpack.c.h.b16 %v386
  %v2552 = vunpack.c.l.b16 %v387
  %v2553 = vunpack.c.h.b16 %v387
  %v2554 = vunpack.c.l.b16 %v388
  %v2555 = vunpack.c.h.b16 %v388
  %v2556 = vunpack.c.l.b16 %v389
  %v2557 = vunpack.c.h.b16 %v389
  %v2558 = vunpack.c.l.b16 %v390
  %v2559 = vunpack.c.h.b16 %v390
  %v2560 = vunpack.c.l.b16 %v391
  %v2561 = vunpack.c.h.b16 %v391
  %v2562 = vunpack.c.l.b16 %v392
  %v2563 = vunpack.c.h.b16 %v392
  %v2564 = vunpack.c.l.b16 %v393
  %v2565 = vunpack.c.h.b16 %v393
  %v2566 = vunpack.c.l.b16 %v394
  %v2567 = vunpack.c.h.b16 %v394
  %v2568 = vunpack.c.l.b16 %v395
  %v2569 = vunpack.c.h.b16 %v395
  %v2570 = vunpack.c.l.b16 %v396
  %v2571 = vunpack.c.h.b16 %v396
  %v2572 = vunpack.c.l.b16 %v397
  %v2573 = vunpack.c.h.b16 %v397
  %v2574 = vunpack.c.l.b16 %v398
  %v2575 = vunpack.c.h.b16 %v398
  %v2576 = vunpack.c.l.b16 %v399
  %v2577 = vunpack.c.h.b16 %v399
  %v2578 = vunpack.c.l.b16 %v400
  %v2579 = vunpack.c.h.b16 %v400
  %v2580 = vunpack.c.l.b16 %v401
  %v2581 = vunpack.c.h.b16 %v401
  %v2582 = vunpack.c.l.b16 %v402
  %v2583 = vunpack.c.h.b16 %v402
  %v2584 = vunpack.c.l.b16 %v403
  %v2585 = vunpack.c.h.b16 %v403
  %v2586 = vunpack.c.l.b16 %v404
  %v2587 = vunpack.c.h.b16 %v404
  %v2588 = vunpack.c.l.b16 %v405
  %v2589 = vunpack.c.h.b16 %v405
  %v2590 = vunpack.c.l.b16 %v406
  %v2591 = vunpack.c.h.b16 %v406
  %v2592 = vunpack.c.l.b16 %v407
  %v2593 = vunpack.c.h.b16 %v407
  %v2594 = vunpack.c.l.b16 %v408
  %v2595 = vunpack.c.h.b16 %v408
  %v2596 = vunpack.c.l.b16 %v409
  %v2597 = vunpack.c.h.b16 %v409
  %v2598 = vunpack.c.l.b16 %v410
  %v2599 = vunpack.c.h.b16 %v410
  %v2600 = vunpack.c.l.b16 %v411
  %v2601 = vunpack.c.h.b16 %v411
  %v2602 = vunpack.c.l.b16 %v412
  %v2603 = vunpack.c.h.b16 %v412
  %v2604 = vunpack.c.l.b16 %v413
  %v2605 = vunpack.c.h.b16 %v413
  %v2606 = vunpack.c.l.b16 %v414
  %v2607 = vunpack.c.h.b16 %v414
  %v2608 = vunpack.c.l.b16 %v415
  %v2609 = vunpack.c.h.b16 %v415
  %v2610 = vunpack.c.l.b16 %v416
  %v2611 = vunpack.c.h.b16 %v416
  %v2612 = vunpack.c.l.b16 %v417
  %v2613 = vunpack.c.h.b16 %v417
  %v2614 = vunpack.c.l.b16 %v418
  %v2615 = vunpack.c.h.b16 %v418
  %v2616 = vunpack.c.l.b16 %v419
  %v2617 = vunpack.c.h.b16 %v419
  %v2618 = vunpack.c.l.b16 %v420
  %v2619 = vunpack.c.h.b16 %v420
  %v2620 = vunpack.c.l.b16 %v421
  %v2621 = vunpack.c.h.b16 %v421
  %v2622 = vunpack.c.l.b16 %v422
  %v2623 = vunpack.c.h.b16 %v422
  %v2624 = vunpack.c.l.b16 %v423
  %v2625 = vunpack.c.h.b16 %v423
  %v2626 = vunpack.c.l.b16 %v424
  %v2627 = vunpack.c.h.b16 %v424
  %v2628 = vunpack.c.l.b16 %v425
  %v2629 = vunpack.c.h.b16 %v425
  %v2630 = vunpack.c.l.b16 %v426
  %v2631 = vunpack.c.h.b16 %v426
  %v2632 = vunpack.c.l.b16 %v427
  %v2633 = vunpack.c.h.b16 %v427
  %v2634 = vunpack.c.l.b16 %v428
  %v2635 = vunpack.c.h.b16 %v428
  %v2636 = vunpack.c.l.b16 %v429
  %v2637 = vunpack.c.h.b16 %v429
  %v2638 = vunpack.c.l.b16 %v430
  %v2639 = vunpack.c.h.b16 %v430
  %v2640 = vunpack.c.l.b16 %v431
  %v2641 = vunpack.c.h.b16 %v431
  %v2642 = vunpack.c.l.b16 %v432
  %v2643 = vunpack.c.h.b16 %v432
  %v2644 = vunpack.c.l.b16 %v433
  %v2645 = vunpack.c.h.b16 %v433
  %v2646 = vunpack.c.l.b16 %v434
  %v2647 = vunpack.c.h.b16 %v434
  %v2648 = vunpack.c.l.b16 %v435
  %v2649 = vunpack.c.h.b16 %v435
  %v2650 = vunpack.c.l.b16 %v436
  %v2651 = vunpack.c.h.b16 %v436
  %v2652 = vunpack.c.l.b16 %v437
  %v2653 = vunpack.c.h.b16 %v437
  %v2654 = vunpack.c.l.b16 %v438
  %v2655 = vunpack.c.h.b16 %v438
  %v2656 = vunpack.c.l.b16 %v439
  %v2657 = vunpack.c.h.b16 %v439
  %v2658 = vunpack.c.l.b16 %v440
  %v2659 = vunpack.c.h.b16 %v440
  %v2660 = vunpack.c.l.b16 %v441
  %v2661 = vunpack.c.h.b16 %v441
  %v2662 = vunpack.c.l.b16 %v442
  %v2663 = vunpack.c.h.b16 %v442
  %v2664 = vunpack.c.l.b16 %v443
  %v2665 = vunpack.c.h.b16 %v443
  %v2666 = vunpack.c.l.b16 %v444
  %v2667 = vunpack.c.h.b16 %v444
  %v2668 = vunpack.c.l.b16 %v445
  %v2669 = vunpack.c.h.b16 %v445
  %v2670 = vunpack.c.l.b16 %v446
  %v2671 = vunpack.c.h.b16 %v446
  %v2672 = vunpack.c.l.b16 %v447
  %v2673 = vunpack.c.h.b16 %v447
  %v2674 = vunpack.c.l.b16 %v448
  %v2675 = vunpack.c.h.b16 %v448
  %v2676 = vunpack.c.l.b16 %v449
  %v2677 = vunpack.c.h.b16 %v449
  %v2678 = vunpack.c.l.b16 %v450
  %v2679 = vunpack.c.h.b16 %v450
  %v2680 = vunpack.c.l.b16 %v451
  %v2681 = vunpack.c.h.b16 %v451
  %v2682 = vunpack.c.l.b16 %v452
  %v2683 = vunpack.c.h.b16 %v452
  %v2684 = vunpack.c.l.b16 %v453
  %v2685 = vunpack.c.h.b16 %v453
  %v2686 = vunpack.c.l.b16 %v454
  %v2687 = vunpack.c.h.b16 %v454
  %v2688 = vunpack.c.l.b16 %v455
  %v2689 = vunpack.c.h.b16 %v455
  %v2690 = vunpack.c.l.b16 %v456
  %v2691 = vunpack.c.h.b16 %v456
  %v2692 = vunpack.c.l.b16 %v457
  %v2693 = vunpack.c.h.b16 %v457
  %v2694 = vunpack.c.l.b16 %v458
  %v2695 = vunpack.c.h.b16 %v458
  %v2696 = vunpack.c.l.b16 %v459
  %v2697 = vunpack.c.h.b16 %v459
  %v2698 = vunpack.c.l.b16 %v460
  %v2699 = vunpack.c.h.b16 %v460
  %v2700 = vunpack.c.l.b16 %v461
  %v2701 = vunpack.c.h.b16 %v461
  %v2702 = vunpack.c.l.b16 %v462
  %v2703 = vunpack.c.h.b16 %v462
  %v2704 = vunpack.c.l.b16 %v463
  %v2705 = vunpack.c.h.b16 %v463
  %v2706 = vunpack.c.l.b16 %v464
  %v2707 = vunpack.c.h.b16 %v464
  %v2708 = vunpack.c.l.b16 %v465
  %v2709 = vunpack.c.h.b16 %v465
  %v2710 = vunpack.c.l.b16 %v466
  %v2711 = vunpack.c.h.b16 %v466
  %v2712 = vunpack.c.l.b16 %v467
  %v2713 = vunpack.c.h.b16 %v467
  %v2714 = vunpack.c.l.b16 %v468
  %v2715 = vunpack.c.h.b16 %v468
  %v2716 = vunpack.c.l.b16 %v469
  %v2717 = vunpack.c.h.b16 %v469
  %v2718 = vunpack.c.l.b16 %v470
  %v2719 = vunpack.c.h.b16 %v470
  %v2720 = vunpack.c.l.b16 %v471
  %v2721 = vunpack.c.h.b16 %v471
  %v2722 = vunpack.c.l.b16 %v472
  %v2723 = vunpack.c.h.b16 %v472
  %v2724 = vunpack.c.l.b16 %v473
  %v2725 = vunpack.c.h.b16 %v473
  %v2726 = vunpack.c.l.b16 %v474
  %v2727 = vunpack.c.h.b16 %v474
  %v2728 = vunpack.c.l.b16 %v475
  %v2729 = vunpack.c.h.b16 %v475
  %v2730 = vunpack.c.l.b16 %v476
  %v2731 = vunpack.c.h.b16 %v476
  %v2732 = vunpack.c.l.b16 %v477
  %v2733 = vunpack.c.h.b16 %v477
  %v2734 = vunpack.c.l.b16 %v478
  %v2735 = vunpack.c.h.b16 %v478
  %v2736 = vunpack.c.l.b16 %v479
  %v2737 = vunpack.c.h.b16 %v479
  %v2738 = vunpack.c.l.b16 %v480
  %v2739 = vunpack.c.h.b16 %v480
  %v2740 = vunpack.c.l.b16 %v481
  %v2741 = vunpack.c.h.b16 %v481
  %v2742 = vunpack.c.l.b16 %v482
  %v2743 = vunpack.c.h.b16 %v482
  %v2744 = vunpack.c.l.b16 %v483
  %v2745 = vunpack.c.h.b16 %v483
  %v2746 = vunpack.c.l.b16 %v484
  %v2747 = vunpack.c.h.b16 %v484
  %v2748 = vunpack.c.l.b16 %v485
  %v2749 = vunpack.c.h.b16 %v485
  %v2750 = vunpack.c.l.b16 %v486
  %v2751 = vunpack.c.h.b16 %v486
  %v2752 = vunpack.c.l.b16 %v487
  %v2753 = vunpack.c.h.b16 %v487
  %v2754 = vunpack.c.l.b16 %v488
  %v2755 = vunpack.c.h.b16 %v488
  %v2756 = vunpack.c.l.b16 %v489
  %v2757 = vunpack.c.h.b16 %v489
  %v2758 = vunpack.c.l.b16 %v490
  %v2759 = vunpack.c.h.b16 %v490
  %v2760 = vunpack.c.l.b16 %v491
  %v2761 = vunpack.c.h.b16 %v491
  %v2762 = vunpack.c.l.b16 %v492
  %v2763 = vunpack.c.h.b16 %v492
  %v2764 = vunpack.c.l.b16 %v493
  %v2765 = vunpack.c.h.b16 %v493
  %v2766 = vunpack.c.l.b16 %v494
  %v2767 = vunpack.c.h.b16 %v494
  %v2768 = vunpack.c.l.b16 %v495
  %v2769 = vunpack.c.h.b16 %v495
  %v2770 = vunpack.c.l.b16 %v496
  %v2771 = vunpack.c.h.b16 %v496
  %v2772 = vunpack.c.l.b16 %v497
  %v2773 = vunpack.c.h.b16 %v497
  %v2774 = vunpack.c.l.b16 %v498
  %v2775 = vunpack.c.h.b16 %v498
  %v2776 = vunpack.c.l.b16 %v499
  %v2777 = vunpack.c.h.b16 %v499
  %v2778 = vunpack.c.l.b16 %v500
  %v2779 = vunpack.c.h.b16 %v500
  %v2780 = vunpack.c.l.b16 %v501
  %v2781 = vunpack.c.h.b16 %v501
  %v2782 = vunpack.c.l.b16 %v502
  %v2783 = vunpack.c.h.b16 %v502
  %v2784 = vunpack.c.l.b16 %v503
  %v2785 = vunpack.c.h.b16 %v503
  %v2786 = vunpack.c.l.b16 %v504
  %v2787 = vunpack.c.h.b16 %v504
  %v2788 = vunpack.c.l.b16 %v505
  %v2789 = vunpack.c.h.b16 %v505
  %v2790 = vunpack.c.l.b16 %v506
  %v2791 = vunpack.c.h.b16 %v506
  %v2792 = vunpack.c.l.b16 %v507
  %v2793 = vunpack.c.h.b16 %v507
  %v2794 = vunpack.c.l.b16 %v508
  %v2795 = vunpack.c.h.b16 %v508
  %v2796 = vunpack.c.l.b16 %v509
  %v2797 = vunpack.c.h.b16 %v509
  %v2798 = vunpack.c.l.b16 %v510
  %v2799 = vunpack.c.h.b16 %v510
  %v2800 = vunpack.c.l.b16 %v511
  %v2801 = vunpack.c.h.b16 %v511
  %v2802 = vunpack.c.l.b16 %v512
  %v2803 = vunpack.c.h.b16 %v512
  %v2804 = vunpack.c.l.b16 %v513
  %v2805 = vunpack.c.h.b16 %v513
  %v2806 = vunpack.c.l.b16 %v514
  %v2807 = vunpack.c.h.b16 %v514
  %v2808 = vunpack.c.l.b16 %v515
  %v2809 = vunpack.c.h.b16 %v515
  %v2810 = vunpack.c.l.b16 %v516
  %v2811 = vunpack.c.h.b16 %v516
  %v2812 = vunpack.c.l.b16 %v517
  %v2813 = vunpack.c.h.b16 %v517
  %v2814 = vunpack.c.l.b16 %v518
  %v2815 = vunpack.c.h.b16 %v518
  %v2816 = vunpack.c.l.b16 %v519
  %v2817 = vunpack.c.h.b16 %v519
  %v2818 = vunpack.c.l.b16 %v520
  %v2819 = vunpack.c.h.b16 %v520
  %v2820 = vunpack.c.l.b16 %v521
  %v2821 = vunpack.c.h.b16 %v521
  %v2822 = vunpack.c.l.b16 %v522
  %v2823 = vunpack.c.h.b16 %v522
  %v2824 = vunpack.c.l.b16 %v523
  %v2825 = vunpack.c.h.b16 %v523
  %v2826 = vunpack.c.l.b16 %v524
  %v2827 = vunpack.c.h.b16 %v524
  %v2828 = vunpack.c.l.b16 %v525
  %v2829 = vunpack.c.h.b16 %v525
  %v2830 = vunpack.c.l.b16 %v526
  %v2831 = vunpack.c.h.b16 %v526
  %v2832 = vunpack.c.l.b16 %v527
  %v2833 = vunpack.c.h.b16 %v527
  %v2834 = vunpack.c.l.b16 %v528
  %v2835 = vunpack.c.h.b16 %v528
  %v2836 = vunpack.c.l.b16 %v529
  %v2837 = vunpack.c.h.b16 %v529
  %v2838 = vunpack.c.l.b16 %v530
  %v2839 = vunpack.c.h.b16 %v530
  %v2840 = vunpack.c.l.b16 %v531
  %v2841 = vunpack.c.h.b16 %v531
  %v2842 = vunpack.c.l.b16 %v532
  %v2843 = vunpack.c.h.b16 %v532
  %v2844 = vunpack.c.l.b16 %v533
  %v2845 = vunpack.c.h.b16 %v533
  %v2846 = vunpack.c.l.b16 %v534
  %v2847 = vunpack.c.h.b16 %v534
  %v2848 = vunpack.c.l.b16 %v535
  %v2849 = vunpack.c.h.b16 %v535
  %v2850 = vunpack.c.l.b16 %v536
  %v2851 = vunpack.c.h.b16 %v536
  %v2852 = vunpack.c.l.b16 %v537
  %v2853 = vunpack.c.h.b16 %v537
  %v2854 = vunpack.c.l.b16 %v538
  %v2855 = vunpack.c.h.b16 %v538
  %v2856 = vunpack.c.l.b16 %v539
  %v2857 = vunpack.c.h.b16 %v539
  %v2858 = vunpack.c.l.b16 %v540
  %v2859 = vunpack.c.h.b16 %v540
  %v2860 = vunpack.c.l.b16 %v541
  %v2861 = vunpack.c.h.b16 %v541
  %v2862 = vunpack.c.l.b16 %v542
  %v2863 = vunpack.c.h.b16 %v542
  %v2864 = vunpack.c.l.b16 %v543
  %v2865 = vunpack.c.h.b16 %v543
  %v2866 = vunpack.c.l.b16 %v544
  %v2867 = vunpack.c.h.b16 %v544
  %v2868 = vunpack.c.l.b16 %v545
  %v2869 = vunpack.c.h.b16 %v545
  %v2870 = vunpack.c.l.b16 %v546
  %v2871 = vunpack.c.h.b16 %v546
  %v2872 = vunpack.c.l.b16 %v547
  %v2873 = vunpack.c.h.b16 %v547
  %v2874 = vunpack.c.l.b16 %v548
  %v2875 = vunpack.c.h.b16 %v548
  %v2876 = vunpack.c.l.b16 %v549
  %v2877 = vunpack.c.h.b16 %v549
  %v2878 = vunpack.c.l.b16 %v550
  %v2879 = vunpack.c.h.b16 %v550
  %v2880 = vunpack.c.l.b16 %v551
  %v2881 = vunpack.c.h.b16 %v551
  %v2882 = vunpack.c.l.b16 %v552
  %v2883 = vunpack.c.h.b16 %v552
  %v2884 = vunpack.c.l.b16 %v553
  %v2885 = vunpack.c.h.b16 %v553
  %v2886 = vunpack.c.l.b16 %v554
  %v2887 = vunpack.c.h.b16 %v554
  %v2888 = vunpack.c.l.b16 %v555
  %v2889 = vunpack.c.h.b16 %v555
  %v2890 = vunpack.c.l.b16 %v556
  %v2891 = vunpack.c.h.b16 %v556
  %v2892 = vunpack.c.l.b16 %v557
  %v2893 = vunpack.c.h.b16 %v557
  %v2894 = vunpack.c.l.b16 %v558
  %v2895 = vunpack.c.h.b16 %v558
  %v2896 = vunpack.c.l.b16 %v559
  %v2897 = vunpack.c.h.b16 %v559
  %v2898 = vunpack.c.l.b16 %v560
  %v2899 = vunpack.c.h.b16 %v560
  %v2900 = vunpack.c.l.b16 %v561
  %v2901 = vunpack.c.h.b16 %v561
  %v2902 = vunpack.c.l.b16 %v562
  %v2903 = vunpack.c.h.b16 %v562
  %v2904 = vunpack.c.l.b16 %v563
  %v2905 = vunpack.c.h.b16 %v563
  %v2906 = vunpack.c.l.b16 %v564
  %v2907 = vunpack.c.h.b16 %v564
  %v2908 = vunpack.c.l.b16 %v565
  %v2909 = vunpack.c.h.b16 %v565
  %v2910 = vunpack.c.l.b16 %v566
  %v2911 = vunpack.c.h.b16 %v566
  %v2912 = vunpack.c.l.b16 %v567
  %v2913 = vunpack.c.h.b16 %v567
  %v2914 = vunpack.c.l.b16 %v568
  %v2915 = vunpack.c.h.b16 %v568
  %v2916 = vunpack.c.l.b16 %v569
  %v2917 = vunpack.c.h.b16 %v569
  %v2918 = vunpack.c.l.b16 %v570
  %v2919 = vunpack.c.h.b16 %v570
  %v2920 = vunpack.c.l.b16 %v571
  %v2921 = vunpack.c.h.b16 %v571
  %v2922 = vunpack.c.l.b16 %v572
  %v2923 = vunpack.c.h.b16 %v572
  %v2924 = vunpack.c.l.b16 %v573
  %v2925 = vunpack.c.h.b16 %v573
  %v2926 = vunpack.c.l.b16 %v574
  %v2927 = vunpack.c.h.b16 %v574
  %v2928 = vunpack.c.l.b16 %v575
  %v2929 = vunpack.c.h.b16 %v575
  %v2930 = vunpack.c.l.b16 %v576
  %v2931 = vunpack.c.h.b16 %v576
  %v2932 = vunpack.c.l.b16 %v577
  %v2933 = vunpack.c.h.b16 %v577
  %v2934 = vunpack.c.l.b16 %v578
  %v2935 = vunpack.c.h.b16 %v578
  %v2936 = vunpack.c.l.b16 %v579
  %v2937 = vunpack.c.h.b16 %v579
  %v2938 = vunpack.c.l.b16 %v580
  %v2939 = vunpack.c.h.b16 %v580
  %v2940 = vunpack.c.l.b16 %v581
  %v2941 = vunpack.c.h.b16 %v581
  %v2942 = vunpack.c.l.b16 %v582
  %v2943 = vunpack.c.h.b16 %v582
  %v2944 = vunpack.c.l.b16 %v583
  %v2945 = vunpack.c.h.b16 %v583
  %v2946 = vunpack.c.l.b16 %v584
  %v2947 = vunpack.c.h.b16 %v584
  %v2948 = vunpack.c.l.b16 %v585
  %v2949 = vunpack.c.h.b16 %v585
  %v2950 = vunpack.c.l.b16 %v586
  %v2951 = vunpack.c.h.b16 %v586
  %v2952 = vunpack.c.l.b16 %v587
  %v2953 = vunpack.c.h.b16 %v587
  %v2954 = vunpack.c.l.b16 %v588
  %v2955 = vunpack.c.h.b16 %v588
  %v2956 = vunpack.c.l.b16 %v589
  %v2957 = vunpack.c.h.b16 %v589
  %v2958 = vunpack.c.l.b16 %v590
  %v2959 = vunpack.c.h.b16 %v590
  %v2960 = vunpack.c.l.b16 %v591
  %v2961 = vunpack.c.h.b16 %v591
  %v2962 = vunpack.c.l.b16 %v592
  %v2963 = vunpack.c.h.b16 %v592
  %v2964 = vunpack.c.l.b16 %v593
  %v2965 = vunpack.c.h.b16 %v593
  %v2966 = vunpack.c.l.b16 %v594
  %v2967 = vunpack.c.h.b16 %v594
  %v2968 = vunpack.c.l.b16 %v595
  %v2969 = vunpack.c.h.b16 %v595
  %v2970 = vunpack.c.l.b16 %v596
  %v2971 = vunpack.c.h.b16 %v596
  %v2972 = vunpack.c.l.b16 %v597
  %v2973 = vunpack.c.h.b16 %v597
  %v2974 = vunpack.c.l.b16 %v598
  %v2975 = vunpack.c.h.b16 %v598
  %v2976 = vunpack.c.l.b16 %v599
  %v2977 = vunpack.c.h.b16 %v599
  %v2978 = vunpack.c.l.b16 %v600
  %v2979 = vunpack.c.h.b16 %v600
  %v2980 = vunpack.c.l.b16 %v601
  %v2981 = vunpack.c.h.b16 %v601
  %v2982 = vunpack.c.l.b16 %v602
  %v2983 = vunpack.c.h.b16 %v602
  %v2984 = vunpack.c.l.b16 %v603
  %v2985 = vunpack.c.h.b16 %v603
  %v2986 = vunpack.c.l.b16 %v604
  %v2987 = vunpack.c.h.b16 %v604
  %v2988 = vunpack.c.l.b16 %v605
  %v2989 = vunpack.c.h.b16 %v605
  %v2990 = vunpack.c.l.b16 %v606
  %v2991 = vunpack.c.h.b16 %v606
  %v2992 = vunpack.c.l.b16 %v607
  %v2993 = vunpack.c.h.b16 %v607
  %v2994 = vunpack.c.l.b16 %v608
  %v2995 = vunpack.c.h.b16 %v608
  %v2996 = vunpack.c.l.b16 %v609
  %v2997 = vunpack.c.h.b16 %v609
  %v2998 = vunpack.c.l.b16 %v610
  %v2999 = vunpack.c.h.b16 %v610
  %v3000 = vunpack.c.l.b16 %v611
  %v3001 = vunpack.c.h.b16 %v611
  %v3002 = vunpack.c.l.b16 %v612
  %v3003 = vunpack.c.h.b16 %v612
  %v3004 = vunpack.c.l.b16 %v613
  %v3005 = vunpack.c.h.b16 %v613
  %v3006 = vunpack.c.l.b16 %v614
  %v3007 = vunpack.c.h.b16 %v614
  %v3008 = vunpack.c.l.b16 %v615
  %v3009 = vunpack.c.h.b16 %v615
  %v3010 = vunpack.c.l.b16 %v616
  %v3011 = vunpack.c.h.b16 %v616
  %v3012 = vunpack.c.l.b16 %v617
  %v3013 = vunpack.c.h.b16 %v617
  %v3014 = vunpack.c.l.b16 %v618
  %v3015 = vunpack.c.h.b16 %v618
  %v3016 = vunpack.c.l.b16 %v619
  %v3017 = vunpack.c.h.b16 %v619
  %v3018 = vunpack.c.l.b16 %v620
  %v3019 = vunpack.c.h.b16 %v620
  %v3020 = vunpack.c.l.b16 %v621
  %v3021 = vunpack.c.h.b16 %v621
  %v3022 = vunpack.c.l.b16 %v622
  %v3023 = vunpack.c.h.b16 %v622
  %v3024 = vunpack.c.l.b16 %v623
  %v3025 = vunpack.c.h.b16 %v623
  %v3026 = vunpack.c.l.b16 %v624
  %v3027 = vunpack.c.h.b16 %v624
  %v3028 = vunpack.c.l.b16 %v625
  %v3029 = vunpack.c.h.b16 %v625
  %v3030 = vunpack.c.l.b16 %v626
  %v3031 = vunpack.c.h.b16 %v626
  %v3032 = vunpack.c.l.b16 %v627
  %v3033 = vunpack.c.h.b16 %v627
  %v3034 = vunpack.c.l.b16 %v628
  %v3035 = vunpack.c.h.b16 %v628
  %v3036 = vunpack.c.l.b16 %v629
  %v3037 = vunpack.c.h.b16 %v629
  %v3038 = vunpack.c.l.b16 %v630
  %v3039 = vunpack.c.h.b16 %v630
  %v3040 = vunpack.c.l.b16 %v631
  %v3041 = vunpack.c.h.b16 %v631
  %v3042 = vunpack.c.l.b16 %v632
  %v3043 = vunpack.c.h.b16 %v632
  %v3044 = vunpack.c.l.b16 %v633
  %v3045 = vunpack.c.h.b16 %v633
  %v3046 = vunpack.c.l.b16 %v634
  %v3047 = vunpack.c.h.b16 %v634
  %v3048 = vunpack.c.l.b16 %v635
  %v3049 = vunpack.c.h.b16 %v635
  %v3050 = vunpack.c.l.b16 %v636
  %v3051 = vunpack.c.h.b16 %v636
  %v3052 = vunpack.c.l.b16 %v637
  %v3053 = vunpack.c.h.b16 %v637
  %v3054 = vunpack.c.l.b16 %v638
  %v3055 = vunpack.c.h.b16 %v638
  %v3056 = vunpack.c.l.b16 %v639
  %v3057 = vunpack.c.h.b16 %v639
  %v3058 = vunpack.c.l.b16 %v640
  %v3059 = vunpack.c.h.b16 %v640
  %v3060 = vunpack.c.l.b16 %v641
  %v3061 = vunpack.c.h.b16 %v641
  %v3062 = vunpack.c.l.b16 %v642
  %v3063 = vunpack.c.h.b16 %v642
  %v3064 = vunpack.c.l.b16 %v643
  %v3065 = vunpack.c.h.b16 %v643
  %v3066 = vunpack.c.l.b16 %v644
  %v3067 = vunpack.c.h.b16 %v644
  %v3068 = vunpack.c.l.b16 %v645
  %v3069 = vunpack.c.h.b16 %v645
  %v3070 = vunpack.c.l.b16 %v646
  %v3071 = vunpack.c.h.b16 %v646
  %v3072 = vunpack.c.l.b16 %v647
  %v3073 = vunpack.c.h.b16 %v647
  %v3074 = vunpack.c.l.b16 %v648
  %v3075 = vunpack.c.h.b16 %v648
  %v3076 = vunpack.c.l.b16 %v649
  %v3077 = vunpack.c.h.b16 %v649
  %v3078 = vunpack.c.l.b16 %v650
  %v3079 = vunpack.c.h.b16 %v650
  %v3080 = vunpack.c.l.b16 %v651
  %v3081 = vunpack.c.h.b16 %v651
  %v3082 = vunpack.c.l.b16 %v652
  %v3083 = vunpack.c.h.b16 %v652
  %v3084 = vunpack.c.l.b16 %v653
  %v3085 = vunpack.c.h.b16 %v653
  %v3086 = vunpack.c.l.b16 %v654
  %v3087 = vunpack.c.h.b16 %v654
  %v3088 = vunpack.c.l.b16 %v655
  %v3089 = vunpack.c.h.b16 %v655
  %v3090 = vunpack.c.l.b16 %v656
  %v3091 = vunpack.c.h.b16 %v656
  %v3092 = vunpack.c.l.b16 %v657
  %v3093 = vunpack.c.h.b16 %v657
  %v3094 = vunpack.c.l.b16 %v658
  %v3095 = vunpack.c.h.b16 %v658
  %v3096 = vunpack.c.l.b16 %v659
  %v3097 = vunpack.c.h.b16 %v659
  %v3098 = vunpack.c.l.b16 %v660
  %v3099 = vunpack.c.h.b16 %v660
  %v3100 = vunpack.c.l.b16 %v661
  %v3101 = vunpack.c.h.b16 %v661
  %v3102 = vunpack.c.l.b16 %v662
  %v3103 = vunpack.c.h.b16 %v662
  %v3104 = vunpack.c.l.b16 %v663
  %v3105 = vunpack.c.h.b16 %v663
  %v3106 = vunpack.c.l.b16 %v664
  %v3107 = vunpack.c.h.b16 %v664
  %v3108 = vunpack.c.l.b16 %v665
  %v3109 = vunpack.c.h.b16 %v665
  %v3110 = vunpack.c.l.b16 %v666
  %v3111 = vunpack.c.h.b16 %v666
  %v3112 = vunpack.c.l.b16 %v667
  %v3113 = vunpack.c.h.b16 %v667
  %v3114 = vunpack.c.l.b16 %v668
  %v3115 = vunpack.c.h.b16 %v668
  %v3116 = vunpack.c.l.b16 %v669
  %v3117 = vunpack.c.h.b16 %v669
  %v3118 = vunpack.c.l.b16 %v670
  %v3119 = vunpack.c.h.b16 %v670
  %v3120 = vunpack.c.l.b16 %v671
  %v3121 = vunpack.c.h.b16 %v671
  %v3122 = vunpack.c.l.b16 %v672
  %v3123 = vunpack.c.h.b16 %v672
  %v3124 = vunpack.c.l.b16 %v673
  %v3125 = vunpack.c.h.b16 %v673
  %v3126 = vunpack.c.l.b16 %v674
  %v3127 = vunpack.c.h.b16 %v674
  %v3128 = vunpack.c.l.b16 %v675
  %v3129 = vunpack.c.h.b16 %v675
  %v3130 = vunpack.c.l.b16 %v676
  %v3131 = vunpack.c.h.b16 %v676
  %v3132 = vunpack.c.l.b16 %v677
  %v3133 = vunpack.c.h.b16 %v677
  %v3134 = vunpack.c.l.b16 %v678
  %v3135 = vunpack.c.h.b16 %v678
  %v3136 = vunpack.c.l.b16 %v679
  %v3137 = vunpack.c.h.b16 %v679
  %v3138 = vunpack.c.l.b16 %v680
  %v3139 = vunpack.c.h.b16 %v680
  %v3140 = vunpack.c.l.b16 %v681
  %v3141 = vunpack.c.h.b16 %v681
  %v3142 = vunpack.c.l.b16 %v682
  %v3143 = vunpack.c.h.b16 %v682
  %v3144 = vunpack.c.l.b16 %v683
  %v3145 = vunpack.c.h.b16 %v683
  %v3146 = vunpack.c.l.b16 %v684
  %v3147 = vunpack.c.h.b16 %v684
  %v3148 = vunpack.c.l.b16 %v685
  %v3149 = vunpack.c.h.b16 %v685
  %v3150 = vunpack.c.l.b16 %v686
  %v3151 = vunpack.c.h.b16 %v686
  %v3152 = vunpack.c.l.b16 %v687
  %v3153 = vunpack.c.h.b16 %v687
  %v3154 = vunpack.c.l.b16 %v688
  %v3155 = vunpack.c.h.b16 %v688
  %v3156 = vunpack.c.l.b16 %v689
  %v3157 = vunpack.c.h.b16 %v689
  %v3158 = vunpack.c.l.b16 %v690
  %v3159 = vunpack.c.h.b16 %v690
  %v3160 = vunpack.c.l.b16 %v691
  %v3161 = vunpack.c.h.b16 %v691
  %v3162 = vunpack.c.l.b16 %v692
  %v3163 = vunpack.c.h.b16 %v692
  %v3164 = vunpack.c.l.b16 %v693
  %v3165 = vunpack.c.h.b16 %v693
  %v3166 = vunpack.c.l.b16 %v694
  %v3167 = vunpack.c.h.b16 %v694
  %v3168 = vunpack.c.l.b16 %v695
  %v3169 = vunpack.c.h.b16 %v695
  %v3170 = vunpack.c.l.b16 %v696
  %v3171 = vunpack.c.h.b16 %v696
  %v3172 = vunpack.c.l.b16 %v697
  %v3173 = vunpack.c.h.b16 %v697
  %v3174 = vunpack.c.l.b16 %v698
  %v3175 = vunpack.c.h.b16 %v698
  %v3176 = vunpack.c.l.b16 %v699
  %v3177 = vunpack.c.h.b16 %v699
  %v3178 = vunpack.c.l.b16 %v700
  %v3179 = vunpack.c.h.b16 %v700
  %v3180 = vunpack.c.l.b16 %v701
  %v3181 = vunpack.c.h.b16 %v701
  %v3182 = vunpack.c.l.b16 %v702
  %v3183 = vunpack.c.h.b16 %v702
  %v3184 = vunpack.c.l.b16 %v703
  %v3185 = vunpack.c.h.b16 %v703
  %v3186 = vunpack.c.l.b16 %v704
  %v3187 = vunpack.c.h.b16 %v704
  %v3188 = vunpack.c.l.b16 %v705
  %v3189 = vunpack.c.h.b16 %v705
  %v3190 = vunpack.c.l.b16 %v706
  %v3191 = vunpack.c.h.b16 %v706
  %v3192 = vunpack.c.l.b16 %v707
  %v3193 = vunpack.c.h.b16 %v707
  %v3194 = vunpack.c.l.b16 %v708
  %v3195 = vunpack.c.h.b16 %v708
  %v3196 = vunpack.c.l.b16 %v709
  %v3197 = vunpack.c.h.b16 %v709
  %v3198 = vunpack.c.l.b16 %v710
  %v3199 = vunpack.c.h.b16 %v710
  %v3200 = vunpack.c.l.b16 %v711
  %v3201 = vunpack.c.h.b16 %v711
  %v3202 = vunpack.c.l.b16 %v712
  %v3203 = vunpack.c.h.b16 %v712
  %v3204 = vunpack.c.l.b16 %v713
  %v3205 = vunpack.c.h.b16 %v713
  %v3206 = vunpack.c.l.b16 %v714
  %v3207 = vunpack.c.h.b16 %v714
  %v3208 = vunpack.c.l.b16 %v715
  %v3209 = vunpack.c.h.b16 %v715
  %v3210 = vunpack.c.l.b16 %v716
  %v3211 = vunpack.c.h.b16 %v716
  %v3212 = vunpack.c.l.b16 %v717
  %v3213 = vunpack.c.h.b16 %v717
  %v3214 = vunpack.c.l.b16 %v718
  %v3215 = vunpack.c.h.b16 %v718
  %v3216 = vunpack.c.l.b16 %v719
  %v3217 = vunpack.c.h.b16 %v719
  %v3218 = vunpack.c.l.b16 %v720
  %v3219 = vunpack.c.h.b16 %v720
  %v3220 = vunpack.c.l.b16 %v721
  %v3221 = vunpack.c.h.b16 %v721
  %v3222 = vunpack.c.l.b16 %v722
  %v3223 = vunpack.c.h.b16 %v722
  %v3224 = vunpack.c.l.b16 %v723
  %v3225 = vunpack.c.h.b16 %v723
  %v3226 = vunpack.c.l.b16 %v724
  %v3227 = vunpack.c.h.b16 %v724
  %v3228 = vunpack.c.l.b16 %v725
  %v3229 = vunpack.c.h.b16 %v725
  %v3230 = vunpack.c.l.b16 %v726
  %v3231 = vunpack.c.h.b16 %v726
  %v3232 = vunpack.c.l.b16 %v727
  %v3233 = vunpack.c.h.b16 %v727
  %v3234 = vunpack.c.l.b16 %v728
  %v3235 = vunpack.c.h.b16 %v728
  %v3236 = vunpack.c.l.b16 %v729
  %v3237 = vunpack.c.h.b16 %v729
  %v3238 = vunpack.c.l.b16 %v730
  %v3239 = vunpack.c.h.b16 %v730
  %v3240 = vunpack.c.l.b16 %v731
  %v3241 = vunpack.c.h.b16 %v731
  %v3242 = vunpack.c.l.b16 %v732
  %v3243 = vunpack.c.h.b16 %v732
  %v3244 = vunpack.c.l.b16 %v733
  %v3245 = vunpack.c.h.b16 %v733
  %v3246 = vunpack.c.l.b16 %v734
  %v3247 = vunpack.c.h.b16 %v734
  %v3248 = vunpack.c.l.b16 %v735
  %v3249 = vunpack.c.h.b16 %v735
  %v3250 = vunpack.c.l.b16 %v736
  %v3251 = vunpack.c.h.b16 %v736
  %v3252 = vunpack.c.l.b16 %v737
  %v3253 = vunpack.c.h.b16 %v737
  %v3254 = vunpack.c.l.b16 %v738
  %v3255 = vunpack.c.h.b16 %v738
  %v3256 = vunpack.c.l.b16 %v739
  %v3257 = vunpack.c.h.b16 %v739
  %v3258 = vunpack.c.l.b16 %v740
  %v3259 = vunpack.c.h.b16 %v740
  %v3260 = vunpack.c.l.b16 %v741
  %v3261 = vunpack.c.h.b16 %v741
  %v3262 = vunpack.c.l.b16 %v742
  %v3263 = vunpack.c.h.b16 %v742
  %v3264 = vunpack.c.l.b16 %v743
  %v3265 = vunpack.c.h.b16 %v743
  %v3266 = vunpack.c.l.b16 %v744
  %v3267 = vunpack.c.h.b16 %v744
  %v3268 = vunpack.c.l.b16 %v745
  %v3269 = vunpack.c.h.b16 %v745
  %v3270 = vunpack.c.l.b16 %v746
  %v3271 = vunpack.c.h.b16 %v746
  %v3272 = vunpack.c.l.b16 %v747
  %v3273 = vunpack.c.h.b16 %v747
  %v3274 = vunpack.c.l.b16 %v748
  %v3275 = vunpack.c.h.b16 %v748
  %v3276 = vunpack.c.l.b16 %v749
  %v3277 = vunpack.c.h.b16 %v749
  %v3278 = vunpack.c.l.b16 %v750
  %v3279 = vunpack.c.h.b16 %v750
  %v3280 = vunpack.c.l.b16 %v751
  %v3281 = vunpack.c.h.b16 %v751
  %v3282 = vunpack.c.l.b16 %v752
  %v3283 = vunpack.c.h.b16 %v752
  %v3284 = vunpack.c.l.b16 %v753
  %v3285 = vunpack.c.h.b16 %v753
  %v3286 = vunpack.c.l.b16 %v754
  %v3287 = vunpack.c.h.b16 %v754
  %v3288 = vunpack.c.l.b16 %v755
  %v3289 = vunpack.c.h.b16 %v755
  %v3290 = vunpack.c.l.b16 %v756
  %v3291 = vunpack.c.h.b16 %v756
  %v3292 = vunpack.c.l.b16 %v757
  %v3293 = vunpack.c.h.b16 %v757
  %v3294 = vunpack.c.l.b16 %v758
  %v3295 = vunpack.c.h.b16 %v758
  %v3296 = vunpack.c.l.b16 %v759
  %v3297 = vunpack.c.h.b16 %v759
  %v3298 = vunpack.c.l.b16 %v760
  %v3299 = vunpack.c.h.b16 %v760
  %v3300 = vunpack.c.l.b16 %v761
  %v3301 = vunpack.c.h.b16 %v761
  %v3302 = vunpack.c.l.b16 %v762
  %v3303 = vunpack.c.h.b16 %v762
  %v3304 = vunpack.c.l.b16 %v763
  %v3305 = vunpack.c.h.b16 %v763
  %v3306 = vunpack.c.l.b16 %v764
  %v3307 = vunpack.c.h.b16 %v764
  %v3308 = vunpack.c.l.b16 %v765
  %v3309 = vunpack.c.h.b16 %v765
  %v3310 = vunpack.c.l.b16 %v766
  %v3311 = vunpack.c.h.b16 %v766
  %v3312 = vunpack.c.l.b16 %v767
  %v3313 = vunpack.c.h.b16 %v767
  %v3314 = vunpack.c.l.b16 %v768
  %v3315 = vunpack.c.h.b16 %v768
  %v3316 = vunpack.c.l.b16 %v769
  %v3317 = vunpack.c.h.b16 %v769
  %v3318 = vunpack.c.l.b16 %v770
  %v3319 = vunpack.c.h.b16 %v770
  %v3320 = vunpack.c.l.b16 %v771
  %v3321 = vunpack.c.h.b16 %v771
  %v3322 = vunpack.c.l.b16 %v772
  %v3323 = vunpack.c.h.b16 %v772
  %v3324 = vunpack.c.l.b16 %v773
  %v3325 = vunpack.c.h.b16 %v773
  %v3326 = vunpack.c.l.b16 %v774
  %v3327 = vunpack.c.h.b16 %v774
  %v3328 = vunpack.c.l.b16 %v775
  %v3329 = vunpack.c.h.b16 %v775
  %v3330 = vunpack.c.l.b16 %v776
  %v3331 = vunpack.c.h.b16 %v776
  %v3332 = vunpack.c.l.b16 %v777
  %v3333 = vunpack.c.h.b16 %v777
  %v3334 = vunpack.c.l.b16 %v778
  %v3335 = vunpack.c.h.b16 %v778
  %v3336 = vunpack.c.l.b16 %v779
  %v3337 = vunpack.c.h.b16 %v779
  %v3338 = vunpack.c.l.b16 %v780
  %v3339 = vunpack.c.h.b16 %v780
  %v3340 = vunpack.c.l.b16 %v781
  %v3341 = vunpack.c.h.b16 %v781
  %v3342 = vunpack.c.l.b16 %v782
  %v3343 = vunpack.c.h.b16 %v782
  %v3344 = vunpack.c.l.b16 %v783
  %v3345 = vunpack.c.h.b16 %v783
  %v3346 = vunpack.c.l.b16 %v784
  %v3347 = vunpack.c.h.b16 %v784
  %v3348 = vunpack.c.l.b16 %v785
  %v3349 = vunpack.c.h.b16 %v785
  %v3350 = vunpack.c.l.b16 %v786
  %v3351 = vunpack.c.h.b16 %v786
  %v3352 = vunpack.c.l.b16 %v787
  %v3353 = vunpack.c.h.b16 %v787
  %v3354 = vunpack.c.l.b16 %v788
  %v3355 = vunpack.c.h.b16 %v788
  %v3356 = vunpack.c.l.b16 %v789
  %v3357 = vunpack.c.h.b16 %v789
  %v3358 = vunpack.c.l.b16 %v790
  %v3359 = vunpack.c.h.b16 %v790
  %v3360 = vunpack.c.l.b16 %v791
  %v3361 = vunpack.c.h.b16 %v791
  %v3362 = vunpack.c.l.b16 %v792
  %v3363 = vunpack.c.h.b16 %v792
  %v3364 = vunpack.c.l.b16 %v793
  %v3365 = vunpack.c.h.b16 %v793
  %v3366 = vunpack.c.l.b16 %v794
  %v3367 = vunpack.c.h.b16 %v794
  %v3368 = vunpack.c.l.b16 %v795
  %v3369 = vunpack.c.h.b16 %v795
  %v3370 = vunpack.c.l.b16 %v796
  %v3371 = vunpack.c.h.b16 %v796
  %v3372 = vunpack.c.l.b16 %v797
  %v3373 = vunpack.c.h.b16 %v797
  %v3374 = vunpack.c.l.b16 %v798
  %v3375 = vunpack.c.h.b16 %v798
  %v3376 = vunpack.c.l.b16 %v799
  %v3377 = vunpack.c.h.b16 %v799
  %v3378 = vunpack.c.l.b16 %v800
  %v3379 = vunpack.c.h.b16 %v800
  %v3380 = vunpack.c.l.b16 %v801
  %v3381 = vunpack.c.h.b16 %v801
  %v3382 = vunpack.c.l.b16 %v802
  %v3383 = vunpack.c.h.b16 %v802
  %v3384 = vunpack.c.l.b16 %v803
  %v3385 = vunpack.c.h.b16 %v803
  %v3386 = vunpack.c.l.b16 %v804
  %v3387 = vunpack.c.h.b16 %v804
  %v3388 = vunpack.c.l.b16 %v805
  %v3389 = vunpack.c.h.b16 %v805
  %v3390 = vunpack.c.l.b16 %v806
  %v3391 = vunpack.c.h.b16 %v806
  %v3392 = vunpack.c.l.b16 %v807
  %v3393 = vunpack.c.h.b16 %v807
  %v3394 = vunpack.c.l.b16 %v808
  %v3395 = vunpack.c.h.b16 %v808
  %v3396 = vunpack.c.l.b16 %v809
  %v3397 = vunpack.c.h.b16 %v809
  %v3398 = vunpack.c.l.b16 %v810
  %v3399 = vunpack.c.h.b16 %v810
  %v3400 = vunpack.c.l.b16 %v811
  %v3401 = vunpack.c.h.b16 %v811
  %v3402 = vunpack.c.l.b16 %v812
  %v3403 = vunpack.c.h.b16 %v812
  %v3404 = vunpack.c.l.b16 %v813
  %v3405 = vunpack.c.h.b16 %v813
  %v3406 = vunpack.c.l.b16 %v814
  %v3407 = vunpack.c.h.b16 %v814
  %v3408 = vunpack.c.l.b16 %v815
  %v3409 = vunpack.c.h.b16 %v815
  %v3410 = vunpack.c.l.b16 %v816
  %v3411 = vunpack.c.h.b16 %v816
  %v3412 = vunpack.c.l.b16 %v817
  %v3413 = vunpack.c.h.b16 %v817
  %v3414 = vunpack.c.l.b16 %v818
  %v3415 = vunpack.c.h.b16 %v818
  %v3416 = vunpack.c.l.b16 %v819
  %v3417 = vunpack.c.h.b16 %v819
  %v3418 = vunpack.c.l.b16 %v820
  %v3419 = vunpack.c.h.b16 %v820
  %v3420 = vunpack.c.l.b16 %v821
  %v3421 = vunpack.c.h.b16 %v821
  %v3422 = vunpack.c.l.b16 %v822
  %v3423 = vunpack.c.h.b16 %v822
  %v3424 = vunpack.c.l.b16 %v823
  %v3425 = vunpack.c.h.b16 %v823
  %v3426 = vunpack.c.l.b16 %v824
  %v3427 = vunpack.c.h.b16 %v824
  %v3428 = vunpack.c.l.b16 %v825
  %v3429 = vunpack.c.h.b16 %v825
  %v3430 = vunpack.c.l.b16 %v826
  %v3431 = vunpack.c.h.b16 %v826
  %v3432 = vunpack.c.l.b16 %v827
  %v3433 = vunpack.c.h.b16 %v827
  %v3434 = vunpack.c.l.b16 %v828
  %v3435 = vunpack.c.h.b16 %v828
  %v3436 = vunpack.c.l.b16 %v829
  %v3437 = vunpack.c.h.b16 %v829
  %v3438 = vunpack.c.l.b16 %v830
  %v3439 = vunpack.c.h.b16 %v830
  %v3440 = vunpack.c.l.b16 %v831
  %v3441 = vunpack.c.h.b16 %v831
  %v3442 = vunpack.c.l.b16 %v832
  %v3443 = vunpack.c.h.b16 %v832
  %v3444 = vunpack.c.l.b16 %v833
  %v3445 = vunpack.c.h.b16 %v833
  %v3446 = vunpack.c.l.b16 %v834
  %v3447 = vunpack.c.h.b16 %v834
  %v3448 = vunpack.c.l.b16 %v835
  %v3449 = vunpack.c.h.b16 %v835
  %v3450 = vunpack.c.l.b16 %v836
  %v3451 = vunpack.c.h.b16 %v836
  %v3452 = vunpack.c.l.b16 %v837
  %v3453 = vunpack.c.h.b16 %v837
  %v3454 = vunpack.c.l.b16 %v838
  %v3455 = vunpack.c.h.b16 %v838
  %v3456 = vunpack.c.l.b16 %v839
  %v3457 = vunpack.c.h.b16 %v839
  %v3458 = vunpack.c.l.b16 %v840
  %v3459 = vunpack.c.h.b16 %v840
  %v3460 = vunpack.c.l.b16 %v841
  %v3461 = vunpack.c.h.b16 %v841
  %v3462 = vunpack.c.l.b16 %v842
  %v3463 = vunpack.c.h.b16 %v842
  %v3464 = vunpack.c.l.b16 %v843
  %v3465 = vunpack.c.h.b16 %v843
  %v3466 = vunpack.c.l.b16 %v844
  %v3467 = vunpack.c.h.b16 %v844
  %v3468 = vunpack.c.l.b16 %v845
  %v3469 = vunpack.c.h.b16 %v845
  %v3470 = vunpack.c.l.b16 %v846
  %v3471 = vunpack.c.h.b16 %v846
  %v3472 = vunpack.c.l.b16 %v847
  %v3473 = vunpack.c.h.b16 %v847
  %v3474 = vunpack.c.l.b16 %v848
  %v3475 = vunpack.c.h.b16 %v848
  %v3476 = vunpack.c.l.b16 %v849
  %v3477 = vunpack.c.h.b16 %v849
  %v3478 = vunpack.c.l.b16 %v850
  %v3479 = vunpack.c.h.b16 %v850
  %v3480 = vunpack.c.l.b16 %v851
  %v3481 = vunpack.c.h.b16 %v851
  %v3482 = vunpack.c.l.b16 %v852
  %v3483 = vunpack.c.h.b16 %v852
  %v3484 = vunpack.c.l.b16 %v853
  %v3485 = vunpack.c.h.b16 %v853
  %v3486 = vunpack.c.l.b16 %v854
  %v3487 = vunpack.c.h.b16 %v854
  %v3488 = vunpack.c.l.b16 %v855
  %v3489 = vunpack.c.h.b16 %v855
  %v3490 = vunpack.c.l.b16 %v856
  %v3491 = vunpack.c.h.b16 %v856
  %v3492 = vunpack.c.l.b16 %v857
  %v3493 = vunpack.c.h.b16 %v857
  %v3494 = vunpack.c.l.b16 %v858
  %v3495 = vunpack.c.h.b16 %v858
  %v3496 = vunpack.c.l.b16 %v859
  %v3497 = vunpack.c.h.b16 %v859
  %v3498 = vunpack.c.l.b16 %v860
  %v3499 = vunpack.c.h.b16 %v860
  %v3500 = vunpack.c.l.b16 %v861
  %v3501 = vunpack.c.h.b16 %v861
  %v3502 = vunpack.c.l.b16 %v862
  %v3503 = vunpack.c.h.b16 %v862
  %v3504 = vunpack.c.l.b16 %v863
  %v3505 = vunpack.c.h.b16 %v863
  %v3506 = vunpack.c.l.b16 %v864
  %v3507 = vunpack.c.h.b16 %v864
  %v3508 = vunpack.c.l.b16 %v865
  %v3509 = vunpack.c.h.b16 %v865
  %v3510 = vunpack.c.l.b16 %v866
  %v3511 = vunpack.c.h.b16 %v866
  %v3512 = vunpack.c.l.b16 %v867
  %v3513 = vunpack.c.h.b16 %v867
  %v3514 = vunpack.c.l.b16 %v868
  %v3515 = vunpack.c.h.b16 %v868
  %v3516 = vunpack.c.l.b16 %v869
  %v3517 = vunpack.c.h.b16 %v869
  %v3518 = vunpack.c.l.b16 %v870
  %v3519 = vunpack.c.h.b16 %v870
  %v3520 = vunpack.c.l.b16 %v871
  %v3521 = vunpack.c.h.b16 %v871
  %v3522 = vunpack.c.l.b16 %v872
  %v3523 = vunpack.c.h.b16 %v872
  %v3524 = vunpack.c.l.b16 %v873
  %v3525 = vunpack.c.h.b16 %v873
  %v3526 = vunpack.c.l.b16 %v874
  %v3527 = vunpack.c.h.b16 %v874
  %v3528 = vunpack.c.l.b16 %v875
  %v3529 = vunpack.c.h.b16 %v875
  %v3530 = vunpack.c.l.b16 %v876
  %v3531 = vunpack.c.h.b16 %v876
  %v3532 = vunpack.c.l.b16 %v877
  %v3533 = vunpack.c.h.b16 %v877
  %v3534 = vunpack.c.l.b16 %v878
  %v3535 = vunpack.c.h.b16 %v878
  %v3536 = vunpack.c.l.b16 %v879
  %v3537 = vunpack.c.h.b16 %v879
  %v3538 = vunpack.c.l.b16 %v880
  %v3539 = vunpack.c.h.b16 %v880
  %v3540 = vunpack.c.l.b16 %v881
  %v3541 = vunpack.c.h.b16 %v881
  %v3542 = vunpack.c.l.b16 %v882
  %v3543 = vunpack.c.h.b16 %v882
  %v3544 = vunpack.c.l.b16 %v883
  %v3545 = vunpack.c.h.b16 %v883
  %v3546 = vunpack.c.l.b16 %v884
  %v3547 = vunpack.c.h.b16 %v884
  %v3548 = vunpack.c.l.b16 %v885
  %v3549 = vunpack.c.h.b16 %v885
  %v3550 = vunpack.c.l.b16 %v886
  %v3551 = vunpack.c.h.b16 %v886
  %v3552 = vunpack.c.l.b16 %v887
  %v3553 = vunpack.c.h.b16 %v887
  %v3554 = vunpack.c.l.b16 %v888
  %v3555 = vunpack.c.h.b16 %v888
  %v3556 = vunpack.c.l.b16 %v889
  %v3557 = vunpack.c.h.b16 %v889
  %v3558 = vunpack.c.l.b16 %v890
  %v3559 = vunpack.c.h.b16 %v890
  %v3560 = vunpack.c.l.b16 %v891
  %v3561 = vunpack.c.h.b16 %v891
  %v3562 = vunpack.c.l.b16 %v892
  %v3563 = vunpack.c.h.b16 %v892
  %v3564 = vunpack.c.l.b16 %v893
  %v3565 = vunpack.c.h.b16 %v893
  %v3566 = vunpack.c.l.b16 %v894
  %v3567 = vunpack.c.h.b16 %v894
  %v3568 = vunpack.c.l.b16 %v895
  %v3569 = vunpack.c.h.b16 %v895
  %v3570 = vunpack.c.l.b16 %v896
  %v3571 = vunpack.c.h.b16 %v896
  %v3572 = vunpack.c.l.b16 %v897
  %v3573 = vunpack.c.h.b16 %v897
  %v3574 = vunpack.c.l.b16 %v898
  %v3575 = vunpack.c.h.b16 %v898
  %v3576 = vunpack.c.l.b16 %v899
  %v3577 = vunpack.c.h.b16 %v899
  %v3578 = vunpack.c.l.b16 %v900
  %v3579 = vunpack.c.h.b16 %v900
  %v3580 = vunpack.c.l.b16 %v901
  %v3581 = vunpack.c.h.b16 %v901
  %v3582 = vunpack.c.l.b16 %v902
  %v3583 = vunpack.c.h.b16 %v902
  %v3584 = vunpack.c.l.b16 %v903
  %v3585 = vunpack.c.h.b16 %v903
  %v3586 = vpack.c.b16 %v1866, %v1858
  %v3587 = vpack.c.b16 %v1867, %v1859
  %v3588 = vpack.c.b16 %v1868, %v1860
  %v3589 = vpack.c.b16 %v1869, %v1861
  %v3590 = vpack.c.b16 %v1870, %v1862
  %v3591 = vpack.c.b16 %v1871, %v1863
  %v3592 = vpack.c.b16 %v1872, %v1864
  %v3593 = vpack.c.b16 %v1873, %v1865
  %v3594 = vpack.c.b16 %v1882, %v1874
  %v3595 = vpack.c.b16 %v1883, %v1875
  %v3596 = vpack.c.b16 %v1884, %v1876
  %v3597 = vpack.c.b16 %v1885, %v1877
  %v3598 = vpack.c.b16 %v1886, %v1878
  %v3599 = vpack.c.b16 %v1887, %v1879
  %v3600 = vpack.c.b16 %v1888, %v1880
  %v3601 = vpack.c.b16 %v1889, %v1881
  %v3602 = vpack.c.b16 %v1898, %v1890
  %v3603 = vpack.c.b16 %v1899, %v1891
  %v3604 = vpack.c.b16 %v1900, %v1892
  %v3605 = vpack.c.b16 %v1901, %v1893
  %v3606 = vpack.c.b16 %v1902, %v1894
  %v3607 = vpack.c.b16 %v1903, %v1895
  %v3608 = vpack.c.b16 %v1904, %v1896
  %v3609 = vpack.c.b16 %v1905, %v1897
  %v3610 = vpack.c.b16 %v1914, %v1906
  %v3611 = vpack.c.b16 %v1915, %v1907
  %v3612 = vpack.c.b16 %v1916, %v1908
  %v3613 = vpack.c.b16 %v1917, %v1909
  %v3614 = vpack.c.b16 %v1918, %v1910
  %v3615 = vpack.c.b16 %v1919, %v1911
  %v3616 = vpack.c.b16 %v1920, %v1912
  %v3617 = vpack.c.b16 %v1921, %v1913
  %v3618 = vpack.c.b16 %v1930, %v1922
  %v3619 = vpack.c.b16 %v1931, %v1923
  %v3620 = vpack.c.b16 %v1932, %v1924
  %v3621 = vpack.c.b16 %v1933, %v1925
  %v3622 = vpack.c.b16 %v1934, %v1926
  %v3623 = vpack.c.b16 %v1935, %v1927
  %v3624 = vpack.c.b16 %v1936, %v1928
  %v3625 = vpack.c.b16 %v1937, %v1929
  %v3626 = vpack.c.b16 %v1946, %v1938
  %v3627 = vpack.c.b16 %v1947, %v1939
  %v3628 = vpack.c.b16 %v1948, %v1940
  %v3629 = vpack.c.b16 %v1949, %v1941
  %v3630 = vpack.c.b16 %v1950, %v1942
  %v3631 = vpack.c.b16 %v1951, %v1943
  %v3632 = vpack.c.b16 %v1952, %v1944
  %v3633 = vpack.c.b16 %v1953, %v1945
  %v3634 = vpack.c.b16 %v1962, %v1954
  %v3635 = vpack.c.b16 %v1963, %v1955
  %v3636 = vpack.c.b16 %v1964, %v1956
  %v3637 = vpack.c.b16 %v1965, %v1957
  %v3638 = vpack.c.b16 %v1966, %v1958
  %v3639 = vpack.c.b16 %v1967, %v1959
  %v3640 = vpack.c.b16 %v1968, %v1960
  %v3641 = vpack.c.b16 %v1969, %v1961
  %v3642 = vpack.c.b16 %v1978, %v1970
  %v3643 = vpack.c.b16 %v1979, %v1971
  %v3644 = vpack.c.b16 %v1980, %v1972
  %v3645 = vpack.c.b16 %v1981, %v1973
  %v3646 = vpack.c.b16 %v1982, %v1974
  %v3647 = vpack.c.b16 %v1983, %v1975
  %v3648 = vpack.c.b16 %v1984, %v1976
  %v3649 = vpack.c.b16 %v1985, %v1977
  %v3650 = vpack.c.b16 %v1994, %v1986
  %v3651 = vpack.c.b16 %v1995, %v1987
  %v3652 = vpack.c.b16 %v1996, %v1988
  %v3653 = vpack.c.b16 %v1997, %v1989
  %v3654 = vpack.c.b16 %v1998, %v1990
  %v3655 = vpack.c.b16 %v1999, %v1991
  %v3656 = vpack.c.b16 %v2000, %v1992
  %v3657 = vpack.c.b16 %v2001, %v1993
  %v3658 = vpack.c.b16 %v2010, %v2002
  %v3659 = vpack.c.b16 %v2011, %v2003
  %v3660 = vpack.c.b16 %v2012, %v2004
  %v3661 = vpack.c.b16 %v2013, %v2005
  %v3662 = vpack.c.b16 %v2014, %v2006
  %v3663 = vpack.c.b16 %v2015, %v2007
  %v3664 = vpack.c.b16 %v2016, %v2008
  %v3665 = vpack.c.b16 %v2017, %v2009
  %v3666 = vpack.c.b16 %v2026, %v2018
  %v3667 = vpack.c.b16 %v2027, %v2019
  %v3668 = vpack.c.b16 %v2028, %v2020
  %v3669 = vpack.c.b16 %v2029, %v2021
  %v3670 = vpack.c.b16 %v2030, %v2022
  %v3671 = vpack.c.b16 %v2031, %v2023
  %v3672 = vpack.c.b16 %v2032, %v2024
  %v3673 = vpack.c.b16 %v2033, %v2025
  %v3674 = vpack.c.b16 %v2042, %v2034
  %v3675 = vpack.c.b16 %v2043, %v2035
  %v3676 = vpack.c.b16 %v2044, %v2036
  %v3677 = vpack.c.b16 %v2045, %v2037
  %v3678 = vpack.c.b16 %v2046, %v2038
  %v3679 = vpack.c.b16 %v2047, %v2039
  %v3680 = vpack.c.b16 %v2048, %v2040
  %v3681 = vpack.c.b16 %v2049, %v2041
  %v3682 = vpack.c.b16 %v2058, %v2050
  %v3683 = vpack.c.b16 %v2059, %v2051
  %v3684 = vpack.c.b16 %v2060, %v2052
  %v3685 = vpack.c.b16 %v2061, %v2053
  %v3686 = vpack.c.b16 %v2062, %v2054
  %v3687 = vpack.c.b16 %v2063, %v2055
  %v3688 = vpack.c.b16 %v2064, %v2056
  %v3689 = vpack.c.b16 %v2065, %v2057
  %v3690 = vpack.c.b16 %v2074, %v2066
  %v3691 = vpack.c.b16 %v2075, %v2067
  %v3692 = vpack.c.b16 %v2076, %v2068
  %v3693 = vpack.c.b16 %v2077, %v2069
  %v3694 = vpack.c.b16 %v2078, %v2070
  %v3695 = vpack.c.b16 %v2079, %v2071
  %v3696 = vpack.c.b16 %v2080, %v2072
  %v3697 = vpack.c.b16 %v2081, %v2073
  %v3698 = vpack.c.b16 %v2090, %v2082
  %v3699 = vpack.c.b16 %v2091, %v2083
  %v3700 = vpack.c.b16 %v2092, %v2084
  %v3701 = vpack.c.b16 %v2093, %v2085
  %v3702 = vpack.c.b16 %v2094, %v2086
  %v3703 = vpack.c.b16 %v2095, %v2087
  %v3704 = vpack.c.b16 %v2096, %v2088
  %v3705 = vpack.c.b16 %v2097, %v2089
  %v3706 = vpack.c.b16 %v2106, %v2098
  %v3707 = vpack.c.b16 %v2107, %v2099
  %v3708 = vpack.c.b16 %v2108, %v2100
  %v3709 = vpack.c.b16 %v2109, %v2101
  %v3710 = vpack.c.b16 %v2110, %v2102
  %v3711 = vpack.c.b16 %v2111, %v2103
  %v3712 = vpack.c.b16 %v2112, %v2104
  %v3713 = vpack.c.b16 %v2113, %v2105
  %v3714 = vpack.c.b16 %v2122, %v2114
  %v3715 = vpack.c.b16 %v2123, %v2115
  %v3716 = vpack.c.b16 %v2124, %v2116
  %v3717 = vpack.c.b16 %v2125, %v2117
  %v3718 = vpack.c.b16 %v2126, %v2118
  %v3719 = vpack.c.b16 %v2127, %v2119
  %v3720 = vpack.c.b16 %v2128, %v2120
  %v3721 = vpack.c.b16 %v2129, %v2121
  %v3722 = vpack.c.b16 %v2138, %v2130
  %v3723 = vpack.c.b16 %v2139, %v2131
  %v3724 = vpack.c.b16 %v2140, %v2132
  %v3725 = vpack.c.b16 %v2141, %v2133
  %v3726 = vpack.c.b16 %v2142, %v2134
  %v3727 = vpack.c.b16 %v2143, %v2135
  %v3728 = vpack.c.b16 %v2144, %v2136
  %v3729 = vpack.c.b16 %v2145, %v2137
  %v3730 = vpack.c.b16 %v2154, %v2146
  %v3731 = vpack.c.b16 %v2155, %v2147
  %v3732 = vpack.c.b16 %v2156, %v2148
  %v3733 = vpack.c.b16 %v2157, %v2149
  %v3734 = vpack.c.b16 %v2158, %v2150
  %v3735 = vpack.c.b16 %v2159, %v2151
  %v3736 = vpack.c.b16 %v2160, %v2152
  %v3737 = vpack.c.b16 %v2161, %v2153
  %v3738 = vpack.c.b16 %v2170, %v2162
  %v3739 = vpack.c.b16 %v2171, %v2163
  %v3740 = vpack.c.b16 %v2172, %v2164
  %v3741 = vpack.c.b16 %v2173, %v2165
  %v3742 = vpack.c.b16 %v2174, %v2166
  %v3743 = vpack.c.b16 %v2175, %v2167
  %v3744 = vpack.c.b16 %v2176, %v2168
  %v3745 = vpack.c.b16 %v2177, %v2169
  %v3746 = vpack.c.b16 %v2186, %v2178
  %v3747 = vpack.c.b16 %v2187, %v2179
  %v3748 = vpack.c.b16 %v2188, %v2180
  %v3749 = vpack.c.b16 %v2189, %v2181
  %v3750 = vpack.c.b16 %v2190, %v2182
  %v3751 = vpack.c.b16 %v2191, %v2183
  %v3752 = vpack.c.b16 %v2192, %v2184
  %v3753 = vpack.c.b16 %v2193, %v2185
  %v3754 = vpack.c.b16 %v2202, %v2194
  %v3755 = vpack.c.b16 %v2203, %v2195
  %v3756 = vpack.c.b16 %v2204, %v2196
  %v3757 = vpack.c.b16 %v2205, %v2197
  %v3758 = vpack.c.b16 %v2206, %v2198
  %v3759 = vpack.c.b16 %v2207, %v2199
  %v3760 = vpack.c.b16 %v2208, %v2200
  %v3761 = vpack.c.b16 %v2209, %v2201
  %v3762 = vpack.c.b16 %v2218, %v2210
  %v3763 = vpack.c.b16 %v2219, %v2211
  %v3764 = vpack.c.b16 %v2220, %v2212
  %v3765 = vpack.c.b16 %v2221, %v2213
  %v3766 = vpack.c.b16 %v2222, %v2214
  %v3767 = vpack.c.b16 %v2223, %v2215
  %v3768 = vpack.c.b16 %v2224, %v2216
  %v3769 = vpack.c.b16 %v2225, %v2217
  %v3770 = vpack.c.b16 %v2234, %v2226
  %v3771 = vpack.c.b16 %v2235, %v2227
  %v3772 = vpack.c.b16 %v2236, %v2228
  %v3773 = vpack.c.b16 %v2237, %v2229
  %v3774 = vpack.c.b16 %v2238, %v2230
  %v3775 = vpack.c.b16 %v2239, %v2231
  %v3776 = vpack.c.b16 %v2240, %v2232
  %v3777 = vpack.c.b16 %v2241, %v2233
  %v3778 = vpack.c.b16 %v2250, %v2242
  %v3779 = vpack.c.b16 %v2251, %v2243
  %v3780 = vpack.c.b16 %v2252, %v2244
  %v3781 = vpack.c.b16 %v2253, %v2245
  %v3782 = vpack.c.b16 %v2254, %v2246
  %v3783 = vpack.c.b16 %v2255, %v2247
  %v3784 = vpack.c.b16 %v2256, %v2248
  %v3785 = vpack.c.b16 %v2257, %v2249
  %v3786 = vpack.c.b16 %v2266, %v2258
  %v3787 = vpack.c.b16 %v2267, %v2259
  %v3788 = vpack.c.b16 %v2268, %v2260
  %v3789 = vpack.c.b16 %v2269, %v2261
  %v3790 = vpack.c.b16 %v2270, %v2262
  %v3791 = vpack.c.b16 %v2271, %v2263
  %v3792 = vpack.c.b16 %v2272, %v2264
  %v3793 = vpack.c.b16 %v2273, %v2265
  %v3794 = vpack.c.b16 %v2282, %v2274
  %v3795 = vpack.c.b16 %v2283, %v2275
  %v3796 = vpack.c.b16 %v2284, %v2276
  %v3797 = vpack.c.b16 %v2285, %v2277
  %v3798 = vpack.c.b16 %v2286, %v2278
  %v3799 = vpack.c.b16 %v2287, %v2279
  %v3800 = vpack.c.b16 %v2288, %v2280
  %v3801 = vpack.c.b16 %v2289, %v2281
  %v3802 = vpack.c.b16 %v2298, %v2290
  %v3803 = vpack.c.b16 %v2299, %v2291
  %v3804 = vpack.c.b16 %v2300, %v2292
  %v3805 = vpack.c.b16 %v2301, %v2293
  %v3806 = vpack.c.b16 %v2302, %v2294
  %v3807 = vpack.c.b16 %v2303, %v2295
  %v3808 = vpack.c.b16 %v2304, %v2296
  %v3809 = vpack.c.b16 %v2305, %v2297
  %v3810 = vpack.c.b16 %v2314, %v2306
  %v3811 = vpack.c.b16 %v2315, %v2307
  %v3812 = vpack.c.b16 %v2316, %v2308
  %v3813 = vpack.c.b16 %v2317, %v2309
  %v3814 = vpack.c.b16 %v2318, %v2310
  %v3815 = vpack.c.b16 %v2319, %v2311
  %v3816 = vpack.c.b16 %v2320, %v2312
  %v3817 = vpack.c.b16 %v2321, %v2313
  %v3818 = vpack.c.b16 %v2330, %v2322
  %v3819 = vpack.c.b16 %v2331, %v2323
  %v3820 = vpack.c.b16 %v2332, %v2324
  %v3821 = vpack.c.b16 %v2333, %v2325
  %v3822 = vpack.c.b16 %v2334, %v2326
  %v3823 = vpack.c.b16 %v2335, %v2327
  %v3824 = vpack.c.b16 %v2336, %v2328
  %v3825 = vpack.c.b16 %v2337, %v2329
  %v3826 = vpack.c.b16 %v2346, %v2338
  %v3827 = vpack.c.b16 %v2347, %v2339
  %v3828 = vpack.c.b16 %v2348, %v2340
  %v3829 = vpack.c.b16 %v2349, %v2341
  %v3830 = vpack.c.b16 %v2350, %v2342
  %v3831 = vpack.c.b16 %v2351, %v2343
  %v3832 = vpack.c.b16 %v2352, %v2344
  %v3833 = vpack.c.b16 %v2353, %v2345
  %v3834 = vpack.c.b16 %v2362, %v2354
  %v3835 = vpack.c.b16 %v2363, %v2355
  %v3836 = vpack.c.b16 %v2364, %v2356
  %v3837 = vpack.c.b16 %v2365, %v2357
  %v3838 = vpack.c.b16 %v2366, %v2358
  %v3839 = vpack.c.b16 %v2367, %v2359
  %v3840 = vpack.c.b16 %v2368, %v2360
  %v3841 = vpack.c.b16 %v2369, %v2361
  %v3842 = vpack.c.b16 %v2378, %v2370
  %v3843 = vpack.c.b16 %v2379, %v2371
  %v3844 = vpack.c.b16 %v2380, %v2372
  %v3845 = vpack.c.b16 %v2381, %v2373
  %v3846 = vpack.c.b16 %v2382, %v2374
  %v3847 = vpack.c.b16 %v2383, %v2375
  %v3848 = vpack.c.b16 %v2384, %v2376
  %v3849 = vpack.c.b16 %v2385, %v2377
  %v3850 = vpack.c.b16 %v2394, %v2386
  %v3851 = vpack.c.b16 %v2395, %v2387
  %v3852 = vpack.c.b16 %v2396, %v2388
  %v3853 = vpack.c.b16 %v2397, %v2389
  %v3854 = vpack.c.b16 %v2398, %v2390
  %v3855 = vpack.c.b16 %v2399, %v2391
  %v3856 = vpack.c.b16 %v2400, %v2392
  %v3857 = vpack.c.b16 %v2401, %v2393
  %v3858 = vpack.c.b16 %v2410, %v2402
  %v3859 = vpack.c.b16 %v2411, %v2403
  %v3860 = vpack.c.b16 %v2412, %v2404
  %v3861 = vpack.c.b16 %v2413, %v2405
  %v3862 = vpack.c.b16 %v2414, %v2406
  %v3863 = vpack.c.b16 %v2415, %v2407
  %v3864 = vpack.c.b16 %v2416, %v2408
  %v3865 = vpack.c.b16 %v2417, %v2409
  %v3866 = vpack.c.b16 %v2426, %v2418
  %v3867 = vpack.c.b16 %v2427, %v2419
  %v3868 = vpack.c.b16 %v2428, %v2420
  %v3869 = vpack.c.b16 %v2429, %v2421
  %v3870 = vpack.c.b16 %v2430, %v2422
  %v3871 = vpack.c.b16 %v2431, %v2423
  %v3872 = vpack.c.b16 %v2432, %v2424
  %v3873 = vpack.c.b16 %v2433, %v2425
  %v3874 = vpack.c.b16 %v2442, %v2434
  %v3875 = vpack.c.b16 %v2443, %v2435
  %v3876 = vpack.c.b16 %v2444, %v2436
  %v3877 = vpack.c.b16 %v2445, %v2437
  %v3878 = vpack.c.b16 %v2446, %v2438
  %v3879 = vpack.c.b16 %v2447, %v2439
  %v3880 = vpack.c.b16 %v2448, %v2440
  %v3881 = vpack.c.b16 %v2449, %v2441
  %v3882 = vpack.c.b16 %v2458, %v2450
  %v3883 = vpack.c.b16 %v2459, %v2451
  %v3884 = vpack.c.b16 %v2460, %v2452
  %v3885 = vpack.c.b16 %v2461, %v2453
  %v3886 = vpack.c.b16 %v2462, %v2454
  %v3887 = vpack.c.b16 %v2463, %v2455
  %v3888 = vpack.c.b16 %v2464, %v2456
  %v3889 = vpack.c.b16 %v2465, %v2457
  %v3890 = vpack.c.b16 %v2474, %v2466
  %v3891 = vpack.c.b16 %v2475, %v2467
  %v3892 = vpack.c.b16 %v2476, %v2468
  %v3893 = vpack.c.b16 %v2477, %v2469
  %v3894 = vpack.c.b16 %v2478, %v2470
  %v3895 = vpack.c.b16 %v2479, %v2471
  %v3896 = vpack.c.b16 %v2480, %v2472
  %v3897 = vpack.c.b16 %v2481, %v2473
  %v3898 = vpack.c.b16 %v2490, %v2482
  %v3899 = vpack.c.b16 %v2491, %v2483
  %v3900 = vpack.c.b16 %v2492, %v2484
  %v3901 = vpack.c.b16 %v2493, %v2485
  %v3902 = vpack.c.b16 %v2494, %v2486
  %v3903 = vpack.c.b16 %v2495, %v2487
  %v3904 = vpack.c.b16 %v2496, %v2488
  %v3905 = vpack.c.b16 %v2497, %v2489
  %v3906 = vpack.c.b16 %v2506, %v2498
  %v3907 = vpack.c.b16 %v2507, %v2499
  %v3908 = vpack.c.b16 %v2508, %v2500
  %v3909 = vpack.c.b16 %v2509, %v2501
  %v3910 = vpack.c.b16 %v2510, %v2502
  %v3911 = vpack.c.b16 %v2511, %v2503
  %v3912 = vpack.c.b16 %v2512, %v2504
  %v3913 = vpack.c.b16 %v2513, %v2505
  %v3914 = vpack.c.b16 %v2522, %v2514
  %v3915 = vpack.c.b16 %v2523, %v2515
  %v3916 = vpack.c.b16 %v2524, %v2516
  %v3917 = vpack.c.b16 %v2525, %v2517
  %v3918 = vpack.c.b16 %v2526, %v2518
  %v3919 = vpack.c.b16 %v2527, %v2519
  %v3920 = vpack.c.b16 %v2528, %v2520
  %v3921 = vpack.c.b16 %v2529, %v2521
  %v3922 = vpack.c.b16 %v2538, %v2530
  %v3923 = vpack.c.b16 %v2539, %v2531
  %v3924 = vpack.c.b16 %v2540, %v2532
  %v3925 = vpack.c.b16 %v2541, %v2533
  %v3926 = vpack.c.b16 %v2542, %v2534
  %v3927 = vpack.c.b16 %v2543, %v2535
  %v3928 = vpack.c.b16 %v2544, %v2536
  %v3929 = vpack.c.b16 %v2545, %v2537
  %v3930 = vpack.c.b16 %v2554, %v2546
  %v3931 = vpack.c.b16 %v2555, %v2547
  %v3932 = vpack.c.b16 %v2556, %v2548
  %v3933 = vpack.c.b16 %v2557, %v2549
  %v3934 = vpack.c.b16 %v2558, %v2550
  %v3935 = vpack.c.b16 %v2559, %v2551
  %v3936 = vpack.c.b16 %v2560, %v2552
  %v3937 = vpack.c.b16 %v2561, %v2553
  %v3938 = vpack.c.b16 %v2570, %v2562
  %v3939 = vpack.c.b16 %v2571, %v2563
  %v3940 = vpack.c.b16 %v2572, %v2564
  %v3941 = vpack.c.b16 %v2573, %v2565
  %v3942 = vpack.c.b16 %v2574, %v2566
  %v3943 = vpack.c.b16 %v2575, %v2567
  %v3944 = vpack.c.b16 %v2576, %v2568
  %v3945 = vpack.c.b16 %v2577, %v2569
  %v3946 = vpack.c.b16 %v2586, %v2578
  %v3947 = vpack.c.b16 %v2587, %v2579
  %v3948 = vpack.c.b16 %v2588, %v2580
  %v3949 = vpack.c.b16 %v2589, %v2581
  %v3950 = vpack.c.b16 %v2590, %v2582
  %v3951 = vpack.c.b16 %v2591, %v2583
  %v3952 = vpack.c.b16 %v2592, %v2584
  %v3953 = vpack.c.b16 %v2593, %v2585
  %v3954 = vpack.c.b16 %v2602, %v2594
  %v3955 = vpack.c.b16 %v2603, %v2595
  %v3956 = vpack.c.b16 %v2604, %v2596
  %v3957 = vpack.c.b16 %v2605, %v2597
  %v3958 = vpack.c.b16 %v2606, %v2598
  %v3959 = vpack.c.b16 %v2607, %v2599
  %v3960 = vpack.c.b16 %v2608, %v2600
  %v3961 = vpack.c.b16 %v2609, %v2601
  %v3962 = vpack.c.b16 %v2618, %v2610
  %v3963 = vpack.c.b16 %v2619, %v2611
  %v3964 = vpack.c.b16 %v2620, %v2612
  %v3965 = vpack.c.b16 %v2621, %v2613
  %v3966 = vpack.c.b16 %v2622, %v2614
  %v3967 = vpack.c.b16 %v2623, %v2615
  %v3968 = vpack.c.b16 %v2624, %v2616
  %v3969 = vpack.c.b16 %v2625, %v2617
  %v3970 = vpack.c.b16 %v2634, %v2626
  %v3971 = vpack.c.b16 %v2635, %v2627
  %v3972 = vpack.c.b16 %v2636, %v2628
  %v3973 = vpack.c.b16 %v2637, %v2629
  %v3974 = vpack.c.b16 %v2638, %v2630
  %v3975 = vpack.c.b16 %v2639, %v2631
  %v3976 = vpack.c.b16 %v2640, %v2632
  %v3977 = vpack.c.b16 %v2641, %v2633
  %v3978 = vpack.c.b16 %v2650, %v2642
  %v3979 = vpack.c.b16 %v2651, %v2643
  %v3980 = vpack.c.b16 %v2652, %v2644
  %v3981 = vpack.c.b16 %v2653, %v2645
  %v3982 = vpack.c.b16 %v2654, %v2646
  %v3983 = vpack.c.b16 %v2655, %v2647
  %v3984 = vpack.c.b16 %v2656, %v2648
  %v3985 = vpack.c.b16 %v2657, %v2649
  %v3986 = vpack.c.b16 %v2666, %v2658
  %v3987 = vpack.c.b16 %v2667, %v2659
  %v3988 = vpack.c.b16 %v2668, %v2660
  %v3989 = vpack.c.b16 %v2669, %v2661
  %v3990 = vpack.c.b16 %v2670, %v2662
  %v3991 = vpack.c.b16 %v2671, %v2663
  %v3992 = vpack.c.b16 %v2672, %v2664
  %v3993 = vpack.c.b16 %v2673, %v2665
  %v3994 = vpack.c.b16 %v2682, %v2674
  %v3995 = vpack.c.b16 %v2683, %v2675
  %v3996 = vpack.c.b16 %v2684, %v2676
  %v3997 = vpack.c.b16 %v2685, %v2677
  %v3998 = vpack.c.b16 %v2686, %v2678
  %v3999 = vpack.c.b16 %v2687, %v2679
  %v4000 = vpack.c.b16 %v2688, %v2680
  %v4001 = vpack.c.b16 %v2689, %v2681
  %v4002 = vpack.c.b16 %v2698, %v2690
  %v4003 = vpack.c.b16 %v2699, %v2691
  %v4004 = vpack.c.b16 %v2700, %v2692
  %v4005 = vpack.c.b16 %v2701, %v2693
  %v4006 = vpack.c.b16 %v2702, %v2694
  %v4007 = vpack.c.b16 %v2703, %v2695
  %v4008 = vpack.c.b16 %v2704, %v2696
  %v4009 = vpack.c.b16 %v2705, %v2697
  %v4010 = vpack.c.b16 %v2714, %v2706
  %v4011 = vpack.c.b16 %v2715, %v2707
  %v4012 = vpack.c.b16 %v2716, %v2708
  %v4013 = vpack.c.b16 %v2717, %v2709
  %v4014 = vpack.c.b16 %v2718, %v2710
  %v4015 = vpack.c.b16 %v2719, %v2711
  %v4016 = vpack.c.b16 %v2720, %v2712
  %v4017 = vpack.c.b16 %v2721, %v2713
  %v4018 = vpack.c.b16 %v2730, %v2722
  %v4019 = vpack.c.b16 %v2731, %v2723
  %v4020 = vpack.c.b16 %v2732, %v2724
  %v4021 = vpack.c.b16 %v2733, %v2725
  %v4022 = vpack.c.b16 %v2734, %v2726
  %v4023 = vpack.c.b16 %v2735, %v2727
  %v4024 = vpack.c.b16 %v2736, %v2728
  %v4025 = vpack.c.b16 %v2737, %v2729
  %v4026 = vpack.c.b16 %v2746, %v2738
  %v4027 = vpack.c.b16 %v2747, %v2739
  %v4028 = vpack.c.b16 %v2748, %v2740
  %v4029 = vpack.c.b16 %v2749, %v2741
  %v4030 = vpack.c.b16 %v2750, %v2742
  %v4031 = vpack.c.b16 %v2751, %v2743
  %v4032 = vpack.c.b16 %v2752, %v2744
  %v4033 = vpack.c.b16 %v2753, %v2745
  %v4034 = vpack.c.b16 %v2762, %v2754
  %v4035 = vpack.c.b16 %v2763, %v2755
  %v4036 = vpack.c.b16 %v2764, %v2756
  %v4037 = vpack.c.b16 %v2765, %v2757
  %v4038 = vpack.c.b16 %v2766, %v2758
  %v4039 = vpack.c.b16 %v2767, %v2759
  %v4040 = vpack.c.b16 %v2768, %v2760
  %v4041 = vpack.c.b16 %v2769, %v2761
  %v4042 = vpack.c.b16 %v2778, %v2770
  %v4043 = vpack.c.b16 %v2779, %v2771
  %v4044 = vpack.c.b16 %v2780, %v2772
  %v4045 = vpack.c.b16 %v2781, %v2773
  %v4046 = vpack.c.b16 %v2782, %v2774
  %v4047 = vpack.c.b16 %v2783, %v2775
  %v4048 = vpack.c.b16 %v2784, %v2776
  %v4049 = vpack.c.b16 %v2785, %v2777
  %v4050 = vpack.c.b16 %v2794, %v2786
  %v4051 = vpack.c.b16 %v2795, %v2787
  %v4052 = vpack.c.b16 %v2796, %v2788
  %v4053 = vpack.c.b16 %v2797, %v2789
  %v4054 = vpack.c.b16 %v2798, %v2790
  %v4055 = vpack.c.b16 %v2799, %v2791
  %v4056 = vpack.c.b16 %v2800, %v2792
  %v4057 = vpack.c.b16 %v2801, %v2793
  %v4058 = vpack.c.b16 %v2810, %v2802
  %v4059 = vpack.c.b16 %v2811, %v2803
  %v4060 = vpack.c.b16 %v2812, %v2804
  %v4061 = vpack.c.b16 %v2813, %v2805
  %v4062 = vpack.c.b16 %v2814, %v2806
  %v4063 = vpack.c.b16 %v2815, %v2807
  %v4064 = vpack.c.b16 %v2816, %v2808
  %v4065 = vpack.c.b16 %v2817, %v2809
  %v4066 = vpack.c.b16 %v2826, %v2818
  %v4067 = vpack.c.b16 %v2827, %v2819
  %v4068 = vpack.c.b16 %v2828, %v2820
  %v4069 = vpack.c.b16 %v2829, %v2821
  %v4070 = vpack.c.b16 %v2830, %v2822
  %v4071 = vpack.c.b16 %v2831, %v2823
  %v4072 = vpack.c.b16 %v2832, %v2824
  %v4073 = vpack.c.b16 %v2833, %v2825
  %v4074 = vpack.c.b16 %v2842, %v2834
  %v4075 = vpack.c.b16 %v2843, %v2835
  %v4076 = vpack.c.b16 %v2844, %v2836
  %v4077 = vpack.c.b16 %v2845, %v2837
  %v4078 = vpack.c.b16 %v2846, %v2838
  %v4079 = vpack.c.b16 %v2847, %v2839
  %v4080 = vpack.c.b16 %v2848, %v2840
  %v4081 = vpack.c.b16 %v2849, %v2841
  %v4082 = vpack.c.b16 %v2858, %v2850
  %v4083 = vpack.c.b16 %v2859, %v2851
  %v4084 = vpack.c.b16 %v2860, %v2852
  %v4085 = vpack.c.b16 %v2861, %v2853
  %v4086 = vpack.c.b16 %v2862, %v2854
  %v4087 = vpack.c.b16 %v2863, %v2855
  %v4088 = vpack.c.b16 %v2864, %v2856
  %v4089 = vpack.c.b16 %v2865, %v2857
  %v4090 = vpack.c.b16 %v2874, %v2866
  %v4091 = vpack.c.b16 %v2875, %v2867
  %v4092 = vpack.c.b16 %v2876, %v2868
  %v4093 = vpack.c.b16 %v2877, %v2869
  %v4094 = vpack.c.b16 %v2878, %v2870
  %v4095 = vpack.c.b16 %v2879, %v2871
  %v4096 = vpack.c.b16 %v2880, %v2872
  %v4097 = vpack.c.b16 %v2881, %v2873
  %v4098 = vpack.c.b16 %v2890, %v2882
  %v4099 = vpack.c.b16 %v2891, %v2883
  %v4100 = vpack.c.b16 %v2892, %v2884
  %v4101 = vpack.c.b16 %v2893, %v2885
  %v4102 = vpack.c.b16 %v2894, %v2886
  %v4103 = vpack.c.b16 %v2895, %v2887
  %v4104 = vpack.c.b16 %v2896, %v2888
  %v4105 = vpack.c.b16 %v2897, %v2889
  %v4106 = vpack.c.b16 %v2906, %v2898
  %v4107 = vpack.c.b16 %v2907, %v2899
  %v4108 = vpack.c.b16 %v2908, %v2900
  %v4109 = vpack.c.b16 %v2909, %v2901
  %v4110 = vpack.c.b16 %v2910, %v2902
  %v4111 = vpack.c.b16 %v2911, %v2903
  %v4112 = vpack.c.b16 %v2912, %v2904
  %v4113 = vpack.c.b16 %v2913, %v2905
  %v4114 = vpack.c.b16 %v2922, %v2914
  %v4115 = vpack.c.b16 %v2923, %v2915
  %v4116 = vpack.c.b16 %v2924, %v2916
  %v4117 = vpack.c.b16 %v2925, %v2917
  %v4118 = vpack.c.b16 %v2926, %v2918
  %v4119 = vpack.c.b16 %v2927, %v2919
  %v4120 = vpack.c.b16 %v2928, %v2920
  %v4121 = vpack.c.b16 %v2929, %v2921
  %v4122 = vpack.c.b16 %v2938, %v2930
  %v4123 = vpack.c.b16 %v2939, %v2931
  %v4124 = vpack.c.b16 %v2940, %v2932
  %v4125 = vpack.c.b16 %v2941, %v2933
  %v4126 = vpack.c.b16 %v2942, %v2934
  %v4127 = vpack.c.b16 %v2943, %v2935
  %v4128 = vpack.c.b16 %v2944, %v2936
  %v4129 = vpack.c.b16 %v2945, %v2937
  %v4130 = vpack.c.b16 %v2954, %v2946
  %v4131 = vpack.c.b16 %v2955, %v2947
  %v4132 = vpack.c.b16 %v2956, %v2948
  %v4133 = vpack.c.b16 %v2957, %v2949
  %v4134 = vpack.c.b16 %v2958, %v2950
  %v4135 = vpack.c.b16 %v2959, %v2951
  %v4136 = vpack.c.b16 %v2960, %v2952
  %v4137 = vpack.c.b16 %v2961, %v2953
  %v4138 = vpack.c.b16 %v2970, %v2962
  %v4139 = vpack.c.b16 %v2971, %v2963
  %v4140 = vpack.c.b16 %v2972, %v2964
  %v4141 = vpack.c.b16 %v2973, %v2965
  %v4142 = vpack.c.b16 %v2974, %v2966
  %v4143 = vpack.c.b16 %v2975, %v2967
  %v4144 = vpack.c.b16 %v2976, %v2968
  %v4145 = vpack.c.b16 %v2977, %v2969
  %v4146 = vpack.c.b16 %v2986, %v2978
  %v4147 = vpack.c.b16 %v2987, %v2979
  %v4148 = vpack.c.b16 %v2988, %v2980
  %v4149 = vpack.c.b16 %v2989, %v2981
  %v4150 = vpack.c.b16 %v2990, %v2982
  %v4151 = vpack.c.b16 %v2991, %v2983
  %v4152 = vpack.c.b16 %v2992, %v2984
  %v4153 = vpack.c.b16 %v2993, %v2985
  %v4154 = vpack.c.b16 %v3002, %v2994
  %v4155 = vpack.c.b16 %v3003, %v2995
  %v4156 = vpack.c.b16 %v3004, %v2996
  %v4157 = vpack.c.b16 %v3005, %v2997
  %v4158 = vpack.c.b16 %v3006, %v2998
  %v4159 = vpack.c.b16 %v3007, %v2999
  %v4160 = vpack.c.b16 %v3008, %v3000
  %v4161 = vpack.c.b16 %v3009, %v3001
  %v4162 = vpack.c.b16 %v3018, %v3010
  %v4163 = vpack.c.b16 %v3019, %v3011
  %v4164 = vpack.c.b16 %v3020, %v3012
  %v4165 = vpack.c.b16 %v3021, %v3013
  %v4166 = vpack.c.b16 %v3022, %v3014
  %v4167 = vpack.c.b16 %v3023, %v3015
  %v4168 = vpack.c.b16 %v3024, %v3016
  %v4169 = vpack.c.b16 %v3025, %v3017
  %v4170 = vpack.c.b16 %v3034, %v3026
  %v4171 = vpack.c.b16 %v3035, %v3027
  %v4172 = vpack.c.b16 %v3036, %v3028
  %v4173 = vpack.c.b16 %v3037, %v3029
  %v4174 = vpack.c.b16 %v3038, %v3030
  %v4175 = vpack.c.b16 %v3039, %v3031
  %v4176 = vpack.c.b16 %v3040, %v3032
  %v4177 = vpack.c.b16 %v3041, %v3033
  %v4178 = vpack.c.b16 %v3050, %v3042
  %v4179 = vpack.c.b16 %v3051, %v3043
  %v4180 = vpack.c.b16 %v3052, %v3044
  %v4181 = vpack.c.b16 %v3053, %v3045
  %v4182 = vpack.c.b16 %v3054, %v3046
  %v4183 = vpack.c.b16 %v3055, %v3047
  %v4184 = vpack.c.b16 %v3056, %v3048
  %v4185 = vpack.c.b16 %v3057, %v3049
  %v4186 = vpack.c.b16 %v3066, %v3058
  %v4187 = vpack.c.b16 %v3067, %v3059
  %v4188 = vpack.c.b16 %v3068, %v3060
  %v4189 = vpack.c.b16 %v3069, %v3061
  %v4190 = vpack.c.b16 %v3070, %v3062
  %v4191 = vpack.c.b16 %v3071, %v3063
  %v4192 = vpack.c.b16 %v3072, %v3064
  %v4193 = vpack.c.b16 %v3073, %v3065
  %v4194 = vpack.c.b16 %v3082, %v3074
  %v4195 = vpack.c.b16 %v3083, %v3075
  %v4196 = vpack.c.b16 %v3084, %v3076
  %v4197 = vpack.c.b16 %v3085, %v3077
  %v4198 = vpack.c.b16 %v3086, %v3078
  %v4199 = vpack.c.b16 %v3087, %v3079
  %v4200 = vpack.c.b16 %v3088, %v3080
  %v4201 = vpack.c.b16 %v3089, %v3081
  %v4202 = vpack.c.b16 %v3098, %v3090
  %v4203 = vpack.c.b16 %v3099, %v3091
  %v4204 = vpack.c.b16 %v3100, %v3092
  %v4205 = vpack.c.b16 %v3101, %v3093
  %v4206 = vpack.c.b16 %v3102, %v3094
  %v4207 = vpack.c.b16 %v3103, %v3095
  %v4208 = vpack.c.b16 %v3104, %v3096
  %v4209 = vpack.c.b16 %v3105, %v3097
  %v4210 = vpack.c.b16 %v3114, %v3106
  %v4211 = vpack.c.b16 %v3115, %v3107
  %v4212 = vpack.c.b16 %v3116, %v3108
  %v4213 = vpack.c.b16 %v3117, %v3109
  %v4214 = vpack.c.b16 %v3118, %v3110
  %v4215 = vpack.c.b16 %v3119, %v3111
  %v4216 = vpack.c.b16 %v3120, %v3112
  %v4217 = vpack.c.b16 %v3121, %v3113
  %v4218 = vpack.c.b16 %v3130, %v3122
  %v4219 = vpack.c.b16 %v3131, %v3123
  %v4220 = vpack.c.b16 %v3132, %v3124
  %v4221 = vpack.c.b16 %v3133, %v3125
  %v4222 = vpack.c.b16 %v3134, %v3126
  %v4223 = vpack.c.b16 %v3135, %v3127
  %v4224 = vpack.c.b16 %v3136, %v3128
  %v4225 = vpack.c.b16 %v3137, %v3129
  %v4226 = vpack.c.b16 %v3146, %v3138
  %v4227 = vpack.c.b16 %v3147, %v3139
  %v4228 = vpack.c.b16 %v3148, %v3140
  %v4229 = vpack.c.b16 %v3149, %v3141
  %v4230 = vpack.c.b16 %v3150, %v3142
  %v4231 = vpack.c.b16 %v3151, %v3143
  %v4232 = vpack.c.b16 %v3152, %v3144
  %v4233 = vpack.c.b16 %v3153, %v3145
  %v4234 = vpack.c.b16 %v3162, %v3154
  %v4235 = vpack.c.b16 %v3163, %v3155
  %v4236 = vpack.c.b16 %v3164, %v3156
  %v4237 = vpack.c.b16 %v3165, %v3157
  %v4238 = vpack.c.b16 %v3166, %v3158
  %v4239 = vpack.c.b16 %v3167, %v3159
  %v4240 = vpack.c.b16 %v3168, %v3160
  %v4241 = vpack.c.b16 %v3169, %v3161
  %v4242 = vpack.c.b16 %v3178, %v3170
  %v4243 = vpack.c.b16 %v3179, %v3171
  %v4244 = vpack.c.b16 %v3180, %v3172
  %v4245 = vpack.c.b16 %v3181, %v3173
  %v4246 = vpack.c.b16 %v3182, %v3174
  %v4247 = vpack.c.b16 %v3183, %v3175
  %v4248 = vpack.c.b16 %v3184, %v3176
  %v4249 = vpack.c.b16 %v3185, %v3177
  %v4250 = vpack.c.b16 %v3194, %v3186
  %v4251 = vpack.c.b16 %v3195, %v3187
  %v4252 = vpack.c.b16 %v3196, %v3188
  %v4253 = vpack.c.b16 %v3197, %v3189
  %v4254 = vpack.c.b16 %v3198, %v3190
  %v4255 = vpack.c.b16 %v3199, %v3191
  %v4256 = vpack.c.b16 %v3200, %v3192
  %v4257 = vpack.c.b16 %v3201, %v3193
  %v4258 = vpack.c.b16 %v3210, %v3202
  %v4259 = vpack.c.b16 %v3211, %v3203
  %v4260 = vpack.c.b16 %v3212, %v3204
  %v4261 = vpack.c.b16 %v3213, %v3205
  %v4262 = vpack.c.b16 %v3214, %v3206
  %v4263 = vpack.c.b16 %v3215, %v3207
  %v4264 = vpack.c.b16 %v3216, %v3208
  %v4265 = vpack.c.b16 %v3217, %v3209
  %v4266 = vpack.c.b16 %v3226, %v3218
  %v4267 = vpack.c.b16 %v3227, %v3219
  %v4268 = vpack.c.b16 %v3228, %v3220
  %v4269 = vpack.c.b16 %v3229, %v3221
  %v4270 = vpack.c.b16 %v3230, %v3222
  %v4271 = vpack.c.b16 %v3231, %v3223
  %v4272 = vpack.c.b16 %v3232, %v3224
  %v4273 = vpack.c.b16 %v3233, %v3225
  %v4274 = vpack.c.b16 %v3242, %v3234
  %v4275 = vpack.c.b16 %v3243, %v3235
  %v4276 = vpack.c.b16 %v3244, %v3236
  %v4277 = vpack.c.b16 %v3245, %v3237
  %v4278 = vpack.c.b16 %v3246, %v3238
  %v4279 = vpack.c.b16 %v3247, %v3239
  %v4280 = vpack.c.b16 %v3248, %v3240
  %v4281 = vpack.c.b16 %v3249, %v3241
  %v4282 = vpack.c.b16 %v3258, %v3250
  %v4283 = vpack.c.b16 %v3259, %v3251
  %v4284 = vpack.c.b16 %v3260, %v3252
  %v4285 = vpack.c.b16 %v3261, %v3253
  %v4286 = vpack.c.b16 %v3262, %v3254
  %v4287 = vpack.c.b16 %v3263, %v3255
  %v4288 = vpack.c.b16 %v3264, %v3256
  %v4289 = vpack.c.b16 %v3265, %v3257
  %v4290 = vpack.c.b16 %v3274, %v3266
  %v4291 = vpack.c.b16 %v3275, %v3267
  %v4292 = vpack.c.b16 %v3276, %v3268
  %v4293 = vpack.c.b16 %v3277, %v3269
  %v4294 = vpack.c.b16 %v3278, %v3270
  %v4295 = vpack.c.b16 %v3279, %v3271
  %v4296 = vpack.c.b16 %v3280, %v3272
  %v4297 = vpack.c.b16 %v3281, %v3273
  %v4298 = vpack.c.b16 %v3290, %v3282
  %v4299 = vpack.c.b16 %v3291, %v3283
  %v4300 = vpack.c.b16 %v3292, %v3284
  %v4301 = vpack.c.b16 %v3293, %v3285
  %v4302 = vpack.c.b16 %v3294, %v3286
  %v4303 = vpack.c.b16 %v3295, %v3287
  %v4304 = vpack.c.b16 %v3296, %v3288
  %v4305 = vpack.c.b16 %v3297, %v3289
  %v4306 = vpack.c.b16 %v3306, %v3298
  %v4307 = vpack.c.b16 %v3307, %v3299
  %v4308 = vpack.c.b16 %v3308, %v3300
  %v4309 = vpack.c.b16 %v3309, %v3301
  %v4310 = vpack.c.b16 %v3310, %v3302
  %v4311 = vpack.c.b16 %v3311, %v3303
  %v4312 = vpack.c.b16 %v3312, %v3304
  %v4313 = vpack.c.b16 %v3313, %v3305
  %v4314 = vpack.c.b16 %v3322, %v3314
  %v4315 = vpack.c.b16 %v3323, %v3315
  %v4316 = vpack.c.b16 %v3324, %v3316
  %v4317 = vpack.c.b16 %v3325, %v3317
  %v4318 = vpack.c.b16 %v3326, %v3318
  %v4319 = vpack.c.b16 %v3327, %v3319
  %v4320 = vpack.c.b16 %v3328, %v3320
  %v4321 = vpack.c.b16 %v3329, %v3321
  %v4322 = vpack.c.b16 %v3338, %v3330
  %v4323 = vpack.c.b16 %v3339, %v3331
  %v4324 = vpack.c.b16 %v3340, %v3332
  %v4325 = vpack.c.b16 %v3341, %v3333
  %v4326 = vpack.c.b16 %v3342, %v3334
  %v4327 = vpack.c.b16 %v3343, %v3335
  %v4328 = vpack.c.b16 %v3344, %v3336
  %v4329 = vpack.c.b16 %v3345, %v3337
  %v4330 = vpack.c.b16 %v3354, %v3346
  %v4331 = vpack.c.b16 %v3355, %v3347
  %v4332 = vpack.c.b16 %v3356, %v3348
  %v4333 = vpack.c.b16 %v3357, %v3349
  %v4334 = vpack.c.b16 %v3358, %v3350
  %v4335 = vpack.c.b16 %v3359, %v3351
  %v4336 = vpack.c.b16 %v3360, %v3352
  %v4337 = vpack.c.b16 %v3361, %v3353
  %v4338 = vpack.c.b16 %v3370, %v3362
  %v4339 = vpack.c.b16 %v3371, %v3363
  %v4340 = vpack.c.b16 %v3372, %v3364
  %v4341 = vpack.c.b16 %v3373, %v3365
  %v4342 = vpack.c.b16 %v3374, %v3366
  %v4343 = vpack.c.b16 %v3375, %v3367
  %v4344 = vpack.c.b16 %v3376, %v3368
  %v4345 = vpack.c.b16 %v3377, %v3369
  %v4346 = vpack.c.b16 %v3386, %v3378
  %v4347 = vpack.c.b16 %v3387, %v3379
  %v4348 = vpack.c.b16 %v3388, %v3380
  %v4349 = vpack.c.b16 %v3389, %v3381
  %v4350 = vpack.c.b16 %v3390, %v3382
  %v4351 = vpack.c.b16 %v3391, %v3383
  %v4352 = vpack.c.b16 %v3392, %v3384
  %v4353 = vpack.c.b16 %v3393, %v3385
  %v4354 = vpack.c.b16 %v3402, %v3394
  %v4355 = vpack.c.b16 %v3403, %v3395
  %v4356 = vpack.c.b16 %v3404, %v3396
  %v4357 = vpack.c.b16 %v3405, %v3397
  %v4358 = vpack.c.b16 %v3406, %v3398
  %v4359 = vpack.c.b16 %v3407, %v3399
  %v4360 = vpack.c.b16 %v3408, %v3400
  %v4361 = vpack.c.b16 %v3409, %v3401
  %v4362 = vpack.c.b16 %v3418, %v3410
  %v4363 = vpack.c.b16 %v3419, %v3411
  %v4364 = vpack.c.b16 %v3420, %v3412
  %v4365 = vpack.c.b16 %v3421, %v3413
  %v4366 = vpack.c.b16 %v3422, %v3414
  %v4367 = vpack.c.b16 %v3423, %v3415
  %v4368 = vpack.c.b16 %v3424, %v3416
  %v4369 = vpack.c.b16 %v3425, %v3417
  %v4370 = vpack.c.b16 %v3434, %v3426
  %v4371 = vpack.c.b16 %v3435, %v3427
  %v4372 = vpack.c.b16 %v3436, %v3428
  %v4373 = vpack.c.b16 %v3437, %v3429
  %v4374 = vpack.c.b16 %v3438, %v3430
  %v4375 = vpack.c.b16 %v3439, %v3431
  %v4376 = vpack.c.b16 %v3440, %v3432
  %v4377 = vpack.c.b16 %v3441, %v3433
  %v4378 = vpack.c.b16 %v3450, %v3442
  %v4379 = vpack.c.b16 %v3451, %v3443
  %v4380 = vpack.c.b16 %v3452, %v3444
  %v4381 = vpack.c.b16 %v3453, %v3445
  %v4382 = vpack.c.b16 %v3454, %v3446
  %v4383 = vpack.c.b16 %v3455, %v3447
  %v4384 = vpack.c.b16 %v3456, %v3448
  %v4385 = vpack.c.b16 %v3457, %v3449
  %v4386 = vpack.c.b16 %v3466, %v3458
  %v4387 = vpack.c.b16 %v3467, %v3459
  %v4388 = vpack.c.b16 %v3468, %v3460
  %v4389 = vpack.c.b16 %v3469, %v3461
  %v4390 = vpack.c.b16 %v3470, %v3462
  %v4391 = vpack.c.b16 %v3471, %v3463
  %v4392 = vpack.c.b16 %v3472, %v3464
  %v4393 = vpack.c.b16 %v3473, %v3465
  %v4394 = vpack.c.b16 %v3482, %v3474
  %v4395 = vpack.c.b16 %v3483, %v3475
  %v4396 = vpack.c.b16 %v3484, %v3476
  %v4397 = vpack.c.b16 %v3485, %v3477
  %v4398 = vpack.c.b16 %v3486, %v3478
  %v4399 = vpack.c.b16 %v3487, %v3479
  %v4400 = vpack.c.b16 %v3488, %v3480
  %v4401 = vpack.c.b16 %v3489, %v3481
  %v4402 = vpack.c.b16 %v3498, %v3490
  %v4403 = vpack.c.b16 %v3499, %v3491
  %v4404 = vpack.c.b16 %v3500, %v3492
  %v4405 = vpack.c.b16 %v3501, %v3493
  %v4406 = vpack.c.b16 %v3502, %v3494
  %v4407 = vpack.c.b16 %v3503, %v3495
  %v4408 = vpack.c.b16 %v3504, %v3496
  %v4409 = vpack.c.b16 %v3505, %v3497
  %v4410 = vpack.c.b16 %v3514, %v3506
  %v4411 = vpack.c.b16 %v3515, %v3507
  %v4412 = vpack.c.b16 %v3516, %v3508
  %v4413 = vpack.c.b16 %v3517, %v3509
  %v4414 = vpack.c.b16 %v3518, %v3510
  %v4415 = vpack.c.b16 %v3519, %v3511
  %v4416 = vpack.c.b16 %v3520, %v3512
  %v4417 = vpack.c.b16 %v3521, %v3513
  %v4418 = vpack.c.b16 %v3530, %v3522
  %v4419 = vpack.c.b16 %v3531, %v3523
  %v4420 = vpack.c.b16 %v3532, %v3524
  %v4421 = vpack.c.b16 %v3533, %v3525
  %v4422 = vpack.c.b16 %v3534, %v3526
  %v4423 = vpack.c.b16 %v3535, %v3527
  %v4424 = vpack.c.b16 %v3536, %v3528
  %v4425 = vpack.c.b16 %v3537, %v3529
  %v4426 = vpack.c.b16 %v3546, %v3538
  %v4427 = vpack.c.b16 %v3547, %v3539
  %v4428 = vpack.c.b16 %v3548, %v3540
  %v4429 = vpack.c.b16 %v3549, %v3541
  %v4430 = vpack.c.b16 %v3550, %v3542
  %v4431 = vpack.c.b16 %v3551, %v3543
  %v4432 = vpack.c.b16 %v3552, %v3544
  %v4433 = vpack.c.b16 %v3553, %v3545
  %v4434 = vpack.c.b16 %v3562, %v3554
  %v4435 = vpack.c.b16 %v3563, %v3555
  %v4436 = vpack.c.b16 %v3564, %v3556
  %v4437 = vpack.c.b16 %v3565, %v3557
  %v4438 = vpack.c.b16 %v3566, %v3558
  %v4439 = vpack.c.b16 %v3567, %v3559
  %v4440 = vpack.c.b16 %v3568, %v3560
  %v4441 = vpack.c.b16 %v3569, %v3561
  %v4442 = vpack.c.b16 %v3578, %v3570
  %v4443 = vpack.c.b16 %v3579, %v3571
  %v4444 = vpack.c.b16 %v3580, %v3572
  %v4445 = vpack.c.b16 %v3581, %v3573
  %v4446 = vpack.c.b16 %v3582, %v3574
  %v4447 = vpack.c.b16 %v3583, %v3575
  %v4448 = vpack.c.b16 %v3584, %v3576
  %v4449 = vpack.c.b16 %v3585, %v3577
  %vm5314 = vcmask 523264
  %v5316 = vsel %vm5314, %v980, 0
  %5318 = vmatprep.subr.bf16.mxu0 %v3643
  %5319 = vmatpush1.bf16.msra.mxu0 %v3642
  %5320 = vmatprep.subr.bf16.mxu0 %v3635
  %5321 = vmatpush1.bf16.msra.mxu0 %v3634
  %5322 = vmatprep.subr.bf16.mxu0 %v3627
  %5323 = vmatpush1.bf16.msra.mxu0 %v3626
  %5324 = vmatprep.subr.bf16.mxu0 %v3619
  %5325 = vmatpush1.bf16.msra.mxu0 %v3618
  %5326 = vmatprep.subr.bf16.mxu0 %v3611
  %5327 = vmatpush1.bf16.msra.mxu0 %v3610
  %5328 = vmatprep.subr.bf16.mxu0 %v3603
  %5329 = vmatpush1.bf16.msra.mxu0 %v3602
  %5330 = vmatprep.subr.bf16.mxu0 %v3595
  %5331 = vmatpush1.bf16.msra.mxu0 %v3594
  %5332 = vmatprep.subr.bf16.mxu0 %v3587
  %5333 = vmatpush1.bf16.msra.mxu0 %v3586
  %5334 = vmatprep.subr.bf16.mxu0 %v3707
  %5335 = vmatpush2.bf16.msra.mxu0 %v3706
  %5336 = vmatprep.subr.bf16.mxu0 %v3699
  %5337 = vmatpush2.bf16.msra.mxu0 %v3698
  %5338 = vmatprep.subr.bf16.mxu0 %v3691
  %5339 = vmatpush2.bf16.msra.mxu0 %v3690
  %5340 = vmatprep.subr.bf16.mxu0 %v3683
  %5341 = vmatpush2.bf16.msra.mxu0 %v3682
  %5342 = vmatprep.subr.bf16.mxu0 %v3675
  %5343 = vmatpush2.bf16.msra.mxu0 %v3674
  %5344 = vmatprep.subr.bf16.mxu0 %v3667
  %5345 = vmatpush2.bf16.msra.mxu0 %v3666
  %5346 = vmatprep.subr.bf16.mxu0 %v3659
  %5347 = vmatpush2.bf16.msra.mxu0 %v3658
  %5348 = vmatprep.subr.bf16.mxu0 %v3651
  %5349 = vmatpush2.bf16.msra.mxu0 %v3650
  %5350 = vmatprep.mubr.bf16.mxu0 %v968
  %5351 = vmatmul.mubr.bf16.gmra.mxu0 %v967
  %v5352 = vpop.f32.mrf.mxu0
  %v5353 = vadd.f32 %v909, %v5352
  %v5354 = vpop.f32.mrf.mxu0
  %v5355 = vadd.f32 %v913, %v5354
  %v5356 = vpop.f32.mrf.mxu0
  %v5357 = vpop.f32.mrf.mxu0
  %5358 = vdwg.mxu0
  %5359 = vmatprep.subr.bf16.mxu0 %v3771
  %5360 = vmatpush1.bf16.msra.mxu0 %v3770
  %5361 = vmatprep.subr.bf16.mxu0 %v3763
  %5362 = vmatpush1.bf16.msra.mxu0 %v3762
  %5363 = vmatprep.subr.bf16.mxu0 %v3755
  %5364 = vmatpush1.bf16.msra.mxu0 %v3754
  %5365 = vmatprep.subr.bf16.mxu0 %v3747
  %5366 = vmatpush1.bf16.msra.mxu0 %v3746
  %5367 = vmatprep.subr.bf16.mxu0 %v3739
  %5368 = vmatpush1.bf16.msra.mxu0 %v3738
  %5369 = vmatprep.subr.bf16.mxu0 %v3731
  %5370 = vmatpush1.bf16.msra.mxu0 %v3730
  %5371 = vmatprep.subr.bf16.mxu0 %v3723
  %5372 = vmatpush1.bf16.msra.mxu0 %v3722
  %5373 = vmatprep.subr.bf16.mxu0 %v3715
  %5374 = vmatpush1.bf16.msra.mxu0 %v3714
  %5375 = vmatprep.subr.bf16.mxu0 %v3835
  %5376 = vmatpush2.bf16.msra.mxu0 %v3834
  %5377 = vmatprep.subr.bf16.mxu0 %v3827
  %5378 = vmatpush2.bf16.msra.mxu0 %v3826
  %5379 = vmatprep.subr.bf16.mxu0 %v3819
  %5380 = vmatpush2.bf16.msra.mxu0 %v3818
  %5381 = vmatprep.subr.bf16.mxu0 %v3811
  %5382 = vmatpush2.bf16.msra.mxu0 %v3810
  %5383 = vmatprep.subr.bf16.mxu0 %v3803
  %5384 = vmatpush2.bf16.msra.mxu0 %v3802
  %5385 = vmatprep.subr.bf16.mxu0 %v3795
  %5386 = vmatpush2.bf16.msra.mxu0 %v3794
  %5387 = vmatprep.subr.bf16.mxu0 %v3787
  %5388 = vmatpush2.bf16.msra.mxu0 %v3786
  %5389 = vmatprep.subr.bf16.mxu0 %v3779
  %5390 = vmatpush2.bf16.msra.mxu0 %v3778
  %5391 = vmatprep.mubr.bf16.mxu0 %v970
  %5392 = vmatmul.mubr.bf16.gmra.mxu0 %v969
  %v5393 = vpop.f32.mrf.mxu0
  %v5394 = vadd.f32 %v5353, %v5393
  %v5395 = vpop.f32.mrf.mxu0
  %v5396 = vadd.f32 %v5355, %v5395
  %v5397 = vpop.f32.mrf.mxu0
  %v5398 = vpop.f32.mrf.mxu0
  %5399 = vdwg.mxu0
  %5400 = vmatprep.subr.bf16.mxu0 %v3899
  %5401 = vmatpush1.bf16.msra.mxu0 %v3898
  %5402 = vmatprep.subr.bf16.mxu0 %v3891
  %5403 = vmatpush1.bf16.msra.mxu0 %v3890
  %5404 = vmatprep.subr.bf16.mxu0 %v3883
  %5405 = vmatpush1.bf16.msra.mxu0 %v3882
  %5406 = vmatprep.subr.bf16.mxu0 %v3875
  %5407 = vmatpush1.bf16.msra.mxu0 %v3874
  %5408 = vmatprep.subr.bf16.mxu0 %v3867
  %5409 = vmatpush1.bf16.msra.mxu0 %v3866
  %5410 = vmatprep.subr.bf16.mxu0 %v3859
  %5411 = vmatpush1.bf16.msra.mxu0 %v3858
  %5412 = vmatprep.subr.bf16.mxu0 %v3851
  %5413 = vmatpush1.bf16.msra.mxu0 %v3850
  %5414 = vmatprep.subr.bf16.mxu0 %v3843
  %5415 = vmatpush1.bf16.msra.mxu0 %v3842
  %5416 = vmatprep.subr.bf16.mxu0 %v3963
  %5417 = vmatpush2.bf16.msra.mxu0 %v3962
  %5418 = vmatprep.subr.bf16.mxu0 %v3955
  %5419 = vmatpush2.bf16.msra.mxu0 %v3954
  %5420 = vmatprep.subr.bf16.mxu0 %v3947
  %5421 = vmatpush2.bf16.msra.mxu0 %v3946
  %5422 = vmatprep.subr.bf16.mxu0 %v3939
  %5423 = vmatpush2.bf16.msra.mxu0 %v3938
  %5424 = vmatprep.subr.bf16.mxu0 %v3931
  %5425 = vmatpush2.bf16.msra.mxu0 %v3930
  %5426 = vmatprep.subr.bf16.mxu0 %v3923
  %5427 = vmatpush2.bf16.msra.mxu0 %v3922
  %5428 = vmatprep.subr.bf16.mxu0 %v3915
  %5429 = vmatpush2.bf16.msra.mxu0 %v3914
  %5430 = vmatprep.subr.bf16.mxu0 %v3907
  %5431 = vmatpush2.bf16.msra.mxu0 %v3906
  %5432 = vmatprep.mubr.bf16.mxu0 %v972
  %5433 = vmatmul.mubr.bf16.gmra.mxu0 %v971
  %v5434 = vpop.f32.mrf.mxu0
  %v5435 = vadd.f32 %v5394, %v5434
  %v5436 = vpop.f32.mrf.mxu0
  %v5437 = vadd.f32 %v5396, %v5436
  %v5438 = vpop.f32.mrf.mxu0
  %v5439 = vpop.f32.mrf.mxu0
  %5440 = vdwg.mxu0
  %5441 = vmatprep.subr.bf16.mxu0 %v4027
  %5442 = vmatpush1.bf16.msra.mxu0 %v4026
  %5443 = vmatprep.subr.bf16.mxu0 %v4019
  %5444 = vmatpush1.bf16.msra.mxu0 %v4018
  %5445 = vmatprep.subr.bf16.mxu0 %v4011
  %5446 = vmatpush1.bf16.msra.mxu0 %v4010
  %5447 = vmatprep.subr.bf16.mxu0 %v4003
  %5448 = vmatpush1.bf16.msra.mxu0 %v4002
  %5449 = vmatprep.subr.bf16.mxu0 %v3995
  %5450 = vmatpush1.bf16.msra.mxu0 %v3994
  %5451 = vmatprep.subr.bf16.mxu0 %v3987
  %5452 = vmatpush1.bf16.msra.mxu0 %v3986
  %5453 = vmatprep.subr.bf16.mxu0 %v3979
  %5454 = vmatpush1.bf16.msra.mxu0 %v3978
  %5455 = vmatprep.subr.bf16.mxu0 %v3971
  %5456 = vmatpush1.bf16.msra.mxu0 %v3970
  %5457 = vmatprep.subr.bf16.mxu0 %v4091
  %5458 = vmatpush2.bf16.msra.mxu0 %v4090
  %5459 = vmatprep.subr.bf16.mxu0 %v4083
  %5460 = vmatpush2.bf16.msra.mxu0 %v4082
  %5461 = vmatprep.subr.bf16.mxu0 %v4075
  %5462 = vmatpush2.bf16.msra.mxu0 %v4074
  %5463 = vmatprep.subr.bf16.mxu0 %v4067
  %5464 = vmatpush2.bf16.msra.mxu0 %v4066
  %5465 = vmatprep.subr.bf16.mxu0 %v4059
  %5466 = vmatpush2.bf16.msra.mxu0 %v4058
  %5467 = vmatprep.subr.bf16.mxu0 %v4051
  %5468 = vmatpush2.bf16.msra.mxu0 %v4050
  %5469 = vmatprep.subr.bf16.mxu0 %v4043
  %5470 = vmatpush2.bf16.msra.mxu0 %v4042
  %5471 = vmatprep.subr.bf16.mxu0 %v4035
  %5472 = vmatpush2.bf16.msra.mxu0 %v4034
  %5473 = vmatprep.mubr.bf16.mxu0 %v974
  %5474 = vmatmul.mubr.bf16.gmra.mxu0 %v973
  %v5475 = vpop.f32.mrf.mxu0
  %v5476 = vadd.f32 %v5435, %v5475
  %v5477 = vpop.f32.mrf.mxu0
  %v5478 = vadd.f32 %v5437, %v5477
  %v5479 = vpop.f32.mrf.mxu0
  %v5480 = vpop.f32.mrf.mxu0
  %5481 = vdwg.mxu0
  %5482 = vmatprep.subr.bf16.mxu0 %v4155
  %5483 = vmatpush1.bf16.msra.mxu0 %v4154
  %5484 = vmatprep.subr.bf16.mxu0 %v4147
  %5485 = vmatpush1.bf16.msra.mxu0 %v4146
  %5486 = vmatprep.subr.bf16.mxu0 %v4139
  %5487 = vmatpush1.bf16.msra.mxu0 %v4138
  %5488 = vmatprep.subr.bf16.mxu0 %v4131
  %5489 = vmatpush1.bf16.msra.mxu0 %v4130
  %5490 = vmatprep.subr.bf16.mxu0 %v4123
  %5491 = vmatpush1.bf16.msra.mxu0 %v4122
  %5492 = vmatprep.subr.bf16.mxu0 %v4115
  %5493 = vmatpush1.bf16.msra.mxu0 %v4114
  %5494 = vmatprep.subr.bf16.mxu0 %v4107
  %5495 = vmatpush1.bf16.msra.mxu0 %v4106
  %5496 = vmatprep.subr.bf16.mxu0 %v4099
  %5497 = vmatpush1.bf16.msra.mxu0 %v4098
  %5498 = vmatprep.subr.bf16.mxu0 %v4219
  %5499 = vmatpush2.bf16.msra.mxu0 %v4218
  %5500 = vmatprep.subr.bf16.mxu0 %v4211
  %5501 = vmatpush2.bf16.msra.mxu0 %v4210
  %5502 = vmatprep.subr.bf16.mxu0 %v4203
  %5503 = vmatpush2.bf16.msra.mxu0 %v4202
  %5504 = vmatprep.subr.bf16.mxu0 %v4195
  %5505 = vmatpush2.bf16.msra.mxu0 %v4194
  %5506 = vmatprep.subr.bf16.mxu0 %v4187
  %5507 = vmatpush2.bf16.msra.mxu0 %v4186
  %5508 = vmatprep.subr.bf16.mxu0 %v4179
  %5509 = vmatpush2.bf16.msra.mxu0 %v4178
  %5510 = vmatprep.subr.bf16.mxu0 %v4171
  %5511 = vmatpush2.bf16.msra.mxu0 %v4170
  %5512 = vmatprep.subr.bf16.mxu0 %v4163
  %5513 = vmatpush2.bf16.msra.mxu0 %v4162
  %5514 = vmatprep.mubr.bf16.mxu0 %v976
  %5515 = vmatmul.mubr.bf16.gmra.mxu0 %v975
  %v5516 = vpop.f32.mrf.mxu0
  %v5517 = vadd.f32 %v5476, %v5516
  %v5518 = vpop.f32.mrf.mxu0
  %v5519 = vadd.f32 %v5478, %v5518
  %v5520 = vpop.f32.mrf.mxu0
  %v5521 = vpop.f32.mrf.mxu0
  %5522 = vdwg.mxu0
  %5523 = vmatprep.subr.bf16.mxu0 %v4283
  %5524 = vmatpush1.bf16.msra.mxu0 %v4282
  %5525 = vmatprep.subr.bf16.mxu0 %v4275
  %5526 = vmatpush1.bf16.msra.mxu0 %v4274
  %5527 = vmatprep.subr.bf16.mxu0 %v4267
  %5528 = vmatpush1.bf16.msra.mxu0 %v4266
  %5529 = vmatprep.subr.bf16.mxu0 %v4259
  %5530 = vmatpush1.bf16.msra.mxu0 %v4258
  %5531 = vmatprep.subr.bf16.mxu0 %v4251
  %5532 = vmatpush1.bf16.msra.mxu0 %v4250
  %5533 = vmatprep.subr.bf16.mxu0 %v4243
  %5534 = vmatpush1.bf16.msra.mxu0 %v4242
  %5535 = vmatprep.subr.bf16.mxu0 %v4235
  %5536 = vmatpush1.bf16.msra.mxu0 %v4234
  %5537 = vmatprep.subr.bf16.mxu0 %v4227
  %5538 = vmatpush1.bf16.msra.mxu0 %v4226
  %5539 = vmatprep.subr.bf16.mxu0 %v4347
  %5540 = vmatpush2.bf16.msra.mxu0 %v4346
  %5541 = vmatprep.subr.bf16.mxu0 %v4339
  %5542 = vmatpush2.bf16.msra.mxu0 %v4338
  %5543 = vmatprep.subr.bf16.mxu0 %v4331
  %5544 = vmatpush2.bf16.msra.mxu0 %v4330
  %5545 = vmatprep.subr.bf16.mxu0 %v4323
  %5546 = vmatpush2.bf16.msra.mxu0 %v4322
  %5547 = vmatprep.subr.bf16.mxu0 %v4315
  %5548 = vmatpush2.bf16.msra.mxu0 %v4314
  %5549 = vmatprep.subr.bf16.mxu0 %v4307
  %5550 = vmatpush2.bf16.msra.mxu0 %v4306
  %5551 = vmatprep.subr.bf16.mxu0 %v4299
  %5552 = vmatpush2.bf16.msra.mxu0 %v4298
  %5553 = vmatprep.subr.bf16.mxu0 %v4291
  %5554 = vmatpush2.bf16.msra.mxu0 %v4290
  %5555 = vmatprep.mubr.bf16.mxu0 %v978
  %5556 = vmatmul.mubr.bf16.gmra.mxu0 %v977
  %v5557 = vpop.f32.mrf.mxu0
  %v5558 = vadd.f32 %v5517, %v5557
  %v5559 = vpop.f32.mrf.mxu0
  %v5560 = vadd.f32 %v5519, %v5559
  %v5561 = vpop.f32.mrf.mxu0
  %v5562 = vpop.f32.mrf.mxu0
  %5563 = vdwg.mxu0
  %5564 = vmatprep.subr.bf16.mxu0 %v4411
  %5565 = vmatpush1.bf16.msra.mxu0 %v4410
  %5566 = vmatprep.subr.bf16.mxu0 %v4403
  %5567 = vmatpush1.bf16.msra.mxu0 %v4402
  %5568 = vmatprep.subr.bf16.mxu0 %v4395
  %5569 = vmatpush1.bf16.msra.mxu0 %v4394
  %5570 = vmatprep.subr.bf16.mxu0 %v4387
  %5571 = vmatpush1.bf16.msra.mxu0 %v4386
  %5572 = vmatprep.subr.bf16.mxu0 %v4379
  %5573 = vmatpush1.bf16.msra.mxu0 %v4378
  %5574 = vmatprep.subr.bf16.mxu0 %v4371
  %5575 = vmatpush1.bf16.msra.mxu0 %v4370
  %5576 = vmatprep.subr.bf16.mxu0 %v4363
  %5577 = vmatpush1.bf16.msra.mxu0 %v4362
  %5578 = vmatprep.subr.bf16.mxu0 %v4355
  %5579 = vmatpush1.bf16.msra.mxu0 %v4354
  %5580 = vmatprep.subr.bf16.mxu0 0
  %5581 = vmatpush2.bf16.msra.mxu0 0
  %5582 = vmatprep.subr.bf16.mxu0 0
  %5583 = vmatpush2.bf16.msra.mxu0 0
  %5584 = vmatprep.subr.bf16.mxu0 0
  %5585 = vmatpush2.bf16.msra.mxu0 0
  %5586 = vmatprep.subr.bf16.mxu0 0
  %5587 = vmatpush2.bf16.msra.mxu0 0
  %5588 = vmatprep.subr.bf16.mxu0 %v4443
  %5589 = vmatpush2.bf16.msra.mxu0 %v4442
  %5590 = vmatprep.subr.bf16.mxu0 %v4435
  %5591 = vmatpush2.bf16.msra.mxu0 %v4434
  %5592 = vmatprep.subr.bf16.mxu0 %v4427
  %5593 = vmatpush2.bf16.msra.mxu0 %v4426
  %5594 = vmatprep.subr.bf16.mxu0 %v4419
  %5595 = vmatpush2.bf16.msra.mxu0 %v4418
  %5596 = vmatprep.mubr.bf16.mxu0 %v5316
  %5597 = vmatmul.mubr.bf16.gmra.mxu0 %v979
  %v5598 = vpop.f32.mrf.mxu0
  %v5599 = vadd.f32 %v5558, %v5598
  %v5600 = vpop.f32.mrf.mxu0
  %v5601 = vadd.f32 %v5560, %v5600
  %v5602 = vpop.f32.mrf.mxu0
  %v5603 = vpop.f32.mrf.mxu0
  %5604 = vdwg.mxu0
  %5605 = vmatprep.subr.bf16.mxu0 %v3645
  %5606 = vmatpush1.bf16.msra.mxu0 %v3644
  %5607 = vmatprep.subr.bf16.mxu0 %v3637
  %5608 = vmatpush1.bf16.msra.mxu0 %v3636
  %5609 = vmatprep.subr.bf16.mxu0 %v3629
  %5610 = vmatpush1.bf16.msra.mxu0 %v3628
  %5611 = vmatprep.subr.bf16.mxu0 %v3621
  %5612 = vmatpush1.bf16.msra.mxu0 %v3620
  %5613 = vmatprep.subr.bf16.mxu0 %v3613
  %5614 = vmatpush1.bf16.msra.mxu0 %v3612
  %5615 = vmatprep.subr.bf16.mxu0 %v3605
  %5616 = vmatpush1.bf16.msra.mxu0 %v3604
  %5617 = vmatprep.subr.bf16.mxu0 %v3597
  %5618 = vmatpush1.bf16.msra.mxu0 %v3596
  %5619 = vmatprep.subr.bf16.mxu0 %v3589
  %5620 = vmatpush1.bf16.msra.mxu0 %v3588
  %5621 = vmatprep.subr.bf16.mxu0 %v3709
  %5622 = vmatpush2.bf16.msra.mxu0 %v3708
  %5623 = vmatprep.subr.bf16.mxu0 %v3701
  %5624 = vmatpush2.bf16.msra.mxu0 %v3700
  %5625 = vmatprep.subr.bf16.mxu0 %v3693
  %5626 = vmatpush2.bf16.msra.mxu0 %v3692
  %5627 = vmatprep.subr.bf16.mxu0 %v3685
  %5628 = vmatpush2.bf16.msra.mxu0 %v3684
  %5629 = vmatprep.subr.bf16.mxu0 %v3677
  %5630 = vmatpush2.bf16.msra.mxu0 %v3676
  %5631 = vmatprep.subr.bf16.mxu0 %v3669
  %5632 = vmatpush2.bf16.msra.mxu0 %v3668
  %5633 = vmatprep.subr.bf16.mxu0 %v3661
  %5634 = vmatpush2.bf16.msra.mxu0 %v3660
  %5635 = vmatprep.subr.bf16.mxu0 %v3653
  %5636 = vmatpush2.bf16.msra.mxu0 %v3652
  %5637 = vmatprep.mubr.bf16.mxu0 %v968
  %5638 = vmatmul.mubr.bf16.gmra.mxu0 %v967
  %v5639 = vpop.f32.mrf.mxu0
  %v5640 = vadd.f32 %v917, %v5639
  %v5641 = vpop.f32.mrf.mxu0
  %v5642 = vadd.f32 %v921, %v5641
  %v5643 = vpop.f32.mrf.mxu0
  %v5644 = vpop.f32.mrf.mxu0
  %5645 = vdwg.mxu0
  %5646 = vmatprep.subr.bf16.mxu0 %v3773
  %5647 = vmatpush1.bf16.msra.mxu0 %v3772
  %5648 = vmatprep.subr.bf16.mxu0 %v3765
  %5649 = vmatpush1.bf16.msra.mxu0 %v3764
  %5650 = vmatprep.subr.bf16.mxu0 %v3757
  %5651 = vmatpush1.bf16.msra.mxu0 %v3756
  %5652 = vmatprep.subr.bf16.mxu0 %v3749
  %5653 = vmatpush1.bf16.msra.mxu0 %v3748
  %5654 = vmatprep.subr.bf16.mxu0 %v3741
  %5655 = vmatpush1.bf16.msra.mxu0 %v3740
  %5656 = vmatprep.subr.bf16.mxu0 %v3733
  %5657 = vmatpush1.bf16.msra.mxu0 %v3732
  %5658 = vmatprep.subr.bf16.mxu0 %v3725
  %5659 = vmatpush1.bf16.msra.mxu0 %v3724
  %5660 = vmatprep.subr.bf16.mxu0 %v3717
  %5661 = vmatpush1.bf16.msra.mxu0 %v3716
  %5662 = vmatprep.subr.bf16.mxu0 %v3837
  %5663 = vmatpush2.bf16.msra.mxu0 %v3836
  %5664 = vmatprep.subr.bf16.mxu0 %v3829
  %5665 = vmatpush2.bf16.msra.mxu0 %v3828
  %5666 = vmatprep.subr.bf16.mxu0 %v3821
  %5667 = vmatpush2.bf16.msra.mxu0 %v3820
  %5668 = vmatprep.subr.bf16.mxu0 %v3813
  %5669 = vmatpush2.bf16.msra.mxu0 %v3812
  %5670 = vmatprep.subr.bf16.mxu0 %v3805
  %5671 = vmatpush2.bf16.msra.mxu0 %v3804
  %5672 = vmatprep.subr.bf16.mxu0 %v3797
  %5673 = vmatpush2.bf16.msra.mxu0 %v3796
  %5674 = vmatprep.subr.bf16.mxu0 %v3789
  %5675 = vmatpush2.bf16.msra.mxu0 %v3788
  %5676 = vmatprep.subr.bf16.mxu0 %v3781
  %5677 = vmatpush2.bf16.msra.mxu0 %v3780
  %5678 = vmatprep.mubr.bf16.mxu0 %v970
  %5679 = vmatmul.mubr.bf16.gmra.mxu0 %v969
  %v5680 = vpop.f32.mrf.mxu0
  %v5681 = vadd.f32 %v5640, %v5680
  %v5682 = vpop.f32.mrf.mxu0
  %v5683 = vadd.f32 %v5642, %v5682
  %v5684 = vpop.f32.mrf.mxu0
  %v5685 = vpop.f32.mrf.mxu0
  %5686 = vdwg.mxu0
  %5687 = vmatprep.subr.bf16.mxu0 %v3901
  %5688 = vmatpush1.bf16.msra.mxu0 %v3900
  %5689 = vmatprep.subr.bf16.mxu0 %v3893
  %5690 = vmatpush1.bf16.msra.mxu0 %v3892
  %5691 = vmatprep.subr.bf16.mxu0 %v3885
  %5692 = vmatpush1.bf16.msra.mxu0 %v3884
  %5693 = vmatprep.subr.bf16.mxu0 %v3877
  %5694 = vmatpush1.bf16.msra.mxu0 %v3876
  %5695 = vmatprep.subr.bf16.mxu0 %v3869
  %5696 = vmatpush1.bf16.msra.mxu0 %v3868
  %5697 = vmatprep.subr.bf16.mxu0 %v3861
  %5698 = vmatpush1.bf16.msra.mxu0 %v3860
  %5699 = vmatprep.subr.bf16.mxu0 %v3853
  %5700 = vmatpush1.bf16.msra.mxu0 %v3852
  %5701 = vmatprep.subr.bf16.mxu0 %v3845
  %5702 = vmatpush1.bf16.msra.mxu0 %v3844
  %5703 = vmatprep.subr.bf16.mxu0 %v3965
  %5704 = vmatpush2.bf16.msra.mxu0 %v3964
  %5705 = vmatprep.subr.bf16.mxu0 %v3957
  %5706 = vmatpush2.bf16.msra.mxu0 %v3956
  %5707 = vmatprep.subr.bf16.mxu0 %v3949
  %5708 = vmatpush2.bf16.msra.mxu0 %v3948
  %5709 = vmatprep.subr.bf16.mxu0 %v3941
  %5710 = vmatpush2.bf16.msra.mxu0 %v3940
  %5711 = vmatprep.subr.bf16.mxu0 %v3933
  %5712 = vmatpush2.bf16.msra.mxu0 %v3932
  %5713 = vmatprep.subr.bf16.mxu0 %v3925
  %5714 = vmatpush2.bf16.msra.mxu0 %v3924
  %5715 = vmatprep.subr.bf16.mxu0 %v3917
  %5716 = vmatpush2.bf16.msra.mxu0 %v3916
  %5717 = vmatprep.subr.bf16.mxu0 %v3909
  %5718 = vmatpush2.bf16.msra.mxu0 %v3908
  %5719 = vmatprep.mubr.bf16.mxu0 %v972
  %5720 = vmatmul.mubr.bf16.gmra.mxu0 %v971
  %v5721 = vpop.f32.mrf.mxu0
  %v5722 = vadd.f32 %v5681, %v5721
  %v5723 = vpop.f32.mrf.mxu0
  %v5724 = vadd.f32 %v5683, %v5723
  %v5725 = vpop.f32.mrf.mxu0
  %v5726 = vpop.f32.mrf.mxu0
  %5727 = vdwg.mxu0
  %5728 = vmatprep.subr.bf16.mxu0 %v4029
  %5729 = vmatpush1.bf16.msra.mxu0 %v4028
  %5730 = vmatprep.subr.bf16.mxu0 %v4021
  %5731 = vmatpush1.bf16.msra.mxu0 %v4020
  %5732 = vmatprep.subr.bf16.mxu0 %v4013
  %5733 = vmatpush1.bf16.msra.mxu0 %v4012
  %5734 = vmatprep.subr.bf16.mxu0 %v4005
  %5735 = vmatpush1.bf16.msra.mxu0 %v4004
  %5736 = vmatprep.subr.bf16.mxu0 %v3997
  %5737 = vmatpush1.bf16.msra.mxu0 %v3996
  %5738 = vmatprep.subr.bf16.mxu0 %v3989
  %5739 = vmatpush1.bf16.msra.mxu0 %v3988
  %5740 = vmatprep.subr.bf16.mxu0 %v3981
  %5741 = vmatpush1.bf16.msra.mxu0 %v3980
  %5742 = vmatprep.subr.bf16.mxu0 %v3973
  %5743 = vmatpush1.bf16.msra.mxu0 %v3972
  %5744 = vmatprep.subr.bf16.mxu0 %v4093
  %5745 = vmatpush2.bf16.msra.mxu0 %v4092
  %5746 = vmatprep.subr.bf16.mxu0 %v4085
  %5747 = vmatpush2.bf16.msra.mxu0 %v4084
  %5748 = vmatprep.subr.bf16.mxu0 %v4077
  %5749 = vmatpush2.bf16.msra.mxu0 %v4076
  %5750 = vmatprep.subr.bf16.mxu0 %v4069
  %5751 = vmatpush2.bf16.msra.mxu0 %v4068
  %5752 = vmatprep.subr.bf16.mxu0 %v4061
  %5753 = vmatpush2.bf16.msra.mxu0 %v4060
  %5754 = vmatprep.subr.bf16.mxu0 %v4053
  %5755 = vmatpush2.bf16.msra.mxu0 %v4052
  %5756 = vmatprep.subr.bf16.mxu0 %v4045
  %5757 = vmatpush2.bf16.msra.mxu0 %v4044
  %5758 = vmatprep.subr.bf16.mxu0 %v4037
  %5759 = vmatpush2.bf16.msra.mxu0 %v4036
  %5760 = vmatprep.mubr.bf16.mxu0 %v974
  %5761 = vmatmul.mubr.bf16.gmra.mxu0 %v973
  %v5762 = vpop.f32.mrf.mxu0
  %v5763 = vadd.f32 %v5722, %v5762
  %v5764 = vpop.f32.mrf.mxu0
  %v5765 = vadd.f32 %v5724, %v5764
  %v5766 = vpop.f32.mrf.mxu0
  %v5767 = vpop.f32.mrf.mxu0
  %5768 = vdwg.mxu0
  %5769 = vmatprep.subr.bf16.mxu0 %v4157
  %5770 = vmatpush1.bf16.msra.mxu0 %v4156
  %5771 = vmatprep.subr.bf16.mxu0 %v4149
  %5772 = vmatpush1.bf16.msra.mxu0 %v4148
  %5773 = vmatprep.subr.bf16.mxu0 %v4141
  %5774 = vmatpush1.bf16.msra.mxu0 %v4140
  %5775 = vmatprep.subr.bf16.mxu0 %v4133
  %5776 = vmatpush1.bf16.msra.mxu0 %v4132
  %5777 = vmatprep.subr.bf16.mxu0 %v4125
  %5778 = vmatpush1.bf16.msra.mxu0 %v4124
  %5779 = vmatprep.subr.bf16.mxu0 %v4117
  %5780 = vmatpush1.bf16.msra.mxu0 %v4116
  %5781 = vmatprep.subr.bf16.mxu0 %v4109
  %5782 = vmatpush1.bf16.msra.mxu0 %v4108
  %5783 = vmatprep.subr.bf16.mxu0 %v4101
  %5784 = vmatpush1.bf16.msra.mxu0 %v4100
  %5785 = vmatprep.subr.bf16.mxu0 %v4221
  %5786 = vmatpush2.bf16.msra.mxu0 %v4220
  %5787 = vmatprep.subr.bf16.mxu0 %v4213
  %5788 = vmatpush2.bf16.msra.mxu0 %v4212
  %5789 = vmatprep.subr.bf16.mxu0 %v4205
  %5790 = vmatpush2.bf16.msra.mxu0 %v4204
  %5791 = vmatprep.subr.bf16.mxu0 %v4197
  %5792 = vmatpush2.bf16.msra.mxu0 %v4196
  %5793 = vmatprep.subr.bf16.mxu0 %v4189
  %5794 = vmatpush2.bf16.msra.mxu0 %v4188
  %5795 = vmatprep.subr.bf16.mxu0 %v4181
  %5796 = vmatpush2.bf16.msra.mxu0 %v4180
  %5797 = vmatprep.subr.bf16.mxu0 %v4173
  %5798 = vmatpush2.bf16.msra.mxu0 %v4172
  %5799 = vmatprep.subr.bf16.mxu0 %v4165
  %5800 = vmatpush2.bf16.msra.mxu0 %v4164
  %5801 = vmatprep.mubr.bf16.mxu0 %v976
  %5802 = vmatmul.mubr.bf16.gmra.mxu0 %v975
  %v5803 = vpop.f32.mrf.mxu0
  %v5804 = vadd.f32 %v5763, %v5803
  %v5805 = vpop.f32.mrf.mxu0
  %v5806 = vadd.f32 %v5765, %v5805
  %v5807 = vpop.f32.mrf.mxu0
  %v5808 = vpop.f32.mrf.mxu0
  %5809 = vdwg.mxu0
  %5810 = vmatprep.subr.bf16.mxu0 %v4285
  %5811 = vmatpush1.bf16.msra.mxu0 %v4284
  %5812 = vmatprep.subr.bf16.mxu0 %v4277
  %5813 = vmatpush1.bf16.msra.mxu0 %v4276
  %5814 = vmatprep.subr.bf16.mxu0 %v4269
  %5815 = vmatpush1.bf16.msra.mxu0 %v4268
  %5816 = vmatprep.subr.bf16.mxu0 %v4261
  %5817 = vmatpush1.bf16.msra.mxu0 %v4260
  %5818 = vmatprep.subr.bf16.mxu0 %v4253
  %5819 = vmatpush1.bf16.msra.mxu0 %v4252
  %5820 = vmatprep.subr.bf16.mxu0 %v4245
  %5821 = vmatpush1.bf16.msra.mxu0 %v4244
  %5822 = vmatprep.subr.bf16.mxu0 %v4237
  %5823 = vmatpush1.bf16.msra.mxu0 %v4236
  %5824 = vmatprep.subr.bf16.mxu0 %v4229
  %5825 = vmatpush1.bf16.msra.mxu0 %v4228
  %5826 = vmatprep.subr.bf16.mxu0 %v4349
  %5827 = vmatpush2.bf16.msra.mxu0 %v4348
  %5828 = vmatprep.subr.bf16.mxu0 %v4341
  %5829 = vmatpush2.bf16.msra.mxu0 %v4340
  %5830 = vmatprep.subr.bf16.mxu0 %v4333
  %5831 = vmatpush2.bf16.msra.mxu0 %v4332
  %5832 = vmatprep.subr.bf16.mxu0 %v4325
  %5833 = vmatpush2.bf16.msra.mxu0 %v4324
  %5834 = vmatprep.subr.bf16.mxu0 %v4317
  %5835 = vmatpush2.bf16.msra.mxu0 %v4316
  %5836 = vmatprep.subr.bf16.mxu0 %v4309
  %5837 = vmatpush2.bf16.msra.mxu0 %v4308
  %5838 = vmatprep.subr.bf16.mxu0 %v4301
  %5839 = vmatpush2.bf16.msra.mxu0 %v4300
  %5840 = vmatprep.subr.bf16.mxu0 %v4293
  %5841 = vmatpush2.bf16.msra.mxu0 %v4292
  %5842 = vmatprep.mubr.bf16.mxu0 %v978
  %5843 = vmatmul.mubr.bf16.gmra.mxu0 %v977
  %v5844 = vpop.f32.mrf.mxu0
  %v5845 = vadd.f32 %v5804, %v5844
  %v5846 = vpop.f32.mrf.mxu0
  %v5847 = vadd.f32 %v5806, %v5846
  %v5848 = vpop.f32.mrf.mxu0
  %v5849 = vpop.f32.mrf.mxu0
  %5850 = vdwg.mxu0
  %5851 = vmatprep.subr.bf16.mxu0 %v4413
  %5852 = vmatpush1.bf16.msra.mxu0 %v4412
  %5853 = vmatprep.subr.bf16.mxu0 %v4405
  %5854 = vmatpush1.bf16.msra.mxu0 %v4404
  %5855 = vmatprep.subr.bf16.mxu0 %v4397
  %5856 = vmatpush1.bf16.msra.mxu0 %v4396
  %5857 = vmatprep.subr.bf16.mxu0 %v4389
  %5858 = vmatpush1.bf16.msra.mxu0 %v4388
  %5859 = vmatprep.subr.bf16.mxu0 %v4381
  %5860 = vmatpush1.bf16.msra.mxu0 %v4380
  %5861 = vmatprep.subr.bf16.mxu0 %v4373
  %5862 = vmatpush1.bf16.msra.mxu0 %v4372
  %5863 = vmatprep.subr.bf16.mxu0 %v4365
  %5864 = vmatpush1.bf16.msra.mxu0 %v4364
  %5865 = vmatprep.subr.bf16.mxu0 %v4357
  %5866 = vmatpush1.bf16.msra.mxu0 %v4356
  %5867 = vmatprep.subr.bf16.mxu0 0
  %5868 = vmatpush2.bf16.msra.mxu0 0
  %5869 = vmatprep.subr.bf16.mxu0 0
  %5870 = vmatpush2.bf16.msra.mxu0 0
  %5871 = vmatprep.subr.bf16.mxu0 0
  %5872 = vmatpush2.bf16.msra.mxu0 0
  %5873 = vmatprep.subr.bf16.mxu0 0
  %5874 = vmatpush2.bf16.msra.mxu0 0
  %5875 = vmatprep.subr.bf16.mxu0 %v4445
  %5876 = vmatpush2.bf16.msra.mxu0 %v4444
  %5877 = vmatprep.subr.bf16.mxu0 %v4437
  %5878 = vmatpush2.bf16.msra.mxu0 %v4436
  %5879 = vmatprep.subr.bf16.mxu0 %v4429
  %5880 = vmatpush2.bf16.msra.mxu0 %v4428
  %5881 = vmatprep.subr.bf16.mxu0 %v4421
  %5882 = vmatpush2.bf16.msra.mxu0 %v4420
  %5883 = vmatprep.mubr.bf16.mxu0 %v5316
  %5884 = vmatmul.mubr.bf16.gmra.mxu0 %v979
  %v5885 = vpop.f32.mrf.mxu0
  %v5886 = vadd.f32 %v5845, %v5885
  %v5887 = vpop.f32.mrf.mxu0
  %v5888 = vadd.f32 %v5847, %v5887
  %v5889 = vpop.f32.mrf.mxu0
  %v5890 = vpop.f32.mrf.mxu0
  %5891 = vdwg.mxu0
  %5892 = vmatprep.subr.bf16.mxu0 %v3647
  %5893 = vmatpush1.bf16.msra.mxu0 %v3646
  %5894 = vmatprep.subr.bf16.mxu0 %v3639
  %5895 = vmatpush1.bf16.msra.mxu0 %v3638
  %5896 = vmatprep.subr.bf16.mxu0 %v3631
  %5897 = vmatpush1.bf16.msra.mxu0 %v3630
  %5898 = vmatprep.subr.bf16.mxu0 %v3623
  %5899 = vmatpush1.bf16.msra.mxu0 %v3622
  %5900 = vmatprep.subr.bf16.mxu0 %v3615
  %5901 = vmatpush1.bf16.msra.mxu0 %v3614
  %5902 = vmatprep.subr.bf16.mxu0 %v3607
  %5903 = vmatpush1.bf16.msra.mxu0 %v3606
  %5904 = vmatprep.subr.bf16.mxu0 %v3599
  %5905 = vmatpush1.bf16.msra.mxu0 %v3598
  %5906 = vmatprep.subr.bf16.mxu0 %v3591
  %5907 = vmatpush1.bf16.msra.mxu0 %v3590
  %5908 = vmatprep.subr.bf16.mxu0 %v3711
  %5909 = vmatpush2.bf16.msra.mxu0 %v3710
  %5910 = vmatprep.subr.bf16.mxu0 %v3703
  %5911 = vmatpush2.bf16.msra.mxu0 %v3702
  %5912 = vmatprep.subr.bf16.mxu0 %v3695
  %5913 = vmatpush2.bf16.msra.mxu0 %v3694
  %5914 = vmatprep.subr.bf16.mxu0 %v3687
  %5915 = vmatpush2.bf16.msra.mxu0 %v3686
  %5916 = vmatprep.subr.bf16.mxu0 %v3679
  %5917 = vmatpush2.bf16.msra.mxu0 %v3678
  %5918 = vmatprep.subr.bf16.mxu0 %v3671
  %5919 = vmatpush2.bf16.msra.mxu0 %v3670
  %5920 = vmatprep.subr.bf16.mxu0 %v3663
  %5921 = vmatpush2.bf16.msra.mxu0 %v3662
  %5922 = vmatprep.subr.bf16.mxu0 %v3655
  %5923 = vmatpush2.bf16.msra.mxu0 %v3654
  %5924 = vmatprep.mubr.bf16.mxu0 %v968
  %5925 = vmatmul.mubr.bf16.gmra.mxu0 %v967
  %v5926 = vpop.f32.mrf.mxu0
  %v5927 = vadd.f32 %v925, %v5926
  %v5928 = vpop.f32.mrf.mxu0
  %v5929 = vadd.f32 %v929, %v5928
  %v5930 = vpop.f32.mrf.mxu0
  %v5931 = vpop.f32.mrf.mxu0
  %5932 = vdwg.mxu0
  %5933 = vmatprep.subr.bf16.mxu0 %v3775
  %5934 = vmatpush1.bf16.msra.mxu0 %v3774
  %5935 = vmatprep.subr.bf16.mxu0 %v3767
  %5936 = vmatpush1.bf16.msra.mxu0 %v3766
  %5937 = vmatprep.subr.bf16.mxu0 %v3759
  %5938 = vmatpush1.bf16.msra.mxu0 %v3758
  %5939 = vmatprep.subr.bf16.mxu0 %v3751
  %5940 = vmatpush1.bf16.msra.mxu0 %v3750
  %5941 = vmatprep.subr.bf16.mxu0 %v3743
  %5942 = vmatpush1.bf16.msra.mxu0 %v3742
  %5943 = vmatprep.subr.bf16.mxu0 %v3735
  %5944 = vmatpush1.bf16.msra.mxu0 %v3734
  %5945 = vmatprep.subr.bf16.mxu0 %v3727
  %5946 = vmatpush1.bf16.msra.mxu0 %v3726
  %5947 = vmatprep.subr.bf16.mxu0 %v3719
  %5948 = vmatpush1.bf16.msra.mxu0 %v3718
  %5949 = vmatprep.subr.bf16.mxu0 %v3839
  %5950 = vmatpush2.bf16.msra.mxu0 %v3838
  %5951 = vmatprep.subr.bf16.mxu0 %v3831
  %5952 = vmatpush2.bf16.msra.mxu0 %v3830
  %5953 = vmatprep.subr.bf16.mxu0 %v3823
  %5954 = vmatpush2.bf16.msra.mxu0 %v3822
  %5955 = vmatprep.subr.bf16.mxu0 %v3815
  %5956 = vmatpush2.bf16.msra.mxu0 %v3814
  %5957 = vmatprep.subr.bf16.mxu0 %v3807
  %5958 = vmatpush2.bf16.msra.mxu0 %v3806
  %5959 = vmatprep.subr.bf16.mxu0 %v3799
  %5960 = vmatpush2.bf16.msra.mxu0 %v3798
  %5961 = vmatprep.subr.bf16.mxu0 %v3791
  %5962 = vmatpush2.bf16.msra.mxu0 %v3790
  %5963 = vmatprep.subr.bf16.mxu0 %v3783
  %5964 = vmatpush2.bf16.msra.mxu0 %v3782
  %5965 = vmatprep.mubr.bf16.mxu0 %v970
  %5966 = vmatmul.mubr.bf16.gmra.mxu0 %v969
  %v5967 = vpop.f32.mrf.mxu0
  %v5968 = vadd.f32 %v5927, %v5967
  %v5969 = vpop.f32.mrf.mxu0
  %v5970 = vadd.f32 %v5929, %v5969
  %v5971 = vpop.f32.mrf.mxu0
  %v5972 = vpop.f32.mrf.mxu0
  %5973 = vdwg.mxu0
  %5974 = vmatprep.subr.bf16.mxu0 %v3903
  %5975 = vmatpush1.bf16.msra.mxu0 %v3902
  %5976 = vmatprep.subr.bf16.mxu0 %v3895
  %5977 = vmatpush1.bf16.msra.mxu0 %v3894
  %5978 = vmatprep.subr.bf16.mxu0 %v3887
  %5979 = vmatpush1.bf16.msra.mxu0 %v3886
  %5980 = vmatprep.subr.bf16.mxu0 %v3879
  %5981 = vmatpush1.bf16.msra.mxu0 %v3878
  %5982 = vmatprep.subr.bf16.mxu0 %v3871
  %5983 = vmatpush1.bf16.msra.mxu0 %v3870
  %5984 = vmatprep.subr.bf16.mxu0 %v3863
  %5985 = vmatpush1.bf16.msra.mxu0 %v3862
  %5986 = vmatprep.subr.bf16.mxu0 %v3855
  %5987 = vmatpush1.bf16.msra.mxu0 %v3854
  %5988 = vmatprep.subr.bf16.mxu0 %v3847
  %5989 = vmatpush1.bf16.msra.mxu0 %v3846
  %5990 = vmatprep.subr.bf16.mxu0 %v3967
  %5991 = vmatpush2.bf16.msra.mxu0 %v3966
  %5992 = vmatprep.subr.bf16.mxu0 %v3959
  %5993 = vmatpush2.bf16.msra.mxu0 %v3958
  %5994 = vmatprep.subr.bf16.mxu0 %v3951
  %5995 = vmatpush2.bf16.msra.mxu0 %v3950
  %5996 = vmatprep.subr.bf16.mxu0 %v3943
  %5997 = vmatpush2.bf16.msra.mxu0 %v3942
  %5998 = vmatprep.subr.bf16.mxu0 %v3935
  %5999 = vmatpush2.bf16.msra.mxu0 %v3934
  %6000 = vmatprep.subr.bf16.mxu0 %v3927
  %6001 = vmatpush2.bf16.msra.mxu0 %v3926
  %6002 = vmatprep.subr.bf16.mxu0 %v3919
  %6003 = vmatpush2.bf16.msra.mxu0 %v3918
  %6004 = vmatprep.subr.bf16.mxu0 %v3911
  %6005 = vmatpush2.bf16.msra.mxu0 %v3910
  %6006 = vmatprep.mubr.bf16.mxu0 %v972
  %6007 = vmatmul.mubr.bf16.gmra.mxu0 %v971
  %v6008 = vpop.f32.mrf.mxu0
  %v6009 = vadd.f32 %v5968, %v6008
  %v6010 = vpop.f32.mrf.mxu0
  %v6011 = vadd.f32 %v5970, %v6010
  %v6012 = vpop.f32.mrf.mxu0
  %v6013 = vpop.f32.mrf.mxu0
  %6014 = vdwg.mxu0
  %6015 = vmatprep.subr.bf16.mxu0 %v4031
  %6016 = vmatpush1.bf16.msra.mxu0 %v4030
  %6017 = vmatprep.subr.bf16.mxu0 %v4023
  %6018 = vmatpush1.bf16.msra.mxu0 %v4022
  %6019 = vmatprep.subr.bf16.mxu0 %v4015
  %6020 = vmatpush1.bf16.msra.mxu0 %v4014
  %6021 = vmatprep.subr.bf16.mxu0 %v4007
  %6022 = vmatpush1.bf16.msra.mxu0 %v4006
  %6023 = vmatprep.subr.bf16.mxu0 %v3999
  %6024 = vmatpush1.bf16.msra.mxu0 %v3998
  %6025 = vmatprep.subr.bf16.mxu0 %v3991
  %6026 = vmatpush1.bf16.msra.mxu0 %v3990
  %6027 = vmatprep.subr.bf16.mxu0 %v3983
  %6028 = vmatpush1.bf16.msra.mxu0 %v3982
  %6029 = vmatprep.subr.bf16.mxu0 %v3975
  %6030 = vmatpush1.bf16.msra.mxu0 %v3974
  %6031 = vmatprep.subr.bf16.mxu0 %v4095
  %6032 = vmatpush2.bf16.msra.mxu0 %v4094
  %6033 = vmatprep.subr.bf16.mxu0 %v4087
  %6034 = vmatpush2.bf16.msra.mxu0 %v4086
  %6035 = vmatprep.subr.bf16.mxu0 %v4079
  %6036 = vmatpush2.bf16.msra.mxu0 %v4078
  %6037 = vmatprep.subr.bf16.mxu0 %v4071
  %6038 = vmatpush2.bf16.msra.mxu0 %v4070
  %6039 = vmatprep.subr.bf16.mxu0 %v4063
  %6040 = vmatpush2.bf16.msra.mxu0 %v4062
  %6041 = vmatprep.subr.bf16.mxu0 %v4055
  %6042 = vmatpush2.bf16.msra.mxu0 %v4054
  %6043 = vmatprep.subr.bf16.mxu0 %v4047
  %6044 = vmatpush2.bf16.msra.mxu0 %v4046
  %6045 = vmatprep.subr.bf16.mxu0 %v4039
  %6046 = vmatpush2.bf16.msra.mxu0 %v4038
  %6047 = vmatprep.mubr.bf16.mxu0 %v974
  %6048 = vmatmul.mubr.bf16.gmra.mxu0 %v973
  %v6049 = vpop.f32.mrf.mxu0
  %v6050 = vadd.f32 %v6009, %v6049
  %v6051 = vpop.f32.mrf.mxu0
  %v6052 = vadd.f32 %v6011, %v6051
  %v6053 = vpop.f32.mrf.mxu0
  %v6054 = vpop.f32.mrf.mxu0
  %6055 = vdwg.mxu0
  %6056 = vmatprep.subr.bf16.mxu0 %v4159
  %6057 = vmatpush1.bf16.msra.mxu0 %v4158
  %6058 = vmatprep.subr.bf16.mxu0 %v4151
  %6059 = vmatpush1.bf16.msra.mxu0 %v4150
  %6060 = vmatprep.subr.bf16.mxu0 %v4143
  %6061 = vmatpush1.bf16.msra.mxu0 %v4142
  %6062 = vmatprep.subr.bf16.mxu0 %v4135
  %6063 = vmatpush1.bf16.msra.mxu0 %v4134
  %6064 = vmatprep.subr.bf16.mxu0 %v4127
  %6065 = vmatpush1.bf16.msra.mxu0 %v4126
  %6066 = vmatprep.subr.bf16.mxu0 %v4119
  %6067 = vmatpush1.bf16.msra.mxu0 %v4118
  %6068 = vmatprep.subr.bf16.mxu0 %v4111
  %6069 = vmatpush1.bf16.msra.mxu0 %v4110
  %6070 = vmatprep.subr.bf16.mxu0 %v4103
  %6071 = vmatpush1.bf16.msra.mxu0 %v4102
  %6072 = vmatprep.subr.bf16.mxu0 %v4223
  %6073 = vmatpush2.bf16.msra.mxu0 %v4222
  %6074 = vmatprep.subr.bf16.mxu0 %v4215
  %6075 = vmatpush2.bf16.msra.mxu0 %v4214
  %6076 = vmatprep.subr.bf16.mxu0 %v4207
  %6077 = vmatpush2.bf16.msra.mxu0 %v4206
  %6078 = vmatprep.subr.bf16.mxu0 %v4199
  %6079 = vmatpush2.bf16.msra.mxu0 %v4198
  %6080 = vmatprep.subr.bf16.mxu0 %v4191
  %6081 = vmatpush2.bf16.msra.mxu0 %v4190
  %6082 = vmatprep.subr.bf16.mxu0 %v4183
  %6083 = vmatpush2.bf16.msra.mxu0 %v4182
  %6084 = vmatprep.subr.bf16.mxu0 %v4175
  %6085 = vmatpush2.bf16.msra.mxu0 %v4174
  %6086 = vmatprep.subr.bf16.mxu0 %v4167
  %6087 = vmatpush2.bf16.msra.mxu0 %v4166
  %6088 = vmatprep.mubr.bf16.mxu0 %v976
  %6089 = vmatmul.mubr.bf16.gmra.mxu0 %v975
  %v6090 = vpop.f32.mrf.mxu0
  %v6091 = vadd.f32 %v6050, %v6090
  %v6092 = vpop.f32.mrf.mxu0
  %v6093 = vadd.f32 %v6052, %v6092
  %v6094 = vpop.f32.mrf.mxu0
  %v6095 = vpop.f32.mrf.mxu0
  %6096 = vdwg.mxu0
  %6097 = vmatprep.subr.bf16.mxu0 %v4287
  %6098 = vmatpush1.bf16.msra.mxu0 %v4286
  %6099 = vmatprep.subr.bf16.mxu0 %v4279
  %6100 = vmatpush1.bf16.msra.mxu0 %v4278
  %6101 = vmatprep.subr.bf16.mxu0 %v4271
  %6102 = vmatpush1.bf16.msra.mxu0 %v4270
  %6103 = vmatprep.subr.bf16.mxu0 %v4263
  %6104 = vmatpush1.bf16.msra.mxu0 %v4262
  %6105 = vmatprep.subr.bf16.mxu0 %v4255
  %6106 = vmatpush1.bf16.msra.mxu0 %v4254
  %6107 = vmatprep.subr.bf16.mxu0 %v4247
  %6108 = vmatpush1.bf16.msra.mxu0 %v4246
  %6109 = vmatprep.subr.bf16.mxu0 %v4239
  %6110 = vmatpush1.bf16.msra.mxu0 %v4238
  %6111 = vmatprep.subr.bf16.mxu0 %v4231
  %6112 = vmatpush1.bf16.msra.mxu0 %v4230
  %6113 = vmatprep.subr.bf16.mxu0 %v4351
  %6114 = vmatpush2.bf16.msra.mxu0 %v4350
  %6115 = vmatprep.subr.bf16.mxu0 %v4343
  %6116 = vmatpush2.bf16.msra.mxu0 %v4342
  %6117 = vmatprep.subr.bf16.mxu0 %v4335
  %6118 = vmatpush2.bf16.msra.mxu0 %v4334
  %6119 = vmatprep.subr.bf16.mxu0 %v4327
  %6120 = vmatpush2.bf16.msra.mxu0 %v4326
  %6121 = vmatprep.subr.bf16.mxu0 %v4319
  %6122 = vmatpush2.bf16.msra.mxu0 %v4318
  %6123 = vmatprep.subr.bf16.mxu0 %v4311
  %6124 = vmatpush2.bf16.msra.mxu0 %v4310
  %6125 = vmatprep.subr.bf16.mxu0 %v4303
  %6126 = vmatpush2.bf16.msra.mxu0 %v4302
  %6127 = vmatprep.subr.bf16.mxu0 %v4295
  %6128 = vmatpush2.bf16.msra.mxu0 %v4294
  %6129 = vmatprep.mubr.bf16.mxu0 %v978
  %6130 = vmatmul.mubr.bf16.gmra.mxu0 %v977
  %v6131 = vpop.f32.mrf.mxu0
  %v6132 = vadd.f32 %v6091, %v6131
  %v6133 = vpop.f32.mrf.mxu0
  %v6134 = vadd.f32 %v6093, %v6133
  %v6135 = vpop.f32.mrf.mxu0
  %v6136 = vpop.f32.mrf.mxu0
  %6137 = vdwg.mxu0
  %6138 = vmatprep.subr.bf16.mxu0 %v4415
  %6139 = vmatpush1.bf16.msra.mxu0 %v4414
  %6140 = vmatprep.subr.bf16.mxu0 %v4407
  %6141 = vmatpush1.bf16.msra.mxu0 %v4406
  %6142 = vmatprep.subr.bf16.mxu0 %v4399
  %6143 = vmatpush1.bf16.msra.mxu0 %v4398
  %6144 = vmatprep.subr.bf16.mxu0 %v4391
  %6145 = vmatpush1.bf16.msra.mxu0 %v4390
  %6146 = vmatprep.subr.bf16.mxu0 %v4383
  %6147 = vmatpush1.bf16.msra.mxu0 %v4382
  %6148 = vmatprep.subr.bf16.mxu0 %v4375
  %6149 = vmatpush1.bf16.msra.mxu0 %v4374
  %6150 = vmatprep.subr.bf16.mxu0 %v4367
  %6151 = vmatpush1.bf16.msra.mxu0 %v4366
  %6152 = vmatprep.subr.bf16.mxu0 %v4359
  %6153 = vmatpush1.bf16.msra.mxu0 %v4358
  %6154 = vmatprep.subr.bf16.mxu0 0
  %6155 = vmatpush2.bf16.msra.mxu0 0
  %6156 = vmatprep.subr.bf16.mxu0 0
  %6157 = vmatpush2.bf16.msra.mxu0 0
  %6158 = vmatprep.subr.bf16.mxu0 0
  %6159 = vmatpush2.bf16.msra.mxu0 0
  %6160 = vmatprep.subr.bf16.mxu0 0
  %6161 = vmatpush2.bf16.msra.mxu0 0
  %6162 = vmatprep.subr.bf16.mxu0 %v4447
  %6163 = vmatpush2.bf16.msra.mxu0 %v4446
  %6164 = vmatprep.subr.bf16.mxu0 %v4439
  %6165 = vmatpush2.bf16.msra.mxu0 %v4438
  %6166 = vmatprep.subr.bf16.mxu0 %v4431
  %6167 = vmatpush2.bf16.msra.mxu0 %v4430
  %6168 = vmatprep.subr.bf16.mxu0 %v4423
  %6169 = vmatpush2.bf16.msra.mxu0 %v4422
  %6170 = vmatprep.mubr.bf16.mxu0 %v5316
  %6171 = vmatmul.mubr.bf16.gmra.mxu0 %v979
  %v6172 = vpop.f32.mrf.mxu0
  %v6173 = vadd.f32 %v6132, %v6172
  %v6174 = vpop.f32.mrf.mxu0
  %v6175 = vadd.f32 %v6134, %v6174
  %v6176 = vpop.f32.mrf.mxu0
  %v6177 = vpop.f32.mrf.mxu0
  %6178 = vdwg.mxu0
  %6179 = vmatprep.subr.bf16.mxu0 %v3649
  %6180 = vmatpush1.bf16.msra.mxu0 %v3648
  %6181 = vmatprep.subr.bf16.mxu0 %v3641
  %6182 = vmatpush1.bf16.msra.mxu0 %v3640
  %6183 = vmatprep.subr.bf16.mxu0 %v3633
  %6184 = vmatpush1.bf16.msra.mxu0 %v3632
  %6185 = vmatprep.subr.bf16.mxu0 %v3625
  %6186 = vmatpush1.bf16.msra.mxu0 %v3624
  %6187 = vmatprep.subr.bf16.mxu0 %v3617
  %6188 = vmatpush1.bf16.msra.mxu0 %v3616
  %6189 = vmatprep.subr.bf16.mxu0 %v3609
  %6190 = vmatpush1.bf16.msra.mxu0 %v3608
  %6191 = vmatprep.subr.bf16.mxu0 %v3601
  %6192 = vmatpush1.bf16.msra.mxu0 %v3600
  %6193 = vmatprep.subr.bf16.mxu0 %v3593
  %6194 = vmatpush1.bf16.msra.mxu0 %v3592
  %6195 = vmatprep.subr.bf16.mxu0 %v3713
  %6196 = vmatpush2.bf16.msra.mxu0 %v3712
  %6197 = vmatprep.subr.bf16.mxu0 %v3705
  %6198 = vmatpush2.bf16.msra.mxu0 %v3704
  %6199 = vmatprep.subr.bf16.mxu0 %v3697
  %6200 = vmatpush2.bf16.msra.mxu0 %v3696
  %6201 = vmatprep.subr.bf16.mxu0 %v3689
  %6202 = vmatpush2.bf16.msra.mxu0 %v3688
  %6203 = vmatprep.subr.bf16.mxu0 %v3681
  %6204 = vmatpush2.bf16.msra.mxu0 %v3680
  %6205 = vmatprep.subr.bf16.mxu0 %v3673
  %6206 = vmatpush2.bf16.msra.mxu0 %v3672
  %6207 = vmatprep.subr.bf16.mxu0 %v3665
  %6208 = vmatpush2.bf16.msra.mxu0 %v3664
  %6209 = vmatprep.subr.bf16.mxu0 %v3657
  %6210 = vmatpush2.bf16.msra.mxu0 %v3656
  %6211 = vmatprep.mubr.bf16.mxu0 %v968
  %6212 = vmatmul.mubr.bf16.gmra.mxu0 %v967
  %v6213 = vpop.f32.mrf.mxu0
  %v6214 = vadd.f32 %v933, %v6213
  %v6215 = vpop.f32.mrf.mxu0
  %v6216 = vadd.f32 %v937, %v6215
  %v6217 = vpop.f32.mrf.mxu0
  %v6218 = vpop.f32.mrf.mxu0
  %6219 = vdwg.mxu0
  %6220 = vmatprep.subr.bf16.mxu0 %v3777
  %6221 = vmatpush1.bf16.msra.mxu0 %v3776
  %6222 = vmatprep.subr.bf16.mxu0 %v3769
  %6223 = vmatpush1.bf16.msra.mxu0 %v3768
  %6224 = vmatprep.subr.bf16.mxu0 %v3761
  %6225 = vmatpush1.bf16.msra.mxu0 %v3760
  %6226 = vmatprep.subr.bf16.mxu0 %v3753
  %6227 = vmatpush1.bf16.msra.mxu0 %v3752
  %6228 = vmatprep.subr.bf16.mxu0 %v3745
  %6229 = vmatpush1.bf16.msra.mxu0 %v3744
  %6230 = vmatprep.subr.bf16.mxu0 %v3737
  %6231 = vmatpush1.bf16.msra.mxu0 %v3736
  %6232 = vmatprep.subr.bf16.mxu0 %v3729
  %6233 = vmatpush1.bf16.msra.mxu0 %v3728
  %6234 = vmatprep.subr.bf16.mxu0 %v3721
  %6235 = vmatpush1.bf16.msra.mxu0 %v3720
  %6236 = vmatprep.subr.bf16.mxu0 %v3841
  %6237 = vmatpush2.bf16.msra.mxu0 %v3840
  %6238 = vmatprep.subr.bf16.mxu0 %v3833
  %6239 = vmatpush2.bf16.msra.mxu0 %v3832
  %6240 = vmatprep.subr.bf16.mxu0 %v3825
  %6241 = vmatpush2.bf16.msra.mxu0 %v3824
  %6242 = vmatprep.subr.bf16.mxu0 %v3817
  %6243 = vmatpush2.bf16.msra.mxu0 %v3816
  %6244 = vmatprep.subr.bf16.mxu0 %v3809
  %6245 = vmatpush2.bf16.msra.mxu0 %v3808
  %6246 = vmatprep.subr.bf16.mxu0 %v3801
  %6247 = vmatpush2.bf16.msra.mxu0 %v3800
  %6248 = vmatprep.subr.bf16.mxu0 %v3793
  %6249 = vmatpush2.bf16.msra.mxu0 %v3792
  %6250 = vmatprep.subr.bf16.mxu0 %v3785
  %6251 = vmatpush2.bf16.msra.mxu0 %v3784
  %6252 = vmatprep.mubr.bf16.mxu0 %v970
  %6253 = vmatmul.mubr.bf16.gmra.mxu0 %v969
  %v6254 = vpop.f32.mrf.mxu0
  %v6255 = vadd.f32 %v6214, %v6254
  %v6256 = vpop.f32.mrf.mxu0
  %v6257 = vadd.f32 %v6216, %v6256
  %v6258 = vpop.f32.mrf.mxu0
  %v6259 = vpop.f32.mrf.mxu0
  %6260 = vdwg.mxu0
  %6261 = vmatprep.subr.bf16.mxu0 %v3905
  %6262 = vmatpush1.bf16.msra.mxu0 %v3904
  %6263 = vmatprep.subr.bf16.mxu0 %v3897
  %6264 = vmatpush1.bf16.msra.mxu0 %v3896
  %6265 = vmatprep.subr.bf16.mxu0 %v3889
  %6266 = vmatpush1.bf16.msra.mxu0 %v3888
  %6267 = vmatprep.subr.bf16.mxu0 %v3881
  %6268 = vmatpush1.bf16.msra.mxu0 %v3880
  %6269 = vmatprep.subr.bf16.mxu0 %v3873
  %6270 = vmatpush1.bf16.msra.mxu0 %v3872
  %6271 = vmatprep.subr.bf16.mxu0 %v3865
  %6272 = vmatpush1.bf16.msra.mxu0 %v3864
  %6273 = vmatprep.subr.bf16.mxu0 %v3857
  %6274 = vmatpush1.bf16.msra.mxu0 %v3856
  %6275 = vmatprep.subr.bf16.mxu0 %v3849
  %6276 = vmatpush1.bf16.msra.mxu0 %v3848
  %6277 = vmatprep.subr.bf16.mxu0 %v3969
  %6278 = vmatpush2.bf16.msra.mxu0 %v3968
  %6279 = vmatprep.subr.bf16.mxu0 %v3961
  %6280 = vmatpush2.bf16.msra.mxu0 %v3960
  %6281 = vmatprep.subr.bf16.mxu0 %v3953
  %6282 = vmatpush2.bf16.msra.mxu0 %v3952
  %6283 = vmatprep.subr.bf16.mxu0 %v3945
  %6284 = vmatpush2.bf16.msra.mxu0 %v3944
  %6285 = vmatprep.subr.bf16.mxu0 %v3937
  %6286 = vmatpush2.bf16.msra.mxu0 %v3936
  %6287 = vmatprep.subr.bf16.mxu0 %v3929
  %6288 = vmatpush2.bf16.msra.mxu0 %v3928
  %6289 = vmatprep.subr.bf16.mxu0 %v3921
  %6290 = vmatpush2.bf16.msra.mxu0 %v3920
  %6291 = vmatprep.subr.bf16.mxu0 %v3913
  %6292 = vmatpush2.bf16.msra.mxu0 %v3912
  %6293 = vmatprep.mubr.bf16.mxu0 %v972
  %6294 = vmatmul.mubr.bf16.gmra.mxu0 %v971
  %v6295 = vpop.f32.mrf.mxu0
  %v6296 = vadd.f32 %v6255, %v6295
  %v6297 = vpop.f32.mrf.mxu0
  %v6298 = vadd.f32 %v6257, %v6297
  %v6299 = vpop.f32.mrf.mxu0
  %v6300 = vpop.f32.mrf.mxu0
  %6301 = vdwg.mxu0
  %6302 = vmatprep.subr.bf16.mxu0 %v4033
  %6303 = vmatpush1.bf16.msra.mxu0 %v4032
  %6304 = vmatprep.subr.bf16.mxu0 %v4025
  %6305 = vmatpush1.bf16.msra.mxu0 %v4024
  %6306 = vmatprep.subr.bf16.mxu0 %v4017
  %6307 = vmatpush1.bf16.msra.mxu0 %v4016
  %6308 = vmatprep.subr.bf16.mxu0 %v4009
  %6309 = vmatpush1.bf16.msra.mxu0 %v4008
  %6310 = vmatprep.subr.bf16.mxu0 %v4001
  %6311 = vmatpush1.bf16.msra.mxu0 %v4000
  %6312 = vmatprep.subr.bf16.mxu0 %v3993
  %6313 = vmatpush1.bf16.msra.mxu0 %v3992
  %6314 = vmatprep.subr.bf16.mxu0 %v3985
  %6315 = vmatpush1.bf16.msra.mxu0 %v3984
  %6316 = vmatprep.subr.bf16.mxu0 %v3977
  %6317 = vmatpush1.bf16.msra.mxu0 %v3976
  %6318 = vmatprep.subr.bf16.mxu0 %v4097
  %6319 = vmatpush2.bf16.msra.mxu0 %v4096
  %6320 = vmatprep.subr.bf16.mxu0 %v4089
  %6321 = vmatpush2.bf16.msra.mxu0 %v4088
  %6322 = vmatprep.subr.bf16.mxu0 %v4081
  %6323 = vmatpush2.bf16.msra.mxu0 %v4080
  %6324 = vmatprep.subr.bf16.mxu0 %v4073
  %6325 = vmatpush2.bf16.msra.mxu0 %v4072
  %6326 = vmatprep.subr.bf16.mxu0 %v4065
  %6327 = vmatpush2.bf16.msra.mxu0 %v4064
  %6328 = vmatprep.subr.bf16.mxu0 %v4057
  %6329 = vmatpush2.bf16.msra.mxu0 %v4056
  %6330 = vmatprep.subr.bf16.mxu0 %v4049
  %6331 = vmatpush2.bf16.msra.mxu0 %v4048
  %6332 = vmatprep.subr.bf16.mxu0 %v4041
  %6333 = vmatpush2.bf16.msra.mxu0 %v4040
  %6334 = vmatprep.mubr.bf16.mxu0 %v974
  %6335 = vmatmul.mubr.bf16.gmra.mxu0 %v973
  %v6336 = vpop.f32.mrf.mxu0
  %v6337 = vadd.f32 %v6296, %v6336
  %v6338 = vpop.f32.mrf.mxu0
  %v6339 = vadd.f32 %v6298, %v6338
  %v6340 = vpop.f32.mrf.mxu0
  %v6341 = vpop.f32.mrf.mxu0
  %6342 = vdwg.mxu0
  %6343 = vmatprep.subr.bf16.mxu0 %v4161
  %6344 = vmatpush1.bf16.msra.mxu0 %v4160
  %6345 = vmatprep.subr.bf16.mxu0 %v4153
  %6346 = vmatpush1.bf16.msra.mxu0 %v4152
  %6347 = vmatprep.subr.bf16.mxu0 %v4145
  %6348 = vmatpush1.bf16.msra.mxu0 %v4144
  %6349 = vmatprep.subr.bf16.mxu0 %v4137
  %6350 = vmatpush1.bf16.msra.mxu0 %v4136
  %6351 = vmatprep.subr.bf16.mxu0 %v4129
  %6352 = vmatpush1.bf16.msra.mxu0 %v4128
  %6353 = vmatprep.subr.bf16.mxu0 %v4121
  %6354 = vmatpush1.bf16.msra.mxu0 %v4120
  %6355 = vmatprep.subr.bf16.mxu0 %v4113
  %6356 = vmatpush1.bf16.msra.mxu0 %v4112
  %6357 = vmatprep.subr.bf16.mxu0 %v4105
  %6358 = vmatpush1.bf16.msra.mxu0 %v4104
  %6359 = vmatprep.subr.bf16.mxu0 %v4225
  %6360 = vmatpush2.bf16.msra.mxu0 %v4224
  %6361 = vmatprep.subr.bf16.mxu0 %v4217
  %6362 = vmatpush2.bf16.msra.mxu0 %v4216
  %6363 = vmatprep.subr.bf16.mxu0 %v4209
  %6364 = vmatpush2.bf16.msra.mxu0 %v4208
  %6365 = vmatprep.subr.bf16.mxu0 %v4201
  %6366 = vmatpush2.bf16.msra.mxu0 %v4200
  %6367 = vmatprep.subr.bf16.mxu0 %v4193
  %6368 = vmatpush2.bf16.msra.mxu0 %v4192
  %6369 = vmatprep.subr.bf16.mxu0 %v4185
  %6370 = vmatpush2.bf16.msra.mxu0 %v4184
  %6371 = vmatprep.subr.bf16.mxu0 %v4177
  %6372 = vmatpush2.bf16.msra.mxu0 %v4176
  %6373 = vmatprep.subr.bf16.mxu0 %v4169
  %6374 = vmatpush2.bf16.msra.mxu0 %v4168
  %6375 = vmatprep.mubr.bf16.mxu0 %v976
  %6376 = vmatmul.mubr.bf16.gmra.mxu0 %v975
  %v6377 = vpop.f32.mrf.mxu0
  %v6378 = vadd.f32 %v6337, %v6377
  %v6379 = vpop.f32.mrf.mxu0
  %v6380 = vadd.f32 %v6339, %v6379
  %v6381 = vpop.f32.mrf.mxu0
  %v6382 = vpop.f32.mrf.mxu0
  %6383 = vdwg.mxu0
  %6384 = vmatprep.subr.bf16.mxu0 %v4289
  %6385 = vmatpush1.bf16.msra.mxu0 %v4288
  %6386 = vmatprep.subr.bf16.mxu0 %v4281
  %6387 = vmatpush1.bf16.msra.mxu0 %v4280
  %6388 = vmatprep.subr.bf16.mxu0 %v4273
  %6389 = vmatpush1.bf16.msra.mxu0 %v4272
  %6390 = vmatprep.subr.bf16.mxu0 %v4265
  %6391 = vmatpush1.bf16.msra.mxu0 %v4264
  %6392 = vmatprep.subr.bf16.mxu0 %v4257
  %6393 = vmatpush1.bf16.msra.mxu0 %v4256
  %6394 = vmatprep.subr.bf16.mxu0 %v4249
  %6395 = vmatpush1.bf16.msra.mxu0 %v4248
  %6396 = vmatprep.subr.bf16.mxu0 %v4241
  %6397 = vmatpush1.bf16.msra.mxu0 %v4240
  %6398 = vmatprep.subr.bf16.mxu0 %v4233
  %6399 = vmatpush1.bf16.msra.mxu0 %v4232
  %6400 = vmatprep.subr.bf16.mxu0 %v4353
  %6401 = vmatpush2.bf16.msra.mxu0 %v4352
  %6402 = vmatprep.subr.bf16.mxu0 %v4345
  %6403 = vmatpush2.bf16.msra.mxu0 %v4344
  %6404 = vmatprep.subr.bf16.mxu0 %v4337
  %6405 = vmatpush2.bf16.msra.mxu0 %v4336
  %6406 = vmatprep.subr.bf16.mxu0 %v4329
  %6407 = vmatpush2.bf16.msra.mxu0 %v4328
  %6408 = vmatprep.subr.bf16.mxu0 %v4321
  %6409 = vmatpush2.bf16.msra.mxu0 %v4320
  %6410 = vmatprep.subr.bf16.mxu0 %v4313
  %6411 = vmatpush2.bf16.msra.mxu0 %v4312
  %6412 = vmatprep.subr.bf16.mxu0 %v4305
  %6413 = vmatpush2.bf16.msra.mxu0 %v4304
  %6414 = vmatprep.subr.bf16.mxu0 %v4297
  %6415 = vmatpush2.bf16.msra.mxu0 %v4296
  %6416 = vmatprep.mubr.bf16.mxu0 %v978
  %6417 = vmatmul.mubr.bf16.gmra.mxu0 %v977
  %v6418 = vpop.f32.mrf.mxu0
  %v6419 = vadd.f32 %v6378, %v6418
  %v6420 = vpop.f32.mrf.mxu0
  %v6421 = vadd.f32 %v6380, %v6420
  %v6422 = vpop.f32.mrf.mxu0
  %v6423 = vpop.f32.mrf.mxu0
  %6424 = vdwg.mxu0
  %6425 = vmatprep.subr.bf16.mxu0 %v4417
  %6426 = vmatpush1.bf16.msra.mxu0 %v4416
  %6427 = vmatprep.subr.bf16.mxu0 %v4409
  %6428 = vmatpush1.bf16.msra.mxu0 %v4408
  %6429 = vmatprep.subr.bf16.mxu0 %v4401
  %6430 = vmatpush1.bf16.msra.mxu0 %v4400
  %6431 = vmatprep.subr.bf16.mxu0 %v4393
  %6432 = vmatpush1.bf16.msra.mxu0 %v4392
  %6433 = vmatprep.subr.bf16.mxu0 %v4385
  %6434 = vmatpush1.bf16.msra.mxu0 %v4384
  %6435 = vmatprep.subr.bf16.mxu0 %v4377
  %6436 = vmatpush1.bf16.msra.mxu0 %v4376
  %6437 = vmatprep.subr.bf16.mxu0 %v4369
  %6438 = vmatpush1.bf16.msra.mxu0 %v4368
  %6439 = vmatprep.subr.bf16.mxu0 %v4361
  %6440 = vmatpush1.bf16.msra.mxu0 %v4360
  %6441 = vmatprep.subr.bf16.mxu0 0
  %6442 = vmatpush2.bf16.msra.mxu0 0
  %6443 = vmatprep.subr.bf16.mxu0 0
  %6444 = vmatpush2.bf16.msra.mxu0 0
  %6445 = vmatprep.subr.bf16.mxu0 0
  %6446 = vmatpush2.bf16.msra.mxu0 0
  %6447 = vmatprep.subr.bf16.mxu0 0
  %6448 = vmatpush2.bf16.msra.mxu0 0
  %6449 = vmatprep.subr.bf16.mxu0 %v4449
  %6450 = vmatpush2.bf16.msra.mxu0 %v4448
  %6451 = vmatprep.subr.bf16.mxu0 %v4441
  %6452 = vmatpush2.bf16.msra.mxu0 %v4440
  %6453 = vmatprep.subr.bf16.mxu0 %v4433
  %6454 = vmatpush2.bf16.msra.mxu0 %v4432
  %6455 = vmatprep.subr.bf16.mxu0 %v4425
  %6456 = vmatpush2.bf16.msra.mxu0 %v4424
  %6457 = vmatprep.mubr.bf16.mxu0 %v5316
  %6458 = vmatmul.mubr.bf16.gmra.mxu0 %v979
  %v6459 = vpop.f32.mrf.mxu0
  %v6460 = vadd.f32 %v6419, %v6459
  %v6461 = vpop.f32.mrf.mxu0
  %v6462 = vadd.f32 %v6421, %v6461
  %v6463 = vpop.f32.mrf.mxu0
  %v6464 = vpop.f32.mrf.mxu0
  %6465 = vdwg.mxu0
  %v6466 = vmax.f32 %v5599, 0.0
  %v6467 = vmax.f32 %v5601, 0.0
  %v6468 = vmax.f32 %v5886, 0.0
  %v6469 = vmax.f32 %v5888, 0.0
  %v6470 = vmax.f32 %v6173, 0.0
  %v6471 = vmax.f32 %v6175, 0.0
  %v6472 = vmax.f32 %v6460, 0.0
  %v6473 = vmax.f32 %v6462, 0.0
  %v6474 = vpack.c.bf16 %v6466, %v6466
  %v6475 = vpack.c.bf16 %v6467, %v6467
  %v6476 = vpack.c.bf16 %v6468, %v6468
  %v6477 = vpack.c.bf16 %v6469, %v6469
  %v6478 = vpack.c.bf16 %v6470, %v6470
  %v6479 = vpack.c.bf16 %v6471, %v6471
  %v6480 = vpack.c.bf16 %v6472, %v6472
  %v6481 = vpack.c.bf16 %v6473, %v6473
  %v6482 = vld [vmem:[%s3] sm:$0xff]
  %v6483 = vld [vmem:[%s3 + $0x8] sm:$0xff]
  %v6484 = vld [vmem:[%s3 + $0x10] sm:$0xff]
  %v6485 = vld [vmem:[%s3 + $0x18] sm:$0xff]
  %v6486 = vld [vmem:[%s3 + $0x20] sm:$0xff]
  %v6487 = vld [vmem:[%s3 + $0x28] sm:$0xff]
  %v6488 = vld [vmem:[%s3 + $0x30] sm:$0xff]
  %v6489 = vld [vmem:[%s3 + $0x38] sm:$0xff]
  %v6490 = vld [vmem:[%s3 + $0x40] sm:$0xff]
  %v6491 = vld [vmem:[%s3 + $0x48] sm:$0xff]
  %v6492 = vld [vmem:[%s3 + $0x50] sm:$0xff]
  %v6493 = vld [vmem:[%s3 + $0x58] sm:$0xff]
  %v6494 = vld [vmem:[%s3 + $0x60] sm:$0xff]
  %v6495 = vld [vmem:[%s3 + $0x68] sm:$0xff]
  %v6496 = vld [vmem:[%s3 + $0x70] sm:$0xff]
  %v6497 = vld [vmem:[%s3 + $0x78] sm:$0xff]
  %v6498 = vld [vmem:[%s3 + $0x80] sm:$0xff]
  %v6499 = vld [vmem:[%s3 + $0x88] sm:$0xff]
  %v6500 = vld [vmem:[%s3 + $0x90] sm:$0xff]
  %v6501 = vld [vmem:[%s3 + $0x98] sm:$0xff]
  %v6502 = vld [vmem:[%s3 + $0xa0] sm:$0xff]
  %v6503 = vld [vmem:[%s3 + $0xa8] sm:$0xff]
  %v6504 = vld [vmem:[%s3 + $0xb0] sm:$0xff]
  %v6505 = vld [vmem:[%s3 + $0xb8] sm:$0xff]
  %v6506 = vld [vmem:[%s3 + $0xc0] sm:$0xff]
  %v6507 = vld [vmem:[%s3 + $0xc8] sm:$0xff]
  %v6508 = vld [vmem:[%s3 + $0xd0] sm:$0xff]
  %v6509 = vld [vmem:[%s3 + $0xd8] sm:$0xff]
  %v6510 = vld [vmem:[%s3 + $0xe0] sm:$0xff]
  %v6511 = vld [vmem:[%s3 + $0xe8] sm:$0xff]
  %v6512 = vld [vmem:[%s3 + $0xf0] sm:$0xff]
  %v6513 = vld [vmem:[%s3 + $0xf8] sm:$0xff]
  %v6514 = vld [vmem:[%s3 + $0x100] sm:$0xff]
  %v6515 = vld [vmem:[%s3 + $0x108] sm:$0xff]
  %v6516 = vld [vmem:[%s3 + $0x110] sm:$0xff]
  %v6517 = vld [vmem:[%s3 + $0x118] sm:$0xff]
  %v6518 = vld [vmem:[%s3 + $0x120] sm:$0xff]
  %v6519 = vld [vmem:[%s3 + $0x128] sm:$0xff]
  %v6520 = vld [vmem:[%s3 + $0x130] sm:$0xff]
  %v6521 = vld [vmem:[%s3 + $0x138] sm:$0xff]
  %v6522 = vld [vmem:[%s3 + $0x140] sm:$0xff]
  %v6523 = vld [vmem:[%s3 + $0x148] sm:$0xff]
  %v6524 = vld [vmem:[%s3 + $0x150] sm:$0xff]
  %v6525 = vld [vmem:[%s3 + $0x158] sm:$0xff]
  %v6526 = vld [vmem:[%s3 + $0x160] sm:$0xff]
  %v6527 = vld [vmem:[%s3 + $0x168] sm:$0xff]
  %v6528 = vld [vmem:[%s3 + $0x170] sm:$0xff]
  %v6529 = vld [vmem:[%s3 + $0x178] sm:$0xff]
  %v6530 = vld [vmem:[%s3 + $0x180] sm:$0xff]
  %v6531 = vld [vmem:[%s3 + $0x188] sm:$0xff]
  %v6532 = vld [vmem:[%s3 + $0x190] sm:$0xff]
  %v6533 = vld [vmem:[%s3 + $0x198] sm:$0xff]
  %v6534 = vld [vmem:[%s3 + $0x1a0] sm:$0xff]
  %v6535 = vld [vmem:[%s3 + $0x1a8] sm:$0xff]
  %v6536 = vld [vmem:[%s3 + $0x1b0] sm:$0xff]
  %v6537 = vld [vmem:[%s3 + $0x1b8] sm:$0xff]
  %v6538 = vld [vmem:[%s3 + $0x1c0] sm:$0xff]
  %v6539 = vld [vmem:[%s3 + $0x1c8] sm:$0xff]
  %v6540 = vld [vmem:[%s3 + $0x1d0] sm:$0xff]
  %v6541 = vld [vmem:[%s3 + $0x1d8] sm:$0xff]
  %v6542 = vld [vmem:[%s3 + $0x1e0] sm:$0xff]
  %v6543 = vld [vmem:[%s3 + $0x1e8] sm:$0xff]
  %v6544 = vld [vmem:[%s3 + $0x1f0] sm:$0xff]
  %v6545 = vld [vmem:[%s3 + $0x1f8] sm:$0xff]
  %v6546 = vld [vmem:[%s3 + $0x200] sm:$0xff]
  %v6547 = vld [vmem:[%s3 + $0x208] sm:$0xff]
  %v6548 = vld [vmem:[%s3 + $0x210] sm:$0xff]
  %v6549 = vld [vmem:[%s3 + $0x218] sm:$0xff]
  %v6550 = vld [vmem:[%s3 + $0x220] sm:$0xff]
  %v6551 = vld [vmem:[%s3 + $0x228] sm:$0xff]
  %v6552 = vld [vmem:[%s3 + $0x230] sm:$0xff]
  %v6553 = vld [vmem:[%s3 + $0x238] sm:$0xff]
  %v6554 = vld [vmem:[%s3 + $0x240] sm:$0xff]
  %v6555 = vld [vmem:[%s3 + $0x248] sm:$0xff]
  %v6556 = vld [vmem:[%s3 + $0x250] sm:$0xff]
  %v6557 = vld [vmem:[%s3 + $0x258] sm:$0xff]
  %v6558 = vld [vmem:[%s3 + $0x260] sm:$0xff]
  %v6559 = vld [vmem:[%s3 + $0x268] sm:$0xff]
  %v6560 = vld [vmem:[%s3 + $0x270] sm:$0xff]
  %v6561 = vld [vmem:[%s3 + $0x278] sm:$0xff]
  %v6562 = vld [vmem:[%s3 + $0x280] sm:$0xff]
  %v6563 = vld [vmem:[%s3 + $0x288] sm:$0xff]
  %v6564 = vld [vmem:[%s3 + $0x290] sm:$0xff]
  %v6565 = vld [vmem:[%s3 + $0x298] sm:$0xff]
  %v6566 = vld [vmem:[%s3 + $0x2a0] sm:$0xff]
  %v6567 = vld [vmem:[%s3 + $0x2a8] sm:$0xff]
  %v6568 = vld [vmem:[%s3 + $0x2b0] sm:$0xff]
  %v6569 = vld [vmem:[%s3 + $0x2b8] sm:$0xff]
  %v6570 = vld [vmem:[%s3 + $0x2c0] sm:$0xff]
  %v6571 = vld [vmem:[%s3 + $0x2c8] sm:$0xff]
  %v6572 = vld [vmem:[%s3 + $0x2d0] sm:$0xff]
  %v6573 = vld [vmem:[%s3 + $0x2d8] sm:$0xff]
  %v6574 = vld [vmem:[%s3 + $0x2e0] sm:$0xff]
  %v6575 = vld [vmem:[%s3 + $0x2e8] sm:$0xff]
  %v6576 = vld [vmem:[%s3 + $0x2f0] sm:$0xff]
  %v6577 = vld [vmem:[%s3 + $0x2f8] sm:$0xff]
  %v6578 = vld [vmem:[%s3 + $0x300] sm:$0xff]
  %v6579 = vld [vmem:[%s3 + $0x308] sm:$0xff]
  %v6580 = vld [vmem:[%s3 + $0x310] sm:$0xff]
  %v6581 = vld [vmem:[%s3 + $0x318] sm:$0xff]
  %v6582 = vld [vmem:[%s3 + $0x320] sm:$0xff]
  %v6583 = vld [vmem:[%s3 + $0x328] sm:$0xff]
  %v6584 = vld [vmem:[%s3 + $0x330] sm:$0xff]
  %v6585 = vld [vmem:[%s3 + $0x338] sm:$0xff]
  %v6586 = vld [vmem:[%s3 + $0x340] sm:$0xff]
  %v6587 = vld [vmem:[%s3 + $0x348] sm:$0xff]
  %v6588 = vld [vmem:[%s3 + $0x350] sm:$0xff]
  %v6589 = vld [vmem:[%s3 + $0x358] sm:$0xff]
  %v6590 = vld [vmem:[%s3 + $0x360] sm:$0xff]
  %v6591 = vld [vmem:[%s3 + $0x368] sm:$0xff]
  %v6592 = vld [vmem:[%s3 + $0x370] sm:$0xff]
  %v6593 = vld [vmem:[%s3 + $0x378] sm:$0xff]
  %v6594 = vld [vmem:[%s3 + $0x380] sm:$0xff]
  %v6595 = vld [vmem:[%s3 + $0x388] sm:$0xff]
  %v6596 = vld [vmem:[%s3 + $0x390] sm:$0xff]
  %v6597 = vld [vmem:[%s3 + $0x398] sm:$0xff]
  %v6598 = vld [vmem:[%s3 + $0x3a0] sm:$0xff]
  %v6599 = vld [vmem:[%s3 + $0x3a8] sm:$0xff]
  %v6600 = vld [vmem:[%s3 + $0x3b0] sm:$0xff]
  %v6601 = vld [vmem:[%s3 + $0x3b8] sm:$0xff]
  %v6602 = vld [vmem:[%s3 + $0x3c0] sm:$0xff]
  %v6603 = vld [vmem:[%s3 + $0x3c8] sm:$0xff]
  %v6604 = vld [vmem:[%s3 + $0x3d0] sm:$0xff]
  %v6605 = vld [vmem:[%s3 + $0x3d8] sm:$0xff]
  %v6606 = vld [vmem:[%s3 + $0x3e0] sm:$0xff]
  %v6607 = vld [vmem:[%s3 + $0x3e8] sm:$0xff]
  %v6608 = vld [vmem:[%s3 + $0x3f0] sm:$0xff]
  %v6609 = vld [vmem:[%s3 + $0x3f8] sm:$0xff]
  %v6610 = vld [vmem:[%s3 + $0x400] sm:$0xff]
  %v6611 = vld [vmem:[%s3 + $0x408] sm:$0xff]
  %v6612 = vld [vmem:[%s3 + $0x410] sm:$0xff]
  %v6613 = vld [vmem:[%s3 + $0x418] sm:$0xff]
  %v6614 = vld [vmem:[%s3 + $0x420] sm:$0xff]
  %v6615 = vld [vmem:[%s3 + $0x428] sm:$0xff]
  %v6616 = vld [vmem:[%s3 + $0x430] sm:$0xff]
  %v6617 = vld [vmem:[%s3 + $0x438] sm:$0xff]
  %v6618 = vld [vmem:[%s3 + $0x440] sm:$0xff]
  %v6619 = vld [vmem:[%s3 + $0x448] sm:$0xff]
  %v6620 = vld [vmem:[%s3 + $0x450] sm:$0xff]
  %v6621 = vld [vmem:[%s3 + $0x458] sm:$0xff]
  %v6622 = vld [vmem:[%s3 + $0x460] sm:$0xff]
  %v6623 = vld [vmem:[%s3 + $0x468] sm:$0xff]
  %v6624 = vld [vmem:[%s3 + $0x470] sm:$0xff]
  %v6625 = vld [vmem:[%s3 + $0x478] sm:$0xff]
  %v6626 = vld [vmem:[%s3 + $0x480] sm:$0xff]
  %v6627 = vld [vmem:[%s3 + $0x488] sm:$0xff]
  %v6628 = vld [vmem:[%s3 + $0x490] sm:$0xff]
  %v6629 = vld [vmem:[%s3 + $0x498] sm:$0xff]
  %v6630 = vld [vmem:[%s3 + $0x4a0] sm:$0xff]
  %v6631 = vld [vmem:[%s3 + $0x4a8] sm:$0xff]
  %v6632 = vld [vmem:[%s3 + $0x4b0] sm:$0xff]
  %v6633 = vld [vmem:[%s3 + $0x4b8] sm:$0xff]
  %v6634 = vld [vmem:[%s3 + $0x4c0] sm:$0xff]
  %v6635 = vld [vmem:[%s3 + $0x4c8] sm:$0xff]
  %v6636 = vld [vmem:[%s3 + $0x4d0] sm:$0xff]
  %v6637 = vld [vmem:[%s3 + $0x4d8] sm:$0xff]
  %v6638 = vld [vmem:[%s3 + $0x4e0] sm:$0xff]
  %v6639 = vld [vmem:[%s3 + $0x4e8] sm:$0xff]
  %v6640 = vld [vmem:[%s3 + $0x4f0] sm:$0xff]
  %v6641 = vld [vmem:[%s3 + $0x4f8] sm:$0xff]
  %v6642 = vld [vmem:[%s3 + $0x500] sm:$0xff]
  %v6643 = vld [vmem:[%s3 + $0x508] sm:$0xff]
  %v6644 = vld [vmem:[%s3 + $0x510] sm:$0xff]
  %v6645 = vld [vmem:[%s3 + $0x518] sm:$0xff]
  %v6646 = vld [vmem:[%s3 + $0x520] sm:$0xff]
  %v6647 = vld [vmem:[%s3 + $0x528] sm:$0xff]
  %v6648 = vld [vmem:[%s3 + $0x530] sm:$0xff]
  %v6649 = vld [vmem:[%s3 + $0x538] sm:$0xff]
  %v6650 = vld [vmem:[%s3 + $0x540] sm:$0xff]
  %v6651 = vld [vmem:[%s3 + $0x548] sm:$0xff]
  %v6652 = vld [vmem:[%s3 + $0x550] sm:$0xff]
  %v6653 = vld [vmem:[%s3 + $0x558] sm:$0xff]
  %v6654 = vld [vmem:[%s3 + $0x560] sm:$0xff]
  %v6655 = vld [vmem:[%s3 + $0x568] sm:$0xff]
  %v6656 = vld [vmem:[%s3 + $0x570] sm:$0xff]
  %v6657 = vld [vmem:[%s3 + $0x578] sm:$0xff]
  %v6658 = vld [vmem:[%s3 + $0x580] sm:$0xff]
  %v6659 = vld [vmem:[%s3 + $0x588] sm:$0xff]
  %v6660 = vld [vmem:[%s3 + $0x590] sm:$0xff]
  %v6661 = vld [vmem:[%s3 + $0x598] sm:$0xff]
  %v6662 = vld [vmem:[%s3 + $0x5a0] sm:$0xff]
  %v6663 = vld [vmem:[%s3 + $0x5a8] sm:$0xff]
  %v6664 = vld [vmem:[%s3 + $0x5b0] sm:$0xff]
  %v6665 = vld [vmem:[%s3 + $0x5b8] sm:$0xff]
  %v6666 = vld [vmem:[%s3 + $0x5c0] sm:$0xff]
  %v6667 = vld [vmem:[%s3 + $0x5c8] sm:$0xff]
  %v6668 = vld [vmem:[%s3 + $0x5d0] sm:$0xff]
  %v6669 = vld [vmem:[%s3 + $0x5d8] sm:$0xff]
  %v6670 = vld [vmem:[%s3 + $0x5e0] sm:$0xff]
  %v6671 = vld [vmem:[%s3 + $0x5e8] sm:$0xff]
  %v6672 = vld [vmem:[%s3 + $0x5f0] sm:$0xff]
  %v6673 = vld [vmem:[%s3 + $0x5f8] sm:$0xff]
  %v6674 = vld [vmem:[%s3 + $0x600] sm:$0xff]
  %v6675 = vld [vmem:[%s3 + $0x608] sm:$0xff]
  %v6676 = vld [vmem:[%s3 + $0x610] sm:$0xff]
  %v6677 = vld [vmem:[%s3 + $0x618] sm:$0xff]
  %v6678 = vld [vmem:[%s3 + $0x620] sm:$0xff]
  %v6679 = vld [vmem:[%s3 + $0x628] sm:$0xff]
  %v6680 = vld [vmem:[%s3 + $0x630] sm:$0xff]
  %v6681 = vld [vmem:[%s3 + $0x638] sm:$0xff]
  %v6682 = vld [vmem:[%s3 + $0x640] sm:$0xff]
  %v6683 = vld [vmem:[%s3 + $0x648] sm:$0xff]
  %v6684 = vld [vmem:[%s3 + $0x650] sm:$0xff]
  %v6685 = vld [vmem:[%s3 + $0x658] sm:$0xff]
  %v6686 = vld [vmem:[%s3 + $0x660] sm:$0xff]
  %v6687 = vld [vmem:[%s3 + $0x668] sm:$0xff]
  %v6688 = vld [vmem:[%s3 + $0x670] sm:$0xff]
  %v6689 = vld [vmem:[%s3 + $0x678] sm:$0xff]
  %v6690 = vld [vmem:[%s3 + $0x680] sm:$0xff]
  %v6691 = vld [vmem:[%s3 + $0x688] sm:$0xff]
  %v6692 = vld [vmem:[%s3 + $0x690] sm:$0xff]
  %v6693 = vld [vmem:[%s3 + $0x698] sm:$0xff]
  %v6694 = vld [vmem:[%s3 + $0x6a0] sm:$0xff]
  %v6695 = vld [vmem:[%s3 + $0x6a8] sm:$0xff]
  %v6696 = vld [vmem:[%s3 + $0x6b0] sm:$0xff]
  %v6697 = vld [vmem:[%s3 + $0x6b8] sm:$0xff]
  %v6698 = vld [vmem:[%s3 + $0x6c0] sm:$0xff]
  %v6699 = vld [vmem:[%s3 + $0x6c8] sm:$0xff]
  %v6700 = vld [vmem:[%s3 + $0x6d0] sm:$0xff]
  %v6701 = vld [vmem:[%s3 + $0x6d8] sm:$0xff]
  %v6702 = vld [vmem:[%s3 + $0x6e0] sm:$0xff]
  %v6703 = vld [vmem:[%s3 + $0x6e8] sm:$0xff]
  %v6704 = vld [vmem:[%s3 + $0x6f0] sm:$0xff]
  %v6705 = vld [vmem:[%s3 + $0x6f8] sm:$0xff]
  %v6706 = vld [vmem:[%s3 + $0x700] sm:$0xff]
  %v6707 = vld [vmem:[%s3 + $0x708] sm:$0xff]
  %v6708 = vld [vmem:[%s3 + $0x710] sm:$0xff]
  %v6709 = vld [vmem:[%s3 + $0x718] sm:$0xff]
  %v6710 = vld [vmem:[%s3 + $0x720] sm:$0xff]
  %v6711 = vld [vmem:[%s3 + $0x728] sm:$0xff]
  %v6712 = vld [vmem:[%s3 + $0x730] sm:$0xff]
  %v6713 = vld [vmem:[%s3 + $0x738] sm:$0xff]
  %v6714 = vld [vmem:[%s3 + $0x740] sm:$0xff]
  %v6715 = vld [vmem:[%s3 + $0x748] sm:$0xff]
  %v6716 = vld [vmem:[%s3 + $0x750] sm:$0xff]
  %v6717 = vld [vmem:[%s3 + $0x758] sm:$0xff]
  %v6718 = vld [vmem:[%s3 + $0x760] sm:$0xff]
  %v6719 = vld [vmem:[%s3 + $0x768] sm:$0xff]
  %v6720 = vld [vmem:[%s3 + $0x770] sm:$0xff]
  %v6721 = vld [vmem:[%s3 + $0x778] sm:$0xff]
  %v6722 = vld [vmem:[%s3 + $0x780] sm:$0xff]
  %v6723 = vld [vmem:[%s3 + $0x788] sm:$0xff]
  %v6724 = vld [vmem:[%s3 + $0x790] sm:$0xff]
  %v6725 = vld [vmem:[%s3 + $0x798] sm:$0xff]
  %v6726 = vld [vmem:[%s3 + $0x7a0] sm:$0xff]
  %v6727 = vld [vmem:[%s3 + $0x7a8] sm:$0xff]
  %v6728 = vld [vmem:[%s3 + $0x7b0] sm:$0xff]
  %v6729 = vld [vmem:[%s3 + $0x7b8] sm:$0xff]
  %v6730 = vld [vmem:[%s3 + $0x7c0] sm:$0xff]
  %v6731 = vld [vmem:[%s3 + $0x7c8] sm:$0xff]
  %v6732 = vld [vmem:[%s3 + $0x7d0] sm:$0xff]
  %v6733 = vld [vmem:[%s3 + $0x7d8] sm:$0xff]
  %v6734 = vld [vmem:[%s3 + $0x7e0] sm:$0xff]
  %v6735 = vld [vmem:[%s3 + $0x7e8] sm:$0xff]
  %v6736 = vld [vmem:[%s3 + $0x7f0] sm:$0xff]
  %v6737 = vld [vmem:[%s3 + $0x7f8] sm:$0xff]
  %v6738 = vld [vmem:[%s4] sm:$0xf]
  %v6740 = vlaneseq
  %v6741 = vshrl.u32 %v6740, 7
  %v6742 = vsub.s32 0, %v6741
  %v6743 = vrot.slane %v6738, %v6742
  %v6744 = vlaneseq
  %v6745 = vshrl.u32 %v6744, 7
  %v6746 = vsub.s32 1, %v6745
  %v6747 = vrot.slane %v6738, %v6746
  %v6748 = vlaneseq
  %v6749 = vshrl.u32 %v6748, 7
  %v6750 = vsub.s32 2, %v6749
  %v6751 = vrot.slane %v6738, %v6750
  %v6752 = vlaneseq
  %v6753 = vshrl.u32 %v6752, 7
  %v6754 = vsub.s32 3, %v6753
  %v6755 = vrot.slane %v6738, %v6754
  %v7016 = vunpack.c.l.b16 %v6482
  %v7017 = vunpack.c.h.b16 %v6482
  %v7018 = vunpack.c.l.b16 %v6483
  %v7019 = vunpack.c.h.b16 %v6483
  %v7020 = vunpack.c.l.b16 %v6484
  %v7021 = vunpack.c.h.b16 %v6484
  %v7022 = vunpack.c.l.b16 %v6485
  %v7023 = vunpack.c.h.b16 %v6485
  %v7024 = vunpack.c.l.b16 %v6486
  %v7025 = vunpack.c.h.b16 %v6486
  %v7026 = vunpack.c.l.b16 %v6487
  %v7027 = vunpack.c.h.b16 %v6487
  %v7028 = vunpack.c.l.b16 %v6488
  %v7029 = vunpack.c.h.b16 %v6488
  %v7030 = vunpack.c.l.b16 %v6489
  %v7031 = vunpack.c.h.b16 %v6489
  %v7032 = vunpack.c.l.b16 %v6490
  %v7033 = vunpack.c.h.b16 %v6490
  %v7034 = vunpack.c.l.b16 %v6491
  %v7035 = vunpack.c.h.b16 %v6491
  %v7036 = vunpack.c.l.b16 %v6492
  %v7037 = vunpack.c.h.b16 %v6492
  %v7038 = vunpack.c.l.b16 %v6493
  %v7039 = vunpack.c.h.b16 %v6493
  %v7040 = vunpack.c.l.b16 %v6494
  %v7041 = vunpack.c.h.b16 %v6494
  %v7042 = vunpack.c.l.b16 %v6495
  %v7043 = vunpack.c.h.b16 %v6495
  %v7044 = vunpack.c.l.b16 %v6496
  %v7045 = vunpack.c.h.b16 %v6496
  %v7046 = vunpack.c.l.b16 %v6497
  %v7047 = vunpack.c.h.b16 %v6497
  %v7048 = vunpack.c.l.b16 %v6498
  %v7049 = vunpack.c.h.b16 %v6498
  %v7050 = vunpack.c.l.b16 %v6499
  %v7051 = vunpack.c.h.b16 %v6499
  %v7052 = vunpack.c.l.b16 %v6500
  %v7053 = vunpack.c.h.b16 %v6500
  %v7054 = vunpack.c.l.b16 %v6501
  %v7055 = vunpack.c.h.b16 %v6501
  %v7056 = vunpack.c.l.b16 %v6502
  %v7057 = vunpack.c.h.b16 %v6502
  %v7058 = vunpack.c.l.b16 %v6503
  %v7059 = vunpack.c.h.b16 %v6503
  %v7060 = vunpack.c.l.b16 %v6504
  %v7061 = vunpack.c.h.b16 %v6504
  %v7062 = vunpack.c.l.b16 %v6505
  %v7063 = vunpack.c.h.b16 %v6505
  %v7064 = vunpack.c.l.b16 %v6506
  %v7065 = vunpack.c.h.b16 %v6506
  %v7066 = vunpack.c.l.b16 %v6507
  %v7067 = vunpack.c.h.b16 %v6507
  %v7068 = vunpack.c.l.b16 %v6508
  %v7069 = vunpack.c.h.b16 %v6508
  %v7070 = vunpack.c.l.b16 %v6509
  %v7071 = vunpack.c.h.b16 %v6509
  %v7072 = vunpack.c.l.b16 %v6510
  %v7073 = vunpack.c.h.b16 %v6510
  %v7074 = vunpack.c.l.b16 %v6511
  %v7075 = vunpack.c.h.b16 %v6511
  %v7076 = vunpack.c.l.b16 %v6512
  %v7077 = vunpack.c.h.b16 %v6512
  %v7078 = vunpack.c.l.b16 %v6513
  %v7079 = vunpack.c.h.b16 %v6513
  %v7080 = vunpack.c.l.b16 %v6514
  %v7081 = vunpack.c.h.b16 %v6514
  %v7082 = vunpack.c.l.b16 %v6515
  %v7083 = vunpack.c.h.b16 %v6515
  %v7084 = vunpack.c.l.b16 %v6516
  %v7085 = vunpack.c.h.b16 %v6516
  %v7086 = vunpack.c.l.b16 %v6517
  %v7087 = vunpack.c.h.b16 %v6517
  %v7088 = vunpack.c.l.b16 %v6518
  %v7089 = vunpack.c.h.b16 %v6518
  %v7090 = vunpack.c.l.b16 %v6519
  %v7091 = vunpack.c.h.b16 %v6519
  %v7092 = vunpack.c.l.b16 %v6520
  %v7093 = vunpack.c.h.b16 %v6520
  %v7094 = vunpack.c.l.b16 %v6521
  %v7095 = vunpack.c.h.b16 %v6521
  %v7096 = vunpack.c.l.b16 %v6522
  %v7097 = vunpack.c.h.b16 %v6522
  %v7098 = vunpack.c.l.b16 %v6523
  %v7099 = vunpack.c.h.b16 %v6523
  %v7100 = vunpack.c.l.b16 %v6524
  %v7101 = vunpack.c.h.b16 %v6524
  %v7102 = vunpack.c.l.b16 %v6525
  %v7103 = vunpack.c.h.b16 %v6525
  %v7104 = vunpack.c.l.b16 %v6526
  %v7105 = vunpack.c.h.b16 %v6526
  %v7106 = vunpack.c.l.b16 %v6527
  %v7107 = vunpack.c.h.b16 %v6527
  %v7108 = vunpack.c.l.b16 %v6528
  %v7109 = vunpack.c.h.b16 %v6528
  %v7110 = vunpack.c.l.b16 %v6529
  %v7111 = vunpack.c.h.b16 %v6529
  %v7112 = vunpack.c.l.b16 %v6530
  %v7113 = vunpack.c.h.b16 %v6530
  %v7114 = vunpack.c.l.b16 %v6531
  %v7115 = vunpack.c.h.b16 %v6531
  %v7116 = vunpack.c.l.b16 %v6532
  %v7117 = vunpack.c.h.b16 %v6532
  %v7118 = vunpack.c.l.b16 %v6533
  %v7119 = vunpack.c.h.b16 %v6533
  %v7120 = vunpack.c.l.b16 %v6534
  %v7121 = vunpack.c.h.b16 %v6534
  %v7122 = vunpack.c.l.b16 %v6535
  %v7123 = vunpack.c.h.b16 %v6535
  %v7124 = vunpack.c.l.b16 %v6536
  %v7125 = vunpack.c.h.b16 %v6536
  %v7126 = vunpack.c.l.b16 %v6537
  %v7127 = vunpack.c.h.b16 %v6537
  %v7128 = vunpack.c.l.b16 %v6538
  %v7129 = vunpack.c.h.b16 %v6538
  %v7130 = vunpack.c.l.b16 %v6539
  %v7131 = vunpack.c.h.b16 %v6539
  %v7132 = vunpack.c.l.b16 %v6540
  %v7133 = vunpack.c.h.b16 %v6540
  %v7134 = vunpack.c.l.b16 %v6541
  %v7135 = vunpack.c.h.b16 %v6541
  %v7136 = vunpack.c.l.b16 %v6542
  %v7137 = vunpack.c.h.b16 %v6542
  %v7138 = vunpack.c.l.b16 %v6543
  %v7139 = vunpack.c.h.b16 %v6543
  %v7140 = vunpack.c.l.b16 %v6544
  %v7141 = vunpack.c.h.b16 %v6544
  %v7142 = vunpack.c.l.b16 %v6545
  %v7143 = vunpack.c.h.b16 %v6545
  %v7144 = vunpack.c.l.b16 %v6546
  %v7145 = vunpack.c.h.b16 %v6546
  %v7146 = vunpack.c.l.b16 %v6547
  %v7147 = vunpack.c.h.b16 %v6547
  %v7148 = vunpack.c.l.b16 %v6548
  %v7149 = vunpack.c.h.b16 %v6548
  %v7150 = vunpack.c.l.b16 %v6549
  %v7151 = vunpack.c.h.b16 %v6549
  %v7152 = vunpack.c.l.b16 %v6550
  %v7153 = vunpack.c.h.b16 %v6550
  %v7154 = vunpack.c.l.b16 %v6551
  %v7155 = vunpack.c.h.b16 %v6551
  %v7156 = vunpack.c.l.b16 %v6552
  %v7157 = vunpack.c.h.b16 %v6552
  %v7158 = vunpack.c.l.b16 %v6553
  %v7159 = vunpack.c.h.b16 %v6553
  %v7160 = vunpack.c.l.b16 %v6554
  %v7161 = vunpack.c.h.b16 %v6554
  %v7162 = vunpack.c.l.b16 %v6555
  %v7163 = vunpack.c.h.b16 %v6555
  %v7164 = vunpack.c.l.b16 %v6556
  %v7165 = vunpack.c.h.b16 %v6556
  %v7166 = vunpack.c.l.b16 %v6557
  %v7167 = vunpack.c.h.b16 %v6557
  %v7168 = vunpack.c.l.b16 %v6558
  %v7169 = vunpack.c.h.b16 %v6558
  %v7170 = vunpack.c.l.b16 %v6559
  %v7171 = vunpack.c.h.b16 %v6559
  %v7172 = vunpack.c.l.b16 %v6560
  %v7173 = vunpack.c.h.b16 %v6560
  %v7174 = vunpack.c.l.b16 %v6561
  %v7175 = vunpack.c.h.b16 %v6561
  %v7176 = vunpack.c.l.b16 %v6562
  %v7177 = vunpack.c.h.b16 %v6562
  %v7178 = vunpack.c.l.b16 %v6563
  %v7179 = vunpack.c.h.b16 %v6563
  %v7180 = vunpack.c.l.b16 %v6564
  %v7181 = vunpack.c.h.b16 %v6564
  %v7182 = vunpack.c.l.b16 %v6565
  %v7183 = vunpack.c.h.b16 %v6565
  %v7184 = vunpack.c.l.b16 %v6566
  %v7185 = vunpack.c.h.b16 %v6566
  %v7186 = vunpack.c.l.b16 %v6567
  %v7187 = vunpack.c.h.b16 %v6567
  %v7188 = vunpack.c.l.b16 %v6568
  %v7189 = vunpack.c.h.b16 %v6568
  %v7190 = vunpack.c.l.b16 %v6569
  %v7191 = vunpack.c.h.b16 %v6569
  %v7192 = vunpack.c.l.b16 %v6570
  %v7193 = vunpack.c.h.b16 %v6570
  %v7194 = vunpack.c.l.b16 %v6571
  %v7195 = vunpack.c.h.b16 %v6571
  %v7196 = vunpack.c.l.b16 %v6572
  %v7197 = vunpack.c.h.b16 %v6572
  %v7198 = vunpack.c.l.b16 %v6573
  %v7199 = vunpack.c.h.b16 %v6573
  %v7200 = vunpack.c.l.b16 %v6574
  %v7201 = vunpack.c.h.b16 %v6574
  %v7202 = vunpack.c.l.b16 %v6575
  %v7203 = vunpack.c.h.b16 %v6575
  %v7204 = vunpack.c.l.b16 %v6576
  %v7205 = vunpack.c.h.b16 %v6576
  %v7206 = vunpack.c.l.b16 %v6577
  %v7207 = vunpack.c.h.b16 %v6577
  %v7208 = vunpack.c.l.b16 %v6578
  %v7209 = vunpack.c.h.b16 %v6578
  %v7210 = vunpack.c.l.b16 %v6579
  %v7211 = vunpack.c.h.b16 %v6579
  %v7212 = vunpack.c.l.b16 %v6580
  %v7213 = vunpack.c.h.b16 %v6580
  %v7214 = vunpack.c.l.b16 %v6581
  %v7215 = vunpack.c.h.b16 %v6581
  %v7216 = vunpack.c.l.b16 %v6582
  %v7217 = vunpack.c.h.b16 %v6582
  %v7218 = vunpack.c.l.b16 %v6583
  %v7219 = vunpack.c.h.b16 %v6583
  %v7220 = vunpack.c.l.b16 %v6584
  %v7221 = vunpack.c.h.b16 %v6584
  %v7222 = vunpack.c.l.b16 %v6585
  %v7223 = vunpack.c.h.b16 %v6585
  %v7224 = vunpack.c.l.b16 %v6586
  %v7225 = vunpack.c.h.b16 %v6586
  %v7226 = vunpack.c.l.b16 %v6587
  %v7227 = vunpack.c.h.b16 %v6587
  %v7228 = vunpack.c.l.b16 %v6588
  %v7229 = vunpack.c.h.b16 %v6588
  %v7230 = vunpack.c.l.b16 %v6589
  %v7231 = vunpack.c.h.b16 %v6589
  %v7232 = vunpack.c.l.b16 %v6590
  %v7233 = vunpack.c.h.b16 %v6590
  %v7234 = vunpack.c.l.b16 %v6591
  %v7235 = vunpack.c.h.b16 %v6591
  %v7236 = vunpack.c.l.b16 %v6592
  %v7237 = vunpack.c.h.b16 %v6592
  %v7238 = vunpack.c.l.b16 %v6593
  %v7239 = vunpack.c.h.b16 %v6593
  %v7240 = vunpack.c.l.b16 %v6594
  %v7241 = vunpack.c.h.b16 %v6594
  %v7242 = vunpack.c.l.b16 %v6595
  %v7243 = vunpack.c.h.b16 %v6595
  %v7244 = vunpack.c.l.b16 %v6596
  %v7245 = vunpack.c.h.b16 %v6596
  %v7246 = vunpack.c.l.b16 %v6597
  %v7247 = vunpack.c.h.b16 %v6597
  %v7248 = vunpack.c.l.b16 %v6598
  %v7249 = vunpack.c.h.b16 %v6598
  %v7250 = vunpack.c.l.b16 %v6599
  %v7251 = vunpack.c.h.b16 %v6599
  %v7252 = vunpack.c.l.b16 %v6600
  %v7253 = vunpack.c.h.b16 %v6600
  %v7254 = vunpack.c.l.b16 %v6601
  %v7255 = vunpack.c.h.b16 %v6601
  %v7256 = vunpack.c.l.b16 %v6602
  %v7257 = vunpack.c.h.b16 %v6602
  %v7258 = vunpack.c.l.b16 %v6603
  %v7259 = vunpack.c.h.b16 %v6603
  %v7260 = vunpack.c.l.b16 %v6604
  %v7261 = vunpack.c.h.b16 %v6604
  %v7262 = vunpack.c.l.b16 %v6605
  %v7263 = vunpack.c.h.b16 %v6605
  %v7264 = vunpack.c.l.b16 %v6606
  %v7265 = vunpack.c.h.b16 %v6606
  %v7266 = vunpack.c.l.b16 %v6607
  %v7267 = vunpack.c.h.b16 %v6607
  %v7268 = vunpack.c.l.b16 %v6608
  %v7269 = vunpack.c.h.b16 %v6608
  %v7270 = vunpack.c.l.b16 %v6609
  %v7271 = vunpack.c.h.b16 %v6609
  %v7272 = vunpack.c.l.b16 %v6610
  %v7273 = vunpack.c.h.b16 %v6610
  %v7274 = vunpack.c.l.b16 %v6611
  %v7275 = vunpack.c.h.b16 %v6611
  %v7276 = vunpack.c.l.b16 %v6612
  %v7277 = vunpack.c.h.b16 %v6612
  %v7278 = vunpack.c.l.b16 %v6613
  %v7279 = vunpack.c.h.b16 %v6613
  %v7280 = vunpack.c.l.b16 %v6614
  %v7281 = vunpack.c.h.b16 %v6614
  %v7282 = vunpack.c.l.b16 %v6615
  %v7283 = vunpack.c.h.b16 %v6615
  %v7284 = vunpack.c.l.b16 %v6616
  %v7285 = vunpack.c.h.b16 %v6616
  %v7286 = vunpack.c.l.b16 %v6617
  %v7287 = vunpack.c.h.b16 %v6617
  %v7288 = vunpack.c.l.b16 %v6618
  %v7289 = vunpack.c.h.b16 %v6618
  %v7290 = vunpack.c.l.b16 %v6619
  %v7291 = vunpack.c.h.b16 %v6619
  %v7292 = vunpack.c.l.b16 %v6620
  %v7293 = vunpack.c.h.b16 %v6620
  %v7294 = vunpack.c.l.b16 %v6621
  %v7295 = vunpack.c.h.b16 %v6621
  %v7296 = vunpack.c.l.b16 %v6622
  %v7297 = vunpack.c.h.b16 %v6622
  %v7298 = vunpack.c.l.b16 %v6623
  %v7299 = vunpack.c.h.b16 %v6623
  %v7300 = vunpack.c.l.b16 %v6624
  %v7301 = vunpack.c.h.b16 %v6624
  %v7302 = vunpack.c.l.b16 %v6625
  %v7303 = vunpack.c.h.b16 %v6625
  %v7304 = vunpack.c.l.b16 %v6626
  %v7305 = vunpack.c.h.b16 %v6626
  %v7306 = vunpack.c.l.b16 %v6627
  %v7307 = vunpack.c.h.b16 %v6627
  %v7308 = vunpack.c.l.b16 %v6628
  %v7309 = vunpack.c.h.b16 %v6628
  %v7310 = vunpack.c.l.b16 %v6629
  %v7311 = vunpack.c.h.b16 %v6629
  %v7312 = vunpack.c.l.b16 %v6630
  %v7313 = vunpack.c.h.b16 %v6630
  %v7314 = vunpack.c.l.b16 %v6631
  %v7315 = vunpack.c.h.b16 %v6631
  %v7316 = vunpack.c.l.b16 %v6632
  %v7317 = vunpack.c.h.b16 %v6632
  %v7318 = vunpack.c.l.b16 %v6633
  %v7319 = vunpack.c.h.b16 %v6633
  %v7320 = vunpack.c.l.b16 %v6634
  %v7321 = vunpack.c.h.b16 %v6634
  %v7322 = vunpack.c.l.b16 %v6635
  %v7323 = vunpack.c.h.b16 %v6635
  %v7324 = vunpack.c.l.b16 %v6636
  %v7325 = vunpack.c.h.b16 %v6636
  %v7326 = vunpack.c.l.b16 %v6637
  %v7327 = vunpack.c.h.b16 %v6637
  %v7328 = vunpack.c.l.b16 %v6638
  %v7329 = vunpack.c.h.b16 %v6638
  %v7330 = vunpack.c.l.b16 %v6639
  %v7331 = vunpack.c.h.b16 %v6639
  %v7332 = vunpack.c.l.b16 %v6640
  %v7333 = vunpack.c.h.b16 %v6640
  %v7334 = vunpack.c.l.b16 %v6641
  %v7335 = vunpack.c.h.b16 %v6641
  %v7336 = vunpack.c.l.b16 %v6642
  %v7337 = vunpack.c.h.b16 %v6642
  %v7338 = vunpack.c.l.b16 %v6643
  %v7339 = vunpack.c.h.b16 %v6643
  %v7340 = vunpack.c.l.b16 %v6644
  %v7341 = vunpack.c.h.b16 %v6644
  %v7342 = vunpack.c.l.b16 %v6645
  %v7343 = vunpack.c.h.b16 %v6645
  %v7344 = vunpack.c.l.b16 %v6646
  %v7345 = vunpack.c.h.b16 %v6646
  %v7346 = vunpack.c.l.b16 %v6647
  %v7347 = vunpack.c.h.b16 %v6647
  %v7348 = vunpack.c.l.b16 %v6648
  %v7349 = vunpack.c.h.b16 %v6648
  %v7350 = vunpack.c.l.b16 %v6649
  %v7351 = vunpack.c.h.b16 %v6649
  %v7352 = vunpack.c.l.b16 %v6650
  %v7353 = vunpack.c.h.b16 %v6650
  %v7354 = vunpack.c.l.b16 %v6651
  %v7355 = vunpack.c.h.b16 %v6651
  %v7356 = vunpack.c.l.b16 %v6652
  %v7357 = vunpack.c.h.b16 %v6652
  %v7358 = vunpack.c.l.b16 %v6653
  %v7359 = vunpack.c.h.b16 %v6653
  %v7360 = vunpack.c.l.b16 %v6654
  %v7361 = vunpack.c.h.b16 %v6654
  %v7362 = vunpack.c.l.b16 %v6655
  %v7363 = vunpack.c.h.b16 %v6655
  %v7364 = vunpack.c.l.b16 %v6656
  %v7365 = vunpack.c.h.b16 %v6656
  %v7366 = vunpack.c.l.b16 %v6657
  %v7367 = vunpack.c.h.b16 %v6657
  %v7368 = vunpack.c.l.b16 %v6658
  %v7369 = vunpack.c.h.b16 %v6658
  %v7370 = vunpack.c.l.b16 %v6659
  %v7371 = vunpack.c.h.b16 %v6659
  %v7372 = vunpack.c.l.b16 %v6660
  %v7373 = vunpack.c.h.b16 %v6660
  %v7374 = vunpack.c.l.b16 %v6661
  %v7375 = vunpack.c.h.b16 %v6661
  %v7376 = vunpack.c.l.b16 %v6662
  %v7377 = vunpack.c.h.b16 %v6662
  %v7378 = vunpack.c.l.b16 %v6663
  %v7379 = vunpack.c.h.b16 %v6663
  %v7380 = vunpack.c.l.b16 %v6664
  %v7381 = vunpack.c.h.b16 %v6664
  %v7382 = vunpack.c.l.b16 %v6665
  %v7383 = vunpack.c.h.b16 %v6665
  %v7384 = vunpack.c.l.b16 %v6666
  %v7385 = vunpack.c.h.b16 %v6666
  %v7386 = vunpack.c.l.b16 %v6667
  %v7387 = vunpack.c.h.b16 %v6667
  %v7388 = vunpack.c.l.b16 %v6668
  %v7389 = vunpack.c.h.b16 %v6668
  %v7390 = vunpack.c.l.b16 %v6669
  %v7391 = vunpack.c.h.b16 %v6669
  %v7392 = vunpack.c.l.b16 %v6670
  %v7393 = vunpack.c.h.b16 %v6670
  %v7394 = vunpack.c.l.b16 %v6671
  %v7395 = vunpack.c.h.b16 %v6671
  %v7396 = vunpack.c.l.b16 %v6672
  %v7397 = vunpack.c.h.b16 %v6672
  %v7398 = vunpack.c.l.b16 %v6673
  %v7399 = vunpack.c.h.b16 %v6673
  %v7400 = vunpack.c.l.b16 %v6674
  %v7401 = vunpack.c.h.b16 %v6674
  %v7402 = vunpack.c.l.b16 %v6675
  %v7403 = vunpack.c.h.b16 %v6675
  %v7404 = vunpack.c.l.b16 %v6676
  %v7405 = vunpack.c.h.b16 %v6676
  %v7406 = vunpack.c.l.b16 %v6677
  %v7407 = vunpack.c.h.b16 %v6677
  %v7408 = vunpack.c.l.b16 %v6678
  %v7409 = vunpack.c.h.b16 %v6678
  %v7410 = vunpack.c.l.b16 %v6679
  %v7411 = vunpack.c.h.b16 %v6679
  %v7412 = vunpack.c.l.b16 %v6680
  %v7413 = vunpack.c.h.b16 %v6680
  %v7414 = vunpack.c.l.b16 %v6681
  %v7415 = vunpack.c.h.b16 %v6681
  %v7416 = vunpack.c.l.b16 %v6682
  %v7417 = vunpack.c.h.b16 %v6682
  %v7418 = vunpack.c.l.b16 %v6683
  %v7419 = vunpack.c.h.b16 %v6683
  %v7420 = vunpack.c.l.b16 %v6684
  %v7421 = vunpack.c.h.b16 %v6684
  %v7422 = vunpack.c.l.b16 %v6685
  %v7423 = vunpack.c.h.b16 %v6685
  %v7424 = vunpack.c.l.b16 %v6686
  %v7425 = vunpack.c.h.b16 %v6686
  %v7426 = vunpack.c.l.b16 %v6687
  %v7427 = vunpack.c.h.b16 %v6687
  %v7428 = vunpack.c.l.b16 %v6688
  %v7429 = vunpack.c.h.b16 %v6688
  %v7430 = vunpack.c.l.b16 %v6689
  %v7431 = vunpack.c.h.b16 %v6689
  %v7432 = vunpack.c.l.b16 %v6690
  %v7433 = vunpack.c.h.b16 %v6690
  %v7434 = vunpack.c.l.b16 %v6691
  %v7435 = vunpack.c.h.b16 %v6691
  %v7436 = vunpack.c.l.b16 %v6692
  %v7437 = vunpack.c.h.b16 %v6692
  %v7438 = vunpack.c.l.b16 %v6693
  %v7439 = vunpack.c.h.b16 %v6693
  %v7440 = vunpack.c.l.b16 %v6694
  %v7441 = vunpack.c.h.b16 %v6694
  %v7442 = vunpack.c.l.b16 %v6695
  %v7443 = vunpack.c.h.b16 %v6695
  %v7444 = vunpack.c.l.b16 %v6696
  %v7445 = vunpack.c.h.b16 %v6696
  %v7446 = vunpack.c.l.b16 %v6697
  %v7447 = vunpack.c.h.b16 %v6697
  %v7448 = vunpack.c.l.b16 %v6698
  %v7449 = vunpack.c.h.b16 %v6698
  %v7450 = vunpack.c.l.b16 %v6699
  %v7451 = vunpack.c.h.b16 %v6699
  %v7452 = vunpack.c.l.b16 %v6700
  %v7453 = vunpack.c.h.b16 %v6700
  %v7454 = vunpack.c.l.b16 %v6701
  %v7455 = vunpack.c.h.b16 %v6701
  %v7456 = vunpack.c.l.b16 %v6702
  %v7457 = vunpack.c.h.b16 %v6702
  %v7458 = vunpack.c.l.b16 %v6703
  %v7459 = vunpack.c.h.b16 %v6703
  %v7460 = vunpack.c.l.b16 %v6704
  %v7461 = vunpack.c.h.b16 %v6704
  %v7462 = vunpack.c.l.b16 %v6705
  %v7463 = vunpack.c.h.b16 %v6705
  %v7464 = vunpack.c.l.b16 %v6706
  %v7465 = vunpack.c.h.b16 %v6706
  %v7466 = vunpack.c.l.b16 %v6707
  %v7467 = vunpack.c.h.b16 %v6707
  %v7468 = vunpack.c.l.b16 %v6708
  %v7469 = vunpack.c.h.b16 %v6708
  %v7470 = vunpack.c.l.b16 %v6709
  %v7471 = vunpack.c.h.b16 %v6709
  %v7472 = vunpack.c.l.b16 %v6710
  %v7473 = vunpack.c.h.b16 %v6710
  %v7474 = vunpack.c.l.b16 %v6711
  %v7475 = vunpack.c.h.b16 %v6711
  %v7476 = vunpack.c.l.b16 %v6712
  %v7477 = vunpack.c.h.b16 %v6712
  %v7478 = vunpack.c.l.b16 %v6713
  %v7479 = vunpack.c.h.b16 %v6713
  %v7480 = vunpack.c.l.b16 %v6714
  %v7481 = vunpack.c.h.b16 %v6714
  %v7482 = vunpack.c.l.b16 %v6715
  %v7483 = vunpack.c.h.b16 %v6715
  %v7484 = vunpack.c.l.b16 %v6716
  %v7485 = vunpack.c.h.b16 %v6716
  %v7486 = vunpack.c.l.b16 %v6717
  %v7487 = vunpack.c.h.b16 %v6717
  %v7488 = vunpack.c.l.b16 %v6718
  %v7489 = vunpack.c.h.b16 %v6718
  %v7490 = vunpack.c.l.b16 %v6719
  %v7491 = vunpack.c.h.b16 %v6719
  %v7492 = vunpack.c.l.b16 %v6720
  %v7493 = vunpack.c.h.b16 %v6720
  %v7494 = vunpack.c.l.b16 %v6721
  %v7495 = vunpack.c.h.b16 %v6721
  %v7496 = vunpack.c.l.b16 %v6722
  %v7497 = vunpack.c.h.b16 %v6722
  %v7498 = vunpack.c.l.b16 %v6723
  %v7499 = vunpack.c.h.b16 %v6723
  %v7500 = vunpack.c.l.b16 %v6724
  %v7501 = vunpack.c.h.b16 %v6724
  %v7502 = vunpack.c.l.b16 %v6725
  %v7503 = vunpack.c.h.b16 %v6725
  %v7504 = vunpack.c.l.b16 %v6726
  %v7505 = vunpack.c.h.b16 %v6726
  %v7506 = vunpack.c.l.b16 %v6727
  %v7507 = vunpack.c.h.b16 %v6727
  %v7508 = vunpack.c.l.b16 %v6728
  %v7509 = vunpack.c.h.b16 %v6728
  %v7510 = vunpack.c.l.b16 %v6729
  %v7511 = vunpack.c.h.b16 %v6729
  %v7512 = vunpack.c.l.b16 %v6730
  %v7513 = vunpack.c.h.b16 %v6730
  %v7514 = vunpack.c.l.b16 %v6731
  %v7515 = vunpack.c.h.b16 %v6731
  %v7516 = vunpack.c.l.b16 %v6732
  %v7517 = vunpack.c.h.b16 %v6732
  %v7518 = vunpack.c.l.b16 %v6733
  %v7519 = vunpack.c.h.b16 %v6733
  %v7520 = vunpack.c.l.b16 %v6734
  %v7521 = vunpack.c.h.b16 %v6734
  %v7522 = vunpack.c.l.b16 %v6735
  %v7523 = vunpack.c.h.b16 %v6735
  %v7524 = vunpack.c.l.b16 %v6736
  %v7525 = vunpack.c.h.b16 %v6736
  %v7526 = vunpack.c.l.b16 %v6737
  %v7527 = vunpack.c.h.b16 %v6737
  %v7528 = vpack.c.b16 %v7020, %v7016
  %v7529 = vpack.c.b16 %v7021, %v7017
  %v7530 = vpack.c.b16 %v7022, %v7018
  %v7531 = vpack.c.b16 %v7023, %v7019
  %v7532 = vpack.c.b16 %v7028, %v7024
  %v7533 = vpack.c.b16 %v7029, %v7025
  %v7534 = vpack.c.b16 %v7030, %v7026
  %v7535 = vpack.c.b16 %v7031, %v7027
  %v7536 = vpack.c.b16 %v7036, %v7032
  %v7537 = vpack.c.b16 %v7037, %v7033
  %v7538 = vpack.c.b16 %v7038, %v7034
  %v7539 = vpack.c.b16 %v7039, %v7035
  %v7540 = vpack.c.b16 %v7044, %v7040
  %v7541 = vpack.c.b16 %v7045, %v7041
  %v7542 = vpack.c.b16 %v7046, %v7042
  %v7543 = vpack.c.b16 %v7047, %v7043
  %v7544 = vpack.c.b16 %v7052, %v7048
  %v7545 = vpack.c.b16 %v7053, %v7049
  %v7546 = vpack.c.b16 %v7054, %v7050
  %v7547 = vpack.c.b16 %v7055, %v7051
  %v7548 = vpack.c.b16 %v7060, %v7056
  %v7549 = vpack.c.b16 %v7061, %v7057
  %v7550 = vpack.c.b16 %v7062, %v7058
  %v7551 = vpack.c.b16 %v7063, %v7059
  %v7552 = vpack.c.b16 %v7068, %v7064
  %v7553 = vpack.c.b16 %v7069, %v7065
  %v7554 = vpack.c.b16 %v7070, %v7066
  %v7555 = vpack.c.b16 %v7071, %v7067
  %v7556 = vpack.c.b16 %v7076, %v7072
  %v7557 = vpack.c.b16 %v7077, %v7073
  %v7558 = vpack.c.b16 %v7078, %v7074
  %v7559 = vpack.c.b16 %v7079, %v7075
  %v7560 = vpack.c.b16 %v7084, %v7080
  %v7561 = vpack.c.b16 %v7085, %v7081
  %v7562 = vpack.c.b16 %v7086, %v7082
  %v7563 = vpack.c.b16 %v7087, %v7083
  %v7564 = vpack.c.b16 %v7092, %v7088
  %v7565 = vpack.c.b16 %v7093, %v7089
  %v7566 = vpack.c.b16 %v7094, %v7090
  %v7567 = vpack.c.b16 %v7095, %v7091
  %v7568 = vpack.c.b16 %v7100, %v7096
  %v7569 = vpack.c.b16 %v7101, %v7097
  %v7570 = vpack.c.b16 %v7102, %v7098
  %v7571 = vpack.c.b16 %v7103, %v7099
  %v7572 = vpack.c.b16 %v7108, %v7104
  %v7573 = vpack.c.b16 %v7109, %v7105
  %v7574 = vpack.c.b16 %v7110, %v7106
  %v7575 = vpack.c.b16 %v7111, %v7107
  %v7576 = vpack.c.b16 %v7116, %v7112
  %v7577 = vpack.c.b16 %v7117, %v7113
  %v7578 = vpack.c.b16 %v7118, %v7114
  %v7579 = vpack.c.b16 %v7119, %v7115
  %v7580 = vpack.c.b16 %v7124, %v7120
  %v7581 = vpack.c.b16 %v7125, %v7121
  %v7582 = vpack.c.b16 %v7126, %v7122
  %v7583 = vpack.c.b16 %v7127, %v7123
  %v7584 = vpack.c.b16 %v7132, %v7128
  %v7585 = vpack.c.b16 %v7133, %v7129
  %v7586 = vpack.c.b16 %v7134, %v7130
  %v7587 = vpack.c.b16 %v7135, %v7131
  %v7588 = vpack.c.b16 %v7140, %v7136
  %v7589 = vpack.c.b16 %v7141, %v7137
  %v7590 = vpack.c.b16 %v7142, %v7138
  %v7591 = vpack.c.b16 %v7143, %v7139
  %v7592 = vpack.c.b16 %v7148, %v7144
  %v7593 = vpack.c.b16 %v7149, %v7145
  %v7594 = vpack.c.b16 %v7150, %v7146
  %v7595 = vpack.c.b16 %v7151, %v7147
  %v7596 = vpack.c.b16 %v7156, %v7152
  %v7597 = vpack.c.b16 %v7157, %v7153
  %v7598 = vpack.c.b16 %v7158, %v7154
  %v7599 = vpack.c.b16 %v7159, %v7155
  %v7600 = vpack.c.b16 %v7164, %v7160
  %v7601 = vpack.c.b16 %v7165, %v7161
  %v7602 = vpack.c.b16 %v7166, %v7162
  %v7603 = vpack.c.b16 %v7167, %v7163
  %v7604 = vpack.c.b16 %v7172, %v7168
  %v7605 = vpack.c.b16 %v7173, %v7169
  %v7606 = vpack.c.b16 %v7174, %v7170
  %v7607 = vpack.c.b16 %v7175, %v7171
  %v7608 = vpack.c.b16 %v7180, %v7176
  %v7609 = vpack.c.b16 %v7181, %v7177
  %v7610 = vpack.c.b16 %v7182, %v7178
  %v7611 = vpack.c.b16 %v7183, %v7179
  %v7612 = vpack.c.b16 %v7188, %v7184
  %v7613 = vpack.c.b16 %v7189, %v7185
  %v7614 = vpack.c.b16 %v7190, %v7186
  %v7615 = vpack.c.b16 %v7191, %v7187
  %v7616 = vpack.c.b16 %v7196, %v7192
  %v7617 = vpack.c.b16 %v7197, %v7193
  %v7618 = vpack.c.b16 %v7198, %v7194
  %v7619 = vpack.c.b16 %v7199, %v7195
  %v7620 = vpack.c.b16 %v7204, %v7200
  %v7621 = vpack.c.b16 %v7205, %v7201
  %v7622 = vpack.c.b16 %v7206, %v7202
  %v7623 = vpack.c.b16 %v7207, %v7203
  %v7624 = vpack.c.b16 %v7212, %v7208
  %v7625 = vpack.c.b16 %v7213, %v7209
  %v7626 = vpack.c.b16 %v7214, %v7210
  %v7627 = vpack.c.b16 %v7215, %v7211
  %v7628 = vpack.c.b16 %v7220, %v7216
  %v7629 = vpack.c.b16 %v7221, %v7217
  %v7630 = vpack.c.b16 %v7222, %v7218
  %v7631 = vpack.c.b16 %v7223, %v7219
  %v7632 = vpack.c.b16 %v7228, %v7224
  %v7633 = vpack.c.b16 %v7229, %v7225
  %v7634 = vpack.c.b16 %v7230, %v7226
  %v7635 = vpack.c.b16 %v7231, %v7227
  %v7636 = vpack.c.b16 %v7236, %v7232
  %v7637 = vpack.c.b16 %v7237, %v7233
  %v7638 = vpack.c.b16 %v7238, %v7234
  %v7639 = vpack.c.b16 %v7239, %v7235
  %v7640 = vpack.c.b16 %v7244, %v7240
  %v7641 = vpack.c.b16 %v7245, %v7241
  %v7642 = vpack.c.b16 %v7246, %v7242
  %v7643 = vpack.c.b16 %v7247, %v7243
  %v7644 = vpack.c.b16 %v7252, %v7248
  %v7645 = vpack.c.b16 %v7253, %v7249
  %v7646 = vpack.c.b16 %v7254, %v7250
  %v7647 = vpack.c.b16 %v7255, %v7251
  %v7648 = vpack.c.b16 %v7260, %v7256
  %v7649 = vpack.c.b16 %v7261, %v7257
  %v7650 = vpack.c.b16 %v7262, %v7258
  %v7651 = vpack.c.b16 %v7263, %v7259
  %v7652 = vpack.c.b16 %v7268, %v7264
  %v7653 = vpack.c.b16 %v7269, %v7265
  %v7654 = vpack.c.b16 %v7270, %v7266
  %v7655 = vpack.c.b16 %v7271, %v7267
  %v7656 = vpack.c.b16 %v7276, %v7272
  %v7657 = vpack.c.b16 %v7277, %v7273
  %v7658 = vpack.c.b16 %v7278, %v7274
  %v7659 = vpack.c.b16 %v7279, %v7275
  %v7660 = vpack.c.b16 %v7284, %v7280
  %v7661 = vpack.c.b16 %v7285, %v7281
  %v7662 = vpack.c.b16 %v7286, %v7282
  %v7663 = vpack.c.b16 %v7287, %v7283
  %v7664 = vpack.c.b16 %v7292, %v7288
  %v7665 = vpack.c.b16 %v7293, %v7289
  %v7666 = vpack.c.b16 %v7294, %v7290
  %v7667 = vpack.c.b16 %v7295, %v7291
  %v7668 = vpack.c.b16 %v7300, %v7296
  %v7669 = vpack.c.b16 %v7301, %v7297
  %v7670 = vpack.c.b16 %v7302, %v7298
  %v7671 = vpack.c.b16 %v7303, %v7299
  %v7672 = vpack.c.b16 %v7308, %v7304
  %v7673 = vpack.c.b16 %v7309, %v7305
  %v7674 = vpack.c.b16 %v7310, %v7306
  %v7675 = vpack.c.b16 %v7311, %v7307
  %v7676 = vpack.c.b16 %v7316, %v7312
  %v7677 = vpack.c.b16 %v7317, %v7313
  %v7678 = vpack.c.b16 %v7318, %v7314
  %v7679 = vpack.c.b16 %v7319, %v7315
  %v7680 = vpack.c.b16 %v7324, %v7320
  %v7681 = vpack.c.b16 %v7325, %v7321
  %v7682 = vpack.c.b16 %v7326, %v7322
  %v7683 = vpack.c.b16 %v7327, %v7323
  %v7684 = vpack.c.b16 %v7332, %v7328
  %v7685 = vpack.c.b16 %v7333, %v7329
  %v7686 = vpack.c.b16 %v7334, %v7330
  %v7687 = vpack.c.b16 %v7335, %v7331
  %v7688 = vpack.c.b16 %v7340, %v7336
  %v7689 = vpack.c.b16 %v7341, %v7337
  %v7690 = vpack.c.b16 %v7342, %v7338
  %v7691 = vpack.c.b16 %v7343, %v7339
  %v7692 = vpack.c.b16 %v7348, %v7344
  %v7693 = vpack.c.b16 %v7349, %v7345
  %v7694 = vpack.c.b16 %v7350, %v7346
  %v7695 = vpack.c.b16 %v7351, %v7347
  %v7696 = vpack.c.b16 %v7356, %v7352
  %v7697 = vpack.c.b16 %v7357, %v7353
  %v7698 = vpack.c.b16 %v7358, %v7354
  %v7699 = vpack.c.b16 %v7359, %v7355
  %v7700 = vpack.c.b16 %v7364, %v7360
  %v7701 = vpack.c.b16 %v7365, %v7361
  %v7702 = vpack.c.b16 %v7366, %v7362
  %v7703 = vpack.c.b16 %v7367, %v7363
  %v7704 = vpack.c.b16 %v7372, %v7368
  %v7705 = vpack.c.b16 %v7373, %v7369
  %v7706 = vpack.c.b16 %v7374, %v7370
  %v7707 = vpack.c.b16 %v7375, %v7371
  %v7708 = vpack.c.b16 %v7380, %v7376
  %v7709 = vpack.c.b16 %v7381, %v7377
  %v7710 = vpack.c.b16 %v7382, %v7378
  %v7711 = vpack.c.b16 %v7383, %v7379
  %v7712 = vpack.c.b16 %v7388, %v7384
  %v7713 = vpack.c.b16 %v7389, %v7385
  %v7714 = vpack.c.b16 %v7390, %v7386
  %v7715 = vpack.c.b16 %v7391, %v7387
  %v7716 = vpack.c.b16 %v7396, %v7392
  %v7717 = vpack.c.b16 %v7397, %v7393
  %v7718 = vpack.c.b16 %v7398, %v7394
  %v7719 = vpack.c.b16 %v7399, %v7395
  %v7720 = vpack.c.b16 %v7404, %v7400
  %v7721 = vpack.c.b16 %v7405, %v7401
  %v7722 = vpack.c.b16 %v7406, %v7402
  %v7723 = vpack.c.b16 %v7407, %v7403
  %v7724 = vpack.c.b16 %v7412, %v7408
  %v7725 = vpack.c.b16 %v7413, %v7409
  %v7726 = vpack.c.b16 %v7414, %v7410
  %v7727 = vpack.c.b16 %v7415, %v7411
  %v7728 = vpack.c.b16 %v7420, %v7416
  %v7729 = vpack.c.b16 %v7421, %v7417
  %v7730 = vpack.c.b16 %v7422, %v7418
  %v7731 = vpack.c.b16 %v7423, %v7419
  %v7732 = vpack.c.b16 %v7428, %v7424
  %v7733 = vpack.c.b16 %v7429, %v7425
  %v7734 = vpack.c.b16 %v7430, %v7426
  %v7735 = vpack.c.b16 %v7431, %v7427
  %v7736 = vpack.c.b16 %v7436, %v7432
  %v7737 = vpack.c.b16 %v7437, %v7433
  %v7738 = vpack.c.b16 %v7438, %v7434
  %v7739 = vpack.c.b16 %v7439, %v7435
  %v7740 = vpack.c.b16 %v7444, %v7440
  %v7741 = vpack.c.b16 %v7445, %v7441
  %v7742 = vpack.c.b16 %v7446, %v7442
  %v7743 = vpack.c.b16 %v7447, %v7443
  %v7744 = vpack.c.b16 %v7452, %v7448
  %v7745 = vpack.c.b16 %v7453, %v7449
  %v7746 = vpack.c.b16 %v7454, %v7450
  %v7747 = vpack.c.b16 %v7455, %v7451
  %v7748 = vpack.c.b16 %v7460, %v7456
  %v7749 = vpack.c.b16 %v7461, %v7457
  %v7750 = vpack.c.b16 %v7462, %v7458
  %v7751 = vpack.c.b16 %v7463, %v7459
  %v7752 = vpack.c.b16 %v7468, %v7464
  %v7753 = vpack.c.b16 %v7469, %v7465
  %v7754 = vpack.c.b16 %v7470, %v7466
  %v7755 = vpack.c.b16 %v7471, %v7467
  %v7756 = vpack.c.b16 %v7476, %v7472
  %v7757 = vpack.c.b16 %v7477, %v7473
  %v7758 = vpack.c.b16 %v7478, %v7474
  %v7759 = vpack.c.b16 %v7479, %v7475
  %v7760 = vpack.c.b16 %v7484, %v7480
  %v7761 = vpack.c.b16 %v7485, %v7481
  %v7762 = vpack.c.b16 %v7486, %v7482
  %v7763 = vpack.c.b16 %v7487, %v7483
  %v7764 = vpack.c.b16 %v7492, %v7488
  %v7765 = vpack.c.b16 %v7493, %v7489
  %v7766 = vpack.c.b16 %v7494, %v7490
  %v7767 = vpack.c.b16 %v7495, %v7491
  %v7768 = vpack.c.b16 %v7500, %v7496
  %v7769 = vpack.c.b16 %v7501, %v7497
  %v7770 = vpack.c.b16 %v7502, %v7498
  %v7771 = vpack.c.b16 %v7503, %v7499
  %v7772 = vpack.c.b16 %v7508, %v7504
  %v7773 = vpack.c.b16 %v7509, %v7505
  %v7774 = vpack.c.b16 %v7510, %v7506
  %v7775 = vpack.c.b16 %v7511, %v7507
  %v7776 = vpack.c.b16 %v7516, %v7512
  %v7777 = vpack.c.b16 %v7517, %v7513
  %v7778 = vpack.c.b16 %v7518, %v7514
  %v7779 = vpack.c.b16 %v7519, %v7515
  %v7780 = vpack.c.b16 %v7524, %v7520
  %v7781 = vpack.c.b16 %v7525, %v7521
  %v7782 = vpack.c.b16 %v7526, %v7522
  %v7783 = vpack.c.b16 %v7527, %v7523
  %8040 = vmatprep.subr.bf16.mxu0 %v7557
  %8041 = vmatpush1.bf16.msra.mxu0 %v7556
  %8042 = vmatprep.subr.bf16.mxu0 %v7553
  %8043 = vmatpush1.bf16.msra.mxu0 %v7552
  %8044 = vmatprep.subr.bf16.mxu0 %v7549
  %8045 = vmatpush1.bf16.msra.mxu0 %v7548
  %8046 = vmatprep.subr.bf16.mxu0 %v7545
  %8047 = vmatpush1.bf16.msra.mxu0 %v7544
  %8048 = vmatprep.subr.bf16.mxu0 %v7541
  %8049 = vmatpush1.bf16.msra.mxu0 %v7540
  %8050 = vmatprep.subr.bf16.mxu0 %v7537
  %8051 = vmatpush1.bf16.msra.mxu0 %v7536
  %8052 = vmatprep.subr.bf16.mxu0 %v7533
  %8053 = vmatpush1.bf16.msra.mxu0 %v7532
  %8054 = vmatprep.subr.bf16.mxu0 %v7529
  %8055 = vmatpush1.bf16.msra.mxu0 %v7528
  %8056 = vmatprep.subr.bf16.mxu0 %v7589
  %8057 = vmatpush2.bf16.msra.mxu0 %v7588
  %8058 = vmatprep.subr.bf16.mxu0 %v7585
  %8059 = vmatpush2.bf16.msra.mxu0 %v7584
  %8060 = vmatprep.subr.bf16.mxu0 %v7581
  %8061 = vmatpush2.bf16.msra.mxu0 %v7580
  %8062 = vmatprep.subr.bf16.mxu0 %v7577
  %8063 = vmatpush2.bf16.msra.mxu0 %v7576
  %8064 = vmatprep.subr.bf16.mxu0 %v7573
  %8065 = vmatpush2.bf16.msra.mxu0 %v7572
  %8066 = vmatprep.subr.bf16.mxu0 %v7569
  %8067 = vmatpush2.bf16.msra.mxu0 %v7568
  %8068 = vmatprep.subr.bf16.mxu0 %v7565
  %8069 = vmatpush2.bf16.msra.mxu0 %v7564
  %8070 = vmatprep.subr.bf16.mxu0 %v7561
  %8071 = vmatpush2.bf16.msra.mxu0 %v7560
  %8072 = vmatprep.mubr.bf16.mxu0 %v6475
  %8073 = vmatmul.mubr.bf16.gmra.mxu0 %v6474
  %v8074 = vpop.f32.mrf.mxu0
  %v8075 = vadd.f32 %v6743, %v8074
  %v8076 = vpop.f32.mrf.mxu0
  %v8077 = vadd.f32 %v6747, %v8076
  %v8078 = vpop.f32.mrf.mxu0
  %v8079 = vpop.f32.mrf.mxu0
  %8080 = vdwg.mxu0
  %8081 = vmatprep.subr.bf16.mxu0 %v7621
  %8082 = vmatpush1.bf16.msra.mxu0 %v7620
  %8083 = vmatprep.subr.bf16.mxu0 %v7617
  %8084 = vmatpush1.bf16.msra.mxu0 %v7616
  %8085 = vmatprep.subr.bf16.mxu0 %v7613
  %8086 = vmatpush1.bf16.msra.mxu0 %v7612
  %8087 = vmatprep.subr.bf16.mxu0 %v7609
  %8088 = vmatpush1.bf16.msra.mxu0 %v7608
  %8089 = vmatprep.subr.bf16.mxu0 %v7605
  %8090 = vmatpush1.bf16.msra.mxu0 %v7604
  %8091 = vmatprep.subr.bf16.mxu0 %v7601
  %8092 = vmatpush1.bf16.msra.mxu0 %v7600
  %8093 = vmatprep.subr.bf16.mxu0 %v7597
  %8094 = vmatpush1.bf16.msra.mxu0 %v7596
  %8095 = vmatprep.subr.bf16.mxu0 %v7593
  %8096 = vmatpush1.bf16.msra.mxu0 %v7592
  %8097 = vmatprep.subr.bf16.mxu0 %v7653
  %8098 = vmatpush2.bf16.msra.mxu0 %v7652
  %8099 = vmatprep.subr.bf16.mxu0 %v7649
  %8100 = vmatpush2.bf16.msra.mxu0 %v7648
  %8101 = vmatprep.subr.bf16.mxu0 %v7645
  %8102 = vmatpush2.bf16.msra.mxu0 %v7644
  %8103 = vmatprep.subr.bf16.mxu0 %v7641
  %8104 = vmatpush2.bf16.msra.mxu0 %v7640
  %8105 = vmatprep.subr.bf16.mxu0 %v7637
  %8106 = vmatpush2.bf16.msra.mxu0 %v7636
  %8107 = vmatprep.subr.bf16.mxu0 %v7633
  %8108 = vmatpush2.bf16.msra.mxu0 %v7632
  %8109 = vmatprep.subr.bf16.mxu0 %v7629
  %8110 = vmatpush2.bf16.msra.mxu0 %v7628
  %8111 = vmatprep.subr.bf16.mxu0 %v7625
  %8112 = vmatpush2.bf16.msra.mxu0 %v7624
  %8113 = vmatprep.mubr.bf16.mxu0 %v6477
  %8114 = vmatmul.mubr.bf16.gmra.mxu0 %v6476
  %v8115 = vpop.f32.mrf.mxu0
  %v8116 = vadd.f32 %v8075, %v8115
  %v8117 = vpop.f32.mrf.mxu0
  %v8118 = vadd.f32 %v8077, %v8117
  %v8119 = vpop.f32.mrf.mxu0
  %v8120 = vpop.f32.mrf.mxu0
  %8121 = vdwg.mxu0
  %8122 = vmatprep.subr.bf16.mxu0 %v7685
  %8123 = vmatpush1.bf16.msra.mxu0 %v7684
  %8124 = vmatprep.subr.bf16.mxu0 %v7681
  %8125 = vmatpush1.bf16.msra.mxu0 %v7680
  %8126 = vmatprep.subr.bf16.mxu0 %v7677
  %8127 = vmatpush1.bf16.msra.mxu0 %v7676
  %8128 = vmatprep.subr.bf16.mxu0 %v7673
  %8129 = vmatpush1.bf16.msra.mxu0 %v7672
  %8130 = vmatprep.subr.bf16.mxu0 %v7669
  %8131 = vmatpush1.bf16.msra.mxu0 %v7668
  %8132 = vmatprep.subr.bf16.mxu0 %v7665
  %8133 = vmatpush1.bf16.msra.mxu0 %v7664
  %8134 = vmatprep.subr.bf16.mxu0 %v7661
  %8135 = vmatpush1.bf16.msra.mxu0 %v7660
  %8136 = vmatprep.subr.bf16.mxu0 %v7657
  %8137 = vmatpush1.bf16.msra.mxu0 %v7656
  %8138 = vmatprep.subr.bf16.mxu0 %v7717
  %8139 = vmatpush2.bf16.msra.mxu0 %v7716
  %8140 = vmatprep.subr.bf16.mxu0 %v7713
  %8141 = vmatpush2.bf16.msra.mxu0 %v7712
  %8142 = vmatprep.subr.bf16.mxu0 %v7709
  %8143 = vmatpush2.bf16.msra.mxu0 %v7708
  %8144 = vmatprep.subr.bf16.mxu0 %v7705
  %8145 = vmatpush2.bf16.msra.mxu0 %v7704
  %8146 = vmatprep.subr.bf16.mxu0 %v7701
  %8147 = vmatpush2.bf16.msra.mxu0 %v7700
  %8148 = vmatprep.subr.bf16.mxu0 %v7697
  %8149 = vmatpush2.bf16.msra.mxu0 %v7696
  %8150 = vmatprep.subr.bf16.mxu0 %v7693
  %8151 = vmatpush2.bf16.msra.mxu0 %v7692
  %8152 = vmatprep.subr.bf16.mxu0 %v7689
  %8153 = vmatpush2.bf16.msra.mxu0 %v7688
  %8154 = vmatprep.mubr.bf16.mxu0 %v6479
  %8155 = vmatmul.mubr.bf16.gmra.mxu0 %v6478
  %v8156 = vpop.f32.mrf.mxu0
  %v8157 = vadd.f32 %v8116, %v8156
  %v8158 = vpop.f32.mrf.mxu0
  %v8159 = vadd.f32 %v8118, %v8158
  %v8160 = vpop.f32.mrf.mxu0
  %v8161 = vpop.f32.mrf.mxu0
  %8162 = vdwg.mxu0
  %8163 = vmatprep.subr.bf16.mxu0 %v7749
  %8164 = vmatpush1.bf16.msra.mxu0 %v7748
  %8165 = vmatprep.subr.bf16.mxu0 %v7745
  %8166 = vmatpush1.bf16.msra.mxu0 %v7744
  %8167 = vmatprep.subr.bf16.mxu0 %v7741
  %8168 = vmatpush1.bf16.msra.mxu0 %v7740
  %8169 = vmatprep.subr.bf16.mxu0 %v7737
  %8170 = vmatpush1.bf16.msra.mxu0 %v7736
  %8171 = vmatprep.subr.bf16.mxu0 %v7733
  %8172 = vmatpush1.bf16.msra.mxu0 %v7732
  %8173 = vmatprep.subr.bf16.mxu0 %v7729
  %8174 = vmatpush1.bf16.msra.mxu0 %v7728
  %8175 = vmatprep.subr.bf16.mxu0 %v7725
  %8176 = vmatpush1.bf16.msra.mxu0 %v7724
  %8177 = vmatprep.subr.bf16.mxu0 %v7721
  %8178 = vmatpush1.bf16.msra.mxu0 %v7720
  %8179 = vmatprep.subr.bf16.mxu0 %v7781
  %8180 = vmatpush2.bf16.msra.mxu0 %v7780
  %8181 = vmatprep.subr.bf16.mxu0 %v7777
  %8182 = vmatpush2.bf16.msra.mxu0 %v7776
  %8183 = vmatprep.subr.bf16.mxu0 %v7773
  %8184 = vmatpush2.bf16.msra.mxu0 %v7772
  %8185 = vmatprep.subr.bf16.mxu0 %v7769
  %8186 = vmatpush2.bf16.msra.mxu0 %v7768
  %8187 = vmatprep.subr.bf16.mxu0 %v7765
  %8188 = vmatpush2.bf16.msra.mxu0 %v7764
  %8189 = vmatprep.subr.bf16.mxu0 %v7761
  %8190 = vmatpush2.bf16.msra.mxu0 %v7760
  %8191 = vmatprep.subr.bf16.mxu0 %v7757
  %8192 = vmatpush2.bf16.msra.mxu0 %v7756
  %8193 = vmatprep.subr.bf16.mxu0 %v7753
  %8194 = vmatpush2.bf16.msra.mxu0 %v7752
  %8195 = vmatprep.mubr.bf16.mxu0 %v6481
  %8196 = vmatmul.mubr.bf16.gmra.mxu0 %v6480
  %v8197 = vpop.f32.mrf.mxu0
  %v8198 = vadd.f32 %v8157, %v8197
  %v8199 = vpop.f32.mrf.mxu0
  %v8200 = vadd.f32 %v8159, %v8199
  %v8201 = vpop.f32.mrf.mxu0
  %v8202 = vpop.f32.mrf.mxu0
  %8203 = vdwg.mxu0
  %8204 = vmatprep.subr.bf16.mxu0 %v7559
  %8205 = vmatpush1.bf16.msra.mxu0 %v7558
  %8206 = vmatprep.subr.bf16.mxu0 %v7555
  %8207 = vmatpush1.bf16.msra.mxu0 %v7554
  %8208 = vmatprep.subr.bf16.mxu0 %v7551
  %8209 = vmatpush1.bf16.msra.mxu0 %v7550
  %8210 = vmatprep.subr.bf16.mxu0 %v7547
  %8211 = vmatpush1.bf16.msra.mxu0 %v7546
  %8212 = vmatprep.subr.bf16.mxu0 %v7543
  %8213 = vmatpush1.bf16.msra.mxu0 %v7542
  %8214 = vmatprep.subr.bf16.mxu0 %v7539
  %8215 = vmatpush1.bf16.msra.mxu0 %v7538
  %8216 = vmatprep.subr.bf16.mxu0 %v7535
  %8217 = vmatpush1.bf16.msra.mxu0 %v7534
  %8218 = vmatprep.subr.bf16.mxu0 %v7531
  %8219 = vmatpush1.bf16.msra.mxu0 %v7530
  %8220 = vmatprep.subr.bf16.mxu0 %v7591
  %8221 = vmatpush2.bf16.msra.mxu0 %v7590
  %8222 = vmatprep.subr.bf16.mxu0 %v7587
  %8223 = vmatpush2.bf16.msra.mxu0 %v7586
  %8224 = vmatprep.subr.bf16.mxu0 %v7583
  %8225 = vmatpush2.bf16.msra.mxu0 %v7582
  %8226 = vmatprep.subr.bf16.mxu0 %v7579
  %8227 = vmatpush2.bf16.msra.mxu0 %v7578
  %8228 = vmatprep.subr.bf16.mxu0 %v7575
  %8229 = vmatpush2.bf16.msra.mxu0 %v7574
  %8230 = vmatprep.subr.bf16.mxu0 %v7571
  %8231 = vmatpush2.bf16.msra.mxu0 %v7570
  %8232 = vmatprep.subr.bf16.mxu0 %v7567
  %8233 = vmatpush2.bf16.msra.mxu0 %v7566
  %8234 = vmatprep.subr.bf16.mxu0 %v7563
  %8235 = vmatpush2.bf16.msra.mxu0 %v7562
  %8236 = vmatprep.mubr.bf16.mxu0 %v6475
  %8237 = vmatmul.mubr.bf16.gmra.mxu0 %v6474
  %v8238 = vpop.f32.mrf.mxu0
  %v8239 = vadd.f32 %v6751, %v8238
  %v8240 = vpop.f32.mrf.mxu0
  %v8241 = vadd.f32 %v6755, %v8240
  %v8242 = vpop.f32.mrf.mxu0
  %v8243 = vpop.f32.mrf.mxu0
  %8244 = vdwg.mxu0
  %8245 = vmatprep.subr.bf16.mxu0 %v7623
  %8246 = vmatpush1.bf16.msra.mxu0 %v7622
  %8247 = vmatprep.subr.bf16.mxu0 %v7619
  %8248 = vmatpush1.bf16.msra.mxu0 %v7618
  %8249 = vmatprep.subr.bf16.mxu0 %v7615
  %8250 = vmatpush1.bf16.msra.mxu0 %v7614
  %8251 = vmatprep.subr.bf16.mxu0 %v7611
  %8252 = vmatpush1.bf16.msra.mxu0 %v7610
  %8253 = vmatprep.subr.bf16.mxu0 %v7607
  %8254 = vmatpush1.bf16.msra.mxu0 %v7606
  %8255 = vmatprep.subr.bf16.mxu0 %v7603
  %8256 = vmatpush1.bf16.msra.mxu0 %v7602
  %8257 = vmatprep.subr.bf16.mxu0 %v7599
  %8258 = vmatpush1.bf16.msra.mxu0 %v7598
  %8259 = vmatprep.subr.bf16.mxu0 %v7595
  %8260 = vmatpush1.bf16.msra.mxu0 %v7594
  %8261 = vmatprep.subr.bf16.mxu0 %v7655
  %8262 = vmatpush2.bf16.msra.mxu0 %v7654
  %8263 = vmatprep.subr.bf16.mxu0 %v7651
  %8264 = vmatpush2.bf16.msra.mxu0 %v7650
  %8265 = vmatprep.subr.bf16.mxu0 %v7647
  %8266 = vmatpush2.bf16.msra.mxu0 %v7646
  %8267 = vmatprep.subr.bf16.mxu0 %v7643
  %8268 = vmatpush2.bf16.msra.mxu0 %v7642
  %8269 = vmatprep.subr.bf16.mxu0 %v7639
  %8270 = vmatpush2.bf16.msra.mxu0 %v7638
  %8271 = vmatprep.subr.bf16.mxu0 %v7635
  %8272 = vmatpush2.bf16.msra.mxu0 %v7634
  %8273 = vmatprep.subr.bf16.mxu0 %v7631
  %8274 = vmatpush2.bf16.msra.mxu0 %v7630
  %8275 = vmatprep.subr.bf16.mxu0 %v7627
  %8276 = vmatpush2.bf16.msra.mxu0 %v7626
  %8277 = vmatprep.mubr.bf16.mxu0 %v6477
  %8278 = vmatmul.mubr.bf16.gmra.mxu0 %v6476
  %v8279 = vpop.f32.mrf.mxu0
  %v8280 = vadd.f32 %v8239, %v8279
  %v8281 = vpop.f32.mrf.mxu0
  %v8282 = vadd.f32 %v8241, %v8281
  %v8283 = vpop.f32.mrf.mxu0
  %v8284 = vpop.f32.mrf.mxu0
  %8285 = vdwg.mxu0
  %8286 = vmatprep.subr.bf16.mxu0 %v7687
  %8287 = vmatpush1.bf16.msra.mxu0 %v7686
  %8288 = vmatprep.subr.bf16.mxu0 %v7683
  %8289 = vmatpush1.bf16.msra.mxu0 %v7682
  %8290 = vmatprep.subr.bf16.mxu0 %v7679
  %8291 = vmatpush1.bf16.msra.mxu0 %v7678
  %8292 = vmatprep.subr.bf16.mxu0 %v7675
  %8293 = vmatpush1.bf16.msra.mxu0 %v7674
  %8294 = vmatprep.subr.bf16.mxu0 %v7671
  %8295 = vmatpush1.bf16.msra.mxu0 %v7670
  %8296 = vmatprep.subr.bf16.mxu0 %v7667
  %8297 = vmatpush1.bf16.msra.mxu0 %v7666
  %8298 = vmatprep.subr.bf16.mxu0 %v7663
  %8299 = vmatpush1.bf16.msra.mxu0 %v7662
  %8300 = vmatprep.subr.bf16.mxu0 %v7659
  %8301 = vmatpush1.bf16.msra.mxu0 %v7658
  %8302 = vmatprep.subr.bf16.mxu0 %v7719
  %8303 = vmatpush2.bf16.msra.mxu0 %v7718
  %8304 = vmatprep.subr.bf16.mxu0 %v7715
  %8305 = vmatpush2.bf16.msra.mxu0 %v7714
  %8306 = vmatprep.subr.bf16.mxu0 %v7711
  %8307 = vmatpush2.bf16.msra.mxu0 %v7710
  %8308 = vmatprep.subr.bf16.mxu0 %v7707
  %8309 = vmatpush2.bf16.msra.mxu0 %v7706
  %8310 = vmatprep.subr.bf16.mxu0 %v7703
  %8311 = vmatpush2.bf16.msra.mxu0 %v7702
  %8312 = vmatprep.subr.bf16.mxu0 %v7699
  %8313 = vmatpush2.bf16.msra.mxu0 %v7698
  %8314 = vmatprep.subr.bf16.mxu0 %v7695
  %8315 = vmatpush2.bf16.msra.mxu0 %v7694
  %8316 = vmatprep.subr.bf16.mxu0 %v7691
  %8317 = vmatpush2.bf16.msra.mxu0 %v7690
  %8318 = vmatprep.mubr.bf16.mxu0 %v6479
  %8319 = vmatmul.mubr.bf16.gmra.mxu0 %v6478
  %v8320 = vpop.f32.mrf.mxu0
  %v8321 = vadd.f32 %v8280, %v8320
  %v8322 = vpop.f32.mrf.mxu0
  %v8323 = vadd.f32 %v8282, %v8322
  %v8324 = vpop.f32.mrf.mxu0
  %v8325 = vpop.f32.mrf.mxu0
  %8326 = vdwg.mxu0
  %8327 = vmatprep.subr.bf16.mxu0 %v7751
  %8328 = vmatpush1.bf16.msra.mxu0 %v7750
  %8329 = vmatprep.subr.bf16.mxu0 %v7747
  %8330 = vmatpush1.bf16.msra.mxu0 %v7746
  %8331 = vmatprep.subr.bf16.mxu0 %v7743
  %8332 = vmatpush1.bf16.msra.mxu0 %v7742
  %8333 = vmatprep.subr.bf16.mxu0 %v7739
  %8334 = vmatpush1.bf16.msra.mxu0 %v7738
  %8335 = vmatprep.subr.bf16.mxu0 %v7735
  %8336 = vmatpush1.bf16.msra.mxu0 %v7734
  %8337 = vmatprep.subr.bf16.mxu0 %v7731
  %8338 = vmatpush1.bf16.msra.mxu0 %v7730
  %8339 = vmatprep.subr.bf16.mxu0 %v7727
  %8340 = vmatpush1.bf16.msra.mxu0 %v7726
  %8341 = vmatprep.subr.bf16.mxu0 %v7723
  %8342 = vmatpush1.bf16.msra.mxu0 %v7722
  %8343 = vmatprep.subr.bf16.mxu0 %v7783
  %8344 = vmatpush2.bf16.msra.mxu0 %v7782
  %8345 = vmatprep.subr.bf16.mxu0 %v7779
  %8346 = vmatpush2.bf16.msra.mxu0 %v7778
  %8347 = vmatprep.subr.bf16.mxu0 %v7775
  %8348 = vmatpush2.bf16.msra.mxu0 %v7774
  %8349 = vmatprep.subr.bf16.mxu0 %v7771
  %8350 = vmatpush2.bf16.msra.mxu0 %v7770
  %8351 = vmatprep.subr.bf16.mxu0 %v7767
  %8352 = vmatpush2.bf16.msra.mxu0 %v7766
  %8353 = vmatprep.subr.bf16.mxu0 %v7763
  %8354 = vmatpush2.bf16.msra.mxu0 %v7762
  %8355 = vmatprep.subr.bf16.mxu0 %v7759
  %8356 = vmatpush2.bf16.msra.mxu0 %v7758
  %8357 = vmatprep.subr.bf16.mxu0 %v7755
  %8358 = vmatpush2.bf16.msra.mxu0 %v7754
  %8359 = vmatprep.mubr.bf16.mxu0 %v6481
  %8360 = vmatmul.mubr.bf16.gmra.mxu0 %v6480
  %v8361 = vpop.f32.mrf.mxu0
  %v8362 = vadd.f32 %v8321, %v8361
  %v8363 = vpop.f32.mrf.mxu0
  %v8364 = vadd.f32 %v8323, %v8363
  %v8365 = vpop.f32.mrf.mxu0
  %v8366 = vpop.f32.mrf.mxu0
  %8367 = vdwg.mxu0
  %v8368 = vpack.c.bf16 %v8198, %v8198
  %v8369 = vpack.c.bf16 %v8200, %v8200
  %v8370 = vpack.c.bf16 %v8362, %v8362
  %v8371 = vpack.c.bf16 %v8364, %v8364
  %v8372 = vld [vmem:[%s5] sm:$0xff]
  %v8373 = vld [vmem:[%s5 + $0x8] sm:$0xff]
  %v8374 = vld [vmem:[%s5 + $0x10] sm:$0xff]
  %v8375 = vld [vmem:[%s5 + $0x18] sm:$0xff]
  %v8376 = vld [vmem:[%s5 + $0x20] sm:$0xff]
  %v8377 = vld [vmem:[%s5 + $0x28] sm:$0xff]
  %v8378 = vld [vmem:[%s5 + $0x30] sm:$0xff]
  %v8379 = vld [vmem:[%s5 + $0x38] sm:$0xff]
  %v8380 = vld [vmem:[%s5 + $0x40] sm:$0xff]
  %v8381 = vld [vmem:[%s5 + $0x48] sm:$0xff]
  %v8382 = vld [vmem:[%s5 + $0x50] sm:$0xff]
  %v8383 = vld [vmem:[%s5 + $0x58] sm:$0xff]
  %v8384 = vld [vmem:[%s5 + $0x60] sm:$0xff]
  %v8385 = vld [vmem:[%s5 + $0x68] sm:$0xff]
  %v8386 = vld [vmem:[%s5 + $0x70] sm:$0xff]
  %v8387 = vld [vmem:[%s5 + $0x78] sm:$0xff]
  %v8388 = vld [vmem:[%s5 + $0x80] sm:$0xff]
  %v8389 = vld [vmem:[%s5 + $0x88] sm:$0xff]
  %v8390 = vld [vmem:[%s5 + $0x90] sm:$0xff]
  %v8391 = vld [vmem:[%s5 + $0x98] sm:$0xff]
  %v8392 = vld [vmem:[%s5 + $0xa0] sm:$0xff]
  %v8393 = vld [vmem:[%s5 + $0xa8] sm:$0xff]
  %v8394 = vld [vmem:[%s5 + $0xb0] sm:$0xff]
  %v8395 = vld [vmem:[%s5 + $0xb8] sm:$0xff]
  %v8396 = vld [vmem:[%s5 + $0xc0] sm:$0xff]
  %v8397 = vld [vmem:[%s5 + $0xc8] sm:$0xff]
  %v8398 = vld [vmem:[%s5 + $0xd0] sm:$0xff]
  %v8399 = vld [vmem:[%s5 + $0xd8] sm:$0xff]
  %v8400 = vld [vmem:[%s5 + $0xe0] sm:$0xff]
  %v8401 = vld [vmem:[%s5 + $0xe8] sm:$0xff]
  %v8402 = vld [vmem:[%s5 + $0xf0] sm:$0xff]
  %v8403 = vld [vmem:[%s5 + $0xf8] sm:$0xff]
  %v8404 = vld [vmem:[%s5 + $0x100] sm:$0xff]
  %v8405 = vld [vmem:[%s5 + $0x108] sm:$0xff]
  %v8406 = vld [vmem:[%s5 + $0x110] sm:$0xff]
  %v8407 = vld [vmem:[%s5 + $0x118] sm:$0xff]
  %v8408 = vld [vmem:[%s5 + $0x120] sm:$0xff]
  %v8409 = vld [vmem:[%s5 + $0x128] sm:$0xff]
  %v8410 = vld [vmem:[%s5 + $0x130] sm:$0xff]
  %v8411 = vld [vmem:[%s5 + $0x138] sm:$0xff]
  %v8412 = vld [vmem:[%s5 + $0x140] sm:$0xff]
  %v8413 = vld [vmem:[%s5 + $0x148] sm:$0xff]
  %v8414 = vld [vmem:[%s5 + $0x150] sm:$0xff]
  %v8415 = vld [vmem:[%s5 + $0x158] sm:$0xff]
  %v8416 = vld [vmem:[%s5 + $0x160] sm:$0xff]
  %v8417 = vld [vmem:[%s5 + $0x168] sm:$0xff]
  %v8418 = vld [vmem:[%s5 + $0x170] sm:$0xff]
  %v8419 = vld [vmem:[%s5 + $0x178] sm:$0xff]
  %v8420 = vld [vmem:[%s5 + $0x180] sm:$0xff]
  %v8421 = vld [vmem:[%s5 + $0x188] sm:$0xff]
  %v8422 = vld [vmem:[%s5 + $0x190] sm:$0xff]
  %v8423 = vld [vmem:[%s5 + $0x198] sm:$0xff]
  %v8424 = vld [vmem:[%s5 + $0x1a0] sm:$0xff]
  %v8425 = vld [vmem:[%s5 + $0x1a8] sm:$0xff]
  %v8426 = vld [vmem:[%s5 + $0x1b0] sm:$0xff]
  %v8427 = vld [vmem:[%s5 + $0x1b8] sm:$0xff]
  %v8428 = vld [vmem:[%s5 + $0x1c0] sm:$0xff]
  %v8429 = vld [vmem:[%s5 + $0x1c8] sm:$0xff]
  %v8430 = vld [vmem:[%s5 + $0x1d0] sm:$0xff]
  %v8431 = vld [vmem:[%s5 + $0x1d8] sm:$0xff]
  %v8432 = vld [vmem:[%s5 + $0x1e0] sm:$0xff]
  %v8433 = vld [vmem:[%s5 + $0x1e8] sm:$0xff]
  %v8434 = vld [vmem:[%s5 + $0x1f0] sm:$0xff]
  %v8435 = vld [vmem:[%s5 + $0x1f8] sm:$0xff]
  %v8436 = vld [vmem:[%s6] sm:$0x3]
  %v8438 = vlaneseq
  %v8439 = vshrl.u32 %v8438, 7
  %v8440 = vsub.s32 0, %v8439
  %v8441 = vrot.slane %v8436, %v8440
  %v8442 = vlaneseq
  %v8443 = vshrl.u32 %v8442, 7
  %v8444 = vsub.s32 1, %v8443
  %v8445 = vrot.slane %v8436, %v8444
  %v8512 = vunpack.c.l.b16 %v8372
  %v8513 = vunpack.c.h.b16 %v8372
  %v8514 = vunpack.c.l.b16 %v8373
  %v8515 = vunpack.c.h.b16 %v8373
  %v8516 = vunpack.c.l.b16 %v8374
  %v8517 = vunpack.c.h.b16 %v8374
  %v8518 = vunpack.c.l.b16 %v8375
  %v8519 = vunpack.c.h.b16 %v8375
  %v8520 = vunpack.c.l.b16 %v8376
  %v8521 = vunpack.c.h.b16 %v8376
  %v8522 = vunpack.c.l.b16 %v8377
  %v8523 = vunpack.c.h.b16 %v8377
  %v8524 = vunpack.c.l.b16 %v8378
  %v8525 = vunpack.c.h.b16 %v8378
  %v8526 = vunpack.c.l.b16 %v8379
  %v8527 = vunpack.c.h.b16 %v8379
  %v8528 = vunpack.c.l.b16 %v8380
  %v8529 = vunpack.c.h.b16 %v8380
  %v8530 = vunpack.c.l.b16 %v8381
  %v8531 = vunpack.c.h.b16 %v8381
  %v8532 = vunpack.c.l.b16 %v8382
  %v8533 = vunpack.c.h.b16 %v8382
  %v8534 = vunpack.c.l.b16 %v8383
  %v8535 = vunpack.c.h.b16 %v8383
  %v8536 = vunpack.c.l.b16 %v8384
  %v8537 = vunpack.c.h.b16 %v8384
  %v8538 = vunpack.c.l.b16 %v8385
  %v8539 = vunpack.c.h.b16 %v8385
  %v8540 = vunpack.c.l.b16 %v8386
  %v8541 = vunpack.c.h.b16 %v8386
  %v8542 = vunpack.c.l.b16 %v8387
  %v8543 = vunpack.c.h.b16 %v8387
  %v8544 = vunpack.c.l.b16 %v8388
  %v8545 = vunpack.c.h.b16 %v8388
  %v8546 = vunpack.c.l.b16 %v8389
  %v8547 = vunpack.c.h.b16 %v8389
  %v8548 = vunpack.c.l.b16 %v8390
  %v8549 = vunpack.c.h.b16 %v8390
  %v8550 = vunpack.c.l.b16 %v8391
  %v8551 = vunpack.c.h.b16 %v8391
  %v8552 = vunpack.c.l.b16 %v8392
  %v8553 = vunpack.c.h.b16 %v8392
  %v8554 = vunpack.c.l.b16 %v8393
  %v8555 = vunpack.c.h.b16 %v8393
  %v8556 = vunpack.c.l.b16 %v8394
  %v8557 = vunpack.c.h.b16 %v8394
  %v8558 = vunpack.c.l.b16 %v8395
  %v8559 = vunpack.c.h.b16 %v8395
  %v8560 = vunpack.c.l.b16 %v8396
  %v8561 = vunpack.c.h.b16 %v8396
  %v8562 = vunpack.c.l.b16 %v8397
  %v8563 = vunpack.c.h.b16 %v8397
  %v8564 = vunpack.c.l.b16 %v8398
  %v8565 = vunpack.c.h.b16 %v8398
  %v8566 = vunpack.c.l.b16 %v8399
  %v8567 = vunpack.c.h.b16 %v8399
  %v8568 = vunpack.c.l.b16 %v8400
  %v8569 = vunpack.c.h.b16 %v8400
  %v8570 = vunpack.c.l.b16 %v8401
  %v8571 = vunpack.c.h.b16 %v8401
  %v8572 = vunpack.c.l.b16 %v8402
  %v8573 = vunpack.c.h.b16 %v8402
  %v8574 = vunpack.c.l.b16 %v8403
  %v8575 = vunpack.c.h.b16 %v8403
  %v8576 = vunpack.c.l.b16 %v8404
  %v8577 = vunpack.c.h.b16 %v8404
  %v8578 = vunpack.c.l.b16 %v8405
  %v8579 = vunpack.c.h.b16 %v8405
  %v8580 = vunpack.c.l.b16 %v8406
  %v8581 = vunpack.c.h.b16 %v8406
  %v8582 = vunpack.c.l.b16 %v8407
  %v8583 = vunpack.c.h.b16 %v8407
  %v8584 = vunpack.c.l.b16 %v8408
  %v8585 = vunpack.c.h.b16 %v8408
  %v8586 = vunpack.c.l.b16 %v8409
  %v8587 = vunpack.c.h.b16 %v8409
  %v8588 = vunpack.c.l.b16 %v8410
  %v8589 = vunpack.c.h.b16 %v8410
  %v8590 = vunpack.c.l.b16 %v8411
  %v8591 = vunpack.c.h.b16 %v8411
  %v8592 = vunpack.c.l.b16 %v8412
  %v8593 = vunpack.c.h.b16 %v8412
  %v8594 = vunpack.c.l.b16 %v8413
  %v8595 = vunpack.c.h.b16 %v8413
  %v8596 = vunpack.c.l.b16 %v8414
  %v8597 = vunpack.c.h.b16 %v8414
  %v8598 = vunpack.c.l.b16 %v8415
  %v8599 = vunpack.c.h.b16 %v8415
  %v8600 = vunpack.c.l.b16 %v8416
  %v8601 = vunpack.c.h.b16 %v8416
  %v8602 = vunpack.c.l.b16 %v8417
  %v8603 = vunpack.c.h.b16 %v8417
  %v8604 = vunpack.c.l.b16 %v8418
  %v8605 = vunpack.c.h.b16 %v8418
  %v8606 = vunpack.c.l.b16 %v8419
  %v8607 = vunpack.c.h.b16 %v8419
  %v8608 = vunpack.c.l.b16 %v8420
  %v8609 = vunpack.c.h.b16 %v8420
  %v8610 = vunpack.c.l.b16 %v8421
  %v8611 = vunpack.c.h.b16 %v8421
  %v8612 = vunpack.c.l.b16 %v8422
  %v8613 = vunpack.c.h.b16 %v8422
  %v8614 = vunpack.c.l.b16 %v8423
  %v8615 = vunpack.c.h.b16 %v8423
  %v8616 = vunpack.c.l.b16 %v8424
  %v8617 = vunpack.c.h.b16 %v8424
  %v8618 = vunpack.c.l.b16 %v8425
  %v8619 = vunpack.c.h.b16 %v8425
  %v8620 = vunpack.c.l.b16 %v8426
  %v8621 = vunpack.c.h.b16 %v8426
  %v8622 = vunpack.c.l.b16 %v8427
  %v8623 = vunpack.c.h.b16 %v8427
  %v8624 = vunpack.c.l.b16 %v8428
  %v8625 = vunpack.c.h.b16 %v8428
  %v8626 = vunpack.c.l.b16 %v8429
  %v8627 = vunpack.c.h.b16 %v8429
  %v8628 = vunpack.c.l.b16 %v8430
  %v8629 = vunpack.c.h.b16 %v8430
  %v8630 = vunpack.c.l.b16 %v8431
  %v8631 = vunpack.c.h.b16 %v8431
  %v8632 = vunpack.c.l.b16 %v8432
  %v8633 = vunpack.c.h.b16 %v8432
  %v8634 = vunpack.c.l.b16 %v8433
  %v8635 = vunpack.c.h.b16 %v8433
  %v8636 = vunpack.c.l.b16 %v8434
  %v8637 = vunpack.c.h.b16 %v8434
  %v8638 = vunpack.c.l.b16 %v8435
  %v8639 = vunpack.c.h.b16 %v8435
  %v8640 = vpack.c.b16 %v8514, %v8512
  %v8641 = vpack.c.b16 %v8515, %v8513
  %v8642 = vpack.c.b16 %v8518, %v8516
  %v8643 = vpack.c.b16 %v8519, %v8517
  %v8644 = vpack.c.b16 %v8522, %v8520
  %v8645 = vpack.c.b16 %v8523, %v8521
  %v8646 = vpack.c.b16 %v8526, %v8524
  %v8647 = vpack.c.b16 %v8527, %v8525
  %v8648 = vpack.c.b16 %v8530, %v8528
  %v8649 = vpack.c.b16 %v8531, %v8529
  %v8650 = vpack.c.b16 %v8534, %v8532
  %v8651 = vpack.c.b16 %v8535, %v8533
  %v8652 = vpack.c.b16 %v8538, %v8536
  %v8653 = vpack.c.b16 %v8539, %v8537
  %v8654 = vpack.c.b16 %v8542, %v8540
  %v8655 = vpack.c.b16 %v8543, %v8541
  %v8656 = vpack.c.b16 %v8546, %v8544
  %v8657 = vpack.c.b16 %v8547, %v8545
  %v8658 = vpack.c.b16 %v8550, %v8548
  %v8659 = vpack.c.b16 %v8551, %v8549
  %v8660 = vpack.c.b16 %v8554, %v8552
  %v8661 = vpack.c.b16 %v8555, %v8553
  %v8662 = vpack.c.b16 %v8558, %v8556
  %v8663 = vpack.c.b16 %v8559, %v8557
  %v8664 = vpack.c.b16 %v8562, %v8560
  %v8665 = vpack.c.b16 %v8563, %v8561
  %v8666 = vpack.c.b16 %v8566, %v8564
  %v8667 = vpack.c.b16 %v8567, %v8565
  %v8668 = vpack.c.b16 %v8570, %v8568
  %v8669 = vpack.c.b16 %v8571, %v8569
  %v8670 = vpack.c.b16 %v8574, %v8572
  %v8671 = vpack.c.b16 %v8575, %v8573
  %v8672 = vpack.c.b16 %v8578, %v8576
  %v8673 = vpack.c.b16 %v8579, %v8577
  %v8674 = vpack.c.b16 %v8582, %v8580
  %v8675 = vpack.c.b16 %v8583, %v8581
  %v8676 = vpack.c.b16 %v8586, %v8584
  %v8677 = vpack.c.b16 %v8587, %v8585
  %v8678 = vpack.c.b16 %v8590, %v8588
  %v8679 = vpack.c.b16 %v8591, %v8589
  %v8680 = vpack.c.b16 %v8594, %v8592
  %v8681 = vpack.c.b16 %v8595, %v8593
  %v8682 = vpack.c.b16 %v8598, %v8596
  %v8683 = vpack.c.b16 %v8599, %v8597
  %v8684 = vpack.c.b16 %v8602, %v8600
  %v8685 = vpack.c.b16 %v8603, %v8601
  %v8686 = vpack.c.b16 %v8606, %v8604
  %v8687 = vpack.c.b16 %v8607, %v8605
  %v8688 = vpack.c.b16 %v8610, %v8608
  %v8689 = vpack.c.b16 %v8611, %v8609
  %v8690 = vpack.c.b16 %v8614, %v8612
  %v8691 = vpack.c.b16 %v8615, %v8613
  %v8692 = vpack.c.b16 %v8618, %v8616
  %v8693 = vpack.c.b16 %v8619, %v8617
  %v8694 = vpack.c.b16 %v8622, %v8620
  %v8695 = vpack.c.b16 %v8623, %v8621
  %v8696 = vpack.c.b16 %v8626, %v8624
  %v8697 = vpack.c.b16 %v8627, %v8625
  %v8698 = vpack.c.b16 %v8630, %v8628
  %v8699 = vpack.c.b16 %v8631, %v8629
  %v8700 = vpack.c.b16 %v8634, %v8632
  %v8701 = vpack.c.b16 %v8635, %v8633
  %v8702 = vpack.c.b16 %v8638, %v8636
  %v8703 = vpack.c.b16 %v8639, %v8637
  %8768 = vmatprep.subr.bf16.mxu0 %v8655
  %8769 = vmatpush1.bf16.msra.mxu0 %v8654
  %8770 = vmatprep.subr.bf16.mxu0 %v8653
  %8771 = vmatpush1.bf16.msra.mxu0 %v8652
  %8772 = vmatprep.subr.bf16.mxu0 %v8651
  %8773 = vmatpush1.bf16.msra.mxu0 %v8650
  %8774 = vmatprep.subr.bf16.mxu0 %v8649
  %8775 = vmatpush1.bf16.msra.mxu0 %v8648
  %8776 = vmatprep.subr.bf16.mxu0 %v8647
  %8777 = vmatpush1.bf16.msra.mxu0 %v8646
  %8778 = vmatprep.subr.bf16.mxu0 %v8645
  %8779 = vmatpush1.bf16.msra.mxu0 %v8644
  %8780 = vmatprep.subr.bf16.mxu0 %v8643
  %8781 = vmatpush1.bf16.msra.mxu0 %v8642
  %8782 = vmatprep.subr.bf16.mxu0 %v8641
  %8783 = vmatpush1.bf16.msra.mxu0 %v8640
  %8784 = vmatprep.subr.bf16.mxu0 %v8671
  %8785 = vmatpush2.bf16.msra.mxu0 %v8670
  %8786 = vmatprep.subr.bf16.mxu0 %v8669
  %8787 = vmatpush2.bf16.msra.mxu0 %v8668
  %8788 = vmatprep.subr.bf16.mxu0 %v8667
  %8789 = vmatpush2.bf16.msra.mxu0 %v8666
  %8790 = vmatprep.subr.bf16.mxu0 %v8665
  %8791 = vmatpush2.bf16.msra.mxu0 %v8664
  %8792 = vmatprep.subr.bf16.mxu0 %v8663
  %8793 = vmatpush2.bf16.msra.mxu0 %v8662
  %8794 = vmatprep.subr.bf16.mxu0 %v8661
  %8795 = vmatpush2.bf16.msra.mxu0 %v8660
  %8796 = vmatprep.subr.bf16.mxu0 %v8659
  %8797 = vmatpush2.bf16.msra.mxu0 %v8658
  %8798 = vmatprep.subr.bf16.mxu0 %v8657
  %8799 = vmatpush2.bf16.msra.mxu0 %v8656
  %8800 = vmatprep.mubr.bf16.mxu0 %v8369
  %8801 = vmatmul.mubr.bf16.gmra.mxu0 %v8368
  %v8802 = vpop.f32.mrf.mxu0
  %v8803 = vadd.f32 %v8441, %v8802
  %v8804 = vpop.f32.mrf.mxu0
  %v8805 = vadd.f32 %v8445, %v8804
  %v8806 = vpop.f32.mrf.mxu0
  %v8807 = vpop.f32.mrf.mxu0
  %8808 = vdwg.mxu0
  %8809 = vmatprep.subr.bf16.mxu0 %v8687
  %8810 = vmatpush1.bf16.msra.mxu0 %v8686
  %8811 = vmatprep.subr.bf16.mxu0 %v8685
  %8812 = vmatpush1.bf16.msra.mxu0 %v8684
  %8813 = vmatprep.subr.bf16.mxu0 %v8683
  %8814 = vmatpush1.bf16.msra.mxu0 %v8682
  %8815 = vmatprep.subr.bf16.mxu0 %v8681
  %8816 = vmatpush1.bf16.msra.mxu0 %v8680
  %8817 = vmatprep.subr.bf16.mxu0 %v8679
  %8818 = vmatpush1.bf16.msra.mxu0 %v8678
  %8819 = vmatprep.subr.bf16.mxu0 %v8677
  %8820 = vmatpush1.bf16.msra.mxu0 %v8676
  %8821 = vmatprep.subr.bf16.mxu0 %v8675
  %8822 = vmatpush1.bf16.msra.mxu0 %v8674
  %8823 = vmatprep.subr.bf16.mxu0 %v8673
  %8824 = vmatpush1.bf16.msra.mxu0 %v8672
  %8825 = vmatprep.subr.bf16.mxu0 %v8703
  %8826 = vmatpush2.bf16.msra.mxu0 %v8702
  %8827 = vmatprep.subr.bf16.mxu0 %v8701
  %8828 = vmatpush2.bf16.msra.mxu0 %v8700
  %8829 = vmatprep.subr.bf16.mxu0 %v8699
  %8830 = vmatpush2.bf16.msra.mxu0 %v8698
  %8831 = vmatprep.subr.bf16.mxu0 %v8697
  %8832 = vmatpush2.bf16.msra.mxu0 %v8696
  %8833 = vmatprep.subr.bf16.mxu0 %v8695
  %8834 = vmatpush2.bf16.msra.mxu0 %v8694
  %8835 = vmatprep.subr.bf16.mxu0 %v8693
  %8836 = vmatpush2.bf16.msra.mxu0 %v8692
  %8837 = vmatprep.subr.bf16.mxu0 %v8691
  %8838 = vmatpush2.bf16.msra.mxu0 %v8690
  %8839 = vmatprep.subr.bf16.mxu0 %v8689
  %8840 = vmatpush2.bf16.msra.mxu0 %v8688
  %8841 = vmatprep.mubr.bf16.mxu0 %v8371
  %8842 = vmatmul.mubr.bf16.gmra.mxu0 %v8370
  %v8843 = vpop.f32.mrf.mxu0
  %v8844 = vadd.f32 %v8803, %v8843
  %v8845 = vpop.f32.mrf.mxu0
  %v8846 = vadd.f32 %v8805, %v8845
  %v8847 = vpop.f32.mrf.mxu0
  %v8848 = vpop.f32.mrf.mxu0
  %8849 = vdwg.mxu0
  %v8850 = vpack.c.bf16 %v8844, %v8844
  %v8851 = vpack.c.bf16 %v8846, %v8846
  %v8852 = vld [vmem:[%s7] sm:$0xf]
  %v8853 = vld [vmem:[%s7 + $0x4] sm:$0xf]
  %v8854 = vld [vmem:[%s7 + $0x8] sm:$0xf]
  %v8855 = vld [vmem:[%s7 + $0xc] sm:$0xf]
  %v8856 = vld [vmem:[%s7 + $0x10] sm:$0xf]
  %v8857 = vld [vmem:[%s7 + $0x14] sm:$0xf]
  %v8858 = vld [vmem:[%s7 + $0x18] sm:$0xf]
  %v8859 = vld [vmem:[%s7 + $0x1c] sm:$0xf]
  %v8860 = vld [vmem:[%s7 + $0x20] sm:$0xf]
  %v8861 = vld [vmem:[%s7 + $0x24] sm:$0xf]
  %v8862 = vld [vmem:[%s7 + $0x28] sm:$0xf]
  %v8863 = vld [vmem:[%s7 + $0x2c] sm:$0xf]
  %v8864 = vld [vmem:[%s7 + $0x30] sm:$0xf]
  %v8865 = vld [vmem:[%s7 + $0x34] sm:$0xf]
  %v8866 = vld [vmem:[%s7 + $0x38] sm:$0xf]
  %v8867 = vld [vmem:[%s7 + $0x3c] sm:$0xf]
  %v8868 = vld [vmem:[%s7 + $0x40] sm:$0xf]
  %v8869 = vld [vmem:[%s7 + $0x44] sm:$0xf]
  %v8870 = vld [vmem:[%s7 + $0x48] sm:$0xf]
  %v8871 = vld [vmem:[%s7 + $0x4c] sm:$0xf]
  %v8872 = vld [vmem:[%s7 + $0x50] sm:$0xf]
  %v8873 = vld [vmem:[%s7 + $0x54] sm:$0xf]
  %v8874 = vld [vmem:[%s7 + $0x58] sm:$0xf]
  %v8875 = vld [vmem:[%s7 + $0x5c] sm:$0xf]
  %v8876 = vld [vmem:[%s7 + $0x60] sm:$0xf]
  %v8877 = vld [vmem:[%s7 + $0x64] sm:$0xf]
  %v8878 = vld [vmem:[%s7 + $0x68] sm:$0xf]
  %v8879 = vld [vmem:[%s7 + $0x6c] sm:$0xf]
  %v8880 = vld [vmem:[%s7 + $0x70] sm:$0xf]
  %v8881 = vld [vmem:[%s7 + $0x74] sm:$0xf]
  %v8882 = vld [vmem:[%s7 + $0x78] sm:$0xf]
  %v8883 = vld [vmem:[%s7 + $0x7c] sm:$0xf]
  %v8884 = vld [vmem:[%s8] sm:$0x1]
  %v8886 = vlaneseq
  %v8887 = vshrl.u32 %v8886, 7
  %v8888 = vsub.s32 0, %v8887
  %v8889 = vrot.slane %v8884, %v8888
  %v8923 = vunpack.c.l.b16 %v8852
  %v8924 = vunpack.c.l.b16 %v8853
  %v8925 = vunpack.c.l.b16 %v8854
  %v8926 = vunpack.c.l.b16 %v8855
  %v8927 = vunpack.c.l.b16 %v8856
  %v8928 = vunpack.c.l.b16 %v8857
  %v8929 = vunpack.c.l.b16 %v8858
  %v8930 = vunpack.c.l.b16 %v8859
  %v8931 = vunpack.c.l.b16 %v8860
  %v8932 = vunpack.c.l.b16 %v8861
  %v8933 = vunpack.c.l.b16 %v8862
  %v8934 = vunpack.c.l.b16 %v8863
  %v8935 = vunpack.c.l.b16 %v8864
  %v8936 = vunpack.c.l.b16 %v8865
  %v8937 = vunpack.c.l.b16 %v8866
  %v8938 = vunpack.c.l.b16 %v8867
  %v8939 = vunpack.c.l.b16 %v8868
  %v8940 = vunpack.c.l.b16 %v8869
  %v8941 = vunpack.c.l.b16 %v8870
  %v8942 = vunpack.c.l.b16 %v8871
  %v8943 = vunpack.c.l.b16 %v8872
  %v8944 = vunpack.c.l.b16 %v8873
  %v8945 = vunpack.c.l.b16 %v8874
  %v8946 = vunpack.c.l.b16 %v8875
  %v8947 = vunpack.c.l.b16 %v8876
  %v8948 = vunpack.c.l.b16 %v8877
  %v8949 = vunpack.c.l.b16 %v8878
  %v8950 = vunpack.c.l.b16 %v8879
  %v8951 = vunpack.c.l.b16 %v8880
  %v8952 = vunpack.c.l.b16 %v8881
  %v8953 = vunpack.c.l.b16 %v8882
  %v8954 = vunpack.c.l.b16 %v8883
  %v8955 = vpack.c.b16 %v8924, %v8923
  %v8956 = vpack.c.b16 %v8926, %v8925
  %v8957 = vpack.c.b16 %v8928, %v8927
  %v8958 = vpack.c.b16 %v8930, %v8929
  %v8959 = vpack.c.b16 %v8932, %v8931
  %v8960 = vpack.c.b16 %v8934, %v8933
  %v8961 = vpack.c.b16 %v8936, %v8935
  %v8962 = vpack.c.b16 %v8938, %v8937
  %v8963 = vpack.c.b16 %v8940, %v8939
  %v8964 = vpack.c.b16 %v8942, %v8941
  %v8965 = vpack.c.b16 %v8944, %v8943
  %v8966 = vpack.c.b16 %v8946, %v8945
  %v8967 = vpack.c.b16 %v8948, %v8947
  %v8968 = vpack.c.b16 %v8950, %v8949
  %v8969 = vpack.c.b16 %v8952, %v8951
  %v8970 = vpack.c.b16 %v8954, %v8953
  %8987 = vmatprep.subr.bf16.mxu0 0
  %8988 = vmatpush1.bf16.msra.mxu0 %v8962
  %8989 = vmatprep.subr.bf16.mxu0 0
  %8990 = vmatpush1.bf16.msra.mxu0 %v8961
  %8991 = vmatprep.subr.bf16.mxu0 0
  %8992 = vmatpush1.bf16.msra.mxu0 %v8960
  %8993 = vmatprep.subr.bf16.mxu0 0
  %8994 = vmatpush1.bf16.msra.mxu0 %v8959
  %8995 = vmatprep.subr.bf16.mxu0 0
  %8996 = vmatpush1.bf16.msra.mxu0 %v8958
  %8997 = vmatprep.subr.bf16.mxu0 0
  %8998 = vmatpush1.bf16.msra.mxu0 %v8957
  %8999 = vmatprep.subr.bf16.mxu0 0
  %9000 = vmatpush1.bf16.msra.mxu0 %v8956
  %9001 = vmatprep.subr.bf16.mxu0 0
  %9002 = vmatpush1.bf16.msra.mxu0 %v8955
  %9003 = vmatprep.subr.bf16.mxu0 0
  %9004 = vmatpush2.bf16.msra.mxu0 %v8970
  %9005 = vmatprep.subr.bf16.mxu0 0
  %9006 = vmatpush2.bf16.msra.mxu0 %v8969
  %9007 = vmatprep.subr.bf16.mxu0 0
  %9008 = vmatpush2.bf16.msra.mxu0 %v8968
  %9009 = vmatprep.subr.bf16.mxu0 0
  %9010 = vmatpush2.bf16.msra.mxu0 %v8967
  %9011 = vmatprep.subr.bf16.mxu0 0
  %9012 = vmatpush2.bf16.msra.mxu0 %v8966
  %9013 = vmatprep.subr.bf16.mxu0 0
  %9014 = vmatpush2.bf16.msra.mxu0 %v8965
  %9015 = vmatprep.subr.bf16.mxu0 0
  %9016 = vmatpush2.bf16.msra.mxu0 %v8964
  %9017 = vmatprep.subr.bf16.mxu0 0
  %9018 = vmatpush2.bf16.msra.mxu0 %v8963
  %9019 = vmatprep.mubr.bf16.mxu0 %v8851
  %9020 = vmatmul.mubr.bf16.gmra.mxu0 %v8850
  %v9021 = vpop.f32.mrf.mxu0
  %v9022 = vadd.f32 %v8889, %v9021
  %v9023 = vpop.f32.mrf.mxu0
  %v9024 = vpop.f32.mrf.mxu0
  %v9025 = vpop.f32.mrf.mxu0
  %9026 = vdwg.mxu0
  %9027 = vst [vmem:[%s9] sm:$0xff] %v9022
  // Predicated region
  $region38: #{forward.5} parent=0 // pred_check
    _
  $region39: #{forward.5} parent=0 // pred_check_branch
    %9029 = sbr.rel (0) target = $region41
  $region40: #{forward.5} parent=0 // pred_region
    _
  $region41: #{forward.5} parent=0 // pred_fallthru
    _
  // Predicated region
  $region42: #{forward.5} parent=0 // pred_check
    _
  $region43: #{forward.5} parent=0 // pred_check_branch
    %9031 = sbr.rel (0) target = $region45
  $region44: #{forward.5} parent=0 // pred_region
    _
  $region45: #{forward.5} parent=0 // pred_fallthru
    _

</llo_original>
